<compile_context>
chip_gen: v6e
topology: v6e:2x2x1
jax: 0.10.0
libtpu: 0.0.40
codegen_flags: <defaults>
</compile_context>

<pallas_src>
import functools

import numpy as np

import jax
import jax.numpy as jnp
from jax import lax
from jax.experimental import pallas as pl
from jax.experimental.pallas import tpu as pltpu


# ----------------------------- fused kernel ---------------------------------

def _lenet_fused_kernel(x_ref, s1_ref, b1_ref, s2_ref, b2_ref,
                        w3_ref, b3_ref, wf1_ref, bf1_ref, wf2_ref, bf2_ref,
                        out_ref):
    """Whole LeNet forward for one batch tile; all weights live in VMEM.

    Activation layout: rows = (batch, height), lanes = (width, channel),
    channel fastest.  Conv width/channel taps (and the 2x2 avg-pool width
    reduction of the previous layer) are pre-folded into band matrices, so
    each conv is KH lane-dense MXU matmuls accumulated in f32.
    """
    BT = x_ref.shape[0]
    f32 = jnp.float32
    bf16 = jnp.bfloat16

    x = x_ref[...]                                           # (BT, 28, 28) bf16

    # ---- conv1 (1->6, 5x5) + tanh: 5 band matmuls (one per height tap) ----
    acc1 = jnp.dot(x[:, 0:24, :].reshape(BT * 24, 28), s1_ref[0],
                   preferred_element_type=f32)
    for i in range(1, 5):
        acc1 += jnp.dot(x[:, i:i + 24, :].reshape(BT * 24, 28), s1_ref[i],
                        preferred_element_type=f32)
    y1 = jnp.tanh(acc1 + b1_ref[...])                        # (BT*24, 144) f32

    # ---- pool1 height (row-pair sum); width pool + 1/4 folded into s2 ----
    y1p = y1.reshape(BT * 12, 2, 24 * 6)
    a1 = (y1p[:, 0, :] + y1p[:, 1, :]).astype(bf16).reshape(BT, 12, 24 * 6)

    # ---- conv2 (6->16, 5x5) + tanh (K = 144 per tap after pool fold) ----
    acc2 = jnp.dot(a1[:, 0:8, :].reshape(BT * 8, 144), s2_ref[0],
                   preferred_element_type=f32)
    for i in range(1, 5):
        acc2 += jnp.dot(a1[:, i:i + 8, :].reshape(BT * 8, 144), s2_ref[i],
                        preferred_element_type=f32)
    y2 = jnp.tanh(acc2 + b2_ref[...])                        # (BT*8, 128) f32

    # ---- pool2 height (row-pair sum); width pool + 1/4 folded into w3 ----
    y2p = y2.reshape(BT * 4, 2, 8 * 16)
    a2 = (y2p[:, 0, :] + y2p[:, 1, :]).astype(bf16).reshape(BT, 4, 8 * 16)

    # ---- conv3 (16->120, 4x4 over 4x4) + tanh; output zero-padded to 128 ----
    acc3 = jnp.dot(a2[:, 0, :], w3_ref[0], preferred_element_type=f32)
    for i in range(1, 4):
        acc3 += jnp.dot(a2[:, i, :], w3_ref[i], preferred_element_type=f32)
    z = jnp.tanh(acc3 + b3_ref[...]).astype(bf16)            # (BT, 128)

    # ---- classifier: fc1 + tanh, fc2 (all lane-dense 128-wide) ----
    h = jnp.tanh(jnp.dot(z, wf1_ref[...], preferred_element_type=f32)
                 + bf1_ref[...]).astype(bf16)                # (BT, 128)
    logits = jnp.dot(h, wf2_ref[...], preferred_element_type=f32) + bf2_ref[...]
    out_ref[...] = logits.astype(out_ref.dtype)


# --------------------------- parameter packing -------------------------------

def init_params(n_classes=10):
    """Deterministic init mimicking PyTorch uniform(-1/sqrt(fan_in), +)."""
    key = jax.random.PRNGKey(42)
    ks = jax.random.split(key, 10)

    def u(k, shape, fan_in):
        bound = 1.0 / jnp.sqrt(jnp.float32(fan_in))
        return jax.random.uniform(k, shape, jnp.float32, -bound, bound)

    return {
        "c1_w": u(ks[0], (6, 1, 5, 5), 1 * 5 * 5),
        "c1_b": u(ks[1], (6,), 1 * 5 * 5),
        "c2_w": u(ks[2], (16, 6, 5, 5), 6 * 5 * 5),
        "c2_b": u(ks[3], (16,), 6 * 5 * 5),
        "c3_w": u(ks[4], (120, 16, 4, 4), 16 * 4 * 4),
        "c3_b": u(ks[5], (120,), 16 * 4 * 4),
        "f1_w": u(ks[6], (84, 120), 120),
        "f1_b": u(ks[7], (84,), 120),
        "f2_w": u(ks[8], (n_classes, 84), 84),
        "f2_b": u(ks[9], (n_classes,), 84),
    }


def pack_params(params):
    """Repack PyTorch-layout weights into band / fc matrices (once, on host).

    Band matrix S[i] folds the (width tap, input channel) contraction of a
    KHxKW conv into one lane-dense matmul.  The 2x2 avg-pool width reduction
    (with its 0.25 factor) of the preceding layer is folded into the next
    conv's band matrices in f32, then everything is cast to bf16 once.
    Conv3 / fc weights are zero-padded to 128 lanes for lane-dense matmuls
    and an unmasked output store (exact: padded activations are tanh(0)=0 and
    padded weight rows are zero).
    """
    f32 = np.float32
    w1 = np.asarray(params["c1_w"], f32); b1 = np.asarray(params["c1_b"], f32)
    w2 = np.asarray(params["c2_w"], f32); b2 = np.asarray(params["c2_b"], f32)
    w3 = np.asarray(params["c3_w"], f32); b3 = np.asarray(params["c3_b"], f32)
    f1w = np.asarray(params["f1_w"], f32); f1b = np.asarray(params["f1_b"], f32)
    f2w = np.asarray(params["f2_w"], f32); f2b = np.asarray(params["f2_b"], f32)
    n_classes = f2w.shape[0]
    assert n_classes <= 128

    # conv1: input lanes = w(28) x Cin(1) ; output lanes = ow(24) x Cout(6)
    s1 = np.zeros((5, 28, 24 * 6), f32)
    for i in range(5):
        for j in range(5):
            for ow in range(24):
                s1[i, ow + j, ow * 6:(ow + 1) * 6] = w1[:, 0, i, j]

    # avgpool1 width matrix: (ow=24, c=6) -> (ow=12, c=6), 0.25 factor
    q1 = np.zeros((24 * 6, 12 * 6), f32)
    for ow in range(24):
        q1[ow * 6:(ow + 1) * 6, (ow // 2) * 6:(ow // 2 + 1) * 6] = \
            0.25 * np.eye(6, dtype=f32)

    # conv2 bands on pooled lanes; then fold q1 -> K = 144 per tap
    s2 = np.zeros((5, 12 * 6, 8 * 16), f32)
    for i in range(5):
        for j in range(5):
            for ow in range(8):
                w = ow + j
                s2[i, w * 6:(w + 1) * 6, ow * 16:(ow + 1) * 16] = w2[:, :, i, j].T
    s2f = np.einsum("ab,ibc->iac", q1, s2)                    # (5, 144, 128)

    # avgpool2 width matrix: (ow=8, c=16) -> (ow=4, c=16), 0.25 factor
    q2 = np.zeros((8 * 16, 4 * 16), f32)
    for ow in range(8):
        q2[ow * 16:(ow + 1) * 16, (ow // 2) * 16:(ow // 2 + 1) * 16] = \
            0.25 * np.eye(16, dtype=f32)

    # conv3 (4x4 valid over 4x4 = full contraction); fold q2 -> K = 128 per tap
    w3m = np.zeros((4, 4 * 16, 120), f32)
    for i in range(4):
        for j in range(4):
            w3m[i, j * 16:(j + 1) * 16, :] = w3[:, :, i, j].T
    w3f = np.einsum("ab,ibc->iac", q2, w3m)                   # (4, 128, 120)
    w3p = np.zeros((4, 128, 128), f32); w3p[:, :, :120] = w3f
    b3p = np.zeros((128,), f32); b3p[:120] = b3

    # classifier, zero-padded to 128 lanes on both sides
    wf1 = np.zeros((128, 128), f32); wf1[:120, :84] = f1w.T
    bf1 = np.zeros((128,), f32); bf1[:84] = f1b
    wf2 = np.zeros((128, 128), f32); wf2[:84, :n_classes] = f2w.T
    bf2 = np.zeros((128,), f32); bf2[:n_classes] = f2b

    bf = jnp.bfloat16
    return {
        "s1": jnp.asarray(s1, bf),
        "b1": jnp.asarray(np.tile(b1, 24)[None, :], jnp.float32),
        "s2": jnp.asarray(s2f, bf),
        "b2": jnp.asarray(np.tile(b2, 8)[None, :], jnp.float32),
        "w3": jnp.asarray(w3p, bf),
        "b3": jnp.asarray(b3p[None, :], jnp.float32),
        "wf1": jnp.asarray(wf1, bf),
        "bf1": jnp.asarray(bf1[None, :], jnp.float32),
        "wf2": jnp.asarray(wf2, bf),
        "bf2": jnp.asarray(bf2[None, :], jnp.float32),
    }


# ------------------------------- forward -------------------------------------

@functools.partial(jax.jit, static_argnames=("n_classes", "batch_tile"))
def model_mnist_forward(packed, x, *, n_classes=10, batch_tile=128):
    """x: (B, 1, 28, 28) float32 -> logits (B, n_classes) float32."""
    B = x.shape[0]
    assert x.shape[1:] == (1, 28, 28)
    assert 1 <= n_classes <= 128

    # Input is only ever consumed as bf16 by the MXU: ship it as bf16 (halves
    # the HBM->VMEM DMA bytes and the x double-buffer).
    xs = x.reshape(B, 28, 28).astype(jnp.bfloat16)

    # Large default tile (128) to amortize per-step overhead / MXU fill, but
    # capped to the offered batch (rounded to 8) so tiny batches are not
    # padded 16x.  f32 accumulators at bt=128 are < 2 MB; fits every gen.
    bt = int(min(batch_tile, max(8, -(-B // 8) * 8)))
    bp = -(-B // bt) * bt
    if bp != B:
        xs = jnp.pad(xs, ((0, bp - B), (0, 0), (0, 0)))

    weight_keys = ("s1", "b1", "s2", "b2", "w3", "b3",
                   "wf1", "bf1", "wf2", "bf2")
    weights = [packed[k] for k in weight_keys]

    def _resident(arr):
        # Full-array block, same block every grid step -> stays in VMEM.
        nd = arr.ndim
        return pl.BlockSpec(arr.shape, lambda b, _n=nd: (0,) * _n)

    flops_per_img = 2 * (5 * 24 * 28 * 144      # conv1
                         + 5 * 8 * 144 * 128    # conv2 (pool1 folded)
                         + 4 * 128 * 128        # conv3 (pool2 folded, padded)
                         + 128 * 128            # fc1 (padded)
                         + 128 * 128)           # fc2 (padded)
    weight_bytes = int(sum(w.size * w.dtype.itemsize for w in weights))
    cost = pl.CostEstimate(
        flops=int(flops_per_img * bp),
        transcendentals=int((24 * 144 + 8 * 128 + 128 + 128) * bp),
        bytes_accessed=int(xs.size * 2 + bp * 128 * 4 + weight_bytes))

    out = pl.pallas_call(
        _lenet_fused_kernel,
        out_shape=jax.ShapeDtypeStruct((bp, 128), jnp.float32),
        grid=(bp // bt,),
        in_specs=[pl.BlockSpec((bt, 28, 28), lambda b: (b, 0, 0))]
                 + [_resident(w) for w in weights],
        out_specs=pl.BlockSpec((bt, 128), lambda b: (b, 0)),
        compiler_params=pltpu.CompilerParams(
            dimension_semantics=("parallel",),
            vmem_limit_bytes=32 * 1024 * 1024),
        cost_estimate=cost,
    )(xs, *weights)
    return out[:B, :n_classes]


# ------------------------- pure-JAX reference (check) -------------------------

def reference_forward(params, x):
    """f32 XLA reference of the PyTorch module, for validation only."""
    def conv_tanh(a, w, b):
        y = lax.conv_general_dilated(a, w, window_strides=(1, 1),
                                     padding="VALID",
                                     dimension_numbers=("NCHW", "OIHW", "NCHW"))
        return jnp.tanh(y + b[None, :, None, None])

    def avgpool2(a):
        B, C, H, W = a.shape
        return a.reshape(B, C, H // 2, 2, W // 2, 2).mean(axis=(3, 5))

    y = avgpool2(conv_tanh(x, params["c1_w"], params["c1_b"]))
    y = avgpool2(conv_tanh(y, params["c2_w"], params["c2_b"]))
    y = conv_tanh(y, params["c3_w"], params["c3_b"])
    y = y.reshape(y.shape[0], -1)
    y = jnp.tanh(y @ params["f1_w"].T + params["f1_b"])
    return y @ params["f2_w"].T + params["f2_b"]


if __name__ == "__main__":
    params = init_params(n_classes=10)
    packed = pack_params(params)
    # 28x28 input is required for the conv3 -> flatten(120) shape of the module.
    x = jax.random.normal(jax.random.PRNGKey(0), (8, 1, 28, 28), jnp.float32)
    out = jax.block_until_ready(model_mnist_forward(packed, x, n_classes=10))
    assert out.shape == (8, 10) and out.dtype == jnp.float32
    ref = jax.block_until_ready(reference_forward(params, x))
    err = float(jnp.max(jnp.abs(out - ref)))
    assert err < 1e-1, f"mismatch vs f32 reference: {err}"
    print("KERNEL_OK")
</pallas_src>

<mosaic_0001>
module attributes {stable_mosaic.version = 11 : i64} {
  func.func @_lenet_fused_kernel(%arg0: i32, %arg1: memref<8x28x28xbf16, #tpu.memory_space<vmem>>, %arg2: memref<5x28x144xbf16, #tpu.memory_space<vmem>>, %arg3: memref<1x144xf32, #tpu.memory_space<vmem>>, %arg4: memref<5x144x128xbf16, #tpu.memory_space<vmem>>, %arg5: memref<1x128xf32, #tpu.memory_space<vmem>>, %arg6: memref<4x128x128xbf16, #tpu.memory_space<vmem>>, %arg7: memref<1x128xf32, #tpu.memory_space<vmem>>, %arg8: memref<128x128xbf16, #tpu.memory_space<vmem>>, %arg9: memref<1x128xf32, #tpu.memory_space<vmem>>, %arg10: memref<128x128xbf16, #tpu.memory_space<vmem>>, %arg11: memref<1x128xf32, #tpu.memory_space<vmem>>, %arg12: memref<8x128xf32, #tpu.memory_space<vmem>>) attributes {dimension_semantics = [#tpu.dimension_semantics<parallel>], iteration_bounds = array<i64: 1>, scalar_prefetch = 0 : i64, scratch_operands = 0 : i64, tpu.core_type = #tpu.core_type<tc>, window_params = [{transform_indices = @transform_0, window_bounds = array<i64: 8, 28, 28>}, {pipeline_mode = #tpu.pipeline_mode<synchronous>, transform_indices = @transform_1, window_bounds = array<i64: 5, 28, 144>}, {pipeline_mode = #tpu.pipeline_mode<synchronous>, transform_indices = @transform_2, window_bounds = array<i64: 1, 144>}, {pipeline_mode = #tpu.pipeline_mode<synchronous>, transform_indices = @transform_3, window_bounds = array<i64: 5, 144, 128>}, {pipeline_mode = #tpu.pipeline_mode<synchronous>, transform_indices = @transform_4, window_bounds = array<i64: 1, 128>}, {pipeline_mode = #tpu.pipeline_mode<synchronous>, transform_indices = @transform_5, window_bounds = array<i64: 4, 128, 128>}, {pipeline_mode = #tpu.pipeline_mode<synchronous>, transform_indices = @transform_6, window_bounds = array<i64: 1, 128>}, {pipeline_mode = #tpu.pipeline_mode<synchronous>, transform_indices = @transform_7, window_bounds = array<i64: 128, 128>}, {pipeline_mode = #tpu.pipeline_mode<synchronous>, transform_indices = @transform_8, window_bounds = array<i64: 1, 128>}, {pipeline_mode = #tpu.pipeline_mode<synchronous>, transform_indices = @transform_9, window_bounds = array<i64: 128, 128>}, {pipeline_mode = #tpu.pipeline_mode<synchronous>, transform_indices = @transform_10, window_bounds = array<i64: 1, 128>}, {transform_indices = @transform_11, window_bounds = array<i64: 8, 128>}]} {
    %c0 = arith.constant 0 : index
    %c0_0 = arith.constant 0 : index
    %c0_1 = arith.constant 0 : index
    %0 = vector.load %arg1[%c0, %c0_0, %c0_1] : memref<8x28x28xbf16, #tpu.memory_space<vmem>>, vector<8x28x28xbf16>
    %1 = vector.extract_strided_slice %0 {offsets = [0, 0, 0], sizes = [8, 24, 28], strides = [1, 1, 1]} : vector<8x28x28xbf16> to vector<8x24x28xbf16>
    %2 = vector.shape_cast %1 : vector<8x24x28xbf16> to vector<192x28xbf16>
    %c0_2 = arith.constant 0 : index
    %c0_3 = arith.constant 0 : index
    %c0_4 = arith.constant 0 : index
    %3 = vector.load %arg2[%c0_2, %c0_3, %c0_4] : memref<5x28x144xbf16, #tpu.memory_space<vmem>>, vector<1x28x144xbf16>
    %4 = vector.shape_cast %3 : vector<1x28x144xbf16> to vector<28x144xbf16>
    %cst = arith.constant dense<0.000000e+00> : vector<192x144xf32>
    %5 = tpu.matmul %2, %4, %cst {dimension_numbers = #tpu.dot_dimension_numbers<[1], [0], [0], [1], [0, 0, 1, 1], [], []>} : vector<192x28xbf16>, vector<28x144xbf16>, vector<192x144xf32> -> vector<192x144xf32>
    %6 = vector.extract_strided_slice %0 {offsets = [0, 1, 0], sizes = [8, 24, 28], strides = [1, 1, 1]} : vector<8x28x28xbf16> to vector<8x24x28xbf16>
    %7 = vector.shape_cast %6 : vector<8x24x28xbf16> to vector<192x28xbf16>
    %c1 = arith.constant 1 : index
    %c0_5 = arith.constant 0 : index
    %c0_6 = arith.constant 0 : index
    %8 = vector.load %arg2[%c1, %c0_5, %c0_6] : memref<5x28x144xbf16, #tpu.memory_space<vmem>>, vector<1x28x144xbf16>
    %9 = vector.shape_cast %8 : vector<1x28x144xbf16> to vector<28x144xbf16>
    %cst_7 = arith.constant dense<0.000000e+00> : vector<192x144xf32>
    %10 = tpu.matmul %7, %9, %cst_7 {dimension_numbers = #tpu.dot_dimension_numbers<[1], [0], [0], [1], [0, 0, 1, 1], [], []>} : vector<192x28xbf16>, vector<28x144xbf16>, vector<192x144xf32> -> vector<192x144xf32>
    %11 = arith.addf %5, %10 : vector<192x144xf32>
    %12 = vector.extract_strided_slice %0 {offsets = [0, 2, 0], sizes = [8, 24, 28], strides = [1, 1, 1]} : vector<8x28x28xbf16> to vector<8x24x28xbf16>
    %13 = vector.shape_cast %12 : vector<8x24x28xbf16> to vector<192x28xbf16>
    %c2 = arith.constant 2 : index
    %c0_8 = arith.constant 0 : index
    %c0_9 = arith.constant 0 : index
    %14 = vector.load %arg2[%c2, %c0_8, %c0_9] : memref<5x28x144xbf16, #tpu.memory_space<vmem>>, vector<1x28x144xbf16>
    %15 = vector.shape_cast %14 : vector<1x28x144xbf16> to vector<28x144xbf16>
    %cst_10 = arith.constant dense<0.000000e+00> : vector<192x144xf32>
    %16 = tpu.matmul %13, %15, %cst_10 {dimension_numbers = #tpu.dot_dimension_numbers<[1], [0], [0], [1], [0, 0, 1, 1], [], []>} : vector<192x28xbf16>, vector<28x144xbf16>, vector<192x144xf32> -> vector<192x144xf32>
    %17 = arith.addf %11, %16 : vector<192x144xf32>
    %18 = vector.extract_strided_slice %0 {offsets = [0, 3, 0], sizes = [8, 24, 28], strides = [1, 1, 1]} : vector<8x28x28xbf16> to vector<8x24x28xbf16>
    %19 = vector.shape_cast %18 : vector<8x24x28xbf16> to vector<192x28xbf16>
    %c3 = arith.constant 3 : index
    %c0_11 = arith.constant 0 : index
    %c0_12 = arith.constant 0 : index
    %20 = vector.load %arg2[%c3, %c0_11, %c0_12] : memref<5x28x144xbf16, #tpu.memory_space<vmem>>, vector<1x28x144xbf16>
    %21 = vector.shape_cast %20 : vector<1x28x144xbf16> to vector<28x144xbf16>
    %cst_13 = arith.constant dense<0.000000e+00> : vector<192x144xf32>
    %22 = tpu.matmul %19, %21, %cst_13 {dimension_numbers = #tpu.dot_dimension_numbers<[1], [0], [0], [1], [0, 0, 1, 1], [], []>} : vector<192x28xbf16>, vector<28x144xbf16>, vector<192x144xf32> -> vector<192x144xf32>
    %23 = arith.addf %17, %22 : vector<192x144xf32>
    %24 = vector.extract_strided_slice %0 {offsets = [0, 4, 0], sizes = [8, 24, 28], strides = [1, 1, 1]} : vector<8x28x28xbf16> to vector<8x24x28xbf16>
    %25 = vector.shape_cast %24 : vector<8x24x28xbf16> to vector<192x28xbf16>
    %c4 = arith.constant 4 : index
    %c0_14 = arith.constant 0 : index
    %c0_15 = arith.constant 0 : index
    %26 = vector.load %arg2[%c4, %c0_14, %c0_15] : memref<5x28x144xbf16, #tpu.memory_space<vmem>>, vector<1x28x144xbf16>
    %27 = vector.shape_cast %26 : vector<1x28x144xbf16> to vector<28x144xbf16>
    %cst_16 = arith.constant dense<0.000000e+00> : vector<192x144xf32>
    %28 = tpu.matmul %25, %27, %cst_16 {dimension_numbers = #tpu.dot_dimension_numbers<[1], [0], [0], [1], [0, 0, 1, 1], [], []>} : vector<192x28xbf16>, vector<28x144xbf16>, vector<192x144xf32> -> vector<192x144xf32>
    %29 = arith.addf %23, %28 : vector<192x144xf32>
    %c0_17 = arith.constant 0 : index
    %c0_18 = arith.constant 0 : index
    %30 = vector.load %arg3[%c0_17, %c0_18] : memref<1x144xf32, #tpu.memory_space<vmem>>, vector<1x144xf32>
    %31 = vector.broadcast %30 : vector<1x144xf32> to vector<192x144xf32>
    %32 = arith.addf %29, %31 : vector<192x144xf32>
    %33 = math.tanh %32 : vector<192x144xf32>
    %34 = vector.shape_cast %33 : vector<192x144xf32> to vector<96x2x144xf32>
    %35 = vector.extract_strided_slice %34 {offsets = [0, 0, 0], sizes = [96, 1, 144], strides = [1, 1, 1]} : vector<96x2x144xf32> to vector<96x1x144xf32>
    %36 = vector.shape_cast %35 : vector<96x1x144xf32> to vector<96x144xf32>
    %37 = vector.extract_strided_slice %34 {offsets = [0, 1, 0], sizes = [96, 1, 144], strides = [1, 1, 1]} : vector<96x2x144xf32> to vector<96x1x144xf32>
    %38 = vector.shape_cast %37 : vector<96x1x144xf32> to vector<96x144xf32>
    %39 = arith.addf %36, %38 : vector<96x144xf32>
    %40 = arith.truncf %39 : vector<96x144xf32> to vector<96x144xbf16>
    %41 = vector.shape_cast %40 : vector<96x144xbf16> to vector<8x12x144xbf16>
    %42 = vector.extract_strided_slice %41 {offsets = [0, 0, 0], sizes = [8, 8, 144], strides = [1, 1, 1]} : vector<8x12x144xbf16> to vector<8x8x144xbf16>
    %43 = vector.shape_cast %42 : vector<8x8x144xbf16> to vector<64x144xbf16>
    %c0_19 = arith.constant 0 : index
    %c0_20 = arith.constant 0 : index
    %c0_21 = arith.constant 0 : index
    %44 = vector.load %arg4[%c0_19, %c0_20, %c0_21] : memref<5x144x128xbf16, #tpu.memory_space<vmem>>, vector<1x144x128xbf16>
    %45 = vector.shape_cast %44 : vector<1x144x128xbf16> to vector<144x128xbf16>
    %cst_22 = arith.constant dense<0.000000e+00> : vector<64x128xf32>
    %46 = tpu.matmul %43, %45, %cst_22 {dimension_numbers = #tpu.dot_dimension_numbers<[1], [0], [0], [1], [0, 0, 1, 1], [], []>} : vector<64x144xbf16>, vector<144x128xbf16>, vector<64x128xf32> -> vector<64x128xf32>
    %47 = vector.extract_strided_slice %41 {offsets = [0, 1, 0], sizes = [8, 8, 144], strides = [1, 1, 1]} : vector<8x12x144xbf16> to vector<8x8x144xbf16>
    %48 = vector.shape_cast %47 : vector<8x8x144xbf16> to vector<64x144xbf16>
    %c1_23 = arith.constant 1 : index
    %c0_24 = arith.constant 0 : index
    %c0_25 = arith.constant 0 : index
    %49 = vector.load %arg4[%c1_23, %c0_24, %c0_25] : memref<5x144x128xbf16, #tpu.memory_space<vmem>>, vector<1x144x128xbf16>
    %50 = vector.shape_cast %49 : vector<1x144x128xbf16> to vector<144x128xbf16>
    %cst_26 = arith.constant dense<0.000000e+00> : vector<64x128xf32>
    %51 = tpu.matmul %48, %50, %cst_26 {dimension_numbers = #tpu.dot_dimension_numbers<[1], [0], [0], [1], [0, 0, 1, 1], [], []>} : vector<64x144xbf16>, vector<144x128xbf16>, vector<64x128xf32> -> vector<64x128xf32>
    %52 = arith.addf %46, %51 : vector<64x128xf32>
    %53 = vector.extract_strided_slice %41 {offsets = [0, 2, 0], sizes = [8, 8, 144], strides = [1, 1, 1]} : vector<8x12x144xbf16> to vector<8x8x144xbf16>
    %54 = vector.shape_cast %53 : vector<8x8x144xbf16> to vector<64x144xbf16>
    %c2_27 = arith.constant 2 : index
    %c0_28 = arith.constant 0 : index
    %c0_29 = arith.constant 0 : index
    %55 = vector.load %arg4[%c2_27, %c0_28, %c0_29] : memref<5x144x128xbf16, #tpu.memory_space<vmem>>, vector<1x144x128xbf16>
    %56 = vector.shape_cast %55 : vector<1x144x128xbf16> to vector<144x128xbf16>
    %cst_30 = arith.constant dense<0.000000e+00> : vector<64x128xf32>
    %57 = tpu.matmul %54, %56, %cst_30 {dimension_numbers = #tpu.dot_dimension_numbers<[1], [0], [0], [1], [0, 0, 1, 1], [], []>} : vector<64x144xbf16>, vector<144x128xbf16>, vector<64x128xf32> -> vector<64x128xf32>
    %58 = arith.addf %52, %57 : vector<64x128xf32>
    %59 = vector.extract_strided_slice %41 {offsets = [0, 3, 0], sizes = [8, 8, 144], strides = [1, 1, 1]} : vector<8x12x144xbf16> to vector<8x8x144xbf16>
    %60 = vector.shape_cast %59 : vector<8x8x144xbf16> to vector<64x144xbf16>
    %c3_31 = arith.constant 3 : index
    %c0_32 = arith.constant 0 : index
    %c0_33 = arith.constant 0 : index
    %61 = vector.load %arg4[%c3_31, %c0_32, %c0_33] : memref<5x144x128xbf16, #tpu.memory_space<vmem>>, vector<1x144x128xbf16>
    %62 = vector.shape_cast %61 : vector<1x144x128xbf16> to vector<144x128xbf16>
    %cst_34 = arith.constant dense<0.000000e+00> : vector<64x128xf32>
    %63 = tpu.matmul %60, %62, %cst_34 {dimension_numbers = #tpu.dot_dimension_numbers<[1], [0], [0], [1], [0, 0, 1, 1], [], []>} : vector<64x144xbf16>, vector<144x128xbf16>, vector<64x128xf32> -> vector<64x128xf32>
    %64 = arith.addf %58, %63 : vector<64x128xf32>
    %65 = vector.extract_strided_slice %41 {offsets = [0, 4, 0], sizes = [8, 8, 144], strides = [1, 1, 1]} : vector<8x12x144xbf16> to vector<8x8x144xbf16>
    %66 = vector.shape_cast %65 : vector<8x8x144xbf16> to vector<64x144xbf16>
    %c4_35 = arith.constant 4 : index
    %c0_36 = arith.constant 0 : index
    %c0_37 = arith.constant 0 : index
    %67 = vector.load %arg4[%c4_35, %c0_36, %c0_37] : memref<5x144x128xbf16, #tpu.memory_space<vmem>>, vector<1x144x128xbf16>
    %68 = vector.shape_cast %67 : vector<1x144x128xbf16> to vector<144x128xbf16>
    %cst_38 = arith.constant dense<0.000000e+00> : vector<64x128xf32>
    %69 = tpu.matmul %66, %68, %cst_38 {dimension_numbers = #tpu.dot_dimension_numbers<[1], [0], [0], [1], [0, 0, 1, 1], [], []>} : vector<64x144xbf16>, vector<144x128xbf16>, vector<64x128xf32> -> vector<64x128xf32>
    %70 = arith.addf %64, %69 : vector<64x128xf32>
    %c0_39 = arith.constant 0 : index
    %c0_40 = arith.constant 0 : index
    %71 = vector.load %arg5[%c0_39, %c0_40] : memref<1x128xf32, #tpu.memory_space<vmem>>, vector<1x128xf32>
    %72 = vector.broadcast %71 : vector<1x128xf32> to vector<64x128xf32>
    %73 = arith.addf %70, %72 : vector<64x128xf32>
    %74 = math.tanh %73 : vector<64x128xf32>
    %75 = vector.shape_cast %74 : vector<64x128xf32> to vector<32x2x128xf32>
    %76 = vector.extract_strided_slice %75 {offsets = [0, 0, 0], sizes = [32, 1, 128], strides = [1, 1, 1]} : vector<32x2x128xf32> to vector<32x1x128xf32>
    %77 = vector.shape_cast %76 : vector<32x1x128xf32> to vector<32x128xf32>
    %78 = vector.extract_strided_slice %75 {offsets = [0, 1, 0], sizes = [32, 1, 128], strides = [1, 1, 1]} : vector<32x2x128xf32> to vector<32x1x128xf32>
    %79 = vector.shape_cast %78 : vector<32x1x128xf32> to vector<32x128xf32>
    %80 = arith.addf %77, %79 : vector<32x128xf32>
    %81 = arith.truncf %80 : vector<32x128xf32> to vector<32x128xbf16>
    %82 = vector.shape_cast %81 : vector<32x128xbf16> to vector<8x4x128xbf16>
    %83 = vector.extract_strided_slice %82 {offsets = [0, 0, 0], sizes = [8, 1, 128], strides = [1, 1, 1]} : vector<8x4x128xbf16> to vector<8x1x128xbf16>
    %84 = vector.shape_cast %83 : vector<8x1x128xbf16> to vector<8x128xbf16>
    %c0_41 = arith.constant 0 : index
    %c0_42 = arith.constant 0 : index
    %c0_43 = arith.constant 0 : index
    %85 = vector.load %arg6[%c0_41, %c0_42, %c0_43] : memref<4x128x128xbf16, #tpu.memory_space<vmem>>, vector<1x128x128xbf16>
    %86 = vector.shape_cast %85 : vector<1x128x128xbf16> to vector<128x128xbf16>
    %cst_44 = arith.constant dense<0.000000e+00> : vector<8x128xf32>
    %87 = tpu.matmul %84, %86, %cst_44 {dimension_numbers = #tpu.dot_dimension_numbers<[1], [0], [0], [1], [0, 0, 1, 1], [], []>} : vector<8x128xbf16>, vector<128x128xbf16>, vector<8x128xf32> -> vector<8x128xf32>
    %88 = vector.extract_strided_slice %82 {offsets = [0, 1, 0], sizes = [8, 1, 128], strides = [1, 1, 1]} : vector<8x4x128xbf16> to vector<8x1x128xbf16>
    %89 = vector.shape_cast %88 : vector<8x1x128xbf16> to vector<8x128xbf16>
    %c1_45 = arith.constant 1 : index
    %c0_46 = arith.constant 0 : index
    %c0_47 = arith.constant 0 : index
    %90 = vector.load %arg6[%c1_45, %c0_46, %c0_47] : memref<4x128x128xbf16, #tpu.memory_space<vmem>>, vector<1x128x128xbf16>
    %91 = vector.shape_cast %90 : vector<1x128x128xbf16> to vector<128x128xbf16>
    %cst_48 = arith.constant dense<0.000000e+00> : vector<8x128xf32>
    %92 = tpu.matmul %89, %91, %cst_48 {dimension_numbers = #tpu.dot_dimension_numbers<[1], [0], [0], [1], [0, 0, 1, 1], [], []>} : vector<8x128xbf16>, vector<128x128xbf16>, vector<8x128xf32> -> vector<8x128xf32>
    %93 = arith.addf %87, %92 : vector<8x128xf32>
    %94 = vector.extract_strided_slice %82 {offsets = [0, 2, 0], sizes = [8, 1, 128], strides = [1, 1, 1]} : vector<8x4x128xbf16> to vector<8x1x128xbf16>
    %95 = vector.shape_cast %94 : vector<8x1x128xbf16> to vector<8x128xbf16>
    %c2_49 = arith.constant 2 : index
    %c0_50 = arith.constant 0 : index
    %c0_51 = arith.constant 0 : index
    %96 = vector.load %arg6[%c2_49, %c0_50, %c0_51] : memref<4x128x128xbf16, #tpu.memory_space<vmem>>, vector<1x128x128xbf16>
    %97 = vector.shape_cast %96 : vector<1x128x128xbf16> to vector<128x128xbf16>
    %cst_52 = arith.constant dense<0.000000e+00> : vector<8x128xf32>
    %98 = tpu.matmul %95, %97, %cst_52 {dimension_numbers = #tpu.dot_dimension_numbers<[1], [0], [0], [1], [0, 0, 1, 1], [], []>} : vector<8x128xbf16>, vector<128x128xbf16>, vector<8x128xf32> -> vector<8x128xf32>
    %99 = arith.addf %93, %98 : vector<8x128xf32>
    %100 = vector.extract_strided_slice %82 {offsets = [0, 3, 0], sizes = [8, 1, 128], strides = [1, 1, 1]} : vector<8x4x128xbf16> to vector<8x1x128xbf16>
    %101 = vector.shape_cast %100 : vector<8x1x128xbf16> to vector<8x128xbf16>
    %c3_53 = arith.constant 3 : index
    %c0_54 = arith.constant 0 : index
    %c0_55 = arith.constant 0 : index
    %102 = vector.load %arg6[%c3_53, %c0_54, %c0_55] : memref<4x128x128xbf16, #tpu.memory_space<vmem>>, vector<1x128x128xbf16>
    %103 = vector.shape_cast %102 : vector<1x128x128xbf16> to vector<128x128xbf16>
    %cst_56 = arith.constant dense<0.000000e+00> : vector<8x128xf32>
    %104 = tpu.matmul %101, %103, %cst_56 {dimension_numbers = #tpu.dot_dimension_numbers<[1], [0], [0], [1], [0, 0, 1, 1], [], []>} : vector<8x128xbf16>, vector<128x128xbf16>, vector<8x128xf32> -> vector<8x128xf32>
    %105 = arith.addf %99, %104 : vector<8x128xf32>
    %c0_57 = arith.constant 0 : index
    %c0_58 = arith.constant 0 : index
    %106 = vector.load %arg7[%c0_57, %c0_58] : memref<1x128xf32, #tpu.memory_space<vmem>>, vector<1x128xf32>
    %107 = vector.broadcast %106 : vector<1x128xf32> to vector<8x128xf32>
    %108 = arith.addf %105, %107 : vector<8x128xf32>
    %109 = math.tanh %108 : vector<8x128xf32>
    %110 = arith.truncf %109 : vector<8x128xf32> to vector<8x128xbf16>
    %c0_59 = arith.constant 0 : index
    %c0_60 = arith.constant 0 : index
    %111 = vector.load %arg8[%c0_59, %c0_60] : memref<128x128xbf16, #tpu.memory_space<vmem>>, vector<128x128xbf16>
    %cst_61 = arith.constant dense<0.000000e+00> : vector<8x128xf32>
    %112 = tpu.matmul %110, %111, %cst_61 {dimension_numbers = #tpu.dot_dimension_numbers<[1], [0], [0], [1], [0, 0, 1, 1], [], []>} : vector<8x128xbf16>, vector<128x128xbf16>, vector<8x128xf32> -> vector<8x128xf32>
    %c0_62 = arith.constant 0 : index
    %c0_63 = arith.constant 0 : index
    %113 = vector.load %arg9[%c0_62, %c0_63] : memref<1x128xf32, #tpu.memory_space<vmem>>, vector<1x128xf32>
    %114 = vector.broadcast %113 : vector<1x128xf32> to vector<8x128xf32>
    %115 = arith.addf %112, %114 : vector<8x128xf32>
    %116 = math.tanh %115 : vector<8x128xf32>
    %117 = arith.truncf %116 : vector<8x128xf32> to vector<8x128xbf16>
    %c0_64 = arith.constant 0 : index
    %c0_65 = arith.constant 0 : index
    %118 = vector.load %arg10[%c0_64, %c0_65] : memref<128x128xbf16, #tpu.memory_space<vmem>>, vector<128x128xbf16>
    %cst_66 = arith.constant dense<0.000000e+00> : vector<8x128xf32>
    %119 = tpu.matmul %117, %118, %cst_66 {dimension_numbers = #tpu.dot_dimension_numbers<[1], [0], [0], [1], [0, 0, 1, 1], [], []>} : vector<8x128xbf16>, vector<128x128xbf16>, vector<8x128xf32> -> vector<8x128xf32>
    %c0_67 = arith.constant 0 : index
    %c0_68 = arith.constant 0 : index
    %120 = vector.load %arg11[%c0_67, %c0_68] : memref<1x128xf32, #tpu.memory_space<vmem>>, vector<1x128xf32>
    %121 = vector.broadcast %120 : vector<1x128xf32> to vector<8x128xf32>
    %122 = arith.addf %119, %121 : vector<8x128xf32>
    %c0_69 = arith.constant 0 : index
    %c0_70 = arith.constant 0 : index
    %123 = vector.load %arg12[%c0_69, %c0_70] : memref<8x128xf32, #tpu.memory_space<vmem>>, vector<8x128xf32>
    tpu.vector_store %arg12[%c0_69, %c0_70], %122 {strides = array<i32>} : memref<8x128xf32, #tpu.memory_space<vmem>>, vector<8x128xf32>,
    return
  }
  func.func @transform_0(%arg0: i32) -> (i32, i32, i32) {
    %c0_i32 = arith.constant 0 : i32
    %c0_i32_0 = arith.constant 0 : i32
    %c0_i32_1 = arith.constant 0 : i32
    return %arg0, %c0_i32, %c0_i32_0 : i32, i32, i32
  }
  func.func @transform_1(%arg0: i32) -> (i32, i32, i32) {
    %c0_i32 = arith.constant 0 : i32
    %c0_i32_0 = arith.constant 0 : i32
    %c0_i32_1 = arith.constant 0 : i32
    %c0_i32_2 = arith.constant 0 : i32
    return %c0_i32, %c0_i32_0, %c0_i32_1 : i32, i32, i32
  }
  func.func @transform_2(%arg0: i32) -> (i32, i32) {
    %c0_i32 = arith.constant 0 : i32
    %c0_i32_0 = arith.constant 0 : i32
    %c0_i32_1 = arith.constant 0 : i32
    return %c0_i32, %c0_i32_0 : i32, i32
  }
  func.func @transform_3(%arg0: i32) -> (i32, i32, i32) {
    %c0_i32 = arith.constant 0 : i32
    %c0_i32_0 = arith.constant 0 : i32
    %c0_i32_1 = arith.constant 0 : i32
    %c0_i32_2 = arith.constant 0 : i32
    return %c0_i32, %c0_i32_0, %c0_i32_1 : i32, i32, i32
  }
  func.func @transform_4(%arg0: i32) -> (i32, i32) {
    %c0_i32 = arith.constant 0 : i32
    %c0_i32_0 = arith.constant 0 : i32
    %c0_i32_1 = arith.constant 0 : i32
    return %c0_i32, %c0_i32_0 : i32, i32
  }
  func.func @transform_5(%arg0: i32) -> (i32, i32, i32) {
    %c0_i32 = arith.constant 0 : i32
    %c0_i32_0 = arith.constant 0 : i32
    %c0_i32_1 = arith.constant 0 : i32
    %c0_i32_2 = arith.constant 0 : i32
    return %c0_i32, %c0_i32_0, %c0_i32_1 : i32, i32, i32
  }
  func.func @transform_6(%arg0: i32) -> (i32, i32) {
    %c0_i32 = arith.constant 0 : i32
    %c0_i32_0 = arith.constant 0 : i32
    %c0_i32_1 = arith.constant 0 : i32
    return %c0_i32, %c0_i32_0 : i32, i32
  }
  func.func @transform_7(%arg0: i32) -> (i32, i32) {
    %c0_i32 = arith.constant 0 : i32
    %c0_i32_0 = arith.constant 0 : i32
    %c0_i32_1 = arith.constant 0 : i32
    return %c0_i32, %c0_i32_0 : i32, i32
  }
  func.func @transform_8(%arg0: i32) -> (i32, i32) {
    %c0_i32 = arith.constant 0 : i32
    %c0_i32_0 = arith.constant 0 : i32
    %c0_i32_1 = arith.constant 0 : i32
    return %c0_i32, %c0_i32_0 : i32, i32
  }
  func.func @transform_9(%arg0: i32) -> (i32, i32) {
    %c0_i32 = arith.constant 0 : i32
    %c0_i32_0 = arith.constant 0 : i32
    %c0_i32_1 = arith.constant 0 : i32
    return %c0_i32, %c0_i32_0 : i32, i32
  }
  func.func @transform_10(%arg0: i32) -> (i32, i32) {
    %c0_i32 = arith.constant 0 : i32
    %c0_i32_0 = arith.constant 0 : i32
    %c0_i32_1 = arith.constant 0 : i32
    return %c0_i32, %c0_i32_0 : i32, i32
  }
  func.func @transform_11(%arg0: i32) -> (i32, i32) {
    %c0_i32 = arith.constant 0 : i32
    %c0_i32_0 = arith.constant 0 : i32
    return %arg0, %c0_i32 : i32, i32
  }
}

</mosaic_0001>

<llo_original>
// kernel: model_mnist_forward.1
$region0: #{model_mnist_forward.1}
  #allocation0 [shape = 'u32[]', space=smem, size = 0x4, offset = 0x4, fixed_abs, tag = 'smem constant byte address 0x4 - core index']
  #allocation1 [shape = 'u32[144,128]{1,0:T(1,128)}', space=vmem, size = 0x12000, scoped, tag = 'internal scratch']
  %s0 = inlined_call_operand.vmem [shape: bf16[8,28,28], index: 0, kind: input, shape index: {}]
  %s1 = inlined_call_operand.hbm [shape: bf16[5,28,144], index: 1, kind: input, shape index: {}]
  %s2 = inlined_call_operand.vmem [shape: f32[1,144], index: 2, kind: input, shape index: {}]
  %s3 = inlined_call_operand.vmem [shape: bf16[5,144,128], index: 3, kind: input, shape index: {}]
  %s4 = inlined_call_operand.hbm [shape: f32[1,128], index: 4, kind: input, shape index: {}]
  %s5 = inlined_call_operand.hbm [shape: bf16[4,128,128], index: 5, kind: input, shape index: {}]
  %s6 = inlined_call_operand.hbm [shape: f32[1,128], index: 6, kind: input, shape index: {}]
  %s7 = inlined_call_operand.hbm [shape: bf16[128,128], index: 7, kind: input, shape index: {}]
  %s8 = inlined_call_operand.hbm [shape: f32[1,128], index: 8, kind: input, shape index: {}]
  %s9 = inlined_call_operand.hbm [shape: bf16[128,128], index: 9, kind: input, shape index: {}]
  %s10 = inlined_call_operand.hbm [shape: f32[1,128], index: 10, kind: input, shape index: {}]
  %s11 = inlined_call_operand.hbm [shape: f32[8,128], index: 11, kind: output, shape index: {}]
  %s12 = sld [smem:[#allocation0]]
  $region86: #{model_mnist_forward.1} parent=0
    _
  %s14 = ssub.s32 1, %s12
  %s15 = scalar_select 0, %s14, %s12
  $region1: #{model_mnist_forward.1} parent=0
    #allocation2 [shape = 'u8[81920]{0}', space=vmem, size = 0x14000, scoped, tag = 'input window, operand 1, single buffered']
    #allocation3 [shape = 's32[1]{0}', space=sflag, size = 0x4, scoped, tag = 'scoped memory for model_mnist_forward.1']
    #allocation4 [shape = 's32[1]{0}', space=sflag, size = 0x4, scoped, tag = 'scoped memory for model_mnist_forward.1']
    #allocation5 [shape = 'u8[512]{0}', space=vmem, size = 0x400, scoped, tag = 'input window, operand 4, single buffered']
    #allocation6 [shape = 's32[1]{0}', space=sflag, size = 0x4, scoped, tag = 'scoped memory for model_mnist_forward.1']
    #allocation7 [shape = 'u8[131072]{0}', space=vmem, size = 0x20000, scoped, tag = 'input window, operand 5, single buffered']
    #allocation8 [shape = 'u8[512]{0}', space=vmem, size = 0x400, scoped, tag = 'input window, operand 6, single buffered']
    #allocation9 [shape = 's32[1]{0}', space=sflag, size = 0x4, scoped, tag = 'scoped memory for model_mnist_forward.1']
    #allocation10 [shape = 'u8[32768]{0}', space=vmem, size = 0x8000, scoped, tag = 'input window, operand 7, single buffered']
    #allocation11 [shape = 'u8[512]{0}', space=vmem, size = 0x400, scoped, tag = 'input window, operand 8, single buffered']
    #allocation12 [shape = 's32[1]{0}', space=sflag, size = 0x4, scoped, tag = 'scoped memory for model_mnist_forward.1']
    #allocation13 [shape = 'u8[32768]{0}', space=vmem, size = 0x8000, scoped, tag = 'input window, operand 9, single buffered']
    #allocation14 [shape = 'u8[512]{0}', space=vmem, size = 0x400, scoped, tag = 'input window, operand 10, single buffered']
    #allocation15 [shape = 's32[1]{0}', space=sflag, size = 0x4, scoped, tag = 'scoped memory for model_mnist_forward.1']
    #allocation16 [shape = 'u8[4096]{0}', space=vmem, size = 0x1000, scoped, tag = 'output window, operand 0, single buffered']
    %16 = vsyncpa [#allocation3], 0
    %17 = vsyncpa [#allocation6], 0
    %18 = vsyncpa [#allocation9], 0
    %19 = vsyncpa [#allocation12], 0
    %20 = vsyncpa [#allocation15], 0
    %21 = vsyncpa [#allocation4], 0
    // Predicated region
    $region2: #{model_mnist_forward.1} parent=1 // pred_check
      _
    $region3: #{model_mnist_forward.1} parent=1 // pred_check_branch
      %23 = sbr.rel (0) target = $region5
    $region4: #{model_mnist_forward.1} parent=1 // pred_region
      _
    $region5: #{model_mnist_forward.1} parent=1 // pred_fallthru
      _
    // Predicated region
    $region6: #{model_mnist_forward.1} parent=1 // pred_check
      _
    $region7: #{model_mnist_forward.1} parent=1 // pred_check_branch
      %25 = sbr.rel (0) target = $region9
    $region8: #{model_mnist_forward.1} parent=1 // pred_region
      %s27 = ssub.s32 2560, 2560
      %28 = vsyncadd [#allocation3], %s27
      %s29 = sshll.u32 [#allocation2], 4
      %s30 = int_to_ptr.vmem [resolvable:$true] %s29
      %35 = dma.hbm_to_vmem [thread:$0]  %s1, 2560, %s30, [#allocation3], 128, 128, 8
    $region9: #{model_mnist_forward.1} parent=1 // pred_fallthru
      _
    // Predicated region
    $region10: #{model_mnist_forward.1} parent=1 // pred_check
      _
    $region11: #{model_mnist_forward.1} parent=1 // pred_check_branch
      %37 = sbr.rel (0) target = $region13
    $region12: #{model_mnist_forward.1} parent=1 // pred_region
      _
    $region13: #{model_mnist_forward.1} parent=1 // pred_fallthru
      _
    // Predicated region
    $region14: #{model_mnist_forward.1} parent=1 // pred_check
      _
    $region15: #{model_mnist_forward.1} parent=1 // pred_check_branch
      %39 = sbr.rel (0) target = $region17
    $region16: #{model_mnist_forward.1} parent=1 // pred_region
      _
    $region17: #{model_mnist_forward.1} parent=1 // pred_fallthru
      _
    // Predicated region
    $region18: #{model_mnist_forward.1} parent=1 // pred_check
      _
    $region19: #{model_mnist_forward.1} parent=1 // pred_check_branch
      %41 = sbr.rel (0) target = $region21
    $region20: #{model_mnist_forward.1} parent=1 // pred_region
      %s43 = ssub.s32 16, 16
      %44 = vsyncadd [#allocation6], %s43
      %s46 = sshll.u32 [#allocation5], 4
      %s47 = int_to_ptr.vmem [resolvable:$true] %s46
      %49 = dma.hbm_to_vmem [thread:$0]  %s4, 16, %s47, [#allocation6]
    $region21: #{model_mnist_forward.1} parent=1 // pred_fallthru
      _
    // Predicated region
    $region22: #{model_mnist_forward.1} parent=1 // pred_check
      _
    $region23: #{model_mnist_forward.1} parent=1 // pred_check_branch
      %51 = sbr.rel (0) target = $region25
    $region24: #{model_mnist_forward.1} parent=1 // pred_region
      %s53 = ssub.s32 4096, 4096
      %54 = vsyncadd [#allocation6], %s53
      %s55 = sshll.u32 [#allocation7], 4
      %s56 = int_to_ptr.vmem [resolvable:$true] %s55
      %61 = dma.hbm_to_vmem [thread:$0]  %s5, 4096, %s56, [#allocation6], 64, 64, 4
    $region25: #{model_mnist_forward.1} parent=1 // pred_fallthru
      _
    // Predicated region
    $region26: #{model_mnist_forward.1} parent=1 // pred_check
      _
    $region27: #{model_mnist_forward.1} parent=1 // pred_check_branch
      %63 = sbr.rel (0) target = $region29
    $region28: #{model_mnist_forward.1} parent=1 // pred_region
      %s65 = ssub.s32 16, 16
      %66 = vsyncadd [#allocation9], %s65
      %s68 = sshll.u32 [#allocation8], 4
      %s69 = int_to_ptr.vmem [resolvable:$true] %s68
      %71 = dma.hbm_to_vmem [thread:$0]  %s6, 16, %s69, [#allocation9]
    $region29: #{model_mnist_forward.1} parent=1 // pred_fallthru
      _
    // Predicated region
    $region30: #{model_mnist_forward.1} parent=1 // pred_check
      _
    $region31: #{model_mnist_forward.1} parent=1 // pred_check_branch
      %73 = sbr.rel (0) target = $region33
    $region32: #{model_mnist_forward.1} parent=1 // pred_region
      %s75 = ssub.s32 1024, 1024
      %76 = vsyncadd [#allocation9], %s75
      %s77 = sshll.u32 [#allocation10], 4
      %s78 = int_to_ptr.vmem [resolvable:$true] %s77
      %83 = dma.hbm_to_vmem [thread:$0]  %s7, 1024, %s78, [#allocation9], 64, 64, 4
    $region33: #{model_mnist_forward.1} parent=1 // pred_fallthru
      _
    // Predicated region
    $region34: #{model_mnist_forward.1} parent=1 // pred_check
      _
    $region35: #{model_mnist_forward.1} parent=1 // pred_check_branch
      %85 = sbr.rel (0) target = $region37
    $region36: #{model_mnist_forward.1} parent=1 // pred_region
      %s87 = ssub.s32 16, 16
      %88 = vsyncadd [#allocation12], %s87
      %s90 = sshll.u32 [#allocation11], 4
      %s91 = int_to_ptr.vmem [resolvable:$true] %s90
      %93 = dma.hbm_to_vmem [thread:$0]  %s8, 16, %s91, [#allocation12]
    $region37: #{model_mnist_forward.1} parent=1 // pred_fallthru
      _
    // Predicated region
    $region38: #{model_mnist_forward.1} parent=1 // pred_check
      _
    $region39: #{model_mnist_forward.1} parent=1 // pred_check_branch
      %95 = sbr.rel (0) target = $region41
    $region40: #{model_mnist_forward.1} parent=1 // pred_region
      %s97 = ssub.s32 1024, 1024
      %98 = vsyncadd [#allocation12], %s97
      %s99 = sshll.u32 [#allocation13], 4
      %s100 = int_to_ptr.vmem [resolvable:$true] %s99
      %105 = dma.hbm_to_vmem [thread:$0]  %s9, 1024, %s100, [#allocation12], 64, 64, 4
    $region41: #{model_mnist_forward.1} parent=1 // pred_fallthru
      _
    // Predicated region
    $region42: #{model_mnist_forward.1} parent=1 // pred_check
      _
    $region43: #{model_mnist_forward.1} parent=1 // pred_check_branch
      %107 = sbr.rel (0) target = $region45
    $region44: #{model_mnist_forward.1} parent=1 // pred_region
      %s109 = ssub.s32 16, 16
      %110 = vsyncadd [#allocation15], %s109
      %s112 = sshll.u32 [#allocation14], 4
      %s113 = int_to_ptr.vmem [resolvable:$true] %s112
      %115 = dma.hbm_to_vmem [thread:$0]  %s10, 16, %s113, [#allocation15]
    $region45: #{model_mnist_forward.1} parent=1 // pred_fallthru
      _
    // Predicated region
    $region46: #{model_mnist_forward.1} parent=1 // pred_check
      _
    $region47: #{model_mnist_forward.1} parent=1 // pred_check_branch
      %117 = sbr.rel (0) target = $region49
    $region48: #{model_mnist_forward.1} parent=1 // pred_region
      %118 = dma.done [#allocation3], 2560
    $region49: #{model_mnist_forward.1} parent=1 // pred_fallthru
      _
    // Predicated region
    $region50: #{model_mnist_forward.1} parent=1 // pred_check
      _
    $region51: #{model_mnist_forward.1} parent=1 // pred_check_branch
      %120 = sbr.rel (0) target = $region53
    $region52: #{model_mnist_forward.1} parent=1 // pred_region
      %121 = dma.done [#allocation6], 16
    $region53: #{model_mnist_forward.1} parent=1 // pred_fallthru
      _
    // Predicated region
    $region54: #{model_mnist_forward.1} parent=1 // pred_check
      _
    $region55: #{model_mnist_forward.1} parent=1 // pred_check_branch
      %123 = sbr.rel (0) target = $region57
    $region56: #{model_mnist_forward.1} parent=1 // pred_region
      %124 = dma.done [#allocation6], 4096
    $region57: #{model_mnist_forward.1} parent=1 // pred_fallthru
      _
    // Predicated region
    $region58: #{model_mnist_forward.1} parent=1 // pred_check
      _
    $region59: #{model_mnist_forward.1} parent=1 // pred_check_branch
      %126 = sbr.rel (0) target = $region61
    $region60: #{model_mnist_forward.1} parent=1 // pred_region
      %127 = dma.done [#allocation9], 16
    $region61: #{model_mnist_forward.1} parent=1 // pred_fallthru
      _
    // Predicated region
    $region62: #{model_mnist_forward.1} parent=1 // pred_check
      _
    $region63: #{model_mnist_forward.1} parent=1 // pred_check_branch
      %129 = sbr.rel (0) target = $region65
    $region64: #{model_mnist_forward.1} parent=1 // pred_region
      %130 = dma.done [#allocation9], 1024
    $region65: #{model_mnist_forward.1} parent=1 // pred_fallthru
      _
    // Predicated region
    $region66: #{model_mnist_forward.1} parent=1 // pred_check
      _
    $region67: #{model_mnist_forward.1} parent=1 // pred_check_branch
      %132 = sbr.rel (0) target = $region69
    $region68: #{model_mnist_forward.1} parent=1 // pred_region
      %133 = dma.done [#allocation12], 16
    $region69: #{model_mnist_forward.1} parent=1 // pred_fallthru
      _
    // Predicated region
    $region70: #{model_mnist_forward.1} parent=1 // pred_check
      _
    $region71: #{model_mnist_forward.1} parent=1 // pred_check_branch
      %135 = sbr.rel (0) target = $region73
    $region72: #{model_mnist_forward.1} parent=1 // pred_region
      %136 = dma.done [#allocation12], 1024
    $region73: #{model_mnist_forward.1} parent=1 // pred_fallthru
      _
    // Predicated region
    $region74: #{model_mnist_forward.1} parent=1 // pred_check
      _
    $region75: #{model_mnist_forward.1} parent=1 // pred_check_branch
      %138 = sbr.rel (0) target = $region77
    $region76: #{model_mnist_forward.1} parent=1 // pred_region
      %139 = dma.done [#allocation15], 16
    $region77: #{model_mnist_forward.1} parent=1 // pred_fallthru
      _
    %v141 = vld [vmem:[%s0] sm:$0xf]
    %v142 = vld [vmem:[%s0 + $0x4] sm:$0xf]
    %v143 = vld [vmem:[%s0 + $0x8] sm:$0xf]
    %v144 = vld [vmem:[%s0 + $0xc] sm:$0x3]
    %v145 = vld [vmem:[%s0 + $0x10] sm:$0xf]
    %v146 = vld [vmem:[%s0 + $0x14] sm:$0xf]
    %v147 = vld [vmem:[%s0 + $0x18] sm:$0xf]
    %v148 = vld [vmem:[%s0 + $0x1c] sm:$0x3]
    %v149 = vld [vmem:[%s0 + $0x20] sm:$0xf]
    %v150 = vld [vmem:[%s0 + $0x24] sm:$0xf]
    %v151 = vld [vmem:[%s0 + $0x28] sm:$0xf]
    %v152 = vld [vmem:[%s0 + $0x2c] sm:$0x3]
    %v153 = vld [vmem:[%s0 + $0x30] sm:$0xf]
    %v154 = vld [vmem:[%s0 + $0x34] sm:$0xf]
    %v155 = vld [vmem:[%s0 + $0x38] sm:$0xf]
    %v156 = vld [vmem:[%s0 + $0x3c] sm:$0x3]
    %v157 = vld [vmem:[%s0 + $0x40] sm:$0xf]
    %v158 = vld [vmem:[%s0 + $0x44] sm:$0xf]
    %v159 = vld [vmem:[%s0 + $0x48] sm:$0xf]
    %v160 = vld [vmem:[%s0 + $0x4c] sm:$0x3]
    %v161 = vld [vmem:[%s0 + $0x50] sm:$0xf]
    %v162 = vld [vmem:[%s0 + $0x54] sm:$0xf]
    %v163 = vld [vmem:[%s0 + $0x58] sm:$0xf]
    %v164 = vld [vmem:[%s0 + $0x5c] sm:$0x3]
    %v165 = vld [vmem:[%s0 + $0x60] sm:$0xf]
    %v166 = vld [vmem:[%s0 + $0x64] sm:$0xf]
    %v167 = vld [vmem:[%s0 + $0x68] sm:$0xf]
    %v168 = vld [vmem:[%s0 + $0x6c] sm:$0x3]
    %v169 = vld [vmem:[%s0 + $0x70] sm:$0xf]
    %v170 = vld [vmem:[%s0 + $0x74] sm:$0xf]
    %v171 = vld [vmem:[%s0 + $0x78] sm:$0xf]
    %v172 = vld [vmem:[%s0 + $0x7c] sm:$0x3]
    %v173 = vld [vmem:[#allocation2] sm:$0xff]
    %v174 = vld [vmem:[#allocation2 + $0x8] sm:$0xff]
    %v175 = vld [vmem:[#allocation2 + $0x10] sm:$0xff]
    %v176 = vld [vmem:[#allocation2 + $0x18] sm:$0x33]
    %vm177 = vsmask.f32 3328
    %vm178 = vsmask.f32 7440
    %vm179 = vmor %vm177, %vm178
    %v181 = vshrl.u32 %v141, 16
    %v183 = vrot.slane %v181, 4
    %v184 = vshll.u32 %v141, 16
    %v186 = vrot.slane %v184, 5
    %v187 = vor.u32 %v183, %v186
    %v188 = vrot.slane %v187, 4
    %v190 = vshll.u32 %v142, 16
    %v192 = vrot.slane %v190, 5
    %v193 = vsel %vm179, %v188, %v192
    %v194 = vshrl.u32 %v142, 16
    %v196 = vrot.slane %v194, 4
    %v197 = vor.u32 %v196, %v192
    %v198 = vrot.slane %v197, 4
    %v200 = vshll.u32 %v143, 16
    %v202 = vrot.slane %v200, 5
    %v203 = vsel %vm179, %v198, %v202
    %v204 = vshrl.u32 %v143, 16
    %v206 = vrot.slane %v204, 4
    %v207 = vor.u32 %v206, %v202
    %v208 = vrot.slane %v207, 4
    %v210 = vshll.u32 %v144, 16
    %v212 = vrot.slane %v210, 5
    %v213 = vsel %vm179, %v208, %v212
    %v215 = vshrl.u32 %v145, 16
    %v217 = vrot.slane %v215, 4
    %v218 = vshll.u32 %v145, 16
    %v220 = vrot.slane %v218, 5
    %v221 = vor.u32 %v217, %v220
    %v222 = vrot.slane %v221, 4
    %v224 = vshll.u32 %v146, 16
    %v226 = vrot.slane %v224, 5
    %v227 = vsel %vm179, %v222, %v226
    %v228 = vshrl.u32 %v146, 16
    %v230 = vrot.slane %v228, 4
    %v231 = vor.u32 %v230, %v226
    %v232 = vrot.slane %v231, 4
    %v234 = vshll.u32 %v147, 16
    %v236 = vrot.slane %v234, 5
    %v237 = vsel %vm179, %v232, %v236
    %v238 = vshrl.u32 %v147, 16
    %v240 = vrot.slane %v238, 4
    %v241 = vor.u32 %v240, %v236
    %v242 = vrot.slane %v241, 4
    %v244 = vshll.u32 %v148, 16
    %v246 = vrot.slane %v244, 5
    %v247 = vsel %vm179, %v242, %v246
    %v249 = vshrl.u32 %v149, 16
    %v251 = vrot.slane %v249, 4
    %v252 = vshll.u32 %v149, 16
    %v254 = vrot.slane %v252, 5
    %v255 = vor.u32 %v251, %v254
    %v256 = vrot.slane %v255, 4
    %v258 = vshll.u32 %v150, 16
    %v260 = vrot.slane %v258, 5
    %v261 = vsel %vm179, %v256, %v260
    %v262 = vshrl.u32 %v150, 16
    %v264 = vrot.slane %v262, 4
    %v265 = vor.u32 %v264, %v260
    %v266 = vrot.slane %v265, 4
    %v268 = vshll.u32 %v151, 16
    %v270 = vrot.slane %v268, 5
    %v271 = vsel %vm179, %v266, %v270
    %v272 = vshrl.u32 %v151, 16
    %v274 = vrot.slane %v272, 4
    %v275 = vor.u32 %v274, %v270
    %v276 = vrot.slane %v275, 4
    %v278 = vshll.u32 %v152, 16
    %v280 = vrot.slane %v278, 5
    %v281 = vsel %vm179, %v276, %v280
    %v283 = vshrl.u32 %v153, 16
    %v285 = vrot.slane %v283, 4
    %v286 = vshll.u32 %v153, 16
    %v288 = vrot.slane %v286, 5
    %v289 = vor.u32 %v285, %v288
    %v290 = vrot.slane %v289, 4
    %v292 = vshll.u32 %v154, 16
    %v294 = vrot.slane %v292, 5
    %v295 = vsel %vm179, %v290, %v294
    %v296 = vshrl.u32 %v154, 16
    %v298 = vrot.slane %v296, 4
    %v299 = vor.u32 %v298, %v294
    %v300 = vrot.slane %v299, 4
    %v302 = vshll.u32 %v155, 16
    %v304 = vrot.slane %v302, 5
    %v305 = vsel %vm179, %v300, %v304
    %v306 = vshrl.u32 %v155, 16
    %v308 = vrot.slane %v306, 4
    %v309 = vor.u32 %v308, %v304
    %v310 = vrot.slane %v309, 4
    %v312 = vshll.u32 %v156, 16
    %v314 = vrot.slane %v312, 5
    %v315 = vsel %vm179, %v310, %v314
    %v317 = vshrl.u32 %v157, 16
    %v319 = vrot.slane %v317, 4
    %v320 = vshll.u32 %v157, 16
    %v322 = vrot.slane %v320, 5
    %v323 = vor.u32 %v319, %v322
    %v324 = vrot.slane %v323, 4
    %v326 = vshll.u32 %v158, 16
    %v328 = vrot.slane %v326, 5
    %v329 = vsel %vm179, %v324, %v328
    %v330 = vshrl.u32 %v158, 16
    %v332 = vrot.slane %v330, 4
    %v333 = vor.u32 %v332, %v328
    %v334 = vrot.slane %v333, 4
    %v336 = vshll.u32 %v159, 16
    %v338 = vrot.slane %v336, 5
    %v339 = vsel %vm179, %v334, %v338
    %v340 = vshrl.u32 %v159, 16
    %v342 = vrot.slane %v340, 4
    %v343 = vor.u32 %v342, %v338
    %v344 = vrot.slane %v343, 4
    %v346 = vshll.u32 %v160, 16
    %v348 = vrot.slane %v346, 5
    %v349 = vsel %vm179, %v344, %v348
    %v351 = vshrl.u32 %v161, 16
    %v353 = vrot.slane %v351, 4
    %v354 = vshll.u32 %v161, 16
    %v356 = vrot.slane %v354, 5
    %v357 = vor.u32 %v353, %v356
    %v358 = vrot.slane %v357, 4
    %v360 = vshll.u32 %v162, 16
    %v362 = vrot.slane %v360, 5
    %v363 = vsel %vm179, %v358, %v362
    %v364 = vshrl.u32 %v162, 16
    %v366 = vrot.slane %v364, 4
    %v367 = vor.u32 %v366, %v362
    %v368 = vrot.slane %v367, 4
    %v370 = vshll.u32 %v163, 16
    %v372 = vrot.slane %v370, 5
    %v373 = vsel %vm179, %v368, %v372
    %v374 = vshrl.u32 %v163, 16
    %v376 = vrot.slane %v374, 4
    %v377 = vor.u32 %v376, %v372
    %v378 = vrot.slane %v377, 4
    %v380 = vshll.u32 %v164, 16
    %v382 = vrot.slane %v380, 5
    %v383 = vsel %vm179, %v378, %v382
    %v385 = vshrl.u32 %v165, 16
    %v387 = vrot.slane %v385, 4
    %v388 = vshll.u32 %v165, 16
    %v390 = vrot.slane %v388, 5
    %v391 = vor.u32 %v387, %v390
    %v392 = vrot.slane %v391, 4
    %v394 = vshll.u32 %v166, 16
    %v396 = vrot.slane %v394, 5
    %v397 = vsel %vm179, %v392, %v396
    %v398 = vshrl.u32 %v166, 16
    %v400 = vrot.slane %v398, 4
    %v401 = vor.u32 %v400, %v396
    %v402 = vrot.slane %v401, 4
    %v404 = vshll.u32 %v167, 16
    %v406 = vrot.slane %v404, 5
    %v407 = vsel %vm179, %v402, %v406
    %v408 = vshrl.u32 %v167, 16
    %v410 = vrot.slane %v408, 4
    %v411 = vor.u32 %v410, %v406
    %v412 = vrot.slane %v411, 4
    %v414 = vshll.u32 %v168, 16
    %v416 = vrot.slane %v414, 5
    %v417 = vsel %vm179, %v412, %v416
    %v419 = vshrl.u32 %v169, 16
    %v421 = vrot.slane %v419, 4
    %v422 = vshll.u32 %v169, 16
    %v424 = vrot.slane %v422, 5
    %v425 = vor.u32 %v421, %v424
    %v426 = vrot.slane %v425, 4
    %v428 = vshll.u32 %v170, 16
    %v430 = vrot.slane %v428, 5
    %v431 = vsel %vm179, %v426, %v430
    %v432 = vshrl.u32 %v170, 16
    %v434 = vrot.slane %v432, 4
    %v435 = vor.u32 %v434, %v430
    %v436 = vrot.slane %v435, 4
    %v438 = vshll.u32 %v171, 16
    %v440 = vrot.slane %v438, 5
    %v441 = vsel %vm179, %v436, %v440
    %v442 = vshrl.u32 %v171, 16
    %v444 = vrot.slane %v442, 4
    %v445 = vor.u32 %v444, %v440
    %v446 = vrot.slane %v445, 4
    %v448 = vshll.u32 %v172, 16
    %v450 = vrot.slane %v448, 5
    %v451 = vsel %vm179, %v446, %v450
    %s452 = scalar_lea.vmem [#allocation2], 32
    %v453 = vld [vmem:[%s452] sm:$0xff]
    %v454 = vld [vmem:[%s452 + $0x8] sm:$0xff]
    %v455 = vld [vmem:[%s452 + $0x10] sm:$0xff]
    %v456 = vld [vmem:[%s452 + $0x18] sm:$0x33]
    %v457 = vunpack.c.l.b16 %v193
    %v458 = vunpack.c.l.b16 %v203
    %v459 = vunpack.c.l.b16 %v213
    %v460 = vunpack.c.l.b16 %v227
    %v461 = vunpack.c.l.b16 %v237
    %v462 = vunpack.c.l.b16 %v247
    %v463 = vunpack.c.l.b16 %v261
    %v464 = vunpack.c.l.b16 %v271
    %v465 = vunpack.c.l.b16 %v281
    %v466 = vunpack.c.l.b16 %v295
    %v467 = vunpack.c.l.b16 %v305
    %v468 = vunpack.c.l.b16 %v315
    %v469 = vunpack.c.l.b16 %v329
    %v470 = vunpack.c.l.b16 %v339
    %v471 = vunpack.c.l.b16 %v349
    %v472 = vunpack.c.l.b16 %v363
    %v473 = vunpack.c.l.b16 %v373
    %v474 = vunpack.c.l.b16 %v383
    %v475 = vunpack.c.l.b16 %v397
    %v476 = vunpack.c.l.b16 %v407
    %v477 = vunpack.c.l.b16 %v417
    %v478 = vunpack.c.l.b16 %v431
    %v479 = vunpack.c.l.b16 %v441
    %v480 = vunpack.c.l.b16 %v451
    %v481 = vpack.c.b16 %v458, %v457
    %v482 = vpack.c.b16 %v460, %v459
    %v483 = vpack.c.b16 %v462, %v461
    %v484 = vpack.c.b16 %v464, %v463
    %v485 = vpack.c.b16 %v466, %v465
    %v486 = vpack.c.b16 %v468, %v467
    %v487 = vpack.c.b16 %v470, %v469
    %v488 = vpack.c.b16 %v472, %v471
    %v489 = vpack.c.b16 %v474, %v473
    %v490 = vpack.c.b16 %v476, %v475
    %v491 = vpack.c.b16 %v478, %v477
    %v492 = vpack.c.b16 %v480, %v479
    %v497 = vunpack.c.l.b16 %v453
    %v498 = vunpack.c.h.b16 %v453
    %v499 = vunpack.c.l.b16 %v454
    %v500 = vunpack.c.h.b16 %v454
    %v501 = vunpack.c.l.b16 %v455
    %v502 = vunpack.c.h.b16 %v455
    %v503 = vunpack.c.l.b16 %v456
    %v504 = vunpack.c.h.b16 %v456
    %v505 = vpack.c.b16 %v499, %v497
    %v506 = vpack.c.b16 %v500, %v498
    %v507 = vpack.c.b16 %v503, %v501
    %v508 = vpack.c.b16 %v504, %v502
    %vm511 = vcmask 228352
    %v513 = vsel %vm511, %v481, 0
    %v516 = vsel %vm511, %v482, 0
    %v519 = vsel %vm511, %v483, 0
    %v522 = vsel %vm511, %v484, 0
    %v525 = vsel %vm511, %v485, 0
    %v528 = vsel %vm511, %v486, 0
    %v531 = vsel %vm511, %v487, 0
    %v534 = vsel %vm511, %v488, 0
    %v537 = vsel %vm511, %v489, 0
    %v540 = vsel %vm511, %v490, 0
    %v543 = vsel %vm511, %v491, 0
    %v546 = vsel %vm511, %v492, 0
    %vm548 = vcmask 1045504
    %v550 = vsel %vm548, %v507, 0
    %v553 = vsel %vm548, %v508, 0
    %555 = vmatprep.subr.bf16.mxu0 0
    %556 = vmatpush1.bf16.msra.mxu0 0
    %557 = vmatprep.subr.bf16.mxu0 0
    %558 = vmatpush1.bf16.msra.mxu0 0
    %559 = vmatprep.subr.bf16.mxu0 0
    %560 = vmatpush1.bf16.msra.mxu0 0
    %561 = vmatprep.subr.bf16.mxu0 0
    %562 = vmatpush1.bf16.msra.mxu0 0
    %563 = vmatprep.subr.bf16.mxu0 0
    %564 = vmatpush1.bf16.msra.mxu0 0
    %565 = vmatprep.subr.bf16.mxu0 0
    %566 = vmatpush1.bf16.msra.mxu0 0
    %567 = vmatprep.subr.bf16.mxu0 %v553
    %568 = vmatpush1.bf16.msra.mxu0 %v550
    %569 = vmatprep.subr.bf16.mxu0 %v506
    %570 = vmatpush1.bf16.msra.mxu0 %v505
    %571 = vmatprep.subr.bf16.mxu0 0
    %572 = vmatpush2.bf16.msra.mxu0 0
    %573 = vmatprep.subr.bf16.mxu0 0
    %574 = vmatpush2.bf16.msra.mxu0 0
    %575 = vmatprep.subr.bf16.mxu0 0
    %576 = vmatpush2.bf16.msra.mxu0 0
    %577 = vmatprep.subr.bf16.mxu0 0
    %578 = vmatpush2.bf16.msra.mxu0 0
    %579 = vmatprep.subr.bf16.mxu0 0
    %580 = vmatpush2.bf16.msra.mxu0 0
    %581 = vmatprep.subr.bf16.mxu0 0
    %582 = vmatpush2.bf16.msra.mxu0 0
    %583 = vmatprep.subr.bf16.mxu0 0
    %584 = vmatpush2.bf16.msra.mxu0 0
    %585 = vmatprep.subr.bf16.mxu0 0
    %586 = vmatpush2.bf16.msra.mxu0 0
    %587 = vmatprep.mubr.bf16.mxu0 0
    %588 = vmatmul.mubr.bf16.gmra.mxu0 %v513
    %v589 = vpop.f32.mrf.mxu0
    %v590 = vadd.f32 0.0, %v589
    %v591 = vpop.f32.mrf.mxu0
    %v592 = vadd.f32 0.0, %v591
    %v593 = vpop.f32.mrf.mxu0
    %v594 = vadd.f32 0.0, %v593
    %v595 = vpop.f32.mrf.mxu0
    %v596 = vadd.f32 0.0, %v595
    %597 = vmatprep.mubr.bf16.mxu0 0
    %598 = vmatmul.mubr.bf16.gmra.mxu0 %v516
    %v599 = vpop.f32.mrf.mxu0
    %v600 = vadd.f32 0.0, %v599
    %v601 = vpop.f32.mrf.mxu0
    %v602 = vadd.f32 0.0, %v601
    %v603 = vpop.f32.mrf.mxu0
    %v604 = vadd.f32 0.0, %v603
    %v605 = vpop.f32.mrf.mxu0
    %v606 = vadd.f32 0.0, %v605
    %607 = vmatprep.mubr.bf16.mxu0 0
    %608 = vmatmul.mubr.bf16.gmra.mxu0 %v519
    %v609 = vpop.f32.mrf.mxu0
    %v610 = vadd.f32 0.0, %v609
    %v611 = vpop.f32.mrf.mxu0
    %v612 = vadd.f32 0.0, %v611
    %v613 = vpop.f32.mrf.mxu0
    %v614 = vadd.f32 0.0, %v613
    %v615 = vpop.f32.mrf.mxu0
    %v616 = vadd.f32 0.0, %v615
    %617 = vmatprep.mubr.bf16.mxu0 0
    %618 = vmatmul.mubr.bf16.gmra.mxu0 %v522
    %v619 = vpop.f32.mrf.mxu0
    %v620 = vadd.f32 0.0, %v619
    %v621 = vpop.f32.mrf.mxu0
    %v622 = vadd.f32 0.0, %v621
    %v623 = vpop.f32.mrf.mxu0
    %v624 = vadd.f32 0.0, %v623
    %v625 = vpop.f32.mrf.mxu0
    %v626 = vadd.f32 0.0, %v625
    %627 = vmatprep.mubr.bf16.mxu0 0
    %628 = vmatmul.mubr.bf16.gmra.mxu0 %v525
    %v629 = vpop.f32.mrf.mxu0
    %v630 = vadd.f32 0.0, %v629
    %v631 = vpop.f32.mrf.mxu0
    %v632 = vadd.f32 0.0, %v631
    %v633 = vpop.f32.mrf.mxu0
    %v634 = vadd.f32 0.0, %v633
    %v635 = vpop.f32.mrf.mxu0
    %v636 = vadd.f32 0.0, %v635
    %637 = vmatprep.mubr.bf16.mxu0 0
    %638 = vmatmul.mubr.bf16.gmra.mxu0 %v528
    %v639 = vpop.f32.mrf.mxu0
    %v640 = vadd.f32 0.0, %v639
    %v641 = vpop.f32.mrf.mxu0
    %v642 = vadd.f32 0.0, %v641
    %v643 = vpop.f32.mrf.mxu0
    %v644 = vadd.f32 0.0, %v643
    %v645 = vpop.f32.mrf.mxu0
    %v646 = vadd.f32 0.0, %v645
    %647 = vmatprep.mubr.bf16.mxu0 0
    %648 = vmatmul.mubr.bf16.gmra.mxu0 %v531
    %v649 = vpop.f32.mrf.mxu0
    %v650 = vadd.f32 0.0, %v649
    %v651 = vpop.f32.mrf.mxu0
    %v652 = vadd.f32 0.0, %v651
    %v653 = vpop.f32.mrf.mxu0
    %v654 = vadd.f32 0.0, %v653
    %v655 = vpop.f32.mrf.mxu0
    %v656 = vadd.f32 0.0, %v655
    %657 = vmatprep.mubr.bf16.mxu0 0
    %658 = vmatmul.mubr.bf16.gmra.mxu0 %v534
    %v659 = vpop.f32.mrf.mxu0
    %v660 = vadd.f32 0.0, %v659
    %v661 = vpop.f32.mrf.mxu0
    %v662 = vadd.f32 0.0, %v661
    %v663 = vpop.f32.mrf.mxu0
    %v664 = vadd.f32 0.0, %v663
    %v665 = vpop.f32.mrf.mxu0
    %v666 = vadd.f32 0.0, %v665
    %667 = vmatprep.mubr.bf16.mxu0 0
    %668 = vmatmul.mubr.bf16.gmra.mxu0 %v537
    %v669 = vpop.f32.mrf.mxu0
    %v670 = vadd.f32 0.0, %v669
    %v671 = vpop.f32.mrf.mxu0
    %v672 = vadd.f32 0.0, %v671
    %v673 = vpop.f32.mrf.mxu0
    %v674 = vadd.f32 0.0, %v673
    %v675 = vpop.f32.mrf.mxu0
    %v676 = vadd.f32 0.0, %v675
    %677 = vmatprep.mubr.bf16.mxu0 0
    %678 = vmatmul.mubr.bf16.gmra.mxu0 %v540
    %v679 = vpop.f32.mrf.mxu0
    %v680 = vadd.f32 0.0, %v679
    %v681 = vpop.f32.mrf.mxu0
    %v682 = vadd.f32 0.0, %v681
    %v683 = vpop.f32.mrf.mxu0
    %v684 = vadd.f32 0.0, %v683
    %v685 = vpop.f32.mrf.mxu0
    %v686 = vadd.f32 0.0, %v685
    %687 = vmatprep.mubr.bf16.mxu0 0
    %688 = vmatmul.mubr.bf16.gmra.mxu0 %v543
    %v689 = vpop.f32.mrf.mxu0
    %v690 = vadd.f32 0.0, %v689
    %v691 = vpop.f32.mrf.mxu0
    %v692 = vadd.f32 0.0, %v691
    %v693 = vpop.f32.mrf.mxu0
    %v694 = vadd.f32 0.0, %v693
    %v695 = vpop.f32.mrf.mxu0
    %v696 = vadd.f32 0.0, %v695
    %697 = vmatprep.mubr.bf16.mxu0 0
    %698 = vmatmul.mubr.bf16.gmra.mxu0 %v546
    %v699 = vpop.f32.mrf.mxu0
    %v700 = vadd.f32 0.0, %v699
    %v701 = vpop.f32.mrf.mxu0
    %v702 = vadd.f32 0.0, %v701
    %v703 = vpop.f32.mrf.mxu0
    %v704 = vadd.f32 0.0, %v703
    %v705 = vpop.f32.mrf.mxu0
    %v706 = vadd.f32 0.0, %v705
    %707 = vdwg.mxu0
    %v732 = vunpack.c.l.b16 %v141
    %v733 = vunpack.c.l.b16 %v142
    %v734 = vunpack.c.l.b16 %v143
    %v735 = vunpack.c.l.b16 %v145
    %v736 = vunpack.c.l.b16 %v146
    %v737 = vunpack.c.l.b16 %v147
    %v738 = vunpack.c.l.b16 %v149
    %v739 = vunpack.c.l.b16 %v150
    %v740 = vunpack.c.l.b16 %v151
    %v741 = vunpack.c.l.b16 %v153
    %v742 = vunpack.c.l.b16 %v154
    %v743 = vunpack.c.l.b16 %v155
    %v744 = vunpack.c.l.b16 %v157
    %v745 = vunpack.c.l.b16 %v158
    %v746 = vunpack.c.l.b16 %v159
    %v747 = vunpack.c.l.b16 %v161
    %v748 = vunpack.c.l.b16 %v162
    %v749 = vunpack.c.l.b16 %v163
    %v750 = vunpack.c.l.b16 %v165
    %v751 = vunpack.c.l.b16 %v166
    %v752 = vunpack.c.l.b16 %v167
    %v753 = vunpack.c.l.b16 %v169
    %v754 = vunpack.c.l.b16 %v170
    %v755 = vunpack.c.l.b16 %v171
    %v756 = vpack.c.b16 %v733, %v732
    %v757 = vpack.c.b16 %v735, %v734
    %v758 = vpack.c.b16 %v737, %v736
    %v759 = vpack.c.b16 %v739, %v738
    %v760 = vpack.c.b16 %v741, %v740
    %v761 = vpack.c.b16 %v743, %v742
    %v762 = vpack.c.b16 %v745, %v744
    %v763 = vpack.c.b16 %v747, %v746
    %v764 = vpack.c.b16 %v749, %v748
    %v765 = vpack.c.b16 %v751, %v750
    %v766 = vpack.c.b16 %v753, %v752
    %v767 = vpack.c.b16 %v755, %v754
    %v772 = vunpack.c.l.b16 %v173
    %v773 = vunpack.c.h.b16 %v173
    %v774 = vunpack.c.l.b16 %v174
    %v775 = vunpack.c.h.b16 %v174
    %v776 = vunpack.c.l.b16 %v175
    %v777 = vunpack.c.h.b16 %v175
    %v778 = vunpack.c.l.b16 %v176
    %v779 = vunpack.c.h.b16 %v176
    %v780 = vpack.c.b16 %v774, %v772
    %v781 = vpack.c.b16 %v775, %v773
    %v782 = vpack.c.b16 %v778, %v776
    %v783 = vpack.c.b16 %v779, %v777
    %v787 = vsel %vm511, %v756, 0
    %v790 = vsel %vm511, %v757, 0
    %v793 = vsel %vm511, %v758, 0
    %v796 = vsel %vm511, %v759, 0
    %v799 = vsel %vm511, %v760, 0
    %v802 = vsel %vm511, %v761, 0
    %v805 = vsel %vm511, %v762, 0
    %v808 = vsel %vm511, %v763, 0
    %v811 = vsel %vm511, %v764, 0
    %v814 = vsel %vm511, %v765, 0
    %v817 = vsel %vm511, %v766, 0
    %v820 = vsel %vm511, %v767, 0
    %v823 = vsel %vm548, %v782, 0
    %v826 = vsel %vm548, %v783, 0
    %828 = vmatprep.subr.bf16.mxu0 0
    %829 = vmatpush1.bf16.msra.mxu0 0
    %830 = vmatprep.subr.bf16.mxu0 0
    %831 = vmatpush1.bf16.msra.mxu0 0
    %832 = vmatprep.subr.bf16.mxu0 0
    %833 = vmatpush1.bf16.msra.mxu0 0
    %834 = vmatprep.subr.bf16.mxu0 0
    %835 = vmatpush1.bf16.msra.mxu0 0
    %836 = vmatprep.subr.bf16.mxu0 0
    %837 = vmatpush1.bf16.msra.mxu0 0
    %838 = vmatprep.subr.bf16.mxu0 0
    %839 = vmatpush1.bf16.msra.mxu0 0
    %840 = vmatprep.subr.bf16.mxu0 %v826
    %841 = vmatpush1.bf16.msra.mxu0 %v823
    %842 = vmatprep.subr.bf16.mxu0 %v781
    %843 = vmatpush1.bf16.msra.mxu0 %v780
    %844 = vmatprep.subr.bf16.mxu0 0
    %845 = vmatpush2.bf16.msra.mxu0 0
    %846 = vmatprep.subr.bf16.mxu0 0
    %847 = vmatpush2.bf16.msra.mxu0 0
    %848 = vmatprep.subr.bf16.mxu0 0
    %849 = vmatpush2.bf16.msra.mxu0 0
    %850 = vmatprep.subr.bf16.mxu0 0
    %851 = vmatpush2.bf16.msra.mxu0 0
    %852 = vmatprep.subr.bf16.mxu0 0
    %853 = vmatpush2.bf16.msra.mxu0 0
    %854 = vmatprep.subr.bf16.mxu0 0
    %855 = vmatpush2.bf16.msra.mxu0 0
    %856 = vmatprep.subr.bf16.mxu0 0
    %857 = vmatpush2.bf16.msra.mxu0 0
    %858 = vmatprep.subr.bf16.mxu0 0
    %859 = vmatpush2.bf16.msra.mxu0 0
    %860 = vmatprep.mubr.bf16.mxu0 0
    %861 = vmatmul.mubr.bf16.gmra.mxu0 %v787
    %v862 = vpop.f32.mrf.mxu0
    %v863 = vadd.f32 %v590, %v862
    %v864 = vpop.f32.mrf.mxu0
    %v865 = vadd.f32 %v592, %v864
    %v866 = vpop.f32.mrf.mxu0
    %v867 = vadd.f32 %v594, %v866
    %v868 = vpop.f32.mrf.mxu0
    %v869 = vadd.f32 %v596, %v868
    %870 = vmatprep.mubr.bf16.mxu0 0
    %871 = vmatmul.mubr.bf16.gmra.mxu0 %v790
    %v872 = vpop.f32.mrf.mxu0
    %v873 = vadd.f32 %v600, %v872
    %v874 = vpop.f32.mrf.mxu0
    %v875 = vadd.f32 %v602, %v874
    %v876 = vpop.f32.mrf.mxu0
    %v877 = vadd.f32 %v604, %v876
    %v878 = vpop.f32.mrf.mxu0
    %v879 = vadd.f32 %v606, %v878
    %880 = vmatprep.mubr.bf16.mxu0 0
    %881 = vmatmul.mubr.bf16.gmra.mxu0 %v793
    %v882 = vpop.f32.mrf.mxu0
    %v883 = vadd.f32 %v610, %v882
    %v884 = vpop.f32.mrf.mxu0
    %v885 = vadd.f32 %v612, %v884
    %v886 = vpop.f32.mrf.mxu0
    %v887 = vadd.f32 %v614, %v886
    %v888 = vpop.f32.mrf.mxu0
    %v889 = vadd.f32 %v616, %v888
    %890 = vmatprep.mubr.bf16.mxu0 0
    %891 = vmatmul.mubr.bf16.gmra.mxu0 %v796
    %v892 = vpop.f32.mrf.mxu0
    %v893 = vadd.f32 %v620, %v892
    %v894 = vpop.f32.mrf.mxu0
    %v895 = vadd.f32 %v622, %v894
    %v896 = vpop.f32.mrf.mxu0
    %v897 = vadd.f32 %v624, %v896
    %v898 = vpop.f32.mrf.mxu0
    %v899 = vadd.f32 %v626, %v898
    %900 = vmatprep.mubr.bf16.mxu0 0
    %901 = vmatmul.mubr.bf16.gmra.mxu0 %v799
    %v902 = vpop.f32.mrf.mxu0
    %v903 = vadd.f32 %v630, %v902
    %v904 = vpop.f32.mrf.mxu0
    %v905 = vadd.f32 %v632, %v904
    %v906 = vpop.f32.mrf.mxu0
    %v907 = vadd.f32 %v634, %v906
    %v908 = vpop.f32.mrf.mxu0
    %v909 = vadd.f32 %v636, %v908
    %910 = vmatprep.mubr.bf16.mxu0 0
    %911 = vmatmul.mubr.bf16.gmra.mxu0 %v802
    %v912 = vpop.f32.mrf.mxu0
    %v913 = vadd.f32 %v640, %v912
    %v914 = vpop.f32.mrf.mxu0
    %v915 = vadd.f32 %v642, %v914
    %v916 = vpop.f32.mrf.mxu0
    %v917 = vadd.f32 %v644, %v916
    %v918 = vpop.f32.mrf.mxu0
    %v919 = vadd.f32 %v646, %v918
    %920 = vmatprep.mubr.bf16.mxu0 0
    %921 = vmatmul.mubr.bf16.gmra.mxu0 %v805
    %v922 = vpop.f32.mrf.mxu0
    %v923 = vadd.f32 %v650, %v922
    %v924 = vpop.f32.mrf.mxu0
    %v925 = vadd.f32 %v652, %v924
    %v926 = vpop.f32.mrf.mxu0
    %v927 = vadd.f32 %v654, %v926
    %v928 = vpop.f32.mrf.mxu0
    %v929 = vadd.f32 %v656, %v928
    %930 = vmatprep.mubr.bf16.mxu0 0
    %931 = vmatmul.mubr.bf16.gmra.mxu0 %v808
    %v932 = vpop.f32.mrf.mxu0
    %v933 = vadd.f32 %v660, %v932
    %v934 = vpop.f32.mrf.mxu0
    %v935 = vadd.f32 %v662, %v934
    %v936 = vpop.f32.mrf.mxu0
    %v937 = vadd.f32 %v664, %v936
    %v938 = vpop.f32.mrf.mxu0
    %v939 = vadd.f32 %v666, %v938
    %940 = vmatprep.mubr.bf16.mxu0 0
    %941 = vmatmul.mubr.bf16.gmra.mxu0 %v811
    %v942 = vpop.f32.mrf.mxu0
    %v943 = vadd.f32 %v670, %v942
    %v944 = vpop.f32.mrf.mxu0
    %v945 = vadd.f32 %v672, %v944
    %v946 = vpop.f32.mrf.mxu0
    %v947 = vadd.f32 %v674, %v946
    %v948 = vpop.f32.mrf.mxu0
    %v949 = vadd.f32 %v676, %v948
    %950 = vmatprep.mubr.bf16.mxu0 0
    %951 = vmatmul.mubr.bf16.gmra.mxu0 %v814
    %v952 = vpop.f32.mrf.mxu0
    %v953 = vadd.f32 %v680, %v952
    %v954 = vpop.f32.mrf.mxu0
    %v955 = vadd.f32 %v682, %v954
    %v956 = vpop.f32.mrf.mxu0
    %v957 = vadd.f32 %v684, %v956
    %v958 = vpop.f32.mrf.mxu0
    %v959 = vadd.f32 %v686, %v958
    %960 = vmatprep.mubr.bf16.mxu0 0
    %961 = vmatmul.mubr.bf16.gmra.mxu0 %v817
    %v962 = vpop.f32.mrf.mxu0
    %v963 = vadd.f32 %v690, %v962
    %v964 = vpop.f32.mrf.mxu0
    %v965 = vadd.f32 %v692, %v964
    %v966 = vpop.f32.mrf.mxu0
    %v967 = vadd.f32 %v694, %v966
    %v968 = vpop.f32.mrf.mxu0
    %v969 = vadd.f32 %v696, %v968
    %970 = vmatprep.mubr.bf16.mxu0 0
    %971 = vmatmul.mubr.bf16.gmra.mxu0 %v820
    %v972 = vpop.f32.mrf.mxu0
    %v973 = vadd.f32 %v700, %v972
    %v974 = vpop.f32.mrf.mxu0
    %v975 = vadd.f32 %v702, %v974
    %v976 = vpop.f32.mrf.mxu0
    %v977 = vadd.f32 %v704, %v976
    %v978 = vpop.f32.mrf.mxu0
    %v979 = vadd.f32 %v706, %v978
    %980 = vdwg.mxu0
    %vm989 = vcmask 1042432
    %vm990 = vcmask 1046532
    %vm991 = vmor %vm989, %vm990
    %v992 = vrot.slane %v141, 5
    %v993 = vrot.slane %v992, 4
    %v994 = vrot.slane %v142, 5
    %v995 = vsel %vm991, %v993, %v994
    %v996 = vrot.slane %v994, 4
    %v997 = vrot.slane %v143, 5
    %v998 = vsel %vm991, %v996, %v997
    %v999 = vrot.slane %v997, 4
    %v1000 = vrot.slane %v144, 5
    %v1001 = vsel %vm991, %v999, %v1000
    %v1002 = vrot.slane %v145, 5
    %v1003 = vrot.slane %v1002, 4
    %v1004 = vrot.slane %v146, 5
    %v1005 = vsel %vm991, %v1003, %v1004
    %v1006 = vrot.slane %v1004, 4
    %v1007 = vrot.slane %v147, 5
    %v1008 = vsel %vm991, %v1006, %v1007
    %v1009 = vrot.slane %v1007, 4
    %v1010 = vrot.slane %v148, 5
    %v1011 = vsel %vm991, %v1009, %v1010
    %v1012 = vrot.slane %v149, 5
    %v1013 = vrot.slane %v1012, 4
    %v1014 = vrot.slane %v150, 5
    %v1015 = vsel %vm991, %v1013, %v1014
    %v1016 = vrot.slane %v1014, 4
    %v1017 = vrot.slane %v151, 5
    %v1018 = vsel %vm991, %v1016, %v1017
    %v1019 = vrot.slane %v1017, 4
    %v1020 = vrot.slane %v152, 5
    %v1021 = vsel %vm991, %v1019, %v1020
    %v1022 = vrot.slane %v153, 5
    %v1023 = vrot.slane %v1022, 4
    %v1024 = vrot.slane %v154, 5
    %v1025 = vsel %vm991, %v1023, %v1024
    %v1026 = vrot.slane %v1024, 4
    %v1027 = vrot.slane %v155, 5
    %v1028 = vsel %vm991, %v1026, %v1027
    %v1029 = vrot.slane %v1027, 4
    %v1030 = vrot.slane %v156, 5
    %v1031 = vsel %vm991, %v1029, %v1030
    %v1032 = vrot.slane %v157, 5
    %v1033 = vrot.slane %v1032, 4
    %v1034 = vrot.slane %v158, 5
    %v1035 = vsel %vm991, %v1033, %v1034
    %v1036 = vrot.slane %v1034, 4
    %v1037 = vrot.slane %v159, 5
    %v1038 = vsel %vm991, %v1036, %v1037
    %v1039 = vrot.slane %v1037, 4
    %v1040 = vrot.slane %v160, 5
    %v1041 = vsel %vm991, %v1039, %v1040
    %v1042 = vrot.slane %v161, 5
    %v1043 = vrot.slane %v1042, 4
    %v1044 = vrot.slane %v162, 5
    %v1045 = vsel %vm991, %v1043, %v1044
    %v1046 = vrot.slane %v1044, 4
    %v1047 = vrot.slane %v163, 5
    %v1048 = vsel %vm991, %v1046, %v1047
    %v1049 = vrot.slane %v1047, 4
    %v1050 = vrot.slane %v164, 5
    %v1051 = vsel %vm991, %v1049, %v1050
    %v1052 = vrot.slane %v165, 5
    %v1053 = vrot.slane %v1052, 4
    %v1054 = vrot.slane %v166, 5
    %v1055 = vsel %vm991, %v1053, %v1054
    %v1056 = vrot.slane %v1054, 4
    %v1057 = vrot.slane %v167, 5
    %v1058 = vsel %vm991, %v1056, %v1057
    %v1059 = vrot.slane %v1057, 4
    %v1060 = vrot.slane %v168, 5
    %v1061 = vsel %vm991, %v1059, %v1060
    %v1062 = vrot.slane %v169, 5
    %v1063 = vrot.slane %v1062, 4
    %v1064 = vrot.slane %v170, 5
    %v1065 = vsel %vm991, %v1063, %v1064
    %v1066 = vrot.slane %v1064, 4
    %v1067 = vrot.slane %v171, 5
    %v1068 = vsel %vm991, %v1066, %v1067
    %v1069 = vrot.slane %v1067, 4
    %v1070 = vrot.slane %v172, 5
    %v1071 = vsel %vm991, %v1069, %v1070
    %s1072 = scalar_lea.vmem [#allocation2], 64
    %v1073 = vld [vmem:[%s1072] sm:$0xff]
    %v1074 = vld [vmem:[%s1072 + $0x8] sm:$0xff]
    %v1075 = vld [vmem:[%s1072 + $0x10] sm:$0xff]
    %v1076 = vld [vmem:[%s1072 + $0x18] sm:$0x33]
    %v1077 = vunpack.c.l.b16 %v995
    %v1078 = vunpack.c.l.b16 %v998
    %v1079 = vunpack.c.l.b16 %v1001
    %v1080 = vunpack.c.l.b16 %v1005
    %v1081 = vunpack.c.l.b16 %v1008
    %v1082 = vunpack.c.l.b16 %v1011
    %v1083 = vunpack.c.l.b16 %v1015
    %v1084 = vunpack.c.l.b16 %v1018
    %v1085 = vunpack.c.l.b16 %v1021
    %v1086 = vunpack.c.l.b16 %v1025
    %v1087 = vunpack.c.l.b16 %v1028
    %v1088 = vunpack.c.l.b16 %v1031
    %v1089 = vunpack.c.l.b16 %v1035
    %v1090 = vunpack.c.l.b16 %v1038
    %v1091 = vunpack.c.l.b16 %v1041
    %v1092 = vunpack.c.l.b16 %v1045
    %v1093 = vunpack.c.l.b16 %v1048
    %v1094 = vunpack.c.l.b16 %v1051
    %v1095 = vunpack.c.l.b16 %v1055
    %v1096 = vunpack.c.l.b16 %v1058
    %v1097 = vunpack.c.l.b16 %v1061
    %v1098 = vunpack.c.l.b16 %v1065
    %v1099 = vunpack.c.l.b16 %v1068
    %v1100 = vunpack.c.l.b16 %v1071
    %v1101 = vpack.c.b16 %v1078, %v1077
    %v1102 = vpack.c.b16 %v1080, %v1079
    %v1103 = vpack.c.b16 %v1082, %v1081
    %v1104 = vpack.c.b16 %v1084, %v1083
    %v1105 = vpack.c.b16 %v1086, %v1085
    %v1106 = vpack.c.b16 %v1088, %v1087
    %v1107 = vpack.c.b16 %v1090, %v1089
    %v1108 = vpack.c.b16 %v1092, %v1091
    %v1109 = vpack.c.b16 %v1094, %v1093
    %v1110 = vpack.c.b16 %v1096, %v1095
    %v1111 = vpack.c.b16 %v1098, %v1097
    %v1112 = vpack.c.b16 %v1100, %v1099
    %v1117 = vunpack.c.l.b16 %v1073
    %v1118 = vunpack.c.h.b16 %v1073
    %v1119 = vunpack.c.l.b16 %v1074
    %v1120 = vunpack.c.h.b16 %v1074
    %v1121 = vunpack.c.l.b16 %v1075
    %v1122 = vunpack.c.h.b16 %v1075
    %v1123 = vunpack.c.l.b16 %v1076
    %v1124 = vunpack.c.h.b16 %v1076
    %v1125 = vpack.c.b16 %v1119, %v1117
    %v1126 = vpack.c.b16 %v1120, %v1118
    %v1127 = vpack.c.b16 %v1123, %v1121
    %v1128 = vpack.c.b16 %v1124, %v1122
    %v1132 = vsel %vm511, %v1101, 0
    %v1135 = vsel %vm511, %v1102, 0
    %v1138 = vsel %vm511, %v1103, 0
    %v1141 = vsel %vm511, %v1104, 0
    %v1144 = vsel %vm511, %v1105, 0
    %v1147 = vsel %vm511, %v1106, 0
    %v1150 = vsel %vm511, %v1107, 0
    %v1153 = vsel %vm511, %v1108, 0
    %v1156 = vsel %vm511, %v1109, 0
    %v1159 = vsel %vm511, %v1110, 0
    %v1162 = vsel %vm511, %v1111, 0
    %v1165 = vsel %vm511, %v1112, 0
    %v1168 = vsel %vm548, %v1127, 0
    %v1171 = vsel %vm548, %v1128, 0
    %1173 = vmatprep.subr.bf16.mxu0 0
    %1174 = vmatpush1.bf16.msra.mxu0 0
    %1175 = vmatprep.subr.bf16.mxu0 0
    %1176 = vmatpush1.bf16.msra.mxu0 0
    %1177 = vmatprep.subr.bf16.mxu0 0
    %1178 = vmatpush1.bf16.msra.mxu0 0
    %1179 = vmatprep.subr.bf16.mxu0 0
    %1180 = vmatpush1.bf16.msra.mxu0 0
    %1181 = vmatprep.subr.bf16.mxu0 0
    %1182 = vmatpush1.bf16.msra.mxu0 0
    %1183 = vmatprep.subr.bf16.mxu0 0
    %1184 = vmatpush1.bf16.msra.mxu0 0
    %1185 = vmatprep.subr.bf16.mxu0 %v1171
    %1186 = vmatpush1.bf16.msra.mxu0 %v1168
    %1187 = vmatprep.subr.bf16.mxu0 %v1126
    %1188 = vmatpush1.bf16.msra.mxu0 %v1125
    %1189 = vmatprep.subr.bf16.mxu0 0
    %1190 = vmatpush2.bf16.msra.mxu0 0
    %1191 = vmatprep.subr.bf16.mxu0 0
    %1192 = vmatpush2.bf16.msra.mxu0 0
    %1193 = vmatprep.subr.bf16.mxu0 0
    %1194 = vmatpush2.bf16.msra.mxu0 0
    %1195 = vmatprep.subr.bf16.mxu0 0
    %1196 = vmatpush2.bf16.msra.mxu0 0
    %1197 = vmatprep.subr.bf16.mxu0 0
    %1198 = vmatpush2.bf16.msra.mxu0 0
    %1199 = vmatprep.subr.bf16.mxu0 0
    %1200 = vmatpush2.bf16.msra.mxu0 0
    %1201 = vmatprep.subr.bf16.mxu0 0
    %1202 = vmatpush2.bf16.msra.mxu0 0
    %1203 = vmatprep.subr.bf16.mxu0 0
    %1204 = vmatpush2.bf16.msra.mxu0 0
    %1205 = vmatprep.mubr.bf16.mxu0 0
    %1206 = vmatmul.mubr.bf16.gmra.mxu0 %v1132
    %v1207 = vpop.f32.mrf.mxu0
    %v1208 = vadd.f32 0.0, %v1207
    %v1209 = vpop.f32.mrf.mxu0
    %v1210 = vadd.f32 0.0, %v1209
    %v1211 = vpop.f32.mrf.mxu0
    %v1212 = vadd.f32 0.0, %v1211
    %v1213 = vpop.f32.mrf.mxu0
    %v1214 = vadd.f32 0.0, %v1213
    %1215 = vmatprep.mubr.bf16.mxu0 0
    %1216 = vmatmul.mubr.bf16.gmra.mxu0 %v1135
    %v1217 = vpop.f32.mrf.mxu0
    %v1218 = vadd.f32 0.0, %v1217
    %v1219 = vpop.f32.mrf.mxu0
    %v1220 = vadd.f32 0.0, %v1219
    %v1221 = vpop.f32.mrf.mxu0
    %v1222 = vadd.f32 0.0, %v1221
    %v1223 = vpop.f32.mrf.mxu0
    %v1224 = vadd.f32 0.0, %v1223
    %1225 = vmatprep.mubr.bf16.mxu0 0
    %1226 = vmatmul.mubr.bf16.gmra.mxu0 %v1138
    %v1227 = vpop.f32.mrf.mxu0
    %v1228 = vadd.f32 0.0, %v1227
    %v1229 = vpop.f32.mrf.mxu0
    %v1230 = vadd.f32 0.0, %v1229
    %v1231 = vpop.f32.mrf.mxu0
    %v1232 = vadd.f32 0.0, %v1231
    %v1233 = vpop.f32.mrf.mxu0
    %v1234 = vadd.f32 0.0, %v1233
    %1235 = vmatprep.mubr.bf16.mxu0 0
    %1236 = vmatmul.mubr.bf16.gmra.mxu0 %v1141
    %v1237 = vpop.f32.mrf.mxu0
    %v1238 = vadd.f32 0.0, %v1237
    %v1239 = vpop.f32.mrf.mxu0
    %v1240 = vadd.f32 0.0, %v1239
    %v1241 = vpop.f32.mrf.mxu0
    %v1242 = vadd.f32 0.0, %v1241
    %v1243 = vpop.f32.mrf.mxu0
    %v1244 = vadd.f32 0.0, %v1243
    %1245 = vmatprep.mubr.bf16.mxu0 0
    %1246 = vmatmul.mubr.bf16.gmra.mxu0 %v1144
    %v1247 = vpop.f32.mrf.mxu0
    %v1248 = vadd.f32 0.0, %v1247
    %v1249 = vpop.f32.mrf.mxu0
    %v1250 = vadd.f32 0.0, %v1249
    %v1251 = vpop.f32.mrf.mxu0
    %v1252 = vadd.f32 0.0, %v1251
    %v1253 = vpop.f32.mrf.mxu0
    %v1254 = vadd.f32 0.0, %v1253
    %1255 = vmatprep.mubr.bf16.mxu0 0
    %1256 = vmatmul.mubr.bf16.gmra.mxu0 %v1147
    %v1257 = vpop.f32.mrf.mxu0
    %v1258 = vadd.f32 0.0, %v1257
    %v1259 = vpop.f32.mrf.mxu0
    %v1260 = vadd.f32 0.0, %v1259
    %v1261 = vpop.f32.mrf.mxu0
    %v1262 = vadd.f32 0.0, %v1261
    %v1263 = vpop.f32.mrf.mxu0
    %v1264 = vadd.f32 0.0, %v1263
    %1265 = vmatprep.mubr.bf16.mxu0 0
    %1266 = vmatmul.mubr.bf16.gmra.mxu0 %v1150
    %v1267 = vpop.f32.mrf.mxu0
    %v1268 = vadd.f32 0.0, %v1267
    %v1269 = vpop.f32.mrf.mxu0
    %v1270 = vadd.f32 0.0, %v1269
    %v1271 = vpop.f32.mrf.mxu0
    %v1272 = vadd.f32 0.0, %v1271
    %v1273 = vpop.f32.mrf.mxu0
    %v1274 = vadd.f32 0.0, %v1273
    %1275 = vmatprep.mubr.bf16.mxu0 0
    %1276 = vmatmul.mubr.bf16.gmra.mxu0 %v1153
    %v1277 = vpop.f32.mrf.mxu0
    %v1278 = vadd.f32 0.0, %v1277
    %v1279 = vpop.f32.mrf.mxu0
    %v1280 = vadd.f32 0.0, %v1279
    %v1281 = vpop.f32.mrf.mxu0
    %v1282 = vadd.f32 0.0, %v1281
    %v1283 = vpop.f32.mrf.mxu0
    %v1284 = vadd.f32 0.0, %v1283
    %1285 = vmatprep.mubr.bf16.mxu0 0
    %1286 = vmatmul.mubr.bf16.gmra.mxu0 %v1156
    %v1287 = vpop.f32.mrf.mxu0
    %v1288 = vadd.f32 0.0, %v1287
    %v1289 = vpop.f32.mrf.mxu0
    %v1290 = vadd.f32 0.0, %v1289
    %v1291 = vpop.f32.mrf.mxu0
    %v1292 = vadd.f32 0.0, %v1291
    %v1293 = vpop.f32.mrf.mxu0
    %v1294 = vadd.f32 0.0, %v1293
    %1295 = vmatprep.mubr.bf16.mxu0 0
    %1296 = vmatmul.mubr.bf16.gmra.mxu0 %v1159
    %v1297 = vpop.f32.mrf.mxu0
    %v1298 = vadd.f32 0.0, %v1297
    %v1299 = vpop.f32.mrf.mxu0
    %v1300 = vadd.f32 0.0, %v1299
    %v1301 = vpop.f32.mrf.mxu0
    %v1302 = vadd.f32 0.0, %v1301
    %v1303 = vpop.f32.mrf.mxu0
    %v1304 = vadd.f32 0.0, %v1303
    %1305 = vmatprep.mubr.bf16.mxu0 0
    %1306 = vmatmul.mubr.bf16.gmra.mxu0 %v1162
    %v1307 = vpop.f32.mrf.mxu0
    %v1308 = vadd.f32 0.0, %v1307
    %v1309 = vpop.f32.mrf.mxu0
    %v1310 = vadd.f32 0.0, %v1309
    %v1311 = vpop.f32.mrf.mxu0
    %v1312 = vadd.f32 0.0, %v1311
    %v1313 = vpop.f32.mrf.mxu0
    %v1314 = vadd.f32 0.0, %v1313
    %1315 = vmatprep.mubr.bf16.mxu0 0
    %1316 = vmatmul.mubr.bf16.gmra.mxu0 %v1165
    %v1317 = vpop.f32.mrf.mxu0
    %v1318 = vadd.f32 0.0, %v1317
    %v1319 = vpop.f32.mrf.mxu0
    %v1320 = vadd.f32 0.0, %v1319
    %v1321 = vpop.f32.mrf.mxu0
    %v1322 = vadd.f32 0.0, %v1321
    %v1323 = vpop.f32.mrf.mxu0
    %v1324 = vadd.f32 0.0, %v1323
    %1325 = vdwg.mxu0
    %v1326 = vadd.f32 %v863, %v1208
    %v1327 = vadd.f32 %v865, %v1210
    %v1328 = vadd.f32 %v867, %v1212
    %v1329 = vadd.f32 %v869, %v1214
    %v1330 = vadd.f32 %v873, %v1218
    %v1331 = vadd.f32 %v875, %v1220
    %v1332 = vadd.f32 %v877, %v1222
    %v1333 = vadd.f32 %v879, %v1224
    %v1334 = vadd.f32 %v883, %v1228
    %v1335 = vadd.f32 %v885, %v1230
    %v1336 = vadd.f32 %v887, %v1232
    %v1337 = vadd.f32 %v889, %v1234
    %v1338 = vadd.f32 %v893, %v1238
    %v1339 = vadd.f32 %v895, %v1240
    %v1340 = vadd.f32 %v897, %v1242
    %v1341 = vadd.f32 %v899, %v1244
    %v1342 = vadd.f32 %v903, %v1248
    %v1343 = vadd.f32 %v905, %v1250
    %v1344 = vadd.f32 %v907, %v1252
    %v1345 = vadd.f32 %v909, %v1254
    %v1346 = vadd.f32 %v913, %v1258
    %v1347 = vadd.f32 %v915, %v1260
    %v1348 = vadd.f32 %v917, %v1262
    %v1349 = vadd.f32 %v919, %v1264
    %v1350 = vadd.f32 %v923, %v1268
    %v1351 = vadd.f32 %v925, %v1270
    %v1352 = vadd.f32 %v927, %v1272
    %v1353 = vadd.f32 %v929, %v1274
    %v1354 = vadd.f32 %v933, %v1278
    %v1355 = vadd.f32 %v935, %v1280
    %v1356 = vadd.f32 %v937, %v1282
    %v1357 = vadd.f32 %v939, %v1284
    %v1358 = vadd.f32 %v943, %v1288
    %v1359 = vadd.f32 %v945, %v1290
    %v1360 = vadd.f32 %v947, %v1292
    %v1361 = vadd.f32 %v949, %v1294
    %v1362 = vadd.f32 %v953, %v1298
    %v1363 = vadd.f32 %v955, %v1300
    %v1364 = vadd.f32 %v957, %v1302
    %v1365 = vadd.f32 %v959, %v1304
    %v1366 = vadd.f32 %v963, %v1308
    %v1367 = vadd.f32 %v965, %v1310
    %v1368 = vadd.f32 %v967, %v1312
    %v1369 = vadd.f32 %v969, %v1314
    %v1370 = vadd.f32 %v973, %v1318
    %v1371 = vadd.f32 %v975, %v1320
    %v1372 = vadd.f32 %v977, %v1322
    %v1373 = vadd.f32 %v979, %v1324
    %vm1374 = vsmask.f32 2304
    %vm1375 = vsmask.f32 6416
    %vm1376 = vmor %vm1374, %vm1375
    %v1377 = vrot.slane %v181, 5
    %v1378 = vrot.slane %v184, 6
    %v1379 = vor.u32 %v1377, %v1378
    %v1380 = vrot.slane %v1379, 4
    %v1381 = vrot.slane %v194, 5
    %v1382 = vrot.slane %v190, 6
    %v1383 = vor.u32 %v1381, %v1382
    %v1384 = vsel %vm1376, %v1380, %v1383
    %v1385 = vrot.slane %v1383, 4
    %v1386 = vrot.slane %v204, 5
    %v1387 = vrot.slane %v200, 6
    %v1388 = vor.u32 %v1386, %v1387
    %v1389 = vsel %vm1376, %v1385, %v1388
    %v1390 = vrot.slane %v1388, 4
    %v1391 = vshrl.u32 %v144, 16
    %v1393 = vrot.slane %v1391, 5
    %v1394 = vrot.slane %v210, 6
    %v1395 = vor.u32 %v1393, %v1394
    %v1396 = vsel %vm1376, %v1390, %v1395
    %v1397 = vrot.slane %v215, 5
    %v1398 = vrot.slane %v218, 6
    %v1399 = vor.u32 %v1397, %v1398
    %v1400 = vrot.slane %v1399, 4
    %v1401 = vrot.slane %v228, 5
    %v1402 = vrot.slane %v224, 6
    %v1403 = vor.u32 %v1401, %v1402
    %v1404 = vsel %vm1376, %v1400, %v1403
    %v1405 = vrot.slane %v1403, 4
    %v1406 = vrot.slane %v238, 5
    %v1407 = vrot.slane %v234, 6
    %v1408 = vor.u32 %v1406, %v1407
    %v1409 = vsel %vm1376, %v1405, %v1408
    %v1410 = vrot.slane %v1408, 4
    %v1411 = vshrl.u32 %v148, 16
    %v1413 = vrot.slane %v1411, 5
    %v1414 = vrot.slane %v244, 6
    %v1415 = vor.u32 %v1413, %v1414
    %v1416 = vsel %vm1376, %v1410, %v1415
    %v1417 = vrot.slane %v249, 5
    %v1418 = vrot.slane %v252, 6
    %v1419 = vor.u32 %v1417, %v1418
    %v1420 = vrot.slane %v1419, 4
    %v1421 = vrot.slane %v262, 5
    %v1422 = vrot.slane %v258, 6
    %v1423 = vor.u32 %v1421, %v1422
    %v1424 = vsel %vm1376, %v1420, %v1423
    %v1425 = vrot.slane %v1423, 4
    %v1426 = vrot.slane %v272, 5
    %v1427 = vrot.slane %v268, 6
    %v1428 = vor.u32 %v1426, %v1427
    %v1429 = vsel %vm1376, %v1425, %v1428
    %v1430 = vrot.slane %v1428, 4
    %v1431 = vshrl.u32 %v152, 16
    %v1433 = vrot.slane %v1431, 5
    %v1434 = vrot.slane %v278, 6
    %v1435 = vor.u32 %v1433, %v1434
    %v1436 = vsel %vm1376, %v1430, %v1435
    %v1437 = vrot.slane %v283, 5
    %v1438 = vrot.slane %v286, 6
    %v1439 = vor.u32 %v1437, %v1438
    %v1440 = vrot.slane %v1439, 4
    %v1441 = vrot.slane %v296, 5
    %v1442 = vrot.slane %v292, 6
    %v1443 = vor.u32 %v1441, %v1442
    %v1444 = vsel %vm1376, %v1440, %v1443
    %v1445 = vrot.slane %v1443, 4
    %v1446 = vrot.slane %v306, 5
    %v1447 = vrot.slane %v302, 6
    %v1448 = vor.u32 %v1446, %v1447
    %v1449 = vsel %vm1376, %v1445, %v1448
    %v1450 = vrot.slane %v1448, 4
    %v1451 = vshrl.u32 %v156, 16
    %v1453 = vrot.slane %v1451, 5
    %v1454 = vrot.slane %v312, 6
    %v1455 = vor.u32 %v1453, %v1454
    %v1456 = vsel %vm1376, %v1450, %v1455
    %v1457 = vrot.slane %v317, 5
    %v1458 = vrot.slane %v320, 6
    %v1459 = vor.u32 %v1457, %v1458
    %v1460 = vrot.slane %v1459, 4
    %v1461 = vrot.slane %v330, 5
    %v1462 = vrot.slane %v326, 6
    %v1463 = vor.u32 %v1461, %v1462
    %v1464 = vsel %vm1376, %v1460, %v1463
    %v1465 = vrot.slane %v1463, 4
    %v1466 = vrot.slane %v340, 5
    %v1467 = vrot.slane %v336, 6
    %v1468 = vor.u32 %v1466, %v1467
    %v1469 = vsel %vm1376, %v1465, %v1468
    %v1470 = vrot.slane %v1468, 4
    %v1471 = vshrl.u32 %v160, 16
    %v1473 = vrot.slane %v1471, 5
    %v1474 = vrot.slane %v346, 6
    %v1475 = vor.u32 %v1473, %v1474
    %v1476 = vsel %vm1376, %v1470, %v1475
    %v1477 = vrot.slane %v351, 5
    %v1478 = vrot.slane %v354, 6
    %v1479 = vor.u32 %v1477, %v1478
    %v1480 = vrot.slane %v1479, 4
    %v1481 = vrot.slane %v364, 5
    %v1482 = vrot.slane %v360, 6
    %v1483 = vor.u32 %v1481, %v1482
    %v1484 = vsel %vm1376, %v1480, %v1483
    %v1485 = vrot.slane %v1483, 4
    %v1486 = vrot.slane %v374, 5
    %v1487 = vrot.slane %v370, 6
    %v1488 = vor.u32 %v1486, %v1487
    %v1489 = vsel %vm1376, %v1485, %v1488
    %v1490 = vrot.slane %v1488, 4
    %v1491 = vshrl.u32 %v164, 16
    %v1493 = vrot.slane %v1491, 5
    %v1494 = vrot.slane %v380, 6
    %v1495 = vor.u32 %v1493, %v1494
    %v1496 = vsel %vm1376, %v1490, %v1495
    %v1497 = vrot.slane %v385, 5
    %v1498 = vrot.slane %v388, 6
    %v1499 = vor.u32 %v1497, %v1498
    %v1500 = vrot.slane %v1499, 4
    %v1501 = vrot.slane %v398, 5
    %v1502 = vrot.slane %v394, 6
    %v1503 = vor.u32 %v1501, %v1502
    %v1504 = vsel %vm1376, %v1500, %v1503
    %v1505 = vrot.slane %v1503, 4
    %v1506 = vrot.slane %v408, 5
    %v1507 = vrot.slane %v404, 6
    %v1508 = vor.u32 %v1506, %v1507
    %v1509 = vsel %vm1376, %v1505, %v1508
    %v1510 = vrot.slane %v1508, 4
    %v1511 = vshrl.u32 %v168, 16
    %v1513 = vrot.slane %v1511, 5
    %v1514 = vrot.slane %v414, 6
    %v1515 = vor.u32 %v1513, %v1514
    %v1516 = vsel %vm1376, %v1510, %v1515
    %v1517 = vrot.slane %v419, 5
    %v1518 = vrot.slane %v422, 6
    %v1519 = vor.u32 %v1517, %v1518
    %v1520 = vrot.slane %v1519, 4
    %v1521 = vrot.slane %v432, 5
    %v1522 = vrot.slane %v428, 6
    %v1523 = vor.u32 %v1521, %v1522
    %v1524 = vsel %vm1376, %v1520, %v1523
    %v1525 = vrot.slane %v1523, 4
    %v1526 = vrot.slane %v442, 5
    %v1527 = vrot.slane %v438, 6
    %v1528 = vor.u32 %v1526, %v1527
    %v1529 = vsel %vm1376, %v1525, %v1528
    %v1530 = vrot.slane %v1528, 4
    %v1531 = vshrl.u32 %v172, 16
    %v1533 = vrot.slane %v1531, 5
    %v1534 = vrot.slane %v448, 6
    %v1535 = vor.u32 %v1533, %v1534
    %v1536 = vsel %vm1376, %v1530, %v1535
    %s1537 = scalar_lea.vmem [#allocation2], 96
    %v1538 = vld [vmem:[%s1537] sm:$0xff]
    %v1539 = vld [vmem:[%s1537 + $0x8] sm:$0xff]
    %v1540 = vld [vmem:[%s1537 + $0x10] sm:$0xff]
    %v1541 = vld [vmem:[%s1537 + $0x18] sm:$0x33]
    %v1542 = vunpack.c.l.b16 %v1384
    %v1543 = vunpack.c.l.b16 %v1389
    %v1544 = vunpack.c.l.b16 %v1396
    %v1545 = vunpack.c.l.b16 %v1404
    %v1546 = vunpack.c.l.b16 %v1409
    %v1547 = vunpack.c.l.b16 %v1416
    %v1548 = vunpack.c.l.b16 %v1424
    %v1549 = vunpack.c.l.b16 %v1429
    %v1550 = vunpack.c.l.b16 %v1436
    %v1551 = vunpack.c.l.b16 %v1444
    %v1552 = vunpack.c.l.b16 %v1449
    %v1553 = vunpack.c.l.b16 %v1456
    %v1554 = vunpack.c.l.b16 %v1464
    %v1555 = vunpack.c.l.b16 %v1469
    %v1556 = vunpack.c.l.b16 %v1476
    %v1557 = vunpack.c.l.b16 %v1484
    %v1558 = vunpack.c.l.b16 %v1489
    %v1559 = vunpack.c.l.b16 %v1496
    %v1560 = vunpack.c.l.b16 %v1504
    %v1561 = vunpack.c.l.b16 %v1509
    %v1562 = vunpack.c.l.b16 %v1516
    %v1563 = vunpack.c.l.b16 %v1524
    %v1564 = vunpack.c.l.b16 %v1529
    %v1565 = vunpack.c.l.b16 %v1536
    %v1566 = vpack.c.b16 %v1543, %v1542
    %v1567 = vpack.c.b16 %v1545, %v1544
    %v1568 = vpack.c.b16 %v1547, %v1546
    %v1569 = vpack.c.b16 %v1549, %v1548
    %v1570 = vpack.c.b16 %v1551, %v1550
    %v1571 = vpack.c.b16 %v1553, %v1552
    %v1572 = vpack.c.b16 %v1555, %v1554
    %v1573 = vpack.c.b16 %v1557, %v1556
    %v1574 = vpack.c.b16 %v1559, %v1558
    %v1575 = vpack.c.b16 %v1561, %v1560
    %v1576 = vpack.c.b16 %v1563, %v1562
    %v1577 = vpack.c.b16 %v1565, %v1564
    %v1582 = vunpack.c.l.b16 %v1538
    %v1583 = vunpack.c.h.b16 %v1538
    %v1584 = vunpack.c.l.b16 %v1539
    %v1585 = vunpack.c.h.b16 %v1539
    %v1586 = vunpack.c.l.b16 %v1540
    %v1587 = vunpack.c.h.b16 %v1540
    %v1588 = vunpack.c.l.b16 %v1541
    %v1589 = vunpack.c.h.b16 %v1541
    %v1590 = vpack.c.b16 %v1584, %v1582
    %v1591 = vpack.c.b16 %v1585, %v1583
    %v1592 = vpack.c.b16 %v1588, %v1586
    %v1593 = vpack.c.b16 %v1589, %v1587
    %v1597 = vsel %vm511, %v1566, 0
    %v1600 = vsel %vm511, %v1567, 0
    %v1603 = vsel %vm511, %v1568, 0
    %v1606 = vsel %vm511, %v1569, 0
    %v1609 = vsel %vm511, %v1570, 0
    %v1612 = vsel %vm511, %v1571, 0
    %v1615 = vsel %vm511, %v1572, 0
    %v1618 = vsel %vm511, %v1573, 0
    %v1621 = vsel %vm511, %v1574, 0
    %v1624 = vsel %vm511, %v1575, 0
    %v1627 = vsel %vm511, %v1576, 0
    %v1630 = vsel %vm511, %v1577, 0
    %v1633 = vsel %vm548, %v1592, 0
    %v1636 = vsel %vm548, %v1593, 0
    %1638 = vmatprep.subr.bf16.mxu0 0
    %1639 = vmatpush1.bf16.msra.mxu0 0
    %1640 = vmatprep.subr.bf16.mxu0 0
    %1641 = vmatpush1.bf16.msra.mxu0 0
    %1642 = vmatprep.subr.bf16.mxu0 0
    %1643 = vmatpush1.bf16.msra.mxu0 0
    %1644 = vmatprep.subr.bf16.mxu0 0
    %1645 = vmatpush1.bf16.msra.mxu0 0
    %1646 = vmatprep.subr.bf16.mxu0 0
    %1647 = vmatpush1.bf16.msra.mxu0 0
    %1648 = vmatprep.subr.bf16.mxu0 0
    %1649 = vmatpush1.bf16.msra.mxu0 0
    %1650 = vmatprep.subr.bf16.mxu0 %v1636
    %1651 = vmatpush1.bf16.msra.mxu0 %v1633
    %1652 = vmatprep.subr.bf16.mxu0 %v1591
    %1653 = vmatpush1.bf16.msra.mxu0 %v1590
    %1654 = vmatprep.subr.bf16.mxu0 0
    %1655 = vmatpush2.bf16.msra.mxu0 0
    %1656 = vmatprep.subr.bf16.mxu0 0
    %1657 = vmatpush2.bf16.msra.mxu0 0
    %1658 = vmatprep.subr.bf16.mxu0 0
    %1659 = vmatpush2.bf16.msra.mxu0 0
    %1660 = vmatprep.subr.bf16.mxu0 0
    %1661 = vmatpush2.bf16.msra.mxu0 0
    %1662 = vmatprep.subr.bf16.mxu0 0
    %1663 = vmatpush2.bf16.msra.mxu0 0
    %1664 = vmatprep.subr.bf16.mxu0 0
    %1665 = vmatpush2.bf16.msra.mxu0 0
    %1666 = vmatprep.subr.bf16.mxu0 0
    %1667 = vmatpush2.bf16.msra.mxu0 0
    %1668 = vmatprep.subr.bf16.mxu0 0
    %1669 = vmatpush2.bf16.msra.mxu0 0
    %1670 = vmatprep.mubr.bf16.mxu0 0
    %1671 = vmatmul.mubr.bf16.gmra.mxu0 %v1597
    %v1672 = vpop.f32.mrf.mxu0
    %v1673 = vadd.f32 0.0, %v1672
    %v1674 = vpop.f32.mrf.mxu0
    %v1675 = vadd.f32 0.0, %v1674
    %v1676 = vpop.f32.mrf.mxu0
    %v1677 = vadd.f32 0.0, %v1676
    %v1678 = vpop.f32.mrf.mxu0
    %v1679 = vadd.f32 0.0, %v1678
    %1680 = vmatprep.mubr.bf16.mxu0 0
    %1681 = vmatmul.mubr.bf16.gmra.mxu0 %v1600
    %v1682 = vpop.f32.mrf.mxu0
    %v1683 = vadd.f32 0.0, %v1682
    %v1684 = vpop.f32.mrf.mxu0
    %v1685 = vadd.f32 0.0, %v1684
    %v1686 = vpop.f32.mrf.mxu0
    %v1687 = vadd.f32 0.0, %v1686
    %v1688 = vpop.f32.mrf.mxu0
    %v1689 = vadd.f32 0.0, %v1688
    %1690 = vmatprep.mubr.bf16.mxu0 0
    %1691 = vmatmul.mubr.bf16.gmra.mxu0 %v1603
    %v1692 = vpop.f32.mrf.mxu0
    %v1693 = vadd.f32 0.0, %v1692
    %v1694 = vpop.f32.mrf.mxu0
    %v1695 = vadd.f32 0.0, %v1694
    %v1696 = vpop.f32.mrf.mxu0
    %v1697 = vadd.f32 0.0, %v1696
    %v1698 = vpop.f32.mrf.mxu0
    %v1699 = vadd.f32 0.0, %v1698
    %1700 = vmatprep.mubr.bf16.mxu0 0
    %1701 = vmatmul.mubr.bf16.gmra.mxu0 %v1606
    %v1702 = vpop.f32.mrf.mxu0
    %v1703 = vadd.f32 0.0, %v1702
    %v1704 = vpop.f32.mrf.mxu0
    %v1705 = vadd.f32 0.0, %v1704
    %v1706 = vpop.f32.mrf.mxu0
    %v1707 = vadd.f32 0.0, %v1706
    %v1708 = vpop.f32.mrf.mxu0
    %v1709 = vadd.f32 0.0, %v1708
    %1710 = vmatprep.mubr.bf16.mxu0 0
    %1711 = vmatmul.mubr.bf16.gmra.mxu0 %v1609
    %v1712 = vpop.f32.mrf.mxu0
    %v1713 = vadd.f32 0.0, %v1712
    %v1714 = vpop.f32.mrf.mxu0
    %v1715 = vadd.f32 0.0, %v1714
    %v1716 = vpop.f32.mrf.mxu0
    %v1717 = vadd.f32 0.0, %v1716
    %v1718 = vpop.f32.mrf.mxu0
    %v1719 = vadd.f32 0.0, %v1718
    %1720 = vmatprep.mubr.bf16.mxu0 0
    %1721 = vmatmul.mubr.bf16.gmra.mxu0 %v1612
    %v1722 = vpop.f32.mrf.mxu0
    %v1723 = vadd.f32 0.0, %v1722
    %v1724 = vpop.f32.mrf.mxu0
    %v1725 = vadd.f32 0.0, %v1724
    %v1726 = vpop.f32.mrf.mxu0
    %v1727 = vadd.f32 0.0, %v1726
    %v1728 = vpop.f32.mrf.mxu0
    %v1729 = vadd.f32 0.0, %v1728
    %1730 = vmatprep.mubr.bf16.mxu0 0
    %1731 = vmatmul.mubr.bf16.gmra.mxu0 %v1615
    %v1732 = vpop.f32.mrf.mxu0
    %v1733 = vadd.f32 0.0, %v1732
    %v1734 = vpop.f32.mrf.mxu0
    %v1735 = vadd.f32 0.0, %v1734
    %v1736 = vpop.f32.mrf.mxu0
    %v1737 = vadd.f32 0.0, %v1736
    %v1738 = vpop.f32.mrf.mxu0
    %v1739 = vadd.f32 0.0, %v1738
    %1740 = vmatprep.mubr.bf16.mxu0 0
    %1741 = vmatmul.mubr.bf16.gmra.mxu0 %v1618
    %v1742 = vpop.f32.mrf.mxu0
    %v1743 = vadd.f32 0.0, %v1742
    %v1744 = vpop.f32.mrf.mxu0
    %v1745 = vadd.f32 0.0, %v1744
    %v1746 = vpop.f32.mrf.mxu0
    %v1747 = vadd.f32 0.0, %v1746
    %v1748 = vpop.f32.mrf.mxu0
    %v1749 = vadd.f32 0.0, %v1748
    %1750 = vmatprep.mubr.bf16.mxu0 0
    %1751 = vmatmul.mubr.bf16.gmra.mxu0 %v1621
    %v1752 = vpop.f32.mrf.mxu0
    %v1753 = vadd.f32 0.0, %v1752
    %v1754 = vpop.f32.mrf.mxu0
    %v1755 = vadd.f32 0.0, %v1754
    %v1756 = vpop.f32.mrf.mxu0
    %v1757 = vadd.f32 0.0, %v1756
    %v1758 = vpop.f32.mrf.mxu0
    %v1759 = vadd.f32 0.0, %v1758
    %1760 = vmatprep.mubr.bf16.mxu0 0
    %1761 = vmatmul.mubr.bf16.gmra.mxu0 %v1624
    %v1762 = vpop.f32.mrf.mxu0
    %v1763 = vadd.f32 0.0, %v1762
    %v1764 = vpop.f32.mrf.mxu0
    %v1765 = vadd.f32 0.0, %v1764
    %v1766 = vpop.f32.mrf.mxu0
    %v1767 = vadd.f32 0.0, %v1766
    %v1768 = vpop.f32.mrf.mxu0
    %v1769 = vadd.f32 0.0, %v1768
    %1770 = vmatprep.mubr.bf16.mxu0 0
    %1771 = vmatmul.mubr.bf16.gmra.mxu0 %v1627
    %v1772 = vpop.f32.mrf.mxu0
    %v1773 = vadd.f32 0.0, %v1772
    %v1774 = vpop.f32.mrf.mxu0
    %v1775 = vadd.f32 0.0, %v1774
    %v1776 = vpop.f32.mrf.mxu0
    %v1777 = vadd.f32 0.0, %v1776
    %v1778 = vpop.f32.mrf.mxu0
    %v1779 = vadd.f32 0.0, %v1778
    %1780 = vmatprep.mubr.bf16.mxu0 0
    %1781 = vmatmul.mubr.bf16.gmra.mxu0 %v1630
    %v1782 = vpop.f32.mrf.mxu0
    %v1783 = vadd.f32 0.0, %v1782
    %v1784 = vpop.f32.mrf.mxu0
    %v1785 = vadd.f32 0.0, %v1784
    %v1786 = vpop.f32.mrf.mxu0
    %v1787 = vadd.f32 0.0, %v1786
    %v1788 = vpop.f32.mrf.mxu0
    %v1789 = vadd.f32 0.0, %v1788
    %1790 = vdwg.mxu0
    %v1791 = vadd.f32 %v1326, %v1673
    %v1792 = vadd.f32 %v1327, %v1675
    %v1793 = vadd.f32 %v1328, %v1677
    %v1794 = vadd.f32 %v1329, %v1679
    %v1795 = vadd.f32 %v1330, %v1683
    %v1796 = vadd.f32 %v1331, %v1685
    %v1797 = vadd.f32 %v1332, %v1687
    %v1798 = vadd.f32 %v1333, %v1689
    %v1799 = vadd.f32 %v1334, %v1693
    %v1800 = vadd.f32 %v1335, %v1695
    %v1801 = vadd.f32 %v1336, %v1697
    %v1802 = vadd.f32 %v1337, %v1699
    %v1803 = vadd.f32 %v1338, %v1703
    %v1804 = vadd.f32 %v1339, %v1705
    %v1805 = vadd.f32 %v1340, %v1707
    %v1806 = vadd.f32 %v1341, %v1709
    %v1807 = vadd.f32 %v1342, %v1713
    %v1808 = vadd.f32 %v1343, %v1715
    %v1809 = vadd.f32 %v1344, %v1717
    %v1810 = vadd.f32 %v1345, %v1719
    %v1811 = vadd.f32 %v1346, %v1723
    %v1812 = vadd.f32 %v1347, %v1725
    %v1813 = vadd.f32 %v1348, %v1727
    %v1814 = vadd.f32 %v1349, %v1729
    %v1815 = vadd.f32 %v1350, %v1733
    %v1816 = vadd.f32 %v1351, %v1735
    %v1817 = vadd.f32 %v1352, %v1737
    %v1818 = vadd.f32 %v1353, %v1739
    %v1819 = vadd.f32 %v1354, %v1743
    %v1820 = vadd.f32 %v1355, %v1745
    %v1821 = vadd.f32 %v1356, %v1747
    %v1822 = vadd.f32 %v1357, %v1749
    %v1823 = vadd.f32 %v1358, %v1753
    %v1824 = vadd.f32 %v1359, %v1755
    %v1825 = vadd.f32 %v1360, %v1757
    %v1826 = vadd.f32 %v1361, %v1759
    %v1827 = vadd.f32 %v1362, %v1763
    %v1828 = vadd.f32 %v1363, %v1765
    %v1829 = vadd.f32 %v1364, %v1767
    %v1830 = vadd.f32 %v1365, %v1769
    %v1831 = vadd.f32 %v1366, %v1773
    %v1832 = vadd.f32 %v1367, %v1775
    %v1833 = vadd.f32 %v1368, %v1777
    %v1834 = vadd.f32 %v1369, %v1779
    %v1835 = vadd.f32 %v1370, %v1783
    %v1836 = vadd.f32 %v1371, %v1785
    %v1837 = vadd.f32 %v1372, %v1787
    %v1838 = vadd.f32 %v1373, %v1789
    %vm1839 = vcmask 1041408
    %vm1840 = vcmask 1045508
    %vm1841 = vmor %vm1839, %vm1840
    %v1842 = vrot.slane %v141, 6
    %v1843 = vrot.slane %v1842, 4
    %v1844 = vrot.slane %v142, 6
    %v1845 = vsel %vm1841, %v1843, %v1844
    %v1846 = vrot.slane %v1844, 4
    %v1847 = vrot.slane %v143, 6
    %v1848 = vsel %vm1841, %v1846, %v1847
    %v1849 = vrot.slane %v1847, 4
    %v1850 = vrot.slane %v144, 6
    %v1851 = vsel %vm1841, %v1849, %v1850
    %v1852 = vrot.slane %v145, 6
    %v1853 = vrot.slane %v1852, 4
    %v1854 = vrot.slane %v146, 6
    %v1855 = vsel %vm1841, %v1853, %v1854
    %v1856 = vrot.slane %v1854, 4
    %v1857 = vrot.slane %v147, 6
    %v1858 = vsel %vm1841, %v1856, %v1857
    %v1859 = vrot.slane %v1857, 4
    %v1860 = vrot.slane %v148, 6
    %v1861 = vsel %vm1841, %v1859, %v1860
    %v1862 = vrot.slane %v149, 6
    %v1863 = vrot.slane %v1862, 4
    %v1864 = vrot.slane %v150, 6
    %v1865 = vsel %vm1841, %v1863, %v1864
    %v1866 = vrot.slane %v1864, 4
    %v1867 = vrot.slane %v151, 6
    %v1868 = vsel %vm1841, %v1866, %v1867
    %v1869 = vrot.slane %v1867, 4
    %v1870 = vrot.slane %v152, 6
    %v1871 = vsel %vm1841, %v1869, %v1870
    %v1872 = vrot.slane %v153, 6
    %v1873 = vrot.slane %v1872, 4
    %v1874 = vrot.slane %v154, 6
    %v1875 = vsel %vm1841, %v1873, %v1874
    %v1876 = vrot.slane %v1874, 4
    %v1877 = vrot.slane %v155, 6
    %v1878 = vsel %vm1841, %v1876, %v1877
    %v1879 = vrot.slane %v1877, 4
    %v1880 = vrot.slane %v156, 6
    %v1881 = vsel %vm1841, %v1879, %v1880
    %v1882 = vrot.slane %v157, 6
    %v1883 = vrot.slane %v1882, 4
    %v1884 = vrot.slane %v158, 6
    %v1885 = vsel %vm1841, %v1883, %v1884
    %v1886 = vrot.slane %v1884, 4
    %v1887 = vrot.slane %v159, 6
    %v1888 = vsel %vm1841, %v1886, %v1887
    %v1889 = vrot.slane %v1887, 4
    %v1890 = vrot.slane %v160, 6
    %v1891 = vsel %vm1841, %v1889, %v1890
    %v1892 = vrot.slane %v161, 6
    %v1893 = vrot.slane %v1892, 4
    %v1894 = vrot.slane %v162, 6
    %v1895 = vsel %vm1841, %v1893, %v1894
    %v1896 = vrot.slane %v1894, 4
    %v1897 = vrot.slane %v163, 6
    %v1898 = vsel %vm1841, %v1896, %v1897
    %v1899 = vrot.slane %v1897, 4
    %v1900 = vrot.slane %v164, 6
    %v1901 = vsel %vm1841, %v1899, %v1900
    %v1902 = vrot.slane %v165, 6
    %v1903 = vrot.slane %v1902, 4
    %v1904 = vrot.slane %v166, 6
    %v1905 = vsel %vm1841, %v1903, %v1904
    %v1906 = vrot.slane %v1904, 4
    %v1907 = vrot.slane %v167, 6
    %v1908 = vsel %vm1841, %v1906, %v1907
    %v1909 = vrot.slane %v1907, 4
    %v1910 = vrot.slane %v168, 6
    %v1911 = vsel %vm1841, %v1909, %v1910
    %v1912 = vrot.slane %v169, 6
    %v1913 = vrot.slane %v1912, 4
    %v1914 = vrot.slane %v170, 6
    %v1915 = vsel %vm1841, %v1913, %v1914
    %v1916 = vrot.slane %v1914, 4
    %v1917 = vrot.slane %v171, 6
    %v1918 = vsel %vm1841, %v1916, %v1917
    %v1919 = vrot.slane %v1917, 4
    %v1920 = vrot.slane %v172, 6
    %v1921 = vsel %vm1841, %v1919, %v1920
    %s1922 = scalar_lea.vmem [#allocation2], 128
    %v1923 = vld [vmem:[%s1922] sm:$0xff]
    %v1924 = vld [vmem:[%s1922 + $0x8] sm:$0xff]
    %v1925 = vld [vmem:[%s1922 + $0x10] sm:$0xff]
    %v1926 = vld [vmem:[%s1922 + $0x18] sm:$0x33]
    %v1927 = vunpack.c.l.b16 %v1845
    %v1928 = vunpack.c.l.b16 %v1848
    %v1929 = vunpack.c.l.b16 %v1851
    %v1930 = vunpack.c.l.b16 %v1855
    %v1931 = vunpack.c.l.b16 %v1858
    %v1932 = vunpack.c.l.b16 %v1861
    %v1933 = vunpack.c.l.b16 %v1865
    %v1934 = vunpack.c.l.b16 %v1868
    %v1935 = vunpack.c.l.b16 %v1871
    %v1936 = vunpack.c.l.b16 %v1875
    %v1937 = vunpack.c.l.b16 %v1878
    %v1938 = vunpack.c.l.b16 %v1881
    %v1939 = vunpack.c.l.b16 %v1885
    %v1940 = vunpack.c.l.b16 %v1888
    %v1941 = vunpack.c.l.b16 %v1891
    %v1942 = vunpack.c.l.b16 %v1895
    %v1943 = vunpack.c.l.b16 %v1898
    %v1944 = vunpack.c.l.b16 %v1901
    %v1945 = vunpack.c.l.b16 %v1905
    %v1946 = vunpack.c.l.b16 %v1908
    %v1947 = vunpack.c.l.b16 %v1911
    %v1948 = vunpack.c.l.b16 %v1915
    %v1949 = vunpack.c.l.b16 %v1918
    %v1950 = vunpack.c.l.b16 %v1921
    %v1951 = vpack.c.b16 %v1928, %v1927
    %v1952 = vpack.c.b16 %v1930, %v1929
    %v1953 = vpack.c.b16 %v1932, %v1931
    %v1954 = vpack.c.b16 %v1934, %v1933
    %v1955 = vpack.c.b16 %v1936, %v1935
    %v1956 = vpack.c.b16 %v1938, %v1937
    %v1957 = vpack.c.b16 %v1940, %v1939
    %v1958 = vpack.c.b16 %v1942, %v1941
    %v1959 = vpack.c.b16 %v1944, %v1943
    %v1960 = vpack.c.b16 %v1946, %v1945
    %v1961 = vpack.c.b16 %v1948, %v1947
    %v1962 = vpack.c.b16 %v1950, %v1949
    %v1967 = vunpack.c.l.b16 %v1923
    %v1968 = vunpack.c.h.b16 %v1923
    %v1969 = vunpack.c.l.b16 %v1924
    %v1970 = vunpack.c.h.b16 %v1924
    %v1971 = vunpack.c.l.b16 %v1925
    %v1972 = vunpack.c.h.b16 %v1925
    %v1973 = vunpack.c.l.b16 %v1926
    %v1974 = vunpack.c.h.b16 %v1926
    %v1975 = vpack.c.b16 %v1969, %v1967
    %v1976 = vpack.c.b16 %v1970, %v1968
    %v1977 = vpack.c.b16 %v1973, %v1971
    %v1978 = vpack.c.b16 %v1974, %v1972
    %v1982 = vsel %vm511, %v1951, 0
    %v1985 = vsel %vm511, %v1952, 0
    %v1988 = vsel %vm511, %v1953, 0
    %v1991 = vsel %vm511, %v1954, 0
    %v1994 = vsel %vm511, %v1955, 0
    %v1997 = vsel %vm511, %v1956, 0
    %v2000 = vsel %vm511, %v1957, 0
    %v2003 = vsel %vm511, %v1958, 0
    %v2006 = vsel %vm511, %v1959, 0
    %v2009 = vsel %vm511, %v1960, 0
    %v2012 = vsel %vm511, %v1961, 0
    %v2015 = vsel %vm511, %v1962, 0
    %v2018 = vsel %vm548, %v1977, 0
    %v2021 = vsel %vm548, %v1978, 0
    %2023 = vmatprep.subr.bf16.mxu0 0
    %2024 = vmatpush1.bf16.msra.mxu0 0
    %2025 = vmatprep.subr.bf16.mxu0 0
    %2026 = vmatpush1.bf16.msra.mxu0 0
    %2027 = vmatprep.subr.bf16.mxu0 0
    %2028 = vmatpush1.bf16.msra.mxu0 0
    %2029 = vmatprep.subr.bf16.mxu0 0
    %2030 = vmatpush1.bf16.msra.mxu0 0
    %2031 = vmatprep.subr.bf16.mxu0 0
    %2032 = vmatpush1.bf16.msra.mxu0 0
    %2033 = vmatprep.subr.bf16.mxu0 0
    %2034 = vmatpush1.bf16.msra.mxu0 0
    %2035 = vmatprep.subr.bf16.mxu0 %v2021
    %2036 = vmatpush1.bf16.msra.mxu0 %v2018
    %2037 = vmatprep.subr.bf16.mxu0 %v1976
    %2038 = vmatpush1.bf16.msra.mxu0 %v1975
    %2039 = vmatprep.subr.bf16.mxu0 0
    %2040 = vmatpush2.bf16.msra.mxu0 0
    %2041 = vmatprep.subr.bf16.mxu0 0
    %2042 = vmatpush2.bf16.msra.mxu0 0
    %2043 = vmatprep.subr.bf16.mxu0 0
    %2044 = vmatpush2.bf16.msra.mxu0 0
    %2045 = vmatprep.subr.bf16.mxu0 0
    %2046 = vmatpush2.bf16.msra.mxu0 0
    %2047 = vmatprep.subr.bf16.mxu0 0
    %2048 = vmatpush2.bf16.msra.mxu0 0
    %2049 = vmatprep.subr.bf16.mxu0 0
    %2050 = vmatpush2.bf16.msra.mxu0 0
    %2051 = vmatprep.subr.bf16.mxu0 0
    %2052 = vmatpush2.bf16.msra.mxu0 0
    %2053 = vmatprep.subr.bf16.mxu0 0
    %2054 = vmatpush2.bf16.msra.mxu0 0
    %2055 = vmatprep.mubr.bf16.mxu0 0
    %2056 = vmatmul.mubr.bf16.gmra.mxu0 %v1982
    %v2057 = vpop.f32.mrf.mxu0
    %v2058 = vadd.f32 0.0, %v2057
    %v2059 = vpop.f32.mrf.mxu0
    %v2060 = vadd.f32 0.0, %v2059
    %v2061 = vpop.f32.mrf.mxu0
    %v2062 = vadd.f32 0.0, %v2061
    %v2063 = vpop.f32.mrf.mxu0
    %v2064 = vadd.f32 0.0, %v2063
    %2065 = vmatprep.mubr.bf16.mxu0 0
    %2066 = vmatmul.mubr.bf16.gmra.mxu0 %v1985
    %v2067 = vpop.f32.mrf.mxu0
    %v2068 = vadd.f32 0.0, %v2067
    %v2069 = vpop.f32.mrf.mxu0
    %v2070 = vadd.f32 0.0, %v2069
    %v2071 = vpop.f32.mrf.mxu0
    %v2072 = vadd.f32 0.0, %v2071
    %v2073 = vpop.f32.mrf.mxu0
    %v2074 = vadd.f32 0.0, %v2073
    %2075 = vmatprep.mubr.bf16.mxu0 0
    %2076 = vmatmul.mubr.bf16.gmra.mxu0 %v1988
    %v2077 = vpop.f32.mrf.mxu0
    %v2078 = vadd.f32 0.0, %v2077
    %v2079 = vpop.f32.mrf.mxu0
    %v2080 = vadd.f32 0.0, %v2079
    %v2081 = vpop.f32.mrf.mxu0
    %v2082 = vadd.f32 0.0, %v2081
    %v2083 = vpop.f32.mrf.mxu0
    %v2084 = vadd.f32 0.0, %v2083
    %2085 = vmatprep.mubr.bf16.mxu0 0
    %2086 = vmatmul.mubr.bf16.gmra.mxu0 %v1991
    %v2087 = vpop.f32.mrf.mxu0
    %v2088 = vadd.f32 0.0, %v2087
    %v2089 = vpop.f32.mrf.mxu0
    %v2090 = vadd.f32 0.0, %v2089
    %v2091 = vpop.f32.mrf.mxu0
    %v2092 = vadd.f32 0.0, %v2091
    %v2093 = vpop.f32.mrf.mxu0
    %v2094 = vadd.f32 0.0, %v2093
    %2095 = vmatprep.mubr.bf16.mxu0 0
    %2096 = vmatmul.mubr.bf16.gmra.mxu0 %v1994
    %v2097 = vpop.f32.mrf.mxu0
    %v2098 = vadd.f32 0.0, %v2097
    %v2099 = vpop.f32.mrf.mxu0
    %v2100 = vadd.f32 0.0, %v2099
    %v2101 = vpop.f32.mrf.mxu0
    %v2102 = vadd.f32 0.0, %v2101
    %v2103 = vpop.f32.mrf.mxu0
    %v2104 = vadd.f32 0.0, %v2103
    %2105 = vmatprep.mubr.bf16.mxu0 0
    %2106 = vmatmul.mubr.bf16.gmra.mxu0 %v1997
    %v2107 = vpop.f32.mrf.mxu0
    %v2108 = vadd.f32 0.0, %v2107
    %v2109 = vpop.f32.mrf.mxu0
    %v2110 = vadd.f32 0.0, %v2109
    %v2111 = vpop.f32.mrf.mxu0
    %v2112 = vadd.f32 0.0, %v2111
    %v2113 = vpop.f32.mrf.mxu0
    %v2114 = vadd.f32 0.0, %v2113
    %2115 = vmatprep.mubr.bf16.mxu0 0
    %2116 = vmatmul.mubr.bf16.gmra.mxu0 %v2000
    %v2117 = vpop.f32.mrf.mxu0
    %v2118 = vadd.f32 0.0, %v2117
    %v2119 = vpop.f32.mrf.mxu0
    %v2120 = vadd.f32 0.0, %v2119
    %v2121 = vpop.f32.mrf.mxu0
    %v2122 = vadd.f32 0.0, %v2121
    %v2123 = vpop.f32.mrf.mxu0
    %v2124 = vadd.f32 0.0, %v2123
    %2125 = vmatprep.mubr.bf16.mxu0 0
    %2126 = vmatmul.mubr.bf16.gmra.mxu0 %v2003
    %v2127 = vpop.f32.mrf.mxu0
    %v2128 = vadd.f32 0.0, %v2127
    %v2129 = vpop.f32.mrf.mxu0
    %v2130 = vadd.f32 0.0, %v2129
    %v2131 = vpop.f32.mrf.mxu0
    %v2132 = vadd.f32 0.0, %v2131
    %v2133 = vpop.f32.mrf.mxu0
    %v2134 = vadd.f32 0.0, %v2133
    %2135 = vmatprep.mubr.bf16.mxu0 0
    %2136 = vmatmul.mubr.bf16.gmra.mxu0 %v2006
    %v2137 = vpop.f32.mrf.mxu0
    %v2138 = vadd.f32 0.0, %v2137
    %v2139 = vpop.f32.mrf.mxu0
    %v2140 = vadd.f32 0.0, %v2139
    %v2141 = vpop.f32.mrf.mxu0
    %v2142 = vadd.f32 0.0, %v2141
    %v2143 = vpop.f32.mrf.mxu0
    %v2144 = vadd.f32 0.0, %v2143
    %2145 = vmatprep.mubr.bf16.mxu0 0
    %2146 = vmatmul.mubr.bf16.gmra.mxu0 %v2009
    %v2147 = vpop.f32.mrf.mxu0
    %v2148 = vadd.f32 0.0, %v2147
    %v2149 = vpop.f32.mrf.mxu0
    %v2150 = vadd.f32 0.0, %v2149
    %v2151 = vpop.f32.mrf.mxu0
    %v2152 = vadd.f32 0.0, %v2151
    %v2153 = vpop.f32.mrf.mxu0
    %v2154 = vadd.f32 0.0, %v2153
    %2155 = vmatprep.mubr.bf16.mxu0 0
    %2156 = vmatmul.mubr.bf16.gmra.mxu0 %v2012
    %v2157 = vpop.f32.mrf.mxu0
    %v2158 = vadd.f32 0.0, %v2157
    %v2159 = vpop.f32.mrf.mxu0
    %v2160 = vadd.f32 0.0, %v2159
    %v2161 = vpop.f32.mrf.mxu0
    %v2162 = vadd.f32 0.0, %v2161
    %v2163 = vpop.f32.mrf.mxu0
    %v2164 = vadd.f32 0.0, %v2163
    %2165 = vmatprep.mubr.bf16.mxu0 0
    %2166 = vmatmul.mubr.bf16.gmra.mxu0 %v2015
    %v2167 = vpop.f32.mrf.mxu0
    %v2168 = vadd.f32 0.0, %v2167
    %v2169 = vpop.f32.mrf.mxu0
    %v2170 = vadd.f32 0.0, %v2169
    %v2171 = vpop.f32.mrf.mxu0
    %v2172 = vadd.f32 0.0, %v2171
    %v2173 = vpop.f32.mrf.mxu0
    %v2174 = vadd.f32 0.0, %v2173
    %2175 = vdwg.mxu0
    %v2176 = vadd.f32 %v1791, %v2058
    %v2177 = vadd.f32 %v1792, %v2060
    %v2178 = vadd.f32 %v1793, %v2062
    %v2179 = vadd.f32 %v1794, %v2064
    %v2180 = vadd.f32 %v1795, %v2068
    %v2181 = vadd.f32 %v1796, %v2070
    %v2182 = vadd.f32 %v1797, %v2072
    %v2183 = vadd.f32 %v1798, %v2074
    %v2184 = vadd.f32 %v1799, %v2078
    %v2185 = vadd.f32 %v1800, %v2080
    %v2186 = vadd.f32 %v1801, %v2082
    %v2187 = vadd.f32 %v1802, %v2084
    %v2188 = vadd.f32 %v1803, %v2088
    %v2189 = vadd.f32 %v1804, %v2090
    %v2190 = vadd.f32 %v1805, %v2092
    %v2191 = vadd.f32 %v1806, %v2094
    %v2192 = vadd.f32 %v1807, %v2098
    %v2193 = vadd.f32 %v1808, %v2100
    %v2194 = vadd.f32 %v1809, %v2102
    %v2195 = vadd.f32 %v1810, %v2104
    %v2196 = vadd.f32 %v1811, %v2108
    %v2197 = vadd.f32 %v1812, %v2110
    %v2198 = vadd.f32 %v1813, %v2112
    %v2199 = vadd.f32 %v1814, %v2114
    %v2200 = vadd.f32 %v1815, %v2118
    %v2201 = vadd.f32 %v1816, %v2120
    %v2202 = vadd.f32 %v1817, %v2122
    %v2203 = vadd.f32 %v1818, %v2124
    %v2204 = vadd.f32 %v1819, %v2128
    %v2205 = vadd.f32 %v1820, %v2130
    %v2206 = vadd.f32 %v1821, %v2132
    %v2207 = vadd.f32 %v1822, %v2134
    %v2208 = vadd.f32 %v1823, %v2138
    %v2209 = vadd.f32 %v1824, %v2140
    %v2210 = vadd.f32 %v1825, %v2142
    %v2211 = vadd.f32 %v1826, %v2144
    %v2212 = vadd.f32 %v1827, %v2148
    %v2213 = vadd.f32 %v1828, %v2150
    %v2214 = vadd.f32 %v1829, %v2152
    %v2215 = vadd.f32 %v1830, %v2154
    %v2216 = vadd.f32 %v1831, %v2158
    %v2217 = vadd.f32 %v1832, %v2160
    %v2218 = vadd.f32 %v1833, %v2162
    %v2219 = vadd.f32 %v1834, %v2164
    %v2220 = vadd.f32 %v1835, %v2168
    %v2221 = vadd.f32 %v1836, %v2170
    %v2222 = vadd.f32 %v1837, %v2172
    %v2223 = vadd.f32 %v1838, %v2174
    %v2224 = vld [vmem:[%s2] sm:$0x3]
    %v2226 = vlaneseq
    %v2227 = vshrl.u32 %v2226, 7
    %v2228 = vsub.s32 0, %v2227
    %v2229 = vrot.slane %v2224, %v2228
    %v2230 = vlaneseq
    %v2231 = vshrl.u32 %v2230, 7
    %v2232 = vsub.s32 1, %v2231
    %v2233 = vrot.slane %v2224, %v2232
    %v2236 = vadd.f32 %v2176, %v2229
    %v2237 = vadd.f32 %v2177, %v2233
    %v2238 = vadd.f32 %v2178, %v2229
    %v2239 = vadd.f32 %v2179, %v2233
    %v2240 = vadd.f32 %v2180, %v2229
    %v2241 = vadd.f32 %v2181, %v2233
    %v2242 = vadd.f32 %v2182, %v2229
    %v2243 = vadd.f32 %v2183, %v2233
    %v2244 = vadd.f32 %v2184, %v2229
    %v2245 = vadd.f32 %v2185, %v2233
    %v2246 = vadd.f32 %v2186, %v2229
    %v2247 = vadd.f32 %v2187, %v2233
    %v2248 = vadd.f32 %v2188, %v2229
    %v2249 = vadd.f32 %v2189, %v2233
    %v2250 = vadd.f32 %v2190, %v2229
    %v2251 = vadd.f32 %v2191, %v2233
    %v2252 = vadd.f32 %v2192, %v2229
    %v2253 = vadd.f32 %v2193, %v2233
    %v2254 = vadd.f32 %v2194, %v2229
    %v2255 = vadd.f32 %v2195, %v2233
    %v2256 = vadd.f32 %v2196, %v2229
    %v2257 = vadd.f32 %v2197, %v2233
    %v2258 = vadd.f32 %v2198, %v2229
    %v2259 = vadd.f32 %v2199, %v2233
    %v2260 = vadd.f32 %v2200, %v2229
    %v2261 = vadd.f32 %v2201, %v2233
    %v2262 = vadd.f32 %v2202, %v2229
    %v2263 = vadd.f32 %v2203, %v2233
    %v2264 = vadd.f32 %v2204, %v2229
    %v2265 = vadd.f32 %v2205, %v2233
    %v2266 = vadd.f32 %v2206, %v2229
    %v2267 = vadd.f32 %v2207, %v2233
    %v2268 = vadd.f32 %v2208, %v2229
    %v2269 = vadd.f32 %v2209, %v2233
    %v2270 = vadd.f32 %v2210, %v2229
    %v2271 = vadd.f32 %v2211, %v2233
    %v2272 = vadd.f32 %v2212, %v2229
    %v2273 = vadd.f32 %v2213, %v2233
    %v2274 = vadd.f32 %v2214, %v2229
    %v2275 = vadd.f32 %v2215, %v2233
    %v2276 = vadd.f32 %v2216, %v2229
    %v2277 = vadd.f32 %v2217, %v2233
    %v2278 = vadd.f32 %v2218, %v2229
    %v2279 = vadd.f32 %v2219, %v2233
    %v2280 = vadd.f32 %v2220, %v2229
    %v2281 = vadd.f32 %v2221, %v2233
    %v2282 = vadd.f32 %v2222, %v2229
    %v2283 = vadd.f32 %v2223, %v2233
    %v2284 = vtanh.pop %v2236
    %v2285 = vtanh.pop %v2237
    %v2286 = vtanh.pop %v2238
    %v2287 = vtanh.pop %v2239
    %v2288 = vtanh.pop %v2240
    %v2289 = vtanh.pop %v2241
    %v2290 = vtanh.pop %v2242
    %v2291 = vtanh.pop %v2243
    %v2292 = vtanh.pop %v2244
    %v2293 = vtanh.pop %v2245
    %v2294 = vtanh.pop %v2246
    %v2295 = vtanh.pop %v2247
    %v2296 = vtanh.pop %v2248
    %v2297 = vtanh.pop %v2249
    %v2298 = vtanh.pop %v2250
    %v2299 = vtanh.pop %v2251
    %v2300 = vtanh.pop %v2252
    %v2301 = vtanh.pop %v2253
    %v2302 = vtanh.pop %v2254
    %v2303 = vtanh.pop %v2255
    %v2304 = vtanh.pop %v2256
    %v2305 = vtanh.pop %v2257
    %v2306 = vtanh.pop %v2258
    %v2307 = vtanh.pop %v2259
    %v2308 = vtanh.pop %v2260
    %v2309 = vtanh.pop %v2261
    %v2310 = vtanh.pop %v2262
    %v2311 = vtanh.pop %v2263
    %v2312 = vtanh.pop %v2264
    %v2313 = vtanh.pop %v2265
    %v2314 = vtanh.pop %v2266
    %v2315 = vtanh.pop %v2267
    %v2316 = vtanh.pop %v2268
    %v2317 = vtanh.pop %v2269
    %v2318 = vtanh.pop %v2270
    %v2319 = vtanh.pop %v2271
    %v2320 = vtanh.pop %v2272
    %v2321 = vtanh.pop %v2273
    %v2322 = vtanh.pop %v2274
    %v2323 = vtanh.pop %v2275
    %v2324 = vtanh.pop %v2276
    %v2325 = vtanh.pop %v2277
    %v2326 = vtanh.pop %v2278
    %v2327 = vtanh.pop %v2279
    %v2328 = vtanh.pop %v2280
    %v2329 = vtanh.pop %v2281
    %v2330 = vtanh.pop %v2282
    %v2331 = vtanh.pop %v2283
    %v2380 = vcombine.low %v2284, %v2285
    %v2381 = vcombine.high %v2284, %v2285
    %v2383 = vunpack.c.l.s4 1983009808
    %v2384 = vunpack.c.0.s8 %v2383
    %v2385 = vlaneseq
    %v2386 = vshrl.u32 %v2385, 7
    %v2387 = vsub.s32 %v2384, %v2386
    %v2388 = vrot.slane %v2380, %v2387
    %v2390 = vunpack.c.l.s4 1983009808
    %v2391 = vunpack.c.0.s8 %v2390
    %v2392 = vlaneseq
    %v2393 = vshrl.u32 %v2392, 7
    %v2394 = vsub.s32 %v2391, %v2393
    %v2395 = vrot.slane %v2381, %v2394
    %v2396 = vcombine.high %v2388, %v2388
    %v2397 = vcombine.high %v2395, %v2395
    %v2398 = vcombine.low %v2286, %v2287
    %v2399 = vcombine.high %v2286, %v2287
    %v2401 = vunpack.c.l.s4 1983009808
    %v2402 = vunpack.c.0.s8 %v2401
    %v2403 = vlaneseq
    %v2404 = vshrl.u32 %v2403, 7
    %v2405 = vsub.s32 %v2402, %v2404
    %v2406 = vrot.slane %v2398, %v2405
    %v2408 = vunpack.c.l.s4 1983009808
    %v2409 = vunpack.c.0.s8 %v2408
    %v2410 = vlaneseq
    %v2411 = vshrl.u32 %v2410, 7
    %v2412 = vsub.s32 %v2409, %v2411
    %v2413 = vrot.slane %v2399, %v2412
    %v2414 = vcombine.high %v2406, %v2406
    %v2415 = vcombine.high %v2413, %v2413
    %v2416 = vcombine.low %v2288, %v2289
    %v2417 = vcombine.high %v2288, %v2289
    %v2419 = vunpack.c.l.s4 1983009808
    %v2420 = vunpack.c.0.s8 %v2419
    %v2421 = vlaneseq
    %v2422 = vshrl.u32 %v2421, 7
    %v2423 = vsub.s32 %v2420, %v2422
    %v2424 = vrot.slane %v2416, %v2423
    %v2426 = vunpack.c.l.s4 1983009808
    %v2427 = vunpack.c.0.s8 %v2426
    %v2428 = vlaneseq
    %v2429 = vshrl.u32 %v2428, 7
    %v2430 = vsub.s32 %v2427, %v2429
    %v2431 = vrot.slane %v2417, %v2430
    %v2432 = vcombine.high %v2424, %v2424
    %v2433 = vcombine.high %v2431, %v2431
    %v2434 = vcombine.low %v2290, %v2291
    %v2435 = vcombine.high %v2290, %v2291
    %v2437 = vunpack.c.l.s4 1983009808
    %v2438 = vunpack.c.0.s8 %v2437
    %v2439 = vlaneseq
    %v2440 = vshrl.u32 %v2439, 7
    %v2441 = vsub.s32 %v2438, %v2440
    %v2442 = vrot.slane %v2434, %v2441
    %v2444 = vunpack.c.l.s4 1983009808
    %v2445 = vunpack.c.0.s8 %v2444
    %v2446 = vlaneseq
    %v2447 = vshrl.u32 %v2446, 7
    %v2448 = vsub.s32 %v2445, %v2447
    %v2449 = vrot.slane %v2435, %v2448
    %v2450 = vcombine.high %v2442, %v2442
    %v2451 = vcombine.high %v2449, %v2449
    %v2452 = vcombine.low %v2292, %v2293
    %v2453 = vcombine.high %v2292, %v2293
    %v2455 = vunpack.c.l.s4 1983009808
    %v2456 = vunpack.c.0.s8 %v2455
    %v2457 = vlaneseq
    %v2458 = vshrl.u32 %v2457, 7
    %v2459 = vsub.s32 %v2456, %v2458
    %v2460 = vrot.slane %v2452, %v2459
    %v2462 = vunpack.c.l.s4 1983009808
    %v2463 = vunpack.c.0.s8 %v2462
    %v2464 = vlaneseq
    %v2465 = vshrl.u32 %v2464, 7
    %v2466 = vsub.s32 %v2463, %v2465
    %v2467 = vrot.slane %v2453, %v2466
    %v2468 = vcombine.high %v2460, %v2460
    %v2469 = vcombine.high %v2467, %v2467
    %v2470 = vcombine.low %v2294, %v2295
    %v2471 = vcombine.high %v2294, %v2295
    %v2473 = vunpack.c.l.s4 1983009808
    %v2474 = vunpack.c.0.s8 %v2473
    %v2475 = vlaneseq
    %v2476 = vshrl.u32 %v2475, 7
    %v2477 = vsub.s32 %v2474, %v2476
    %v2478 = vrot.slane %v2470, %v2477
    %v2480 = vunpack.c.l.s4 1983009808
    %v2481 = vunpack.c.0.s8 %v2480
    %v2482 = vlaneseq
    %v2483 = vshrl.u32 %v2482, 7
    %v2484 = vsub.s32 %v2481, %v2483
    %v2485 = vrot.slane %v2471, %v2484
    %v2486 = vcombine.high %v2478, %v2478
    %v2487 = vcombine.high %v2485, %v2485
    %v2488 = vcombine.low %v2296, %v2297
    %v2489 = vcombine.high %v2296, %v2297
    %v2491 = vunpack.c.l.s4 1983009808
    %v2492 = vunpack.c.0.s8 %v2491
    %v2493 = vlaneseq
    %v2494 = vshrl.u32 %v2493, 7
    %v2495 = vsub.s32 %v2492, %v2494
    %v2496 = vrot.slane %v2488, %v2495
    %v2498 = vunpack.c.l.s4 1983009808
    %v2499 = vunpack.c.0.s8 %v2498
    %v2500 = vlaneseq
    %v2501 = vshrl.u32 %v2500, 7
    %v2502 = vsub.s32 %v2499, %v2501
    %v2503 = vrot.slane %v2489, %v2502
    %v2504 = vcombine.high %v2496, %v2496
    %v2505 = vcombine.high %v2503, %v2503
    %v2506 = vcombine.low %v2298, %v2299
    %v2507 = vcombine.high %v2298, %v2299
    %v2509 = vunpack.c.l.s4 1983009808
    %v2510 = vunpack.c.0.s8 %v2509
    %v2511 = vlaneseq
    %v2512 = vshrl.u32 %v2511, 7
    %v2513 = vsub.s32 %v2510, %v2512
    %v2514 = vrot.slane %v2506, %v2513
    %v2516 = vunpack.c.l.s4 1983009808
    %v2517 = vunpack.c.0.s8 %v2516
    %v2518 = vlaneseq
    %v2519 = vshrl.u32 %v2518, 7
    %v2520 = vsub.s32 %v2517, %v2519
    %v2521 = vrot.slane %v2507, %v2520
    %v2522 = vcombine.high %v2514, %v2514
    %v2523 = vcombine.high %v2521, %v2521
    %v2524 = vcombine.low %v2300, %v2301
    %v2525 = vcombine.high %v2300, %v2301
    %v2527 = vunpack.c.l.s4 1983009808
    %v2528 = vunpack.c.0.s8 %v2527
    %v2529 = vlaneseq
    %v2530 = vshrl.u32 %v2529, 7
    %v2531 = vsub.s32 %v2528, %v2530
    %v2532 = vrot.slane %v2524, %v2531
    %v2534 = vunpack.c.l.s4 1983009808
    %v2535 = vunpack.c.0.s8 %v2534
    %v2536 = vlaneseq
    %v2537 = vshrl.u32 %v2536, 7
    %v2538 = vsub.s32 %v2535, %v2537
    %v2539 = vrot.slane %v2525, %v2538
    %v2540 = vcombine.high %v2532, %v2532
    %v2541 = vcombine.high %v2539, %v2539
    %v2542 = vcombine.low %v2302, %v2303
    %v2543 = vcombine.high %v2302, %v2303
    %v2545 = vunpack.c.l.s4 1983009808
    %v2546 = vunpack.c.0.s8 %v2545
    %v2547 = vlaneseq
    %v2548 = vshrl.u32 %v2547, 7
    %v2549 = vsub.s32 %v2546, %v2548
    %v2550 = vrot.slane %v2542, %v2549
    %v2552 = vunpack.c.l.s4 1983009808
    %v2553 = vunpack.c.0.s8 %v2552
    %v2554 = vlaneseq
    %v2555 = vshrl.u32 %v2554, 7
    %v2556 = vsub.s32 %v2553, %v2555
    %v2557 = vrot.slane %v2543, %v2556
    %v2558 = vcombine.high %v2550, %v2550
    %v2559 = vcombine.high %v2557, %v2557
    %v2560 = vcombine.low %v2304, %v2305
    %v2561 = vcombine.high %v2304, %v2305
    %v2563 = vunpack.c.l.s4 1983009808
    %v2564 = vunpack.c.0.s8 %v2563
    %v2565 = vlaneseq
    %v2566 = vshrl.u32 %v2565, 7
    %v2567 = vsub.s32 %v2564, %v2566
    %v2568 = vrot.slane %v2560, %v2567
    %v2570 = vunpack.c.l.s4 1983009808
    %v2571 = vunpack.c.0.s8 %v2570
    %v2572 = vlaneseq
    %v2573 = vshrl.u32 %v2572, 7
    %v2574 = vsub.s32 %v2571, %v2573
    %v2575 = vrot.slane %v2561, %v2574
    %v2576 = vcombine.high %v2568, %v2568
    %v2577 = vcombine.high %v2575, %v2575
    %v2578 = vcombine.low %v2306, %v2307
    %v2579 = vcombine.high %v2306, %v2307
    %v2581 = vunpack.c.l.s4 1983009808
    %v2582 = vunpack.c.0.s8 %v2581
    %v2583 = vlaneseq
    %v2584 = vshrl.u32 %v2583, 7
    %v2585 = vsub.s32 %v2582, %v2584
    %v2586 = vrot.slane %v2578, %v2585
    %v2588 = vunpack.c.l.s4 1983009808
    %v2589 = vunpack.c.0.s8 %v2588
    %v2590 = vlaneseq
    %v2591 = vshrl.u32 %v2590, 7
    %v2592 = vsub.s32 %v2589, %v2591
    %v2593 = vrot.slane %v2579, %v2592
    %v2594 = vcombine.high %v2586, %v2586
    %v2595 = vcombine.high %v2593, %v2593
    %v2596 = vcombine.low %v2308, %v2309
    %v2597 = vcombine.high %v2308, %v2309
    %v2599 = vunpack.c.l.s4 1983009808
    %v2600 = vunpack.c.0.s8 %v2599
    %v2601 = vlaneseq
    %v2602 = vshrl.u32 %v2601, 7
    %v2603 = vsub.s32 %v2600, %v2602
    %v2604 = vrot.slane %v2596, %v2603
    %v2606 = vunpack.c.l.s4 1983009808
    %v2607 = vunpack.c.0.s8 %v2606
    %v2608 = vlaneseq
    %v2609 = vshrl.u32 %v2608, 7
    %v2610 = vsub.s32 %v2607, %v2609
    %v2611 = vrot.slane %v2597, %v2610
    %v2612 = vcombine.high %v2604, %v2604
    %v2613 = vcombine.high %v2611, %v2611
    %v2614 = vcombine.low %v2310, %v2311
    %v2615 = vcombine.high %v2310, %v2311
    %v2617 = vunpack.c.l.s4 1983009808
    %v2618 = vunpack.c.0.s8 %v2617
    %v2619 = vlaneseq
    %v2620 = vshrl.u32 %v2619, 7
    %v2621 = vsub.s32 %v2618, %v2620
    %v2622 = vrot.slane %v2614, %v2621
    %v2624 = vunpack.c.l.s4 1983009808
    %v2625 = vunpack.c.0.s8 %v2624
    %v2626 = vlaneseq
    %v2627 = vshrl.u32 %v2626, 7
    %v2628 = vsub.s32 %v2625, %v2627
    %v2629 = vrot.slane %v2615, %v2628
    %v2630 = vcombine.high %v2622, %v2622
    %v2631 = vcombine.high %v2629, %v2629
    %v2632 = vcombine.low %v2312, %v2313
    %v2633 = vcombine.high %v2312, %v2313
    %v2635 = vunpack.c.l.s4 1983009808
    %v2636 = vunpack.c.0.s8 %v2635
    %v2637 = vlaneseq
    %v2638 = vshrl.u32 %v2637, 7
    %v2639 = vsub.s32 %v2636, %v2638
    %v2640 = vrot.slane %v2632, %v2639
    %v2642 = vunpack.c.l.s4 1983009808
    %v2643 = vunpack.c.0.s8 %v2642
    %v2644 = vlaneseq
    %v2645 = vshrl.u32 %v2644, 7
    %v2646 = vsub.s32 %v2643, %v2645
    %v2647 = vrot.slane %v2633, %v2646
    %v2648 = vcombine.high %v2640, %v2640
    %v2649 = vcombine.high %v2647, %v2647
    %v2650 = vcombine.low %v2314, %v2315
    %v2651 = vcombine.high %v2314, %v2315
    %v2653 = vunpack.c.l.s4 1983009808
    %v2654 = vunpack.c.0.s8 %v2653
    %v2655 = vlaneseq
    %v2656 = vshrl.u32 %v2655, 7
    %v2657 = vsub.s32 %v2654, %v2656
    %v2658 = vrot.slane %v2650, %v2657
    %v2660 = vunpack.c.l.s4 1983009808
    %v2661 = vunpack.c.0.s8 %v2660
    %v2662 = vlaneseq
    %v2663 = vshrl.u32 %v2662, 7
    %v2664 = vsub.s32 %v2661, %v2663
    %v2665 = vrot.slane %v2651, %v2664
    %v2666 = vcombine.high %v2658, %v2658
    %v2667 = vcombine.high %v2665, %v2665
    %v2668 = vcombine.low %v2316, %v2317
    %v2669 = vcombine.high %v2316, %v2317
    %v2671 = vunpack.c.l.s4 1983009808
    %v2672 = vunpack.c.0.s8 %v2671
    %v2673 = vlaneseq
    %v2674 = vshrl.u32 %v2673, 7
    %v2675 = vsub.s32 %v2672, %v2674
    %v2676 = vrot.slane %v2668, %v2675
    %v2678 = vunpack.c.l.s4 1983009808
    %v2679 = vunpack.c.0.s8 %v2678
    %v2680 = vlaneseq
    %v2681 = vshrl.u32 %v2680, 7
    %v2682 = vsub.s32 %v2679, %v2681
    %v2683 = vrot.slane %v2669, %v2682
    %v2684 = vcombine.high %v2676, %v2676
    %v2685 = vcombine.high %v2683, %v2683
    %v2686 = vcombine.low %v2318, %v2319
    %v2687 = vcombine.high %v2318, %v2319
    %v2689 = vunpack.c.l.s4 1983009808
    %v2690 = vunpack.c.0.s8 %v2689
    %v2691 = vlaneseq
    %v2692 = vshrl.u32 %v2691, 7
    %v2693 = vsub.s32 %v2690, %v2692
    %v2694 = vrot.slane %v2686, %v2693
    %v2696 = vunpack.c.l.s4 1983009808
    %v2697 = vunpack.c.0.s8 %v2696
    %v2698 = vlaneseq
    %v2699 = vshrl.u32 %v2698, 7
    %v2700 = vsub.s32 %v2697, %v2699
    %v2701 = vrot.slane %v2687, %v2700
    %v2702 = vcombine.high %v2694, %v2694
    %v2703 = vcombine.high %v2701, %v2701
    %v2704 = vcombine.low %v2320, %v2321
    %v2705 = vcombine.high %v2320, %v2321
    %v2707 = vunpack.c.l.s4 1983009808
    %v2708 = vunpack.c.0.s8 %v2707
    %v2709 = vlaneseq
    %v2710 = vshrl.u32 %v2709, 7
    %v2711 = vsub.s32 %v2708, %v2710
    %v2712 = vrot.slane %v2704, %v2711
    %v2714 = vunpack.c.l.s4 1983009808
    %v2715 = vunpack.c.0.s8 %v2714
    %v2716 = vlaneseq
    %v2717 = vshrl.u32 %v2716, 7
    %v2718 = vsub.s32 %v2715, %v2717
    %v2719 = vrot.slane %v2705, %v2718
    %v2720 = vcombine.high %v2712, %v2712
    %v2721 = vcombine.high %v2719, %v2719
    %v2722 = vcombine.low %v2322, %v2323
    %v2723 = vcombine.high %v2322, %v2323
    %v2725 = vunpack.c.l.s4 1983009808
    %v2726 = vunpack.c.0.s8 %v2725
    %v2727 = vlaneseq
    %v2728 = vshrl.u32 %v2727, 7
    %v2729 = vsub.s32 %v2726, %v2728
    %v2730 = vrot.slane %v2722, %v2729
    %v2732 = vunpack.c.l.s4 1983009808
    %v2733 = vunpack.c.0.s8 %v2732
    %v2734 = vlaneseq
    %v2735 = vshrl.u32 %v2734, 7
    %v2736 = vsub.s32 %v2733, %v2735
    %v2737 = vrot.slane %v2723, %v2736
    %v2738 = vcombine.high %v2730, %v2730
    %v2739 = vcombine.high %v2737, %v2737
    %v2740 = vcombine.low %v2324, %v2325
    %v2741 = vcombine.high %v2324, %v2325
    %v2743 = vunpack.c.l.s4 1983009808
    %v2744 = vunpack.c.0.s8 %v2743
    %v2745 = vlaneseq
    %v2746 = vshrl.u32 %v2745, 7
    %v2747 = vsub.s32 %v2744, %v2746
    %v2748 = vrot.slane %v2740, %v2747
    %v2750 = vunpack.c.l.s4 1983009808
    %v2751 = vunpack.c.0.s8 %v2750
    %v2752 = vlaneseq
    %v2753 = vshrl.u32 %v2752, 7
    %v2754 = vsub.s32 %v2751, %v2753
    %v2755 = vrot.slane %v2741, %v2754
    %v2756 = vcombine.high %v2748, %v2748
    %v2757 = vcombine.high %v2755, %v2755
    %v2758 = vcombine.low %v2326, %v2327
    %v2759 = vcombine.high %v2326, %v2327
    %v2761 = vunpack.c.l.s4 1983009808
    %v2762 = vunpack.c.0.s8 %v2761
    %v2763 = vlaneseq
    %v2764 = vshrl.u32 %v2763, 7
    %v2765 = vsub.s32 %v2762, %v2764
    %v2766 = vrot.slane %v2758, %v2765
    %v2768 = vunpack.c.l.s4 1983009808
    %v2769 = vunpack.c.0.s8 %v2768
    %v2770 = vlaneseq
    %v2771 = vshrl.u32 %v2770, 7
    %v2772 = vsub.s32 %v2769, %v2771
    %v2773 = vrot.slane %v2759, %v2772
    %v2774 = vcombine.high %v2766, %v2766
    %v2775 = vcombine.high %v2773, %v2773
    %v2776 = vcombine.low %v2328, %v2329
    %v2777 = vcombine.high %v2328, %v2329
    %v2779 = vunpack.c.l.s4 1983009808
    %v2780 = vunpack.c.0.s8 %v2779
    %v2781 = vlaneseq
    %v2782 = vshrl.u32 %v2781, 7
    %v2783 = vsub.s32 %v2780, %v2782
    %v2784 = vrot.slane %v2776, %v2783
    %v2786 = vunpack.c.l.s4 1983009808
    %v2787 = vunpack.c.0.s8 %v2786
    %v2788 = vlaneseq
    %v2789 = vshrl.u32 %v2788, 7
    %v2790 = vsub.s32 %v2787, %v2789
    %v2791 = vrot.slane %v2777, %v2790
    %v2792 = vcombine.high %v2784, %v2784
    %v2793 = vcombine.high %v2791, %v2791
    %v2794 = vcombine.low %v2330, %v2331
    %v2795 = vcombine.high %v2330, %v2331
    %v2797 = vunpack.c.l.s4 1983009808
    %v2798 = vunpack.c.0.s8 %v2797
    %v2799 = vlaneseq
    %v2800 = vshrl.u32 %v2799, 7
    %v2801 = vsub.s32 %v2798, %v2800
    %v2802 = vrot.slane %v2794, %v2801
    %v2804 = vunpack.c.l.s4 1983009808
    %v2805 = vunpack.c.0.s8 %v2804
    %v2806 = vlaneseq
    %v2807 = vshrl.u32 %v2806, 7
    %v2808 = vsub.s32 %v2805, %v2807
    %v2809 = vrot.slane %v2795, %v2808
    %v2810 = vcombine.high %v2802, %v2802
    %v2811 = vcombine.high %v2809, %v2809
    %v2908 = vrot.slane %v2388, 7
    %v2909 = vrot.slane %v2908, 2
    %v2910 = vrot.slane %v2396, 7
    %v2911 = vrot.slane %v2910, 2
    %v2912 = vrot.slane %v2395, 7
    %v2913 = vrot.slane %v2912, 2
    %v2914 = vrot.slane %v2397, 7
    %v2915 = vrot.slane %v2914, 2
    %v2916 = vrot.slane %v2406, 7
    %v2917 = vrot.slane %v2916, 2
    %v2918 = vrot.slane %v2414, 7
    %v2919 = vrot.slane %v2918, 2
    %v2920 = vrot.slane %v2413, 7
    %v2921 = vrot.slane %v2920, 2
    %v2922 = vrot.slane %v2415, 7
    %v2923 = vrot.slane %v2922, 2
    %v2924 = vrot.slane %v2424, 7
    %v2925 = vrot.slane %v2924, 2
    %v2926 = vrot.slane %v2432, 7
    %v2927 = vrot.slane %v2926, 2
    %v2928 = vrot.slane %v2431, 7
    %v2929 = vrot.slane %v2928, 2
    %v2930 = vrot.slane %v2433, 7
    %v2931 = vrot.slane %v2930, 2
    %v2932 = vrot.slane %v2442, 7
    %v2933 = vrot.slane %v2932, 2
    %v2934 = vrot.slane %v2450, 7
    %v2935 = vrot.slane %v2934, 2
    %v2936 = vrot.slane %v2449, 7
    %v2937 = vrot.slane %v2936, 2
    %v2938 = vrot.slane %v2451, 7
    %v2939 = vrot.slane %v2938, 2
    %v2940 = vrot.slane %v2460, 7
    %v2941 = vrot.slane %v2940, 2
    %v2942 = vrot.slane %v2468, 7
    %v2943 = vrot.slane %v2942, 2
    %v2944 = vrot.slane %v2467, 7
    %v2945 = vrot.slane %v2944, 2
    %v2946 = vrot.slane %v2469, 7
    %v2947 = vrot.slane %v2946, 2
    %v2948 = vrot.slane %v2478, 7
    %v2949 = vrot.slane %v2948, 2
    %v2950 = vrot.slane %v2486, 7
    %v2951 = vrot.slane %v2950, 2
    %v2952 = vrot.slane %v2485, 7
    %v2953 = vrot.slane %v2952, 2
    %v2954 = vrot.slane %v2487, 7
    %v2955 = vrot.slane %v2954, 2
    %v2956 = vrot.slane %v2496, 7
    %v2957 = vrot.slane %v2956, 2
    %v2958 = vrot.slane %v2504, 7
    %v2959 = vrot.slane %v2958, 2
    %v2960 = vrot.slane %v2503, 7
    %v2961 = vrot.slane %v2960, 2
    %v2962 = vrot.slane %v2505, 7
    %v2963 = vrot.slane %v2962, 2
    %v2964 = vrot.slane %v2514, 7
    %v2965 = vrot.slane %v2964, 2
    %v2966 = vrot.slane %v2522, 7
    %v2967 = vrot.slane %v2966, 2
    %v2968 = vrot.slane %v2521, 7
    %v2969 = vrot.slane %v2968, 2
    %v2970 = vrot.slane %v2523, 7
    %v2971 = vrot.slane %v2970, 2
    %v2972 = vrot.slane %v2532, 7
    %v2973 = vrot.slane %v2972, 2
    %v2974 = vrot.slane %v2540, 7
    %v2975 = vrot.slane %v2974, 2
    %v2976 = vrot.slane %v2539, 7
    %v2977 = vrot.slane %v2976, 2
    %v2978 = vrot.slane %v2541, 7
    %v2979 = vrot.slane %v2978, 2
    %v2980 = vrot.slane %v2550, 7
    %v2981 = vrot.slane %v2980, 2
    %v2982 = vrot.slane %v2558, 7
    %v2983 = vrot.slane %v2982, 2
    %v2984 = vrot.slane %v2557, 7
    %v2985 = vrot.slane %v2984, 2
    %v2986 = vrot.slane %v2559, 7
    %v2987 = vrot.slane %v2986, 2
    %v2988 = vrot.slane %v2568, 7
    %v2989 = vrot.slane %v2988, 2
    %v2990 = vrot.slane %v2576, 7
    %v2991 = vrot.slane %v2990, 2
    %v2992 = vrot.slane %v2575, 7
    %v2993 = vrot.slane %v2992, 2
    %v2994 = vrot.slane %v2577, 7
    %v2995 = vrot.slane %v2994, 2
    %v2996 = vrot.slane %v2586, 7
    %v2997 = vrot.slane %v2996, 2
    %v2998 = vrot.slane %v2594, 7
    %v2999 = vrot.slane %v2998, 2
    %v3000 = vrot.slane %v2593, 7
    %v3001 = vrot.slane %v3000, 2
    %v3002 = vrot.slane %v2595, 7
    %v3003 = vrot.slane %v3002, 2
    %v3004 = vrot.slane %v2604, 7
    %v3005 = vrot.slane %v3004, 2
    %v3006 = vrot.slane %v2612, 7
    %v3007 = vrot.slane %v3006, 2
    %v3008 = vrot.slane %v2611, 7
    %v3009 = vrot.slane %v3008, 2
    %v3010 = vrot.slane %v2613, 7
    %v3011 = vrot.slane %v3010, 2
    %v3012 = vrot.slane %v2622, 7
    %v3013 = vrot.slane %v3012, 2
    %v3014 = vrot.slane %v2630, 7
    %v3015 = vrot.slane %v3014, 2
    %v3016 = vrot.slane %v2629, 7
    %v3017 = vrot.slane %v3016, 2
    %v3018 = vrot.slane %v2631, 7
    %v3019 = vrot.slane %v3018, 2
    %v3020 = vrot.slane %v2640, 7
    %v3021 = vrot.slane %v3020, 2
    %v3022 = vrot.slane %v2648, 7
    %v3023 = vrot.slane %v3022, 2
    %v3024 = vrot.slane %v2647, 7
    %v3025 = vrot.slane %v3024, 2
    %v3026 = vrot.slane %v2649, 7
    %v3027 = vrot.slane %v3026, 2
    %v3028 = vrot.slane %v2658, 7
    %v3029 = vrot.slane %v3028, 2
    %v3030 = vrot.slane %v2666, 7
    %v3031 = vrot.slane %v3030, 2
    %v3032 = vrot.slane %v2665, 7
    %v3033 = vrot.slane %v3032, 2
    %v3034 = vrot.slane %v2667, 7
    %v3035 = vrot.slane %v3034, 2
    %v3036 = vrot.slane %v2676, 7
    %v3037 = vrot.slane %v3036, 2
    %v3038 = vrot.slane %v2684, 7
    %v3039 = vrot.slane %v3038, 2
    %v3040 = vrot.slane %v2683, 7
    %v3041 = vrot.slane %v3040, 2
    %v3042 = vrot.slane %v2685, 7
    %v3043 = vrot.slane %v3042, 2
    %v3044 = vrot.slane %v2694, 7
    %v3045 = vrot.slane %v3044, 2
    %v3046 = vrot.slane %v2702, 7
    %v3047 = vrot.slane %v3046, 2
    %v3048 = vrot.slane %v2701, 7
    %v3049 = vrot.slane %v3048, 2
    %v3050 = vrot.slane %v2703, 7
    %v3051 = vrot.slane %v3050, 2
    %v3052 = vrot.slane %v2712, 7
    %v3053 = vrot.slane %v3052, 2
    %v3054 = vrot.slane %v2720, 7
    %v3055 = vrot.slane %v3054, 2
    %v3056 = vrot.slane %v2719, 7
    %v3057 = vrot.slane %v3056, 2
    %v3058 = vrot.slane %v2721, 7
    %v3059 = vrot.slane %v3058, 2
    %v3060 = vrot.slane %v2730, 7
    %v3061 = vrot.slane %v3060, 2
    %v3062 = vrot.slane %v2738, 7
    %v3063 = vrot.slane %v3062, 2
    %v3064 = vrot.slane %v2737, 7
    %v3065 = vrot.slane %v3064, 2
    %v3066 = vrot.slane %v2739, 7
    %v3067 = vrot.slane %v3066, 2
    %v3068 = vrot.slane %v2748, 7
    %v3069 = vrot.slane %v3068, 2
    %v3070 = vrot.slane %v2756, 7
    %v3071 = vrot.slane %v3070, 2
    %v3072 = vrot.slane %v2755, 7
    %v3073 = vrot.slane %v3072, 2
    %v3074 = vrot.slane %v2757, 7
    %v3075 = vrot.slane %v3074, 2
    %v3076 = vrot.slane %v2766, 7
    %v3077 = vrot.slane %v3076, 2
    %v3078 = vrot.slane %v2774, 7
    %v3079 = vrot.slane %v3078, 2
    %v3080 = vrot.slane %v2773, 7
    %v3081 = vrot.slane %v3080, 2
    %v3082 = vrot.slane %v2775, 7
    %v3083 = vrot.slane %v3082, 2
    %v3084 = vrot.slane %v2784, 7
    %v3085 = vrot.slane %v3084, 2
    %v3086 = vrot.slane %v2792, 7
    %v3087 = vrot.slane %v3086, 2
    %v3088 = vrot.slane %v2791, 7
    %v3089 = vrot.slane %v3088, 2
    %v3090 = vrot.slane %v2793, 7
    %v3091 = vrot.slane %v3090, 2
    %v3092 = vrot.slane %v2802, 7
    %v3093 = vrot.slane %v3092, 2
    %v3094 = vrot.slane %v2810, 7
    %v3095 = vrot.slane %v3094, 2
    %v3096 = vrot.slane %v2809, 7
    %v3097 = vrot.slane %v3096, 2
    %v3098 = vrot.slane %v2811, 7
    %v3099 = vrot.slane %v3098, 2
    %v3196 = vadd.f32 %v2388, %v2909
    %v3197 = vadd.f32 %v2396, %v2911
    %v3198 = vadd.f32 %v2395, %v2913
    %v3199 = vadd.f32 %v2397, %v2915
    %v3200 = vadd.f32 %v2406, %v2917
    %v3201 = vadd.f32 %v2414, %v2919
    %v3202 = vadd.f32 %v2413, %v2921
    %v3203 = vadd.f32 %v2415, %v2923
    %v3204 = vadd.f32 %v2424, %v2925
    %v3205 = vadd.f32 %v2432, %v2927
    %v3206 = vadd.f32 %v2431, %v2929
    %v3207 = vadd.f32 %v2433, %v2931
    %v3208 = vadd.f32 %v2442, %v2933
    %v3209 = vadd.f32 %v2450, %v2935
    %v3210 = vadd.f32 %v2449, %v2937
    %v3211 = vadd.f32 %v2451, %v2939
    %v3212 = vadd.f32 %v2460, %v2941
    %v3213 = vadd.f32 %v2468, %v2943
    %v3214 = vadd.f32 %v2467, %v2945
    %v3215 = vadd.f32 %v2469, %v2947
    %v3216 = vadd.f32 %v2478, %v2949
    %v3217 = vadd.f32 %v2486, %v2951
    %v3218 = vadd.f32 %v2485, %v2953
    %v3219 = vadd.f32 %v2487, %v2955
    %v3220 = vadd.f32 %v2496, %v2957
    %v3221 = vadd.f32 %v2504, %v2959
    %v3222 = vadd.f32 %v2503, %v2961
    %v3223 = vadd.f32 %v2505, %v2963
    %v3224 = vadd.f32 %v2514, %v2965
    %v3225 = vadd.f32 %v2522, %v2967
    %v3226 = vadd.f32 %v2521, %v2969
    %v3227 = vadd.f32 %v2523, %v2971
    %v3228 = vadd.f32 %v2532, %v2973
    %v3229 = vadd.f32 %v2540, %v2975
    %v3230 = vadd.f32 %v2539, %v2977
    %v3231 = vadd.f32 %v2541, %v2979
    %v3232 = vadd.f32 %v2550, %v2981
    %v3233 = vadd.f32 %v2558, %v2983
    %v3234 = vadd.f32 %v2557, %v2985
    %v3235 = vadd.f32 %v2559, %v2987
    %v3236 = vadd.f32 %v2568, %v2989
    %v3237 = vadd.f32 %v2576, %v2991
    %v3238 = vadd.f32 %v2575, %v2993
    %v3239 = vadd.f32 %v2577, %v2995
    %v3240 = vadd.f32 %v2586, %v2997
    %v3241 = vadd.f32 %v2594, %v2999
    %v3242 = vadd.f32 %v2593, %v3001
    %v3243 = vadd.f32 %v2595, %v3003
    %v3244 = vadd.f32 %v2604, %v3005
    %v3245 = vadd.f32 %v2612, %v3007
    %v3246 = vadd.f32 %v2611, %v3009
    %v3247 = vadd.f32 %v2613, %v3011
    %v3248 = vadd.f32 %v2622, %v3013
    %v3249 = vadd.f32 %v2630, %v3015
    %v3250 = vadd.f32 %v2629, %v3017
    %v3251 = vadd.f32 %v2631, %v3019
    %v3252 = vadd.f32 %v2640, %v3021
    %v3253 = vadd.f32 %v2648, %v3023
    %v3254 = vadd.f32 %v2647, %v3025
    %v3255 = vadd.f32 %v2649, %v3027
    %v3256 = vadd.f32 %v2658, %v3029
    %v3257 = vadd.f32 %v2666, %v3031
    %v3258 = vadd.f32 %v2665, %v3033
    %v3259 = vadd.f32 %v2667, %v3035
    %v3260 = vadd.f32 %v2676, %v3037
    %v3261 = vadd.f32 %v2684, %v3039
    %v3262 = vadd.f32 %v2683, %v3041
    %v3263 = vadd.f32 %v2685, %v3043
    %v3264 = vadd.f32 %v2694, %v3045
    %v3265 = vadd.f32 %v2702, %v3047
    %v3266 = vadd.f32 %v2701, %v3049
    %v3267 = vadd.f32 %v2703, %v3051
    %v3268 = vadd.f32 %v2712, %v3053
    %v3269 = vadd.f32 %v2720, %v3055
    %v3270 = vadd.f32 %v2719, %v3057
    %v3271 = vadd.f32 %v2721, %v3059
    %v3272 = vadd.f32 %v2730, %v3061
    %v3273 = vadd.f32 %v2738, %v3063
    %v3274 = vadd.f32 %v2737, %v3065
    %v3275 = vadd.f32 %v2739, %v3067
    %v3276 = vadd.f32 %v2748, %v3069
    %v3277 = vadd.f32 %v2756, %v3071
    %v3278 = vadd.f32 %v2755, %v3073
    %v3279 = vadd.f32 %v2757, %v3075
    %v3280 = vadd.f32 %v2766, %v3077
    %v3281 = vadd.f32 %v2774, %v3079
    %v3282 = vadd.f32 %v2773, %v3081
    %v3283 = vadd.f32 %v2775, %v3083
    %v3284 = vadd.f32 %v2784, %v3085
    %v3285 = vadd.f32 %v2792, %v3087
    %v3286 = vadd.f32 %v2791, %v3089
    %v3287 = vadd.f32 %v2793, %v3091
    %v3288 = vadd.f32 %v2802, %v3093
    %v3289 = vadd.f32 %v2810, %v3095
    %v3290 = vadd.f32 %v2809, %v3097
    %v3291 = vadd.f32 %v2811, %v3099
    %v3388 = vlaneseq
    %v3389 = vshrl.u32 %v3388, 7
    %v3390 = vsub.s32 0, %v3389
    %v3391 = vrot.slane %v3196, %v3390
    %v3392 = vlaneseq
    %v3393 = vshrl.u32 %v3392, 7
    %v3394 = vsub.s32 2, %v3393
    %v3395 = vrot.slane %v3196, %v3394
    %v3396 = vlaneseq
    %v3397 = vshrl.u32 %v3396, 7
    %v3398 = vsub.s32 0, %v3397
    %v3399 = vrot.slane %v3197, %v3398
    %v3400 = vlaneseq
    %v3401 = vshrl.u32 %v3400, 7
    %v3402 = vsub.s32 2, %v3401
    %v3403 = vrot.slane %v3197, %v3402
    %v3404 = vlaneseq
    %v3405 = vshrl.u32 %v3404, 7
    %v3406 = vsub.s32 0, %v3405
    %v3407 = vrot.slane %v3198, %v3406
    %v3408 = vlaneseq
    %v3409 = vshrl.u32 %v3408, 7
    %v3410 = vsub.s32 2, %v3409
    %v3411 = vrot.slane %v3198, %v3410
    %v3412 = vlaneseq
    %v3413 = vshrl.u32 %v3412, 7
    %v3414 = vsub.s32 0, %v3413
    %v3415 = vrot.slane %v3199, %v3414
    %v3416 = vlaneseq
    %v3417 = vshrl.u32 %v3416, 7
    %v3418 = vsub.s32 2, %v3417
    %v3419 = vrot.slane %v3199, %v3418
    %v3420 = vlaneseq
    %v3421 = vshrl.u32 %v3420, 7
    %v3422 = vsub.s32 0, %v3421
    %v3423 = vrot.slane %v3200, %v3422
    %v3424 = vlaneseq
    %v3425 = vshrl.u32 %v3424, 7
    %v3426 = vsub.s32 2, %v3425
    %v3427 = vrot.slane %v3200, %v3426
    %v3428 = vlaneseq
    %v3429 = vshrl.u32 %v3428, 7
    %v3430 = vsub.s32 0, %v3429
    %v3431 = vrot.slane %v3201, %v3430
    %v3432 = vlaneseq
    %v3433 = vshrl.u32 %v3432, 7
    %v3434 = vsub.s32 2, %v3433
    %v3435 = vrot.slane %v3201, %v3434
    %v3436 = vlaneseq
    %v3437 = vshrl.u32 %v3436, 7
    %v3438 = vsub.s32 0, %v3437
    %v3439 = vrot.slane %v3202, %v3438
    %v3440 = vlaneseq
    %v3441 = vshrl.u32 %v3440, 7
    %v3442 = vsub.s32 2, %v3441
    %v3443 = vrot.slane %v3202, %v3442
    %v3444 = vlaneseq
    %v3445 = vshrl.u32 %v3444, 7
    %v3446 = vsub.s32 0, %v3445
    %v3447 = vrot.slane %v3203, %v3446
    %v3448 = vlaneseq
    %v3449 = vshrl.u32 %v3448, 7
    %v3450 = vsub.s32 2, %v3449
    %v3451 = vrot.slane %v3203, %v3450
    %v3452 = vlaneseq
    %v3453 = vshrl.u32 %v3452, 7
    %v3454 = vsub.s32 0, %v3453
    %v3455 = vrot.slane %v3204, %v3454
    %v3456 = vlaneseq
    %v3457 = vshrl.u32 %v3456, 7
    %v3458 = vsub.s32 2, %v3457
    %v3459 = vrot.slane %v3204, %v3458
    %v3460 = vlaneseq
    %v3461 = vshrl.u32 %v3460, 7
    %v3462 = vsub.s32 0, %v3461
    %v3463 = vrot.slane %v3205, %v3462
    %v3464 = vlaneseq
    %v3465 = vshrl.u32 %v3464, 7
    %v3466 = vsub.s32 2, %v3465
    %v3467 = vrot.slane %v3205, %v3466
    %v3468 = vlaneseq
    %v3469 = vshrl.u32 %v3468, 7
    %v3470 = vsub.s32 0, %v3469
    %v3471 = vrot.slane %v3206, %v3470
    %v3472 = vlaneseq
    %v3473 = vshrl.u32 %v3472, 7
    %v3474 = vsub.s32 2, %v3473
    %v3475 = vrot.slane %v3206, %v3474
    %v3476 = vlaneseq
    %v3477 = vshrl.u32 %v3476, 7
    %v3478 = vsub.s32 0, %v3477
    %v3479 = vrot.slane %v3207, %v3478
    %v3480 = vlaneseq
    %v3481 = vshrl.u32 %v3480, 7
    %v3482 = vsub.s32 2, %v3481
    %v3483 = vrot.slane %v3207, %v3482
    %v3484 = vlaneseq
    %v3485 = vshrl.u32 %v3484, 7
    %v3486 = vsub.s32 0, %v3485
    %v3487 = vrot.slane %v3208, %v3486
    %v3488 = vlaneseq
    %v3489 = vshrl.u32 %v3488, 7
    %v3490 = vsub.s32 2, %v3489
    %v3491 = vrot.slane %v3208, %v3490
    %v3492 = vlaneseq
    %v3493 = vshrl.u32 %v3492, 7
    %v3494 = vsub.s32 0, %v3493
    %v3495 = vrot.slane %v3209, %v3494
    %v3496 = vlaneseq
    %v3497 = vshrl.u32 %v3496, 7
    %v3498 = vsub.s32 2, %v3497
    %v3499 = vrot.slane %v3209, %v3498
    %v3500 = vlaneseq
    %v3501 = vshrl.u32 %v3500, 7
    %v3502 = vsub.s32 0, %v3501
    %v3503 = vrot.slane %v3210, %v3502
    %v3504 = vlaneseq
    %v3505 = vshrl.u32 %v3504, 7
    %v3506 = vsub.s32 2, %v3505
    %v3507 = vrot.slane %v3210, %v3506
    %v3508 = vlaneseq
    %v3509 = vshrl.u32 %v3508, 7
    %v3510 = vsub.s32 0, %v3509
    %v3511 = vrot.slane %v3211, %v3510
    %v3512 = vlaneseq
    %v3513 = vshrl.u32 %v3512, 7
    %v3514 = vsub.s32 2, %v3513
    %v3515 = vrot.slane %v3211, %v3514
    %v3516 = vlaneseq
    %v3517 = vshrl.u32 %v3516, 7
    %v3518 = vsub.s32 0, %v3517
    %v3519 = vrot.slane %v3212, %v3518
    %v3520 = vlaneseq
    %v3521 = vshrl.u32 %v3520, 7
    %v3522 = vsub.s32 2, %v3521
    %v3523 = vrot.slane %v3212, %v3522
    %v3524 = vlaneseq
    %v3525 = vshrl.u32 %v3524, 7
    %v3526 = vsub.s32 0, %v3525
    %v3527 = vrot.slane %v3213, %v3526
    %v3528 = vlaneseq
    %v3529 = vshrl.u32 %v3528, 7
    %v3530 = vsub.s32 2, %v3529
    %v3531 = vrot.slane %v3213, %v3530
    %v3532 = vlaneseq
    %v3533 = vshrl.u32 %v3532, 7
    %v3534 = vsub.s32 0, %v3533
    %v3535 = vrot.slane %v3214, %v3534
    %v3536 = vlaneseq
    %v3537 = vshrl.u32 %v3536, 7
    %v3538 = vsub.s32 2, %v3537
    %v3539 = vrot.slane %v3214, %v3538
    %v3540 = vlaneseq
    %v3541 = vshrl.u32 %v3540, 7
    %v3542 = vsub.s32 0, %v3541
    %v3543 = vrot.slane %v3215, %v3542
    %v3544 = vlaneseq
    %v3545 = vshrl.u32 %v3544, 7
    %v3546 = vsub.s32 2, %v3545
    %v3547 = vrot.slane %v3215, %v3546
    %v3548 = vlaneseq
    %v3549 = vshrl.u32 %v3548, 7
    %v3550 = vsub.s32 0, %v3549
    %v3551 = vrot.slane %v3216, %v3550
    %v3552 = vlaneseq
    %v3553 = vshrl.u32 %v3552, 7
    %v3554 = vsub.s32 2, %v3553
    %v3555 = vrot.slane %v3216, %v3554
    %v3556 = vlaneseq
    %v3557 = vshrl.u32 %v3556, 7
    %v3558 = vsub.s32 0, %v3557
    %v3559 = vrot.slane %v3217, %v3558
    %v3560 = vlaneseq
    %v3561 = vshrl.u32 %v3560, 7
    %v3562 = vsub.s32 2, %v3561
    %v3563 = vrot.slane %v3217, %v3562
    %v3564 = vlaneseq
    %v3565 = vshrl.u32 %v3564, 7
    %v3566 = vsub.s32 0, %v3565
    %v3567 = vrot.slane %v3218, %v3566
    %v3568 = vlaneseq
    %v3569 = vshrl.u32 %v3568, 7
    %v3570 = vsub.s32 2, %v3569
    %v3571 = vrot.slane %v3218, %v3570
    %v3572 = vlaneseq
    %v3573 = vshrl.u32 %v3572, 7
    %v3574 = vsub.s32 0, %v3573
    %v3575 = vrot.slane %v3219, %v3574
    %v3576 = vlaneseq
    %v3577 = vshrl.u32 %v3576, 7
    %v3578 = vsub.s32 2, %v3577
    %v3579 = vrot.slane %v3219, %v3578
    %v3580 = vlaneseq
    %v3581 = vshrl.u32 %v3580, 7
    %v3582 = vsub.s32 0, %v3581
    %v3583 = vrot.slane %v3220, %v3582
    %v3584 = vlaneseq
    %v3585 = vshrl.u32 %v3584, 7
    %v3586 = vsub.s32 2, %v3585
    %v3587 = vrot.slane %v3220, %v3586
    %v3588 = vlaneseq
    %v3589 = vshrl.u32 %v3588, 7
    %v3590 = vsub.s32 0, %v3589
    %v3591 = vrot.slane %v3221, %v3590
    %v3592 = vlaneseq
    %v3593 = vshrl.u32 %v3592, 7
    %v3594 = vsub.s32 2, %v3593
    %v3595 = vrot.slane %v3221, %v3594
    %v3596 = vlaneseq
    %v3597 = vshrl.u32 %v3596, 7
    %v3598 = vsub.s32 0, %v3597
    %v3599 = vrot.slane %v3222, %v3598
    %v3600 = vlaneseq
    %v3601 = vshrl.u32 %v3600, 7
    %v3602 = vsub.s32 2, %v3601
    %v3603 = vrot.slane %v3222, %v3602
    %v3604 = vlaneseq
    %v3605 = vshrl.u32 %v3604, 7
    %v3606 = vsub.s32 0, %v3605
    %v3607 = vrot.slane %v3223, %v3606
    %v3608 = vlaneseq
    %v3609 = vshrl.u32 %v3608, 7
    %v3610 = vsub.s32 2, %v3609
    %v3611 = vrot.slane %v3223, %v3610
    %v3612 = vlaneseq
    %v3613 = vshrl.u32 %v3612, 7
    %v3614 = vsub.s32 0, %v3613
    %v3615 = vrot.slane %v3224, %v3614
    %v3616 = vlaneseq
    %v3617 = vshrl.u32 %v3616, 7
    %v3618 = vsub.s32 2, %v3617
    %v3619 = vrot.slane %v3224, %v3618
    %v3620 = vlaneseq
    %v3621 = vshrl.u32 %v3620, 7
    %v3622 = vsub.s32 0, %v3621
    %v3623 = vrot.slane %v3225, %v3622
    %v3624 = vlaneseq
    %v3625 = vshrl.u32 %v3624, 7
    %v3626 = vsub.s32 2, %v3625
    %v3627 = vrot.slane %v3225, %v3626
    %v3628 = vlaneseq
    %v3629 = vshrl.u32 %v3628, 7
    %v3630 = vsub.s32 0, %v3629
    %v3631 = vrot.slane %v3226, %v3630
    %v3632 = vlaneseq
    %v3633 = vshrl.u32 %v3632, 7
    %v3634 = vsub.s32 2, %v3633
    %v3635 = vrot.slane %v3226, %v3634
    %v3636 = vlaneseq
    %v3637 = vshrl.u32 %v3636, 7
    %v3638 = vsub.s32 0, %v3637
    %v3639 = vrot.slane %v3227, %v3638
    %v3640 = vlaneseq
    %v3641 = vshrl.u32 %v3640, 7
    %v3642 = vsub.s32 2, %v3641
    %v3643 = vrot.slane %v3227, %v3642
    %v3644 = vlaneseq
    %v3645 = vshrl.u32 %v3644, 7
    %v3646 = vsub.s32 0, %v3645
    %v3647 = vrot.slane %v3228, %v3646
    %v3648 = vlaneseq
    %v3649 = vshrl.u32 %v3648, 7
    %v3650 = vsub.s32 2, %v3649
    %v3651 = vrot.slane %v3228, %v3650
    %v3652 = vlaneseq
    %v3653 = vshrl.u32 %v3652, 7
    %v3654 = vsub.s32 0, %v3653
    %v3655 = vrot.slane %v3229, %v3654
    %v3656 = vlaneseq
    %v3657 = vshrl.u32 %v3656, 7
    %v3658 = vsub.s32 2, %v3657
    %v3659 = vrot.slane %v3229, %v3658
    %v3660 = vlaneseq
    %v3661 = vshrl.u32 %v3660, 7
    %v3662 = vsub.s32 0, %v3661
    %v3663 = vrot.slane %v3230, %v3662
    %v3664 = vlaneseq
    %v3665 = vshrl.u32 %v3664, 7
    %v3666 = vsub.s32 2, %v3665
    %v3667 = vrot.slane %v3230, %v3666
    %v3668 = vlaneseq
    %v3669 = vshrl.u32 %v3668, 7
    %v3670 = vsub.s32 0, %v3669
    %v3671 = vrot.slane %v3231, %v3670
    %v3672 = vlaneseq
    %v3673 = vshrl.u32 %v3672, 7
    %v3674 = vsub.s32 2, %v3673
    %v3675 = vrot.slane %v3231, %v3674
    %v3676 = vlaneseq
    %v3677 = vshrl.u32 %v3676, 7
    %v3678 = vsub.s32 0, %v3677
    %v3679 = vrot.slane %v3232, %v3678
    %v3680 = vlaneseq
    %v3681 = vshrl.u32 %v3680, 7
    %v3682 = vsub.s32 2, %v3681
    %v3683 = vrot.slane %v3232, %v3682
    %v3684 = vlaneseq
    %v3685 = vshrl.u32 %v3684, 7
    %v3686 = vsub.s32 0, %v3685
    %v3687 = vrot.slane %v3233, %v3686
    %v3688 = vlaneseq
    %v3689 = vshrl.u32 %v3688, 7
    %v3690 = vsub.s32 2, %v3689
    %v3691 = vrot.slane %v3233, %v3690
    %v3692 = vlaneseq
    %v3693 = vshrl.u32 %v3692, 7
    %v3694 = vsub.s32 0, %v3693
    %v3695 = vrot.slane %v3234, %v3694
    %v3696 = vlaneseq
    %v3697 = vshrl.u32 %v3696, 7
    %v3698 = vsub.s32 2, %v3697
    %v3699 = vrot.slane %v3234, %v3698
    %v3700 = vlaneseq
    %v3701 = vshrl.u32 %v3700, 7
    %v3702 = vsub.s32 0, %v3701
    %v3703 = vrot.slane %v3235, %v3702
    %v3704 = vlaneseq
    %v3705 = vshrl.u32 %v3704, 7
    %v3706 = vsub.s32 2, %v3705
    %v3707 = vrot.slane %v3235, %v3706
    %v3708 = vlaneseq
    %v3709 = vshrl.u32 %v3708, 7
    %v3710 = vsub.s32 0, %v3709
    %v3711 = vrot.slane %v3236, %v3710
    %v3712 = vlaneseq
    %v3713 = vshrl.u32 %v3712, 7
    %v3714 = vsub.s32 2, %v3713
    %v3715 = vrot.slane %v3236, %v3714
    %v3716 = vlaneseq
    %v3717 = vshrl.u32 %v3716, 7
    %v3718 = vsub.s32 0, %v3717
    %v3719 = vrot.slane %v3237, %v3718
    %v3720 = vlaneseq
    %v3721 = vshrl.u32 %v3720, 7
    %v3722 = vsub.s32 2, %v3721
    %v3723 = vrot.slane %v3237, %v3722
    %v3724 = vlaneseq
    %v3725 = vshrl.u32 %v3724, 7
    %v3726 = vsub.s32 0, %v3725
    %v3727 = vrot.slane %v3238, %v3726
    %v3728 = vlaneseq
    %v3729 = vshrl.u32 %v3728, 7
    %v3730 = vsub.s32 2, %v3729
    %v3731 = vrot.slane %v3238, %v3730
    %v3732 = vlaneseq
    %v3733 = vshrl.u32 %v3732, 7
    %v3734 = vsub.s32 0, %v3733
    %v3735 = vrot.slane %v3239, %v3734
    %v3736 = vlaneseq
    %v3737 = vshrl.u32 %v3736, 7
    %v3738 = vsub.s32 2, %v3737
    %v3739 = vrot.slane %v3239, %v3738
    %v3740 = vlaneseq
    %v3741 = vshrl.u32 %v3740, 7
    %v3742 = vsub.s32 0, %v3741
    %v3743 = vrot.slane %v3240, %v3742
    %v3744 = vlaneseq
    %v3745 = vshrl.u32 %v3744, 7
    %v3746 = vsub.s32 2, %v3745
    %v3747 = vrot.slane %v3240, %v3746
    %v3748 = vlaneseq
    %v3749 = vshrl.u32 %v3748, 7
    %v3750 = vsub.s32 0, %v3749
    %v3751 = vrot.slane %v3241, %v3750
    %v3752 = vlaneseq
    %v3753 = vshrl.u32 %v3752, 7
    %v3754 = vsub.s32 2, %v3753
    %v3755 = vrot.slane %v3241, %v3754
    %v3756 = vlaneseq
    %v3757 = vshrl.u32 %v3756, 7
    %v3758 = vsub.s32 0, %v3757
    %v3759 = vrot.slane %v3242, %v3758
    %v3760 = vlaneseq
    %v3761 = vshrl.u32 %v3760, 7
    %v3762 = vsub.s32 2, %v3761
    %v3763 = vrot.slane %v3242, %v3762
    %v3764 = vlaneseq
    %v3765 = vshrl.u32 %v3764, 7
    %v3766 = vsub.s32 0, %v3765
    %v3767 = vrot.slane %v3243, %v3766
    %v3768 = vlaneseq
    %v3769 = vshrl.u32 %v3768, 7
    %v3770 = vsub.s32 2, %v3769
    %v3771 = vrot.slane %v3243, %v3770
    %v3772 = vlaneseq
    %v3773 = vshrl.u32 %v3772, 7
    %v3774 = vsub.s32 0, %v3773
    %v3775 = vrot.slane %v3244, %v3774
    %v3776 = vlaneseq
    %v3777 = vshrl.u32 %v3776, 7
    %v3778 = vsub.s32 2, %v3777
    %v3779 = vrot.slane %v3244, %v3778
    %v3780 = vlaneseq
    %v3781 = vshrl.u32 %v3780, 7
    %v3782 = vsub.s32 0, %v3781
    %v3783 = vrot.slane %v3245, %v3782
    %v3784 = vlaneseq
    %v3785 = vshrl.u32 %v3784, 7
    %v3786 = vsub.s32 2, %v3785
    %v3787 = vrot.slane %v3245, %v3786
    %v3788 = vlaneseq
    %v3789 = vshrl.u32 %v3788, 7
    %v3790 = vsub.s32 0, %v3789
    %v3791 = vrot.slane %v3246, %v3790
    %v3792 = vlaneseq
    %v3793 = vshrl.u32 %v3792, 7
    %v3794 = vsub.s32 2, %v3793
    %v3795 = vrot.slane %v3246, %v3794
    %v3796 = vlaneseq
    %v3797 = vshrl.u32 %v3796, 7
    %v3798 = vsub.s32 0, %v3797
    %v3799 = vrot.slane %v3247, %v3798
    %v3800 = vlaneseq
    %v3801 = vshrl.u32 %v3800, 7
    %v3802 = vsub.s32 2, %v3801
    %v3803 = vrot.slane %v3247, %v3802
    %v3804 = vlaneseq
    %v3805 = vshrl.u32 %v3804, 7
    %v3806 = vsub.s32 0, %v3805
    %v3807 = vrot.slane %v3248, %v3806
    %v3808 = vlaneseq
    %v3809 = vshrl.u32 %v3808, 7
    %v3810 = vsub.s32 2, %v3809
    %v3811 = vrot.slane %v3248, %v3810
    %v3812 = vlaneseq
    %v3813 = vshrl.u32 %v3812, 7
    %v3814 = vsub.s32 0, %v3813
    %v3815 = vrot.slane %v3249, %v3814
    %v3816 = vlaneseq
    %v3817 = vshrl.u32 %v3816, 7
    %v3818 = vsub.s32 2, %v3817
    %v3819 = vrot.slane %v3249, %v3818
    %v3820 = vlaneseq
    %v3821 = vshrl.u32 %v3820, 7
    %v3822 = vsub.s32 0, %v3821
    %v3823 = vrot.slane %v3250, %v3822
    %v3824 = vlaneseq
    %v3825 = vshrl.u32 %v3824, 7
    %v3826 = vsub.s32 2, %v3825
    %v3827 = vrot.slane %v3250, %v3826
    %v3828 = vlaneseq
    %v3829 = vshrl.u32 %v3828, 7
    %v3830 = vsub.s32 0, %v3829
    %v3831 = vrot.slane %v3251, %v3830
    %v3832 = vlaneseq
    %v3833 = vshrl.u32 %v3832, 7
    %v3834 = vsub.s32 2, %v3833
    %v3835 = vrot.slane %v3251, %v3834
    %v3836 = vlaneseq
    %v3837 = vshrl.u32 %v3836, 7
    %v3838 = vsub.s32 0, %v3837
    %v3839 = vrot.slane %v3252, %v3838
    %v3840 = vlaneseq
    %v3841 = vshrl.u32 %v3840, 7
    %v3842 = vsub.s32 2, %v3841
    %v3843 = vrot.slane %v3252, %v3842
    %v3844 = vlaneseq
    %v3845 = vshrl.u32 %v3844, 7
    %v3846 = vsub.s32 0, %v3845
    %v3847 = vrot.slane %v3253, %v3846
    %v3848 = vlaneseq
    %v3849 = vshrl.u32 %v3848, 7
    %v3850 = vsub.s32 2, %v3849
    %v3851 = vrot.slane %v3253, %v3850
    %v3852 = vlaneseq
    %v3853 = vshrl.u32 %v3852, 7
    %v3854 = vsub.s32 0, %v3853
    %v3855 = vrot.slane %v3254, %v3854
    %v3856 = vlaneseq
    %v3857 = vshrl.u32 %v3856, 7
    %v3858 = vsub.s32 2, %v3857
    %v3859 = vrot.slane %v3254, %v3858
    %v3860 = vlaneseq
    %v3861 = vshrl.u32 %v3860, 7
    %v3862 = vsub.s32 0, %v3861
    %v3863 = vrot.slane %v3255, %v3862
    %v3864 = vlaneseq
    %v3865 = vshrl.u32 %v3864, 7
    %v3866 = vsub.s32 2, %v3865
    %v3867 = vrot.slane %v3255, %v3866
    %v3868 = vlaneseq
    %v3869 = vshrl.u32 %v3868, 7
    %v3870 = vsub.s32 0, %v3869
    %v3871 = vrot.slane %v3256, %v3870
    %v3872 = vlaneseq
    %v3873 = vshrl.u32 %v3872, 7
    %v3874 = vsub.s32 2, %v3873
    %v3875 = vrot.slane %v3256, %v3874
    %v3876 = vlaneseq
    %v3877 = vshrl.u32 %v3876, 7
    %v3878 = vsub.s32 0, %v3877
    %v3879 = vrot.slane %v3257, %v3878
    %v3880 = vlaneseq
    %v3881 = vshrl.u32 %v3880, 7
    %v3882 = vsub.s32 2, %v3881
    %v3883 = vrot.slane %v3257, %v3882
    %v3884 = vlaneseq
    %v3885 = vshrl.u32 %v3884, 7
    %v3886 = vsub.s32 0, %v3885
    %v3887 = vrot.slane %v3258, %v3886
    %v3888 = vlaneseq
    %v3889 = vshrl.u32 %v3888, 7
    %v3890 = vsub.s32 2, %v3889
    %v3891 = vrot.slane %v3258, %v3890
    %v3892 = vlaneseq
    %v3893 = vshrl.u32 %v3892, 7
    %v3894 = vsub.s32 0, %v3893
    %v3895 = vrot.slane %v3259, %v3894
    %v3896 = vlaneseq
    %v3897 = vshrl.u32 %v3896, 7
    %v3898 = vsub.s32 2, %v3897
    %v3899 = vrot.slane %v3259, %v3898
    %v3900 = vlaneseq
    %v3901 = vshrl.u32 %v3900, 7
    %v3902 = vsub.s32 0, %v3901
    %v3903 = vrot.slane %v3260, %v3902
    %v3904 = vlaneseq
    %v3905 = vshrl.u32 %v3904, 7
    %v3906 = vsub.s32 2, %v3905
    %v3907 = vrot.slane %v3260, %v3906
    %v3908 = vlaneseq
    %v3909 = vshrl.u32 %v3908, 7
    %v3910 = vsub.s32 0, %v3909
    %v3911 = vrot.slane %v3261, %v3910
    %v3912 = vlaneseq
    %v3913 = vshrl.u32 %v3912, 7
    %v3914 = vsub.s32 2, %v3913
    %v3915 = vrot.slane %v3261, %v3914
    %v3916 = vlaneseq
    %v3917 = vshrl.u32 %v3916, 7
    %v3918 = vsub.s32 0, %v3917
    %v3919 = vrot.slane %v3262, %v3918
    %v3920 = vlaneseq
    %v3921 = vshrl.u32 %v3920, 7
    %v3922 = vsub.s32 2, %v3921
    %v3923 = vrot.slane %v3262, %v3922
    %v3924 = vlaneseq
    %v3925 = vshrl.u32 %v3924, 7
    %v3926 = vsub.s32 0, %v3925
    %v3927 = vrot.slane %v3263, %v3926
    %v3928 = vlaneseq
    %v3929 = vshrl.u32 %v3928, 7
    %v3930 = vsub.s32 2, %v3929
    %v3931 = vrot.slane %v3263, %v3930
    %v3932 = vlaneseq
    %v3933 = vshrl.u32 %v3932, 7
    %v3934 = vsub.s32 0, %v3933
    %v3935 = vrot.slane %v3264, %v3934
    %v3936 = vlaneseq
    %v3937 = vshrl.u32 %v3936, 7
    %v3938 = vsub.s32 2, %v3937
    %v3939 = vrot.slane %v3264, %v3938
    %v3940 = vlaneseq
    %v3941 = vshrl.u32 %v3940, 7
    %v3942 = vsub.s32 0, %v3941
    %v3943 = vrot.slane %v3265, %v3942
    %v3944 = vlaneseq
    %v3945 = vshrl.u32 %v3944, 7
    %v3946 = vsub.s32 2, %v3945
    %v3947 = vrot.slane %v3265, %v3946
    %v3948 = vlaneseq
    %v3949 = vshrl.u32 %v3948, 7
    %v3950 = vsub.s32 0, %v3949
    %v3951 = vrot.slane %v3266, %v3950
    %v3952 = vlaneseq
    %v3953 = vshrl.u32 %v3952, 7
    %v3954 = vsub.s32 2, %v3953
    %v3955 = vrot.slane %v3266, %v3954
    %v3956 = vlaneseq
    %v3957 = vshrl.u32 %v3956, 7
    %v3958 = vsub.s32 0, %v3957
    %v3959 = vrot.slane %v3267, %v3958
    %v3960 = vlaneseq
    %v3961 = vshrl.u32 %v3960, 7
    %v3962 = vsub.s32 2, %v3961
    %v3963 = vrot.slane %v3267, %v3962
    %v3964 = vlaneseq
    %v3965 = vshrl.u32 %v3964, 7
    %v3966 = vsub.s32 0, %v3965
    %v3967 = vrot.slane %v3268, %v3966
    %v3968 = vlaneseq
    %v3969 = vshrl.u32 %v3968, 7
    %v3970 = vsub.s32 2, %v3969
    %v3971 = vrot.slane %v3268, %v3970
    %v3972 = vlaneseq
    %v3973 = vshrl.u32 %v3972, 7
    %v3974 = vsub.s32 0, %v3973
    %v3975 = vrot.slane %v3269, %v3974
    %v3976 = vlaneseq
    %v3977 = vshrl.u32 %v3976, 7
    %v3978 = vsub.s32 2, %v3977
    %v3979 = vrot.slane %v3269, %v3978
    %v3980 = vlaneseq
    %v3981 = vshrl.u32 %v3980, 7
    %v3982 = vsub.s32 0, %v3981
    %v3983 = vrot.slane %v3270, %v3982
    %v3984 = vlaneseq
    %v3985 = vshrl.u32 %v3984, 7
    %v3986 = vsub.s32 2, %v3985
    %v3987 = vrot.slane %v3270, %v3986
    %v3988 = vlaneseq
    %v3989 = vshrl.u32 %v3988, 7
    %v3990 = vsub.s32 0, %v3989
    %v3991 = vrot.slane %v3271, %v3990
    %v3992 = vlaneseq
    %v3993 = vshrl.u32 %v3992, 7
    %v3994 = vsub.s32 2, %v3993
    %v3995 = vrot.slane %v3271, %v3994
    %v3996 = vlaneseq
    %v3997 = vshrl.u32 %v3996, 7
    %v3998 = vsub.s32 0, %v3997
    %v3999 = vrot.slane %v3272, %v3998
    %v4000 = vlaneseq
    %v4001 = vshrl.u32 %v4000, 7
    %v4002 = vsub.s32 2, %v4001
    %v4003 = vrot.slane %v3272, %v4002
    %v4004 = vlaneseq
    %v4005 = vshrl.u32 %v4004, 7
    %v4006 = vsub.s32 0, %v4005
    %v4007 = vrot.slane %v3273, %v4006
    %v4008 = vlaneseq
    %v4009 = vshrl.u32 %v4008, 7
    %v4010 = vsub.s32 2, %v4009
    %v4011 = vrot.slane %v3273, %v4010
    %v4012 = vlaneseq
    %v4013 = vshrl.u32 %v4012, 7
    %v4014 = vsub.s32 0, %v4013
    %v4015 = vrot.slane %v3274, %v4014
    %v4016 = vlaneseq
    %v4017 = vshrl.u32 %v4016, 7
    %v4018 = vsub.s32 2, %v4017
    %v4019 = vrot.slane %v3274, %v4018
    %v4020 = vlaneseq
    %v4021 = vshrl.u32 %v4020, 7
    %v4022 = vsub.s32 0, %v4021
    %v4023 = vrot.slane %v3275, %v4022
    %v4024 = vlaneseq
    %v4025 = vshrl.u32 %v4024, 7
    %v4026 = vsub.s32 2, %v4025
    %v4027 = vrot.slane %v3275, %v4026
    %v4028 = vlaneseq
    %v4029 = vshrl.u32 %v4028, 7
    %v4030 = vsub.s32 0, %v4029
    %v4031 = vrot.slane %v3276, %v4030
    %v4032 = vlaneseq
    %v4033 = vshrl.u32 %v4032, 7
    %v4034 = vsub.s32 2, %v4033
    %v4035 = vrot.slane %v3276, %v4034
    %v4036 = vlaneseq
    %v4037 = vshrl.u32 %v4036, 7
    %v4038 = vsub.s32 0, %v4037
    %v4039 = vrot.slane %v3277, %v4038
    %v4040 = vlaneseq
    %v4041 = vshrl.u32 %v4040, 7
    %v4042 = vsub.s32 2, %v4041
    %v4043 = vrot.slane %v3277, %v4042
    %v4044 = vlaneseq
    %v4045 = vshrl.u32 %v4044, 7
    %v4046 = vsub.s32 0, %v4045
    %v4047 = vrot.slane %v3278, %v4046
    %v4048 = vlaneseq
    %v4049 = vshrl.u32 %v4048, 7
    %v4050 = vsub.s32 2, %v4049
    %v4051 = vrot.slane %v3278, %v4050
    %v4052 = vlaneseq
    %v4053 = vshrl.u32 %v4052, 7
    %v4054 = vsub.s32 0, %v4053
    %v4055 = vrot.slane %v3279, %v4054
    %v4056 = vlaneseq
    %v4057 = vshrl.u32 %v4056, 7
    %v4058 = vsub.s32 2, %v4057
    %v4059 = vrot.slane %v3279, %v4058
    %v4060 = vlaneseq
    %v4061 = vshrl.u32 %v4060, 7
    %v4062 = vsub.s32 0, %v4061
    %v4063 = vrot.slane %v3280, %v4062
    %v4064 = vlaneseq
    %v4065 = vshrl.u32 %v4064, 7
    %v4066 = vsub.s32 2, %v4065
    %v4067 = vrot.slane %v3280, %v4066
    %v4068 = vlaneseq
    %v4069 = vshrl.u32 %v4068, 7
    %v4070 = vsub.s32 0, %v4069
    %v4071 = vrot.slane %v3281, %v4070
    %v4072 = vlaneseq
    %v4073 = vshrl.u32 %v4072, 7
    %v4074 = vsub.s32 2, %v4073
    %v4075 = vrot.slane %v3281, %v4074
    %v4076 = vlaneseq
    %v4077 = vshrl.u32 %v4076, 7
    %v4078 = vsub.s32 0, %v4077
    %v4079 = vrot.slane %v3282, %v4078
    %v4080 = vlaneseq
    %v4081 = vshrl.u32 %v4080, 7
    %v4082 = vsub.s32 2, %v4081
    %v4083 = vrot.slane %v3282, %v4082
    %v4084 = vlaneseq
    %v4085 = vshrl.u32 %v4084, 7
    %v4086 = vsub.s32 0, %v4085
    %v4087 = vrot.slane %v3283, %v4086
    %v4088 = vlaneseq
    %v4089 = vshrl.u32 %v4088, 7
    %v4090 = vsub.s32 2, %v4089
    %v4091 = vrot.slane %v3283, %v4090
    %v4092 = vlaneseq
    %v4093 = vshrl.u32 %v4092, 7
    %v4094 = vsub.s32 0, %v4093
    %v4095 = vrot.slane %v3284, %v4094
    %v4096 = vlaneseq
    %v4097 = vshrl.u32 %v4096, 7
    %v4098 = vsub.s32 2, %v4097
    %v4099 = vrot.slane %v3284, %v4098
    %v4100 = vlaneseq
    %v4101 = vshrl.u32 %v4100, 7
    %v4102 = vsub.s32 0, %v4101
    %v4103 = vrot.slane %v3285, %v4102
    %v4104 = vlaneseq
    %v4105 = vshrl.u32 %v4104, 7
    %v4106 = vsub.s32 2, %v4105
    %v4107 = vrot.slane %v3285, %v4106
    %v4108 = vlaneseq
    %v4109 = vshrl.u32 %v4108, 7
    %v4110 = vsub.s32 0, %v4109
    %v4111 = vrot.slane %v3286, %v4110
    %v4112 = vlaneseq
    %v4113 = vshrl.u32 %v4112, 7
    %v4114 = vsub.s32 2, %v4113
    %v4115 = vrot.slane %v3286, %v4114
    %v4116 = vlaneseq
    %v4117 = vshrl.u32 %v4116, 7
    %v4118 = vsub.s32 0, %v4117
    %v4119 = vrot.slane %v3287, %v4118
    %v4120 = vlaneseq
    %v4121 = vshrl.u32 %v4120, 7
    %v4122 = vsub.s32 2, %v4121
    %v4123 = vrot.slane %v3287, %v4122
    %v4124 = vlaneseq
    %v4125 = vshrl.u32 %v4124, 7
    %v4126 = vsub.s32 0, %v4125
    %v4127 = vrot.slane %v3288, %v4126
    %v4128 = vlaneseq
    %v4129 = vshrl.u32 %v4128, 7
    %v4130 = vsub.s32 2, %v4129
    %v4131 = vrot.slane %v3288, %v4130
    %v4132 = vlaneseq
    %v4133 = vshrl.u32 %v4132, 7
    %v4134 = vsub.s32 0, %v4133
    %v4135 = vrot.slane %v3289, %v4134
    %v4136 = vlaneseq
    %v4137 = vshrl.u32 %v4136, 7
    %v4138 = vsub.s32 2, %v4137
    %v4139 = vrot.slane %v3289, %v4138
    %v4140 = vlaneseq
    %v4141 = vshrl.u32 %v4140, 7
    %v4142 = vsub.s32 0, %v4141
    %v4143 = vrot.slane %v3290, %v4142
    %v4144 = vlaneseq
    %v4145 = vshrl.u32 %v4144, 7
    %v4146 = vsub.s32 2, %v4145
    %v4147 = vrot.slane %v3290, %v4146
    %v4148 = vlaneseq
    %v4149 = vshrl.u32 %v4148, 7
    %v4150 = vsub.s32 0, %v4149
    %v4151 = vrot.slane %v3291, %v4150
    %v4152 = vlaneseq
    %v4153 = vshrl.u32 %v4152, 7
    %v4154 = vsub.s32 2, %v4153
    %v4155 = vrot.slane %v3291, %v4154
    %v4348 = vpack.c.bf16 %v3391, %v3391
    %v4349 = vpack.c.bf16 %v3395, %v3395
    %v4350 = vpack.c.bf16 %v3399, %v3399
    %v4351 = vpack.c.bf16 %v3403, %v3403
    %v4352 = vpack.c.bf16 %v3407, %v3407
    %v4353 = vpack.c.bf16 %v3411, %v3411
    %v4354 = vpack.c.bf16 %v3415, %v3415
    %v4355 = vpack.c.bf16 %v3419, %v3419
    %v4356 = vpack.c.bf16 %v3423, %v3423
    %v4357 = vpack.c.bf16 %v3427, %v3427
    %v4358 = vpack.c.bf16 %v3431, %v3431
    %v4359 = vpack.c.bf16 %v3435, %v3435
    %v4360 = vpack.c.bf16 %v3439, %v3439
    %v4361 = vpack.c.bf16 %v3443, %v3443
    %v4362 = vpack.c.bf16 %v3447, %v3447
    %v4363 = vpack.c.bf16 %v3451, %v3451
    %v4364 = vpack.c.bf16 %v3455, %v3455
    %v4365 = vpack.c.bf16 %v3459, %v3459
    %v4366 = vpack.c.bf16 %v3463, %v3463
    %v4367 = vpack.c.bf16 %v3467, %v3467
    %v4368 = vpack.c.bf16 %v3471, %v3471
    %v4369 = vpack.c.bf16 %v3475, %v3475
    %v4370 = vpack.c.bf16 %v3479, %v3479
    %v4371 = vpack.c.bf16 %v3483, %v3483
    %v4372 = vpack.c.bf16 %v3487, %v3487
    %v4373 = vpack.c.bf16 %v3491, %v3491
    %v4374 = vpack.c.bf16 %v3495, %v3495
    %v4375 = vpack.c.bf16 %v3499, %v3499
    %v4376 = vpack.c.bf16 %v3503, %v3503
    %v4377 = vpack.c.bf16 %v3507, %v3507
    %v4378 = vpack.c.bf16 %v3511, %v3511
    %v4379 = vpack.c.bf16 %v3515, %v3515
    %v4380 = vpack.c.bf16 %v3519, %v3519
    %v4381 = vpack.c.bf16 %v3523, %v3523
    %v4382 = vpack.c.bf16 %v3527, %v3527
    %v4383 = vpack.c.bf16 %v3531, %v3531
    %v4384 = vpack.c.bf16 %v3535, %v3535
    %v4385 = vpack.c.bf16 %v3539, %v3539
    %v4386 = vpack.c.bf16 %v3543, %v3543
    %v4387 = vpack.c.bf16 %v3547, %v3547
    %v4388 = vpack.c.bf16 %v3551, %v3551
    %v4389 = vpack.c.bf16 %v3555, %v3555
    %v4390 = vpack.c.bf16 %v3559, %v3559
    %v4391 = vpack.c.bf16 %v3563, %v3563
    %v4392 = vpack.c.bf16 %v3567, %v3567
    %v4393 = vpack.c.bf16 %v3571, %v3571
    %v4394 = vpack.c.bf16 %v3575, %v3575
    %v4395 = vpack.c.bf16 %v3579, %v3579
    %v4396 = vpack.c.bf16 %v3583, %v3583
    %v4397 = vpack.c.bf16 %v3587, %v3587
    %v4398 = vpack.c.bf16 %v3591, %v3591
    %v4399 = vpack.c.bf16 %v3595, %v3595
    %v4400 = vpack.c.bf16 %v3599, %v3599
    %v4401 = vpack.c.bf16 %v3603, %v3603
    %v4402 = vpack.c.bf16 %v3607, %v3607
    %v4403 = vpack.c.bf16 %v3611, %v3611
    %v4404 = vpack.c.bf16 %v3615, %v3615
    %v4405 = vpack.c.bf16 %v3619, %v3619
    %v4406 = vpack.c.bf16 %v3623, %v3623
    %v4407 = vpack.c.bf16 %v3627, %v3627
    %v4408 = vpack.c.bf16 %v3631, %v3631
    %v4409 = vpack.c.bf16 %v3635, %v3635
    %v4410 = vpack.c.bf16 %v3639, %v3639
    %v4411 = vpack.c.bf16 %v3643, %v3643
    %v4412 = vpack.c.bf16 %v3647, %v3647
    %v4413 = vpack.c.bf16 %v3651, %v3651
    %v4414 = vpack.c.bf16 %v3655, %v3655
    %v4415 = vpack.c.bf16 %v3659, %v3659
    %v4416 = vpack.c.bf16 %v3663, %v3663
    %v4417 = vpack.c.bf16 %v3667, %v3667
    %v4418 = vpack.c.bf16 %v3671, %v3671
    %v4419 = vpack.c.bf16 %v3675, %v3675
    %v4420 = vpack.c.bf16 %v3679, %v3679
    %v4421 = vpack.c.bf16 %v3683, %v3683
    %v4422 = vpack.c.bf16 %v3687, %v3687
    %v4423 = vpack.c.bf16 %v3691, %v3691
    %v4424 = vpack.c.bf16 %v3695, %v3695
    %v4425 = vpack.c.bf16 %v3699, %v3699
    %v4426 = vpack.c.bf16 %v3703, %v3703
    %v4427 = vpack.c.bf16 %v3707, %v3707
    %v4428 = vpack.c.bf16 %v3711, %v3711
    %v4429 = vpack.c.bf16 %v3715, %v3715
    %v4430 = vpack.c.bf16 %v3719, %v3719
    %v4431 = vpack.c.bf16 %v3723, %v3723
    %v4432 = vpack.c.bf16 %v3727, %v3727
    %v4433 = vpack.c.bf16 %v3731, %v3731
    %v4434 = vpack.c.bf16 %v3735, %v3735
    %v4435 = vpack.c.bf16 %v3739, %v3739
    %v4436 = vpack.c.bf16 %v3743, %v3743
    %v4437 = vpack.c.bf16 %v3747, %v3747
    %v4438 = vpack.c.bf16 %v3751, %v3751
    %v4439 = vpack.c.bf16 %v3755, %v3755
    %v4440 = vpack.c.bf16 %v3759, %v3759
    %v4441 = vpack.c.bf16 %v3763, %v3763
    %v4442 = vpack.c.bf16 %v3767, %v3767
    %v4443 = vpack.c.bf16 %v3771, %v3771
    %v4444 = vpack.c.bf16 %v3775, %v3775
    %v4445 = vpack.c.bf16 %v3779, %v3779
    %v4446 = vpack.c.bf16 %v3783, %v3783
    %v4447 = vpack.c.bf16 %v3787, %v3787
    %v4448 = vpack.c.bf16 %v3791, %v3791
    %v4449 = vpack.c.bf16 %v3795, %v3795
    %v4450 = vpack.c.bf16 %v3799, %v3799
    %v4451 = vpack.c.bf16 %v3803, %v3803
    %v4452 = vpack.c.bf16 %v3807, %v3807
    %v4453 = vpack.c.bf16 %v3811, %v3811
    %v4454 = vpack.c.bf16 %v3815, %v3815
    %v4455 = vpack.c.bf16 %v3819, %v3819
    %v4456 = vpack.c.bf16 %v3823, %v3823
    %v4457 = vpack.c.bf16 %v3827, %v3827
    %v4458 = vpack.c.bf16 %v3831, %v3831
    %v4459 = vpack.c.bf16 %v3835, %v3835
    %v4460 = vpack.c.bf16 %v3839, %v3839
    %v4461 = vpack.c.bf16 %v3843, %v3843
    %v4462 = vpack.c.bf16 %v3847, %v3847
    %v4463 = vpack.c.bf16 %v3851, %v3851
    %v4464 = vpack.c.bf16 %v3855, %v3855
    %v4465 = vpack.c.bf16 %v3859, %v3859
    %v4466 = vpack.c.bf16 %v3863, %v3863
    %v4467 = vpack.c.bf16 %v3867, %v3867
    %v4468 = vpack.c.bf16 %v3871, %v3871
    %v4469 = vpack.c.bf16 %v3875, %v3875
    %v4470 = vpack.c.bf16 %v3879, %v3879
    %v4471 = vpack.c.bf16 %v3883, %v3883
    %v4472 = vpack.c.bf16 %v3887, %v3887
    %v4473 = vpack.c.bf16 %v3891, %v3891
    %v4474 = vpack.c.bf16 %v3895, %v3895
    %v4475 = vpack.c.bf16 %v3899, %v3899
    %v4476 = vpack.c.bf16 %v3903, %v3903
    %v4477 = vpack.c.bf16 %v3907, %v3907
    %v4478 = vpack.c.bf16 %v3911, %v3911
    %v4479 = vpack.c.bf16 %v3915, %v3915
    %v4480 = vpack.c.bf16 %v3919, %v3919
    %v4481 = vpack.c.bf16 %v3923, %v3923
    %v4482 = vpack.c.bf16 %v3927, %v3927
    %v4483 = vpack.c.bf16 %v3931, %v3931
    %v4484 = vpack.c.bf16 %v3935, %v3935
    %v4485 = vpack.c.bf16 %v3939, %v3939
    %v4486 = vpack.c.bf16 %v3943, %v3943
    %v4487 = vpack.c.bf16 %v3947, %v3947
    %v4488 = vpack.c.bf16 %v3951, %v3951
    %v4489 = vpack.c.bf16 %v3955, %v3955
    %v4490 = vpack.c.bf16 %v3959, %v3959
    %v4491 = vpack.c.bf16 %v3963, %v3963
    %v4492 = vpack.c.bf16 %v3967, %v3967
    %v4493 = vpack.c.bf16 %v3971, %v3971
    %v4494 = vpack.c.bf16 %v3975, %v3975
    %v4495 = vpack.c.bf16 %v3979, %v3979
    %v4496 = vpack.c.bf16 %v3983, %v3983
    %v4497 = vpack.c.bf16 %v3987, %v3987
    %v4498 = vpack.c.bf16 %v3991, %v3991
    %v4499 = vpack.c.bf16 %v3995, %v3995
    %v4500 = vpack.c.bf16 %v3999, %v3999
    %v4501 = vpack.c.bf16 %v4003, %v4003
    %v4502 = vpack.c.bf16 %v4007, %v4007
    %v4503 = vpack.c.bf16 %v4011, %v4011
    %v4504 = vpack.c.bf16 %v4015, %v4015
    %v4505 = vpack.c.bf16 %v4019, %v4019
    %v4506 = vpack.c.bf16 %v4023, %v4023
    %v4507 = vpack.c.bf16 %v4027, %v4027
    %v4508 = vpack.c.bf16 %v4031, %v4031
    %v4509 = vpack.c.bf16 %v4035, %v4035
    %v4510 = vpack.c.bf16 %v4039, %v4039
    %v4511 = vpack.c.bf16 %v4043, %v4043
    %v4512 = vpack.c.bf16 %v4047, %v4047
    %v4513 = vpack.c.bf16 %v4051, %v4051
    %v4514 = vpack.c.bf16 %v4055, %v4055
    %v4515 = vpack.c.bf16 %v4059, %v4059
    %v4516 = vpack.c.bf16 %v4063, %v4063
    %v4517 = vpack.c.bf16 %v4067, %v4067
    %v4518 = vpack.c.bf16 %v4071, %v4071
    %v4519 = vpack.c.bf16 %v4075, %v4075
    %v4520 = vpack.c.bf16 %v4079, %v4079
    %v4521 = vpack.c.bf16 %v4083, %v4083
    %v4522 = vpack.c.bf16 %v4087, %v4087
    %v4523 = vpack.c.bf16 %v4091, %v4091
    %v4524 = vpack.c.bf16 %v4095, %v4095
    %v4525 = vpack.c.bf16 %v4099, %v4099
    %v4526 = vpack.c.bf16 %v4103, %v4103
    %v4527 = vpack.c.bf16 %v4107, %v4107
    %v4528 = vpack.c.bf16 %v4111, %v4111
    %v4529 = vpack.c.bf16 %v4115, %v4115
    %v4530 = vpack.c.bf16 %v4119, %v4119
    %v4531 = vpack.c.bf16 %v4123, %v4123
    %v4532 = vpack.c.bf16 %v4127, %v4127
    %v4533 = vpack.c.bf16 %v4131, %v4131
    %v4534 = vpack.c.bf16 %v4135, %v4135
    %v4535 = vpack.c.bf16 %v4139, %v4139
    %v4536 = vpack.c.bf16 %v4143, %v4143
    %v4537 = vpack.c.bf16 %v4147, %v4147
    %v4538 = vpack.c.bf16 %v4151, %v4151
    %v4539 = vpack.c.bf16 %v4155, %v4155
    %v4540 = vld [vmem:[%s3] sm:$0xf]
    %v4541 = vld [vmem:[%s3 + $0x4] sm:$0xf]
    %v4542 = vld [vmem:[%s3 + $0x8] sm:$0xf]
    %v4543 = vld [vmem:[%s3 + $0xc] sm:$0xf]
    %v4544 = vld [vmem:[%s3 + $0x10] sm:$0xf]
    %v4545 = vld [vmem:[%s3 + $0x14] sm:$0xf]
    %v4546 = vld [vmem:[%s3 + $0x18] sm:$0xf]
    %v4547 = vld [vmem:[%s3 + $0x1c] sm:$0xf]
    %v4548 = vld [vmem:[%s3 + $0x20] sm:$0xf]
    %v4549 = vld [vmem:[%s3 + $0x24] sm:$0xf]
    %v4550 = vld [vmem:[%s3 + $0x28] sm:$0xf]
    %v4551 = vld [vmem:[%s3 + $0x2c] sm:$0xf]
    %v4552 = vld [vmem:[%s3 + $0x30] sm:$0xf]
    %v4553 = vld [vmem:[%s3 + $0x34] sm:$0xf]
    %v4554 = vld [vmem:[%s3 + $0x38] sm:$0xf]
    %v4555 = vld [vmem:[%s3 + $0x3c] sm:$0xf]
    %v4556 = vld [vmem:[%s3 + $0x40] sm:$0xf]
    %v4557 = vld [vmem:[%s3 + $0x44] sm:$0xf]
    %s4558 = scalar_lea.vmem %s3, 72
    %v4559 = vld [vmem:[%s4558] sm:$0xf]
    %v4560 = vld [vmem:[%s4558 + $0x4] sm:$0xf]
    %v4561 = vld [vmem:[%s4558 + $0x8] sm:$0xf]
    %v4562 = vld [vmem:[%s4558 + $0xc] sm:$0xf]
    %v4563 = vld [vmem:[%s4558 + $0x10] sm:$0xf]
    %v4564 = vld [vmem:[%s4558 + $0x14] sm:$0xf]
    %v4565 = vld [vmem:[%s4558 + $0x18] sm:$0xf]
    %v4566 = vld [vmem:[%s4558 + $0x1c] sm:$0xf]
    %v4567 = vld [vmem:[%s4558 + $0x20] sm:$0xf]
    %v4568 = vld [vmem:[%s4558 + $0x24] sm:$0xf]
    %v4569 = vld [vmem:[%s4558 + $0x28] sm:$0xf]
    %v4570 = vld [vmem:[%s4558 + $0x2c] sm:$0xf]
    %v4571 = vld [vmem:[%s4558 + $0x30] sm:$0xf]
    %v4572 = vld [vmem:[%s4558 + $0x34] sm:$0xf]
    %v4573 = vld [vmem:[%s4558 + $0x38] sm:$0xf]
    %v4574 = vld [vmem:[%s4558 + $0x3c] sm:$0xf]
    %v4575 = vld [vmem:[%s4558 + $0x40] sm:$0xf]
    %v4576 = vld [vmem:[%s4558 + $0x44] sm:$0xf]
    %v4705 = vunpack.c.l.b16 %v4350
    %v4706 = vunpack.c.l.b16 %v4351
    %v4707 = vunpack.c.l.b16 %v4352
    %v4708 = vunpack.c.l.b16 %v4353
    %v4709 = vunpack.c.l.b16 %v4354
    %v4710 = vunpack.c.l.b16 %v4355
    %v4711 = vunpack.c.l.b16 %v4356
    %v4712 = vunpack.c.l.b16 %v4357
    %v4713 = vunpack.c.l.b16 %v4358
    %v4714 = vunpack.c.l.b16 %v4359
    %v4715 = vunpack.c.l.b16 %v4360
    %v4716 = vunpack.c.l.b16 %v4361
    %v4717 = vunpack.c.l.b16 %v4362
    %v4718 = vunpack.c.l.b16 %v4363
    %v4719 = vunpack.c.l.b16 %v4364
    %v4720 = vunpack.c.l.b16 %v4365
    %v4721 = vunpack.c.l.b16 %v4374
    %v4722 = vunpack.c.l.b16 %v4375
    %v4723 = vunpack.c.l.b16 %v4376
    %v4724 = vunpack.c.l.b16 %v4377
    %v4725 = vunpack.c.l.b16 %v4378
    %v4726 = vunpack.c.l.b16 %v4379
    %v4727 = vunpack.c.l.b16 %v4380
    %v4728 = vunpack.c.l.b16 %v4381
    %v4729 = vunpack.c.l.b16 %v4382
    %v4730 = vunpack.c.l.b16 %v4383
    %v4731 = vunpack.c.l.b16 %v4384
    %v4732 = vunpack.c.l.b16 %v4385
    %v4733 = vunpack.c.l.b16 %v4386
    %v4734 = vunpack.c.l.b16 %v4387
    %v4735 = vunpack.c.l.b16 %v4388
    %v4736 = vunpack.c.l.b16 %v4389
    %v4737 = vunpack.c.l.b16 %v4398
    %v4738 = vunpack.c.l.b16 %v4399
    %v4739 = vunpack.c.l.b16 %v4400
    %v4740 = vunpack.c.l.b16 %v4401
    %v4741 = vunpack.c.l.b16 %v4402
    %v4742 = vunpack.c.l.b16 %v4403
    %v4743 = vunpack.c.l.b16 %v4404
    %v4744 = vunpack.c.l.b16 %v4405
    %v4745 = vunpack.c.l.b16 %v4406
    %v4746 = vunpack.c.l.b16 %v4407
    %v4747 = vunpack.c.l.b16 %v4408
    %v4748 = vunpack.c.l.b16 %v4409
    %v4749 = vunpack.c.l.b16 %v4410
    %v4750 = vunpack.c.l.b16 %v4411
    %v4751 = vunpack.c.l.b16 %v4412
    %v4752 = vunpack.c.l.b16 %v4413
    %v4753 = vunpack.c.l.b16 %v4422
    %v4754 = vunpack.c.l.b16 %v4423
    %v4755 = vunpack.c.l.b16 %v4424
    %v4756 = vunpack.c.l.b16 %v4425
    %v4757 = vunpack.c.l.b16 %v4426
    %v4758 = vunpack.c.l.b16 %v4427
    %v4759 = vunpack.c.l.b16 %v4428
    %v4760 = vunpack.c.l.b16 %v4429
    %v4761 = vunpack.c.l.b16 %v4430
    %v4762 = vunpack.c.l.b16 %v4431
    %v4763 = vunpack.c.l.b16 %v4432
    %v4764 = vunpack.c.l.b16 %v4433
    %v4765 = vunpack.c.l.b16 %v4434
    %v4766 = vunpack.c.l.b16 %v4435
    %v4767 = vunpack.c.l.b16 %v4436
    %v4768 = vunpack.c.l.b16 %v4437
    %v4769 = vunpack.c.l.b16 %v4446
    %v4770 = vunpack.c.l.b16 %v4447
    %v4771 = vunpack.c.l.b16 %v4448
    %v4772 = vunpack.c.l.b16 %v4449
    %v4773 = vunpack.c.l.b16 %v4450
    %v4774 = vunpack.c.l.b16 %v4451
    %v4775 = vunpack.c.l.b16 %v4452
    %v4776 = vunpack.c.l.b16 %v4453
    %v4777 = vunpack.c.l.b16 %v4454
    %v4778 = vunpack.c.l.b16 %v4455
    %v4779 = vunpack.c.l.b16 %v4456
    %v4780 = vunpack.c.l.b16 %v4457
    %v4781 = vunpack.c.l.b16 %v4458
    %v4782 = vunpack.c.l.b16 %v4459
    %v4783 = vunpack.c.l.b16 %v4460
    %v4784 = vunpack.c.l.b16 %v4461
    %v4785 = vunpack.c.l.b16 %v4470
    %v4786 = vunpack.c.l.b16 %v4471
    %v4787 = vunpack.c.l.b16 %v4472
    %v4788 = vunpack.c.l.b16 %v4473
    %v4789 = vunpack.c.l.b16 %v4474
    %v4790 = vunpack.c.l.b16 %v4475
    %v4791 = vunpack.c.l.b16 %v4476
    %v4792 = vunpack.c.l.b16 %v4477
    %v4793 = vunpack.c.l.b16 %v4478
    %v4794 = vunpack.c.l.b16 %v4479
    %v4795 = vunpack.c.l.b16 %v4480
    %v4796 = vunpack.c.l.b16 %v4481
    %v4797 = vunpack.c.l.b16 %v4482
    %v4798 = vunpack.c.l.b16 %v4483
    %v4799 = vunpack.c.l.b16 %v4484
    %v4800 = vunpack.c.l.b16 %v4485
    %v4801 = vunpack.c.l.b16 %v4494
    %v4802 = vunpack.c.l.b16 %v4495
    %v4803 = vunpack.c.l.b16 %v4496
    %v4804 = vunpack.c.l.b16 %v4497
    %v4805 = vunpack.c.l.b16 %v4498
    %v4806 = vunpack.c.l.b16 %v4499
    %v4807 = vunpack.c.l.b16 %v4500
    %v4808 = vunpack.c.l.b16 %v4501
    %v4809 = vunpack.c.l.b16 %v4502
    %v4810 = vunpack.c.l.b16 %v4503
    %v4811 = vunpack.c.l.b16 %v4504
    %v4812 = vunpack.c.l.b16 %v4505
    %v4813 = vunpack.c.l.b16 %v4506
    %v4814 = vunpack.c.l.b16 %v4507
    %v4815 = vunpack.c.l.b16 %v4508
    %v4816 = vunpack.c.l.b16 %v4509
    %v4817 = vunpack.c.l.b16 %v4518
    %v4818 = vunpack.c.l.b16 %v4519
    %v4819 = vunpack.c.l.b16 %v4520
    %v4820 = vunpack.c.l.b16 %v4521
    %v4821 = vunpack.c.l.b16 %v4522
    %v4822 = vunpack.c.l.b16 %v4523
    %v4823 = vunpack.c.l.b16 %v4524
    %v4824 = vunpack.c.l.b16 %v4525
    %v4825 = vunpack.c.l.b16 %v4526
    %v4826 = vunpack.c.l.b16 %v4527
    %v4827 = vunpack.c.l.b16 %v4528
    %v4828 = vunpack.c.l.b16 %v4529
    %v4829 = vunpack.c.l.b16 %v4530
    %v4830 = vunpack.c.l.b16 %v4531
    %v4831 = vunpack.c.l.b16 %v4532
    %v4832 = vunpack.c.l.b16 %v4533
    %v4833 = vrot.slane %v4707, 7
    %vm4834 = vcmask 1041409
    %v4835 = vsel %vm4834, %v4833, %v4705
    %v4836 = vrot.slane %v4709, 6
    %vm4837 = vcmask 1042434
    %v4838 = vsel %vm4837, %v4836, %v4835
    %v4839 = vrot.slane %v4711, 5
    %vm4840 = vcmask 1043459
    %v4841 = vsel %vm4840, %v4839, %v4838
    %v4842 = vrot.slane %v4713, 4
    %vm4843 = vcmask 1044484
    %v4844 = vsel %vm4843, %v4842, %v4841
    %v4845 = vrot.slane %v4715, 3
    %vm4846 = vcmask 1045509
    %v4847 = vsel %vm4846, %v4845, %v4844
    %v4848 = vrot.slane %v4717, 2
    %vm4849 = vcmask 1046534
    %v4850 = vsel %vm4849, %v4848, %v4847
    %v4851 = vrot.slane %v4719, 1
    %vm4852 = vcmask 1047559
    %v4853 = vsel %vm4852, %v4851, %v4850
    %v4854 = vrot.slane %v4708, 7
    %v4855 = vsel %vm4834, %v4854, %v4706
    %v4856 = vrot.slane %v4710, 6
    %v4857 = vsel %vm4837, %v4856, %v4855
    %v4858 = vrot.slane %v4712, 5
    %v4859 = vsel %vm4840, %v4858, %v4857
    %v4860 = vrot.slane %v4714, 4
    %v4861 = vsel %vm4843, %v4860, %v4859
    %v4862 = vrot.slane %v4716, 3
    %v4863 = vsel %vm4846, %v4862, %v4861
    %v4864 = vrot.slane %v4718, 2
    %v4865 = vsel %vm4849, %v4864, %v4863
    %v4866 = vrot.slane %v4720, 1
    %v4867 = vsel %vm4852, %v4866, %v4865
    %v4868 = vrot.slane %v4723, 7
    %v4869 = vsel %vm4834, %v4868, %v4721
    %v4870 = vrot.slane %v4725, 6
    %v4871 = vsel %vm4837, %v4870, %v4869
    %v4872 = vrot.slane %v4727, 5
    %v4873 = vsel %vm4840, %v4872, %v4871
    %v4874 = vrot.slane %v4729, 4
    %v4875 = vsel %vm4843, %v4874, %v4873
    %v4876 = vrot.slane %v4731, 3
    %v4877 = vsel %vm4846, %v4876, %v4875
    %v4878 = vrot.slane %v4733, 2
    %v4879 = vsel %vm4849, %v4878, %v4877
    %v4880 = vrot.slane %v4735, 1
    %v4881 = vsel %vm4852, %v4880, %v4879
    %v4882 = vrot.slane %v4724, 7
    %v4883 = vsel %vm4834, %v4882, %v4722
    %v4884 = vrot.slane %v4726, 6
    %v4885 = vsel %vm4837, %v4884, %v4883
    %v4886 = vrot.slane %v4728, 5
    %v4887 = vsel %vm4840, %v4886, %v4885
    %v4888 = vrot.slane %v4730, 4
    %v4889 = vsel %vm4843, %v4888, %v4887
    %v4890 = vrot.slane %v4732, 3
    %v4891 = vsel %vm4846, %v4890, %v4889
    %v4892 = vrot.slane %v4734, 2
    %v4893 = vsel %vm4849, %v4892, %v4891
    %v4894 = vrot.slane %v4736, 1
    %v4895 = vsel %vm4852, %v4894, %v4893
    %v4896 = vrot.slane %v4739, 7
    %v4897 = vsel %vm4834, %v4896, %v4737
    %v4898 = vrot.slane %v4741, 6
    %v4899 = vsel %vm4837, %v4898, %v4897
    %v4900 = vrot.slane %v4743, 5
    %v4901 = vsel %vm4840, %v4900, %v4899
    %v4902 = vrot.slane %v4745, 4
    %v4903 = vsel %vm4843, %v4902, %v4901
    %v4904 = vrot.slane %v4747, 3
    %v4905 = vsel %vm4846, %v4904, %v4903
    %v4906 = vrot.slane %v4749, 2
    %v4907 = vsel %vm4849, %v4906, %v4905
    %v4908 = vrot.slane %v4751, 1
    %v4909 = vsel %vm4852, %v4908, %v4907
    %v4910 = vrot.slane %v4740, 7
    %v4911 = vsel %vm4834, %v4910, %v4738
    %v4912 = vrot.slane %v4742, 6
    %v4913 = vsel %vm4837, %v4912, %v4911
    %v4914 = vrot.slane %v4744, 5
    %v4915 = vsel %vm4840, %v4914, %v4913
    %v4916 = vrot.slane %v4746, 4
    %v4917 = vsel %vm4843, %v4916, %v4915
    %v4918 = vrot.slane %v4748, 3
    %v4919 = vsel %vm4846, %v4918, %v4917
    %v4920 = vrot.slane %v4750, 2
    %v4921 = vsel %vm4849, %v4920, %v4919
    %v4922 = vrot.slane %v4752, 1
    %v4923 = vsel %vm4852, %v4922, %v4921
    %v4924 = vrot.slane %v4755, 7
    %v4925 = vsel %vm4834, %v4924, %v4753
    %v4926 = vrot.slane %v4757, 6
    %v4927 = vsel %vm4837, %v4926, %v4925
    %v4928 = vrot.slane %v4759, 5
    %v4929 = vsel %vm4840, %v4928, %v4927
    %v4930 = vrot.slane %v4761, 4
    %v4931 = vsel %vm4843, %v4930, %v4929
    %v4932 = vrot.slane %v4763, 3
    %v4933 = vsel %vm4846, %v4932, %v4931
    %v4934 = vrot.slane %v4765, 2
    %v4935 = vsel %vm4849, %v4934, %v4933
    %v4936 = vrot.slane %v4767, 1
    %v4937 = vsel %vm4852, %v4936, %v4935
    %v4938 = vrot.slane %v4756, 7
    %v4939 = vsel %vm4834, %v4938, %v4754
    %v4940 = vrot.slane %v4758, 6
    %v4941 = vsel %vm4837, %v4940, %v4939
    %v4942 = vrot.slane %v4760, 5
    %v4943 = vsel %vm4840, %v4942, %v4941
    %v4944 = vrot.slane %v4762, 4
    %v4945 = vsel %vm4843, %v4944, %v4943
    %v4946 = vrot.slane %v4764, 3
    %v4947 = vsel %vm4846, %v4946, %v4945
    %v4948 = vrot.slane %v4766, 2
    %v4949 = vsel %vm4849, %v4948, %v4947
    %v4950 = vrot.slane %v4768, 1
    %v4951 = vsel %vm4852, %v4950, %v4949
    %v4952 = vrot.slane %v4771, 7
    %v4953 = vsel %vm4834, %v4952, %v4769
    %v4954 = vrot.slane %v4773, 6
    %v4955 = vsel %vm4837, %v4954, %v4953
    %v4956 = vrot.slane %v4775, 5
    %v4957 = vsel %vm4840, %v4956, %v4955
    %v4958 = vrot.slane %v4777, 4
    %v4959 = vsel %vm4843, %v4958, %v4957
    %v4960 = vrot.slane %v4779, 3
    %v4961 = vsel %vm4846, %v4960, %v4959
    %v4962 = vrot.slane %v4781, 2
    %v4963 = vsel %vm4849, %v4962, %v4961
    %v4964 = vrot.slane %v4783, 1
    %v4965 = vsel %vm4852, %v4964, %v4963
    %v4966 = vrot.slane %v4772, 7
    %v4967 = vsel %vm4834, %v4966, %v4770
    %v4968 = vrot.slane %v4774, 6
    %v4969 = vsel %vm4837, %v4968, %v4967
    %v4970 = vrot.slane %v4776, 5
    %v4971 = vsel %vm4840, %v4970, %v4969
    %v4972 = vrot.slane %v4778, 4
    %v4973 = vsel %vm4843, %v4972, %v4971
    %v4974 = vrot.slane %v4780, 3
    %v4975 = vsel %vm4846, %v4974, %v4973
    %v4976 = vrot.slane %v4782, 2
    %v4977 = vsel %vm4849, %v4976, %v4975
    %v4978 = vrot.slane %v4784, 1
    %v4979 = vsel %vm4852, %v4978, %v4977
    %v4980 = vrot.slane %v4787, 7
    %v4981 = vsel %vm4834, %v4980, %v4785
    %v4982 = vrot.slane %v4789, 6
    %v4983 = vsel %vm4837, %v4982, %v4981
    %v4984 = vrot.slane %v4791, 5
    %v4985 = vsel %vm4840, %v4984, %v4983
    %v4986 = vrot.slane %v4793, 4
    %v4987 = vsel %vm4843, %v4986, %v4985
    %v4988 = vrot.slane %v4795, 3
    %v4989 = vsel %vm4846, %v4988, %v4987
    %v4990 = vrot.slane %v4797, 2
    %v4991 = vsel %vm4849, %v4990, %v4989
    %v4992 = vrot.slane %v4799, 1
    %v4993 = vsel %vm4852, %v4992, %v4991
    %v4994 = vrot.slane %v4788, 7
    %v4995 = vsel %vm4834, %v4994, %v4786
    %v4996 = vrot.slane %v4790, 6
    %v4997 = vsel %vm4837, %v4996, %v4995
    %v4998 = vrot.slane %v4792, 5
    %v4999 = vsel %vm4840, %v4998, %v4997
    %v5000 = vrot.slane %v4794, 4
    %v5001 = vsel %vm4843, %v5000, %v4999
    %v5002 = vrot.slane %v4796, 3
    %v5003 = vsel %vm4846, %v5002, %v5001
    %v5004 = vrot.slane %v4798, 2
    %v5005 = vsel %vm4849, %v5004, %v5003
    %v5006 = vrot.slane %v4800, 1
    %v5007 = vsel %vm4852, %v5006, %v5005
    %v5008 = vrot.slane %v4803, 7
    %v5009 = vsel %vm4834, %v5008, %v4801
    %v5010 = vrot.slane %v4805, 6
    %v5011 = vsel %vm4837, %v5010, %v5009
    %v5012 = vrot.slane %v4807, 5
    %v5013 = vsel %vm4840, %v5012, %v5011
    %v5014 = vrot.slane %v4809, 4
    %v5015 = vsel %vm4843, %v5014, %v5013
    %v5016 = vrot.slane %v4811, 3
    %v5017 = vsel %vm4846, %v5016, %v5015
    %v5018 = vrot.slane %v4813, 2
    %v5019 = vsel %vm4849, %v5018, %v5017
    %v5020 = vrot.slane %v4815, 1
    %v5021 = vsel %vm4852, %v5020, %v5019
    %v5022 = vrot.slane %v4804, 7
    %v5023 = vsel %vm4834, %v5022, %v4802
    %v5024 = vrot.slane %v4806, 6
    %v5025 = vsel %vm4837, %v5024, %v5023
    %v5026 = vrot.slane %v4808, 5
    %v5027 = vsel %vm4840, %v5026, %v5025
    %v5028 = vrot.slane %v4810, 4
    %v5029 = vsel %vm4843, %v5028, %v5027
    %v5030 = vrot.slane %v4812, 3
    %v5031 = vsel %vm4846, %v5030, %v5029
    %v5032 = vrot.slane %v4814, 2
    %v5033 = vsel %vm4849, %v5032, %v5031
    %v5034 = vrot.slane %v4816, 1
    %v5035 = vsel %vm4852, %v5034, %v5033
    %v5036 = vrot.slane %v4819, 7
    %v5037 = vsel %vm4834, %v5036, %v4817
    %v5038 = vrot.slane %v4821, 6
    %v5039 = vsel %vm4837, %v5038, %v5037
    %v5040 = vrot.slane %v4823, 5
    %v5041 = vsel %vm4840, %v5040, %v5039
    %v5042 = vrot.slane %v4825, 4
    %v5043 = vsel %vm4843, %v5042, %v5041
    %v5044 = vrot.slane %v4827, 3
    %v5045 = vsel %vm4846, %v5044, %v5043
    %v5046 = vrot.slane %v4829, 2
    %v5047 = vsel %vm4849, %v5046, %v5045
    %v5048 = vrot.slane %v4831, 1
    %v5049 = vsel %vm4852, %v5048, %v5047
    %v5050 = vrot.slane %v4820, 7
    %v5051 = vsel %vm4834, %v5050, %v4818
    %v5052 = vrot.slane %v4822, 6
    %v5053 = vsel %vm4837, %v5052, %v5051
    %v5054 = vrot.slane %v4824, 5
    %v5055 = vsel %vm4840, %v5054, %v5053
    %v5056 = vrot.slane %v4826, 4
    %v5057 = vsel %vm4843, %v5056, %v5055
    %v5058 = vrot.slane %v4828, 3
    %v5059 = vsel %vm4846, %v5058, %v5057
    %v5060 = vrot.slane %v4830, 2
    %v5061 = vsel %vm4849, %v5060, %v5059
    %v5062 = vrot.slane %v4832, 1
    %v5063 = vsel %vm4852, %v5062, %v5061
    %v5064 = vpack.c.b16 %v4881, %v4853
    %v5065 = vpack.c.b16 %v4895, %v4867
    %v5066 = vpack.c.b16 %v4937, %v4909
    %v5067 = vpack.c.b16 %v4951, %v4923
    %v5068 = vpack.c.b16 %v4993, %v4965
    %v5069 = vpack.c.b16 %v5007, %v4979
    %v5070 = vpack.c.b16 %v5049, %v5021
    %v5071 = vpack.c.b16 %v5063, %v5035
    %v5094 = vunpack.c.l.b16 %v4559
    %v5095 = vunpack.c.l.b16 %v4560
    %v5096 = vunpack.c.l.b16 %v4561
    %v5097 = vunpack.c.l.b16 %v4562
    %v5098 = vunpack.c.l.b16 %v4563
    %v5099 = vunpack.c.l.b16 %v4564
    %v5100 = vunpack.c.l.b16 %v4565
    %v5101 = vunpack.c.l.b16 %v4566
    %v5102 = vunpack.c.l.b16 %v4567
    %v5103 = vunpack.c.l.b16 %v4568
    %v5104 = vunpack.c.l.b16 %v4569
    %v5105 = vunpack.c.l.b16 %v4570
    %v5106 = vunpack.c.l.b16 %v4571
    %v5107 = vunpack.c.l.b16 %v4572
    %v5108 = vunpack.c.l.b16 %v4573
    %v5109 = vunpack.c.l.b16 %v4574
    %v5110 = vunpack.c.l.b16 %v4575
    %v5111 = vunpack.c.l.b16 %v4576
    %v5112 = vpack.c.b16 %v5095, %v5094
    %v5113 = vpack.c.b16 %v5097, %v5096
    %v5114 = vpack.c.b16 %v5099, %v5098
    %v5115 = vpack.c.b16 %v5101, %v5100
    %v5116 = vpack.c.b16 %v5103, %v5102
    %v5117 = vpack.c.b16 %v5105, %v5104
    %v5118 = vpack.c.b16 %v5107, %v5106
    %v5119 = vpack.c.b16 %v5109, %v5108
    %v5120 = vpack.c.b16 %v5111, %v5110
    %vm5130 = vcmask 130048
    %v5132 = vsel %vm5130, %v5065, 0
    %v5135 = vsel %vm5130, %v5067, 0
    %v5138 = vsel %vm5130, %v5069, 0
    %v5141 = vsel %vm5130, %v5071, 0
    %5143 = vmatprep.subr.bf16.mxu0 0
    %5144 = vmatpush1.bf16.msra.mxu0 %v5119
    %5145 = vmatprep.subr.bf16.mxu0 0
    %5146 = vmatpush1.bf16.msra.mxu0 %v5118
    %5147 = vmatprep.subr.bf16.mxu0 0
    %5148 = vmatpush1.bf16.msra.mxu0 %v5117
    %5149 = vmatprep.subr.bf16.mxu0 0
    %5150 = vmatpush1.bf16.msra.mxu0 %v5116
    %5151 = vmatprep.subr.bf16.mxu0 0
    %5152 = vmatpush1.bf16.msra.mxu0 %v5115
    %5153 = vmatprep.subr.bf16.mxu0 0
    %5154 = vmatpush1.bf16.msra.mxu0 %v5114
    %5155 = vmatprep.subr.bf16.mxu0 0
    %5156 = vmatpush1.bf16.msra.mxu0 %v5113
    %5157 = vmatprep.subr.bf16.mxu0 0
    %5158 = vmatpush1.bf16.msra.mxu0 %v5112
    %5159 = vmatprep.subr.bf16.mxu0 0
    %5160 = vmatpush2.bf16.msra.mxu0 0
    %5161 = vmatprep.subr.bf16.mxu0 0
    %5162 = vmatpush2.bf16.msra.mxu0 0
    %5163 = vmatprep.subr.bf16.mxu0 0
    %5164 = vmatpush2.bf16.msra.mxu0 0
    %5165 = vmatprep.subr.bf16.mxu0 0
    %5166 = vmatpush2.bf16.msra.mxu0 0
    %5167 = vmatprep.subr.bf16.mxu0 0
    %5168 = vmatpush2.bf16.msra.mxu0 0
    %5169 = vmatprep.subr.bf16.mxu0 0
    %5170 = vmatpush2.bf16.msra.mxu0 0
    %5171 = vmatprep.subr.bf16.mxu0 0
    %5172 = vmatpush2.bf16.msra.mxu0 0
    %5173 = vmatprep.subr.bf16.mxu0 0
    %5174 = vmatpush2.bf16.msra.mxu0 %v5120
    %5175 = vmatprep.mubr.bf16.mxu0 %v5132
    %5176 = vmatmul.mubr.bf16.gmra.mxu0 %v5064
    %v5177 = vpop.f32.mrf.mxu0
    %v5178 = vadd.f32 0.0, %v5177
    %v5179 = vpop.f32.mrf.mxu0
    %v5180 = vpop.f32.mrf.mxu0
    %v5181 = vadd.f32 0.0, %v5180
    %v5182 = vpop.f32.mrf.mxu0
    %5183 = vmatprep.mubr.bf16.mxu0 %v5135
    %5184 = vmatmul.mubr.bf16.gmra.mxu0 %v5066
    %v5185 = vpop.f32.mrf.mxu0
    %v5186 = vadd.f32 0.0, %v5185
    %v5187 = vpop.f32.mrf.mxu0
    %v5188 = vpop.f32.mrf.mxu0
    %v5189 = vadd.f32 0.0, %v5188
    %v5190 = vpop.f32.mrf.mxu0
    %5191 = vmatprep.mubr.bf16.mxu0 %v5138
    %5192 = vmatmul.mubr.bf16.gmra.mxu0 %v5068
    %v5193 = vpop.f32.mrf.mxu0
    %v5194 = vadd.f32 0.0, %v5193
    %v5195 = vpop.f32.mrf.mxu0
    %v5196 = vpop.f32.mrf.mxu0
    %v5197 = vadd.f32 0.0, %v5196
    %v5198 = vpop.f32.mrf.mxu0
    %5199 = vmatprep.mubr.bf16.mxu0 %v5141
    %5200 = vmatmul.mubr.bf16.gmra.mxu0 %v5070
    %v5201 = vpop.f32.mrf.mxu0
    %v5202 = vadd.f32 0.0, %v5201
    %v5203 = vpop.f32.mrf.mxu0
    %v5204 = vpop.f32.mrf.mxu0
    %v5205 = vadd.f32 0.0, %v5204
    %v5206 = vpop.f32.mrf.mxu0
    %5207 = vdwg.mxu0
    %v5224 = vunpack.c.l.b16 %v4348
    %v5225 = vunpack.c.l.b16 %v4349
    %v5226 = vunpack.c.l.b16 %v4372
    %v5227 = vunpack.c.l.b16 %v4373
    %v5228 = vunpack.c.l.b16 %v4396
    %v5229 = vunpack.c.l.b16 %v4397
    %v5230 = vunpack.c.l.b16 %v4420
    %v5231 = vunpack.c.l.b16 %v4421
    %v5232 = vunpack.c.l.b16 %v4444
    %v5233 = vunpack.c.l.b16 %v4445
    %v5234 = vunpack.c.l.b16 %v4468
    %v5235 = vunpack.c.l.b16 %v4469
    %v5236 = vunpack.c.l.b16 %v4492
    %v5237 = vunpack.c.l.b16 %v4493
    %v5238 = vunpack.c.l.b16 %v4516
    %v5239 = vunpack.c.l.b16 %v4517
    %v5240 = vrot.slane %v4705, 7
    %v5241 = vsel %vm4834, %v5240, %v5224
    %v5242 = vrot.slane %v4707, 6
    %v5243 = vsel %vm4837, %v5242, %v5241
    %v5244 = vrot.slane %v4709, 5
    %v5245 = vsel %vm4840, %v5244, %v5243
    %v5246 = vrot.slane %v4711, 4
    %v5247 = vsel %vm4843, %v5246, %v5245
    %v5248 = vrot.slane %v4713, 3
    %v5249 = vsel %vm4846, %v5248, %v5247
    %v5250 = vrot.slane %v4715, 2
    %v5251 = vsel %vm4849, %v5250, %v5249
    %v5252 = vrot.slane %v4717, 1
    %v5253 = vsel %vm4852, %v5252, %v5251
    %v5254 = vrot.slane %v4706, 7
    %v5255 = vsel %vm4834, %v5254, %v5225
    %v5256 = vrot.slane %v4708, 6
    %v5257 = vsel %vm4837, %v5256, %v5255
    %v5258 = vrot.slane %v4710, 5
    %v5259 = vsel %vm4840, %v5258, %v5257
    %v5260 = vrot.slane %v4712, 4
    %v5261 = vsel %vm4843, %v5260, %v5259
    %v5262 = vrot.slane %v4714, 3
    %v5263 = vsel %vm4846, %v5262, %v5261
    %v5264 = vrot.slane %v4716, 2
    %v5265 = vsel %vm4849, %v5264, %v5263
    %v5266 = vrot.slane %v4718, 1
    %v5267 = vsel %vm4852, %v5266, %v5265
    %v5268 = vrot.slane %v4721, 7
    %v5269 = vsel %vm4834, %v5268, %v5226
    %v5270 = vrot.slane %v4723, 6
    %v5271 = vsel %vm4837, %v5270, %v5269
    %v5272 = vrot.slane %v4725, 5
    %v5273 = vsel %vm4840, %v5272, %v5271
    %v5274 = vrot.slane %v4727, 4
    %v5275 = vsel %vm4843, %v5274, %v5273
    %v5276 = vrot.slane %v4729, 3
    %v5277 = vsel %vm4846, %v5276, %v5275
    %v5278 = vrot.slane %v4731, 2
    %v5279 = vsel %vm4849, %v5278, %v5277
    %v5280 = vrot.slane %v4733, 1
    %v5281 = vsel %vm4852, %v5280, %v5279
    %v5282 = vrot.slane %v4722, 7
    %v5283 = vsel %vm4834, %v5282, %v5227
    %v5284 = vrot.slane %v4724, 6
    %v5285 = vsel %vm4837, %v5284, %v5283
    %v5286 = vrot.slane %v4726, 5
    %v5287 = vsel %vm4840, %v5286, %v5285
    %v5288 = vrot.slane %v4728, 4
    %v5289 = vsel %vm4843, %v5288, %v5287
    %v5290 = vrot.slane %v4730, 3
    %v5291 = vsel %vm4846, %v5290, %v5289
    %v5292 = vrot.slane %v4732, 2
    %v5293 = vsel %vm4849, %v5292, %v5291
    %v5294 = vrot.slane %v4734, 1
    %v5295 = vsel %vm4852, %v5294, %v5293
    %v5296 = vrot.slane %v4737, 7
    %v5297 = vsel %vm4834, %v5296, %v5228
    %v5298 = vrot.slane %v4739, 6
    %v5299 = vsel %vm4837, %v5298, %v5297
    %v5300 = vrot.slane %v4741, 5
    %v5301 = vsel %vm4840, %v5300, %v5299
    %v5302 = vrot.slane %v4743, 4
    %v5303 = vsel %vm4843, %v5302, %v5301
    %v5304 = vrot.slane %v4745, 3
    %v5305 = vsel %vm4846, %v5304, %v5303
    %v5306 = vrot.slane %v4747, 2
    %v5307 = vsel %vm4849, %v5306, %v5305
    %v5308 = vrot.slane %v4749, 1
    %v5309 = vsel %vm4852, %v5308, %v5307
    %v5310 = vrot.slane %v4738, 7
    %v5311 = vsel %vm4834, %v5310, %v5229
    %v5312 = vrot.slane %v4740, 6
    %v5313 = vsel %vm4837, %v5312, %v5311
    %v5314 = vrot.slane %v4742, 5
    %v5315 = vsel %vm4840, %v5314, %v5313
    %v5316 = vrot.slane %v4744, 4
    %v5317 = vsel %vm4843, %v5316, %v5315
    %v5318 = vrot.slane %v4746, 3
    %v5319 = vsel %vm4846, %v5318, %v5317
    %v5320 = vrot.slane %v4748, 2
    %v5321 = vsel %vm4849, %v5320, %v5319
    %v5322 = vrot.slane %v4750, 1
    %v5323 = vsel %vm4852, %v5322, %v5321
    %v5324 = vrot.slane %v4753, 7
    %v5325 = vsel %vm4834, %v5324, %v5230
    %v5326 = vrot.slane %v4755, 6
    %v5327 = vsel %vm4837, %v5326, %v5325
    %v5328 = vrot.slane %v4757, 5
    %v5329 = vsel %vm4840, %v5328, %v5327
    %v5330 = vrot.slane %v4759, 4
    %v5331 = vsel %vm4843, %v5330, %v5329
    %v5332 = vrot.slane %v4761, 3
    %v5333 = vsel %vm4846, %v5332, %v5331
    %v5334 = vrot.slane %v4763, 2
    %v5335 = vsel %vm4849, %v5334, %v5333
    %v5336 = vrot.slane %v4765, 1
    %v5337 = vsel %vm4852, %v5336, %v5335
    %v5338 = vrot.slane %v4754, 7
    %v5339 = vsel %vm4834, %v5338, %v5231
    %v5340 = vrot.slane %v4756, 6
    %v5341 = vsel %vm4837, %v5340, %v5339
    %v5342 = vrot.slane %v4758, 5
    %v5343 = vsel %vm4840, %v5342, %v5341
    %v5344 = vrot.slane %v4760, 4
    %v5345 = vsel %vm4843, %v5344, %v5343
    %v5346 = vrot.slane %v4762, 3
    %v5347 = vsel %vm4846, %v5346, %v5345
    %v5348 = vrot.slane %v4764, 2
    %v5349 = vsel %vm4849, %v5348, %v5347
    %v5350 = vrot.slane %v4766, 1
    %v5351 = vsel %vm4852, %v5350, %v5349
    %v5352 = vrot.slane %v4769, 7
    %v5353 = vsel %vm4834, %v5352, %v5232
    %v5354 = vrot.slane %v4771, 6
    %v5355 = vsel %vm4837, %v5354, %v5353
    %v5356 = vrot.slane %v4773, 5
    %v5357 = vsel %vm4840, %v5356, %v5355
    %v5358 = vrot.slane %v4775, 4
    %v5359 = vsel %vm4843, %v5358, %v5357
    %v5360 = vrot.slane %v4777, 3
    %v5361 = vsel %vm4846, %v5360, %v5359
    %v5362 = vrot.slane %v4779, 2
    %v5363 = vsel %vm4849, %v5362, %v5361
    %v5364 = vrot.slane %v4781, 1
    %v5365 = vsel %vm4852, %v5364, %v5363
    %v5366 = vrot.slane %v4770, 7
    %v5367 = vsel %vm4834, %v5366, %v5233
    %v5368 = vrot.slane %v4772, 6
    %v5369 = vsel %vm4837, %v5368, %v5367
    %v5370 = vrot.slane %v4774, 5
    %v5371 = vsel %vm4840, %v5370, %v5369
    %v5372 = vrot.slane %v4776, 4
    %v5373 = vsel %vm4843, %v5372, %v5371
    %v5374 = vrot.slane %v4778, 3
    %v5375 = vsel %vm4846, %v5374, %v5373
    %v5376 = vrot.slane %v4780, 2
    %v5377 = vsel %vm4849, %v5376, %v5375
    %v5378 = vrot.slane %v4782, 1
    %v5379 = vsel %vm4852, %v5378, %v5377
    %v5380 = vrot.slane %v4785, 7
    %v5381 = vsel %vm4834, %v5380, %v5234
    %v5382 = vrot.slane %v4787, 6
    %v5383 = vsel %vm4837, %v5382, %v5381
    %v5384 = vrot.slane %v4789, 5
    %v5385 = vsel %vm4840, %v5384, %v5383
    %v5386 = vrot.slane %v4791, 4
    %v5387 = vsel %vm4843, %v5386, %v5385
    %v5388 = vrot.slane %v4793, 3
    %v5389 = vsel %vm4846, %v5388, %v5387
    %v5390 = vrot.slane %v4795, 2
    %v5391 = vsel %vm4849, %v5390, %v5389
    %v5392 = vrot.slane %v4797, 1
    %v5393 = vsel %vm4852, %v5392, %v5391
    %v5394 = vrot.slane %v4786, 7
    %v5395 = vsel %vm4834, %v5394, %v5235
    %v5396 = vrot.slane %v4788, 6
    %v5397 = vsel %vm4837, %v5396, %v5395
    %v5398 = vrot.slane %v4790, 5
    %v5399 = vsel %vm4840, %v5398, %v5397
    %v5400 = vrot.slane %v4792, 4
    %v5401 = vsel %vm4843, %v5400, %v5399
    %v5402 = vrot.slane %v4794, 3
    %v5403 = vsel %vm4846, %v5402, %v5401
    %v5404 = vrot.slane %v4796, 2
    %v5405 = vsel %vm4849, %v5404, %v5403
    %v5406 = vrot.slane %v4798, 1
    %v5407 = vsel %vm4852, %v5406, %v5405
    %v5408 = vrot.slane %v4801, 7
    %v5409 = vsel %vm4834, %v5408, %v5236
    %v5410 = vrot.slane %v4803, 6
    %v5411 = vsel %vm4837, %v5410, %v5409
    %v5412 = vrot.slane %v4805, 5
    %v5413 = vsel %vm4840, %v5412, %v5411
    %v5414 = vrot.slane %v4807, 4
    %v5415 = vsel %vm4843, %v5414, %v5413
    %v5416 = vrot.slane %v4809, 3
    %v5417 = vsel %vm4846, %v5416, %v5415
    %v5418 = vrot.slane %v4811, 2
    %v5419 = vsel %vm4849, %v5418, %v5417
    %v5420 = vrot.slane %v4813, 1
    %v5421 = vsel %vm4852, %v5420, %v5419
    %v5422 = vrot.slane %v4802, 7
    %v5423 = vsel %vm4834, %v5422, %v5237
    %v5424 = vrot.slane %v4804, 6
    %v5425 = vsel %vm4837, %v5424, %v5423
    %v5426 = vrot.slane %v4806, 5
    %v5427 = vsel %vm4840, %v5426, %v5425
    %v5428 = vrot.slane %v4808, 4
    %v5429 = vsel %vm4843, %v5428, %v5427
    %v5430 = vrot.slane %v4810, 3
    %v5431 = vsel %vm4846, %v5430, %v5429
    %v5432 = vrot.slane %v4812, 2
    %v5433 = vsel %vm4849, %v5432, %v5431
    %v5434 = vrot.slane %v4814, 1
    %v5435 = vsel %vm4852, %v5434, %v5433
    %v5436 = vrot.slane %v4817, 7
    %v5437 = vsel %vm4834, %v5436, %v5238
    %v5438 = vrot.slane %v4819, 6
    %v5439 = vsel %vm4837, %v5438, %v5437
    %v5440 = vrot.slane %v4821, 5
    %v5441 = vsel %vm4840, %v5440, %v5439
    %v5442 = vrot.slane %v4823, 4
    %v5443 = vsel %vm4843, %v5442, %v5441
    %v5444 = vrot.slane %v4825, 3
    %v5445 = vsel %vm4846, %v5444, %v5443
    %v5446 = vrot.slane %v4827, 2
    %v5447 = vsel %vm4849, %v5446, %v5445
    %v5448 = vrot.slane %v4829, 1
    %v5449 = vsel %vm4852, %v5448, %v5447
    %v5450 = vrot.slane %v4818, 7
    %v5451 = vsel %vm4834, %v5450, %v5239
    %v5452 = vrot.slane %v4820, 6
    %v5453 = vsel %vm4837, %v5452, %v5451
    %v5454 = vrot.slane %v4822, 5
    %v5455 = vsel %vm4840, %v5454, %v5453
    %v5456 = vrot.slane %v4824, 4
    %v5457 = vsel %vm4843, %v5456, %v5455
    %v5458 = vrot.slane %v4826, 3
    %v5459 = vsel %vm4846, %v5458, %v5457
    %v5460 = vrot.slane %v4828, 2
    %v5461 = vsel %vm4849, %v5460, %v5459
    %v5462 = vrot.slane %v4830, 1
    %v5463 = vsel %vm4852, %v5462, %v5461
    %v5464 = vpack.c.b16 %v5281, %v5253
    %v5465 = vpack.c.b16 %v5295, %v5267
    %v5466 = vpack.c.b16 %v5337, %v5309
    %v5467 = vpack.c.b16 %v5351, %v5323
    %v5468 = vpack.c.b16 %v5393, %v5365
    %v5469 = vpack.c.b16 %v5407, %v5379
    %v5470 = vpack.c.b16 %v5449, %v5421
    %v5471 = vpack.c.b16 %v5463, %v5435
    %v5494 = vunpack.c.l.b16 %v4540
    %v5495 = vunpack.c.l.b16 %v4541
    %v5496 = vunpack.c.l.b16 %v4542
    %v5497 = vunpack.c.l.b16 %v4543
    %v5498 = vunpack.c.l.b16 %v4544
    %v5499 = vunpack.c.l.b16 %v4545
    %v5500 = vunpack.c.l.b16 %v4546
    %v5501 = vunpack.c.l.b16 %v4547
    %v5502 = vunpack.c.l.b16 %v4548
    %v5503 = vunpack.c.l.b16 %v4549
    %v5504 = vunpack.c.l.b16 %v4550
    %v5505 = vunpack.c.l.b16 %v4551
    %v5506 = vunpack.c.l.b16 %v4552
    %v5507 = vunpack.c.l.b16 %v4553
    %v5508 = vunpack.c.l.b16 %v4554
    %v5509 = vunpack.c.l.b16 %v4555
    %v5510 = vunpack.c.l.b16 %v4556
    %v5511 = vunpack.c.l.b16 %v4557
    %v5512 = vpack.c.b16 %v5495, %v5494
    %v5513 = vpack.c.b16 %v5497, %v5496
    %v5514 = vpack.c.b16 %v5499, %v5498
    %v5515 = vpack.c.b16 %v5501, %v5500
    %v5516 = vpack.c.b16 %v5503, %v5502
    %v5517 = vpack.c.b16 %v5505, %v5504
    %v5518 = vpack.c.b16 %v5507, %v5506
    %v5519 = vpack.c.b16 %v5509, %v5508
    %v5520 = vpack.c.b16 %v5511, %v5510
    %v5531 = vsel %vm5130, %v5465, 0
    %v5534 = vsel %vm5130, %v5467, 0
    %v5537 = vsel %vm5130, %v5469, 0
    %v5540 = vsel %vm5130, %v5471, 0
    %5542 = vmatprep.subr.bf16.mxu0 0
    %5543 = vmatpush1.bf16.msra.mxu0 %v5519
    %5544 = vmatprep.subr.bf16.mxu0 0
    %5545 = vmatpush1.bf16.msra.mxu0 %v5518
    %5546 = vmatprep.subr.bf16.mxu0 0
    %5547 = vmatpush1.bf16.msra.mxu0 %v5517
    %5548 = vmatprep.subr.bf16.mxu0 0
    %5549 = vmatpush1.bf16.msra.mxu0 %v5516
    %5550 = vmatprep.subr.bf16.mxu0 0
    %5551 = vmatpush1.bf16.msra.mxu0 %v5515
    %5552 = vmatprep.subr.bf16.mxu0 0
    %5553 = vmatpush1.bf16.msra.mxu0 %v5514
    %5554 = vmatprep.subr.bf16.mxu0 0
    %5555 = vmatpush1.bf16.msra.mxu0 %v5513
    %5556 = vmatprep.subr.bf16.mxu0 0
    %5557 = vmatpush1.bf16.msra.mxu0 %v5512
    %5558 = vmatprep.subr.bf16.mxu0 0
    %5559 = vmatpush2.bf16.msra.mxu0 0
    %5560 = vmatprep.subr.bf16.mxu0 0
    %5561 = vmatpush2.bf16.msra.mxu0 0
    %5562 = vmatprep.subr.bf16.mxu0 0
    %5563 = vmatpush2.bf16.msra.mxu0 0
    %5564 = vmatprep.subr.bf16.mxu0 0
    %5565 = vmatpush2.bf16.msra.mxu0 0
    %5566 = vmatprep.subr.bf16.mxu0 0
    %5567 = vmatpush2.bf16.msra.mxu0 0
    %5568 = vmatprep.subr.bf16.mxu0 0
    %5569 = vmatpush2.bf16.msra.mxu0 0
    %5570 = vmatprep.subr.bf16.mxu0 0
    %5571 = vmatpush2.bf16.msra.mxu0 0
    %5572 = vmatprep.subr.bf16.mxu0 0
    %5573 = vmatpush2.bf16.msra.mxu0 %v5520
    %5574 = vmatprep.mubr.bf16.mxu0 %v5531
    %5575 = vmatmul.mubr.bf16.gmra.mxu0 %v5464
    %v5576 = vpop.f32.mrf.mxu0
    %v5577 = vadd.f32 %v5178, %v5576
    %v5578 = vpop.f32.mrf.mxu0
    %v5579 = vpop.f32.mrf.mxu0
    %v5580 = vadd.f32 %v5181, %v5579
    %v5581 = vpop.f32.mrf.mxu0
    %5582 = vmatprep.mubr.bf16.mxu0 %v5534
    %5583 = vmatmul.mubr.bf16.gmra.mxu0 %v5466
    %v5584 = vpop.f32.mrf.mxu0
    %v5585 = vadd.f32 %v5186, %v5584
    %v5586 = vpop.f32.mrf.mxu0
    %v5587 = vpop.f32.mrf.mxu0
    %v5588 = vadd.f32 %v5189, %v5587
    %v5589 = vpop.f32.mrf.mxu0
    %5590 = vmatprep.mubr.bf16.mxu0 %v5537
    %5591 = vmatmul.mubr.bf16.gmra.mxu0 %v5468
    %v5592 = vpop.f32.mrf.mxu0
    %v5593 = vadd.f32 %v5194, %v5592
    %v5594 = vpop.f32.mrf.mxu0
    %v5595 = vpop.f32.mrf.mxu0
    %v5596 = vadd.f32 %v5197, %v5595
    %v5597 = vpop.f32.mrf.mxu0
    %5598 = vmatprep.mubr.bf16.mxu0 %v5540
    %5599 = vmatmul.mubr.bf16.gmra.mxu0 %v5470
    %v5600 = vpop.f32.mrf.mxu0
    %v5601 = vadd.f32 %v5202, %v5600
    %v5602 = vpop.f32.mrf.mxu0
    %v5603 = vpop.f32.mrf.mxu0
    %v5604 = vadd.f32 %v5205, %v5603
    %v5605 = vpop.f32.mrf.mxu0
    %5606 = vdwg.mxu0
    %s5607 = scalar_lea.vmem %s3, 144
    %v5608 = vld [vmem:[%s5607] sm:$0xf]
    %v5609 = vld [vmem:[%s5607 + $0x4] sm:$0xf]
    %v5610 = vld [vmem:[%s5607 + $0x8] sm:$0xf]
    %v5611 = vld [vmem:[%s5607 + $0xc] sm:$0xf]
    %v5612 = vld [vmem:[%s5607 + $0x10] sm:$0xf]
    %v5613 = vld [vmem:[%s5607 + $0x14] sm:$0xf]
    %v5614 = vld [vmem:[%s5607 + $0x18] sm:$0xf]
    %v5615 = vld [vmem:[%s5607 + $0x1c] sm:$0xf]
    %v5616 = vld [vmem:[%s5607 + $0x20] sm:$0xf]
    %v5617 = vld [vmem:[%s5607 + $0x24] sm:$0xf]
    %v5618 = vld [vmem:[%s5607 + $0x28] sm:$0xf]
    %v5619 = vld [vmem:[%s5607 + $0x2c] sm:$0xf]
    %v5620 = vld [vmem:[%s5607 + $0x30] sm:$0xf]
    %v5621 = vld [vmem:[%s5607 + $0x34] sm:$0xf]
    %v5622 = vld [vmem:[%s5607 + $0x38] sm:$0xf]
    %v5623 = vld [vmem:[%s5607 + $0x3c] sm:$0xf]
    %v5624 = vld [vmem:[%s5607 + $0x40] sm:$0xf]
    %v5625 = vld [vmem:[%s5607 + $0x44] sm:$0xf]
    %v5642 = vunpack.c.l.b16 %v4366
    %v5643 = vunpack.c.l.b16 %v4367
    %v5644 = vunpack.c.l.b16 %v4390
    %v5645 = vunpack.c.l.b16 %v4391
    %v5646 = vunpack.c.l.b16 %v4414
    %v5647 = vunpack.c.l.b16 %v4415
    %v5648 = vunpack.c.l.b16 %v4438
    %v5649 = vunpack.c.l.b16 %v4439
    %v5650 = vunpack.c.l.b16 %v4462
    %v5651 = vunpack.c.l.b16 %v4463
    %v5652 = vunpack.c.l.b16 %v4486
    %v5653 = vunpack.c.l.b16 %v4487
    %v5654 = vunpack.c.l.b16 %v4510
    %v5655 = vunpack.c.l.b16 %v4511
    %v5656 = vunpack.c.l.b16 %v4534
    %v5657 = vunpack.c.l.b16 %v4535
    %v5658 = vrot.slane %v4709, 7
    %v5659 = vsel %vm4834, %v5658, %v4707
    %v5660 = vrot.slane %v4711, 6
    %v5661 = vsel %vm4837, %v5660, %v5659
    %v5662 = vrot.slane %v4713, 5
    %v5663 = vsel %vm4840, %v5662, %v5661
    %v5664 = vrot.slane %v4715, 4
    %v5665 = vsel %vm4843, %v5664, %v5663
    %v5666 = vrot.slane %v4717, 3
    %v5667 = vsel %vm4846, %v5666, %v5665
    %v5668 = vrot.slane %v4719, 2
    %v5669 = vsel %vm4849, %v5668, %v5667
    %v5670 = vrot.slane %v5642, 1
    %v5671 = vsel %vm4852, %v5670, %v5669
    %v5672 = vrot.slane %v4710, 7
    %v5673 = vsel %vm4834, %v5672, %v4708
    %v5674 = vrot.slane %v4712, 6
    %v5675 = vsel %vm4837, %v5674, %v5673
    %v5676 = vrot.slane %v4714, 5
    %v5677 = vsel %vm4840, %v5676, %v5675
    %v5678 = vrot.slane %v4716, 4
    %v5679 = vsel %vm4843, %v5678, %v5677
    %v5680 = vrot.slane %v4718, 3
    %v5681 = vsel %vm4846, %v5680, %v5679
    %v5682 = vrot.slane %v4720, 2
    %v5683 = vsel %vm4849, %v5682, %v5681
    %v5684 = vrot.slane %v5643, 1
    %v5685 = vsel %vm4852, %v5684, %v5683
    %v5686 = vrot.slane %v4725, 7
    %v5687 = vsel %vm4834, %v5686, %v4723
    %v5688 = vrot.slane %v4727, 6
    %v5689 = vsel %vm4837, %v5688, %v5687
    %v5690 = vrot.slane %v4729, 5
    %v5691 = vsel %vm4840, %v5690, %v5689
    %v5692 = vrot.slane %v4731, 4
    %v5693 = vsel %vm4843, %v5692, %v5691
    %v5694 = vrot.slane %v4733, 3
    %v5695 = vsel %vm4846, %v5694, %v5693
    %v5696 = vrot.slane %v4735, 2
    %v5697 = vsel %vm4849, %v5696, %v5695
    %v5698 = vrot.slane %v5644, 1
    %v5699 = vsel %vm4852, %v5698, %v5697
    %v5700 = vrot.slane %v4726, 7
    %v5701 = vsel %vm4834, %v5700, %v4724
    %v5702 = vrot.slane %v4728, 6
    %v5703 = vsel %vm4837, %v5702, %v5701
    %v5704 = vrot.slane %v4730, 5
    %v5705 = vsel %vm4840, %v5704, %v5703
    %v5706 = vrot.slane %v4732, 4
    %v5707 = vsel %vm4843, %v5706, %v5705
    %v5708 = vrot.slane %v4734, 3
    %v5709 = vsel %vm4846, %v5708, %v5707
    %v5710 = vrot.slane %v4736, 2
    %v5711 = vsel %vm4849, %v5710, %v5709
    %v5712 = vrot.slane %v5645, 1
    %v5713 = vsel %vm4852, %v5712, %v5711
    %v5714 = vrot.slane %v4741, 7
    %v5715 = vsel %vm4834, %v5714, %v4739
    %v5716 = vrot.slane %v4743, 6
    %v5717 = vsel %vm4837, %v5716, %v5715
    %v5718 = vrot.slane %v4745, 5
    %v5719 = vsel %vm4840, %v5718, %v5717
    %v5720 = vrot.slane %v4747, 4
    %v5721 = vsel %vm4843, %v5720, %v5719
    %v5722 = vrot.slane %v4749, 3
    %v5723 = vsel %vm4846, %v5722, %v5721
    %v5724 = vrot.slane %v4751, 2
    %v5725 = vsel %vm4849, %v5724, %v5723
    %v5726 = vrot.slane %v5646, 1
    %v5727 = vsel %vm4852, %v5726, %v5725
    %v5728 = vrot.slane %v4742, 7
    %v5729 = vsel %vm4834, %v5728, %v4740
    %v5730 = vrot.slane %v4744, 6
    %v5731 = vsel %vm4837, %v5730, %v5729
    %v5732 = vrot.slane %v4746, 5
    %v5733 = vsel %vm4840, %v5732, %v5731
    %v5734 = vrot.slane %v4748, 4
    %v5735 = vsel %vm4843, %v5734, %v5733
    %v5736 = vrot.slane %v4750, 3
    %v5737 = vsel %vm4846, %v5736, %v5735
    %v5738 = vrot.slane %v4752, 2
    %v5739 = vsel %vm4849, %v5738, %v5737
    %v5740 = vrot.slane %v5647, 1
    %v5741 = vsel %vm4852, %v5740, %v5739
    %v5742 = vrot.slane %v4757, 7
    %v5743 = vsel %vm4834, %v5742, %v4755
    %v5744 = vrot.slane %v4759, 6
    %v5745 = vsel %vm4837, %v5744, %v5743
    %v5746 = vrot.slane %v4761, 5
    %v5747 = vsel %vm4840, %v5746, %v5745
    %v5748 = vrot.slane %v4763, 4
    %v5749 = vsel %vm4843, %v5748, %v5747
    %v5750 = vrot.slane %v4765, 3
    %v5751 = vsel %vm4846, %v5750, %v5749
    %v5752 = vrot.slane %v4767, 2
    %v5753 = vsel %vm4849, %v5752, %v5751
    %v5754 = vrot.slane %v5648, 1
    %v5755 = vsel %vm4852, %v5754, %v5753
    %v5756 = vrot.slane %v4758, 7
    %v5757 = vsel %vm4834, %v5756, %v4756
    %v5758 = vrot.slane %v4760, 6
    %v5759 = vsel %vm4837, %v5758, %v5757
    %v5760 = vrot.slane %v4762, 5
    %v5761 = vsel %vm4840, %v5760, %v5759
    %v5762 = vrot.slane %v4764, 4
    %v5763 = vsel %vm4843, %v5762, %v5761
    %v5764 = vrot.slane %v4766, 3
    %v5765 = vsel %vm4846, %v5764, %v5763
    %v5766 = vrot.slane %v4768, 2
    %v5767 = vsel %vm4849, %v5766, %v5765
    %v5768 = vrot.slane %v5649, 1
    %v5769 = vsel %vm4852, %v5768, %v5767
    %v5770 = vrot.slane %v4773, 7
    %v5771 = vsel %vm4834, %v5770, %v4771
    %v5772 = vrot.slane %v4775, 6
    %v5773 = vsel %vm4837, %v5772, %v5771
    %v5774 = vrot.slane %v4777, 5
    %v5775 = vsel %vm4840, %v5774, %v5773
    %v5776 = vrot.slane %v4779, 4
    %v5777 = vsel %vm4843, %v5776, %v5775
    %v5778 = vrot.slane %v4781, 3
    %v5779 = vsel %vm4846, %v5778, %v5777
    %v5780 = vrot.slane %v4783, 2
    %v5781 = vsel %vm4849, %v5780, %v5779
    %v5782 = vrot.slane %v5650, 1
    %v5783 = vsel %vm4852, %v5782, %v5781
    %v5784 = vrot.slane %v4774, 7
    %v5785 = vsel %vm4834, %v5784, %v4772
    %v5786 = vrot.slane %v4776, 6
    %v5787 = vsel %vm4837, %v5786, %v5785
    %v5788 = vrot.slane %v4778, 5
    %v5789 = vsel %vm4840, %v5788, %v5787
    %v5790 = vrot.slane %v4780, 4
    %v5791 = vsel %vm4843, %v5790, %v5789
    %v5792 = vrot.slane %v4782, 3
    %v5793 = vsel %vm4846, %v5792, %v5791
    %v5794 = vrot.slane %v4784, 2
    %v5795 = vsel %vm4849, %v5794, %v5793
    %v5796 = vrot.slane %v5651, 1
    %v5797 = vsel %vm4852, %v5796, %v5795
    %v5798 = vrot.slane %v4789, 7
    %v5799 = vsel %vm4834, %v5798, %v4787
    %v5800 = vrot.slane %v4791, 6
    %v5801 = vsel %vm4837, %v5800, %v5799
    %v5802 = vrot.slane %v4793, 5
    %v5803 = vsel %vm4840, %v5802, %v5801
    %v5804 = vrot.slane %v4795, 4
    %v5805 = vsel %vm4843, %v5804, %v5803
    %v5806 = vrot.slane %v4797, 3
    %v5807 = vsel %vm4846, %v5806, %v5805
    %v5808 = vrot.slane %v4799, 2
    %v5809 = vsel %vm4849, %v5808, %v5807
    %v5810 = vrot.slane %v5652, 1
    %v5811 = vsel %vm4852, %v5810, %v5809
    %v5812 = vrot.slane %v4790, 7
    %v5813 = vsel %vm4834, %v5812, %v4788
    %v5814 = vrot.slane %v4792, 6
    %v5815 = vsel %vm4837, %v5814, %v5813
    %v5816 = vrot.slane %v4794, 5
    %v5817 = vsel %vm4840, %v5816, %v5815
    %v5818 = vrot.slane %v4796, 4
    %v5819 = vsel %vm4843, %v5818, %v5817
    %v5820 = vrot.slane %v4798, 3
    %v5821 = vsel %vm4846, %v5820, %v5819
    %v5822 = vrot.slane %v4800, 2
    %v5823 = vsel %vm4849, %v5822, %v5821
    %v5824 = vrot.slane %v5653, 1
    %v5825 = vsel %vm4852, %v5824, %v5823
    %v5826 = vrot.slane %v4805, 7
    %v5827 = vsel %vm4834, %v5826, %v4803
    %v5828 = vrot.slane %v4807, 6
    %v5829 = vsel %vm4837, %v5828, %v5827
    %v5830 = vrot.slane %v4809, 5
    %v5831 = vsel %vm4840, %v5830, %v5829
    %v5832 = vrot.slane %v4811, 4
    %v5833 = vsel %vm4843, %v5832, %v5831
    %v5834 = vrot.slane %v4813, 3
    %v5835 = vsel %vm4846, %v5834, %v5833
    %v5836 = vrot.slane %v4815, 2
    %v5837 = vsel %vm4849, %v5836, %v5835
    %v5838 = vrot.slane %v5654, 1
    %v5839 = vsel %vm4852, %v5838, %v5837
    %v5840 = vrot.slane %v4806, 7
    %v5841 = vsel %vm4834, %v5840, %v4804
    %v5842 = vrot.slane %v4808, 6
    %v5843 = vsel %vm4837, %v5842, %v5841
    %v5844 = vrot.slane %v4810, 5
    %v5845 = vsel %vm4840, %v5844, %v5843
    %v5846 = vrot.slane %v4812, 4
    %v5847 = vsel %vm4843, %v5846, %v5845
    %v5848 = vrot.slane %v4814, 3
    %v5849 = vsel %vm4846, %v5848, %v5847
    %v5850 = vrot.slane %v4816, 2
    %v5851 = vsel %vm4849, %v5850, %v5849
    %v5852 = vrot.slane %v5655, 1
    %v5853 = vsel %vm4852, %v5852, %v5851
    %v5854 = vrot.slane %v4821, 7
    %v5855 = vsel %vm4834, %v5854, %v4819
    %v5856 = vrot.slane %v4823, 6
    %v5857 = vsel %vm4837, %v5856, %v5855
    %v5858 = vrot.slane %v4825, 5
    %v5859 = vsel %vm4840, %v5858, %v5857
    %v5860 = vrot.slane %v4827, 4
    %v5861 = vsel %vm4843, %v5860, %v5859
    %v5862 = vrot.slane %v4829, 3
    %v5863 = vsel %vm4846, %v5862, %v5861
    %v5864 = vrot.slane %v4831, 2
    %v5865 = vsel %vm4849, %v5864, %v5863
    %v5866 = vrot.slane %v5656, 1
    %v5867 = vsel %vm4852, %v5866, %v5865
    %v5868 = vrot.slane %v4822, 7
    %v5869 = vsel %vm4834, %v5868, %v4820
    %v5870 = vrot.slane %v4824, 6
    %v5871 = vsel %vm4837, %v5870, %v5869
    %v5872 = vrot.slane %v4826, 5
    %v5873 = vsel %vm4840, %v5872, %v5871
    %v5874 = vrot.slane %v4828, 4
    %v5875 = vsel %vm4843, %v5874, %v5873
    %v5876 = vrot.slane %v4830, 3
    %v5877 = vsel %vm4846, %v5876, %v5875
    %v5878 = vrot.slane %v4832, 2
    %v5879 = vsel %vm4849, %v5878, %v5877
    %v5880 = vrot.slane %v5657, 1
    %v5881 = vsel %vm4852, %v5880, %v5879
    %v5882 = vpack.c.b16 %v5699, %v5671
    %v5883 = vpack.c.b16 %v5713, %v5685
    %v5884 = vpack.c.b16 %v5755, %v5727
    %v5885 = vpack.c.b16 %v5769, %v5741
    %v5886 = vpack.c.b16 %v5811, %v5783
    %v5887 = vpack.c.b16 %v5825, %v5797
    %v5888 = vpack.c.b16 %v5867, %v5839
    %v5889 = vpack.c.b16 %v5881, %v5853
    %v5912 = vunpack.c.l.b16 %v5608
    %v5913 = vunpack.c.l.b16 %v5609
    %v5914 = vunpack.c.l.b16 %v5610
    %v5915 = vunpack.c.l.b16 %v5611
    %v5916 = vunpack.c.l.b16 %v5612
    %v5917 = vunpack.c.l.b16 %v5613
    %v5918 = vunpack.c.l.b16 %v5614
    %v5919 = vunpack.c.l.b16 %v5615
    %v5920 = vunpack.c.l.b16 %v5616
    %v5921 = vunpack.c.l.b16 %v5617
    %v5922 = vunpack.c.l.b16 %v5618
    %v5923 = vunpack.c.l.b16 %v5619
    %v5924 = vunpack.c.l.b16 %v5620
    %v5925 = vunpack.c.l.b16 %v5621
    %v5926 = vunpack.c.l.b16 %v5622
    %v5927 = vunpack.c.l.b16 %v5623
    %v5928 = vunpack.c.l.b16 %v5624
    %v5929 = vunpack.c.l.b16 %v5625
    %v5930 = vpack.c.b16 %v5913, %v5912
    %v5931 = vpack.c.b16 %v5915, %v5914
    %v5932 = vpack.c.b16 %v5917, %v5916
    %v5933 = vpack.c.b16 %v5919, %v5918
    %v5934 = vpack.c.b16 %v5921, %v5920
    %v5935 = vpack.c.b16 %v5923, %v5922
    %v5936 = vpack.c.b16 %v5925, %v5924
    %v5937 = vpack.c.b16 %v5927, %v5926
    %v5938 = vpack.c.b16 %v5929, %v5928
    %v5949 = vsel %vm5130, %v5883, 0
    %v5952 = vsel %vm5130, %v5885, 0
    %v5955 = vsel %vm5130, %v5887, 0
    %v5958 = vsel %vm5130, %v5889, 0
    %5960 = vmatprep.subr.bf16.mxu0 0
    %5961 = vmatpush1.bf16.msra.mxu0 %v5937
    %5962 = vmatprep.subr.bf16.mxu0 0
    %5963 = vmatpush1.bf16.msra.mxu0 %v5936
    %5964 = vmatprep.subr.bf16.mxu0 0
    %5965 = vmatpush1.bf16.msra.mxu0 %v5935
    %5966 = vmatprep.subr.bf16.mxu0 0
    %5967 = vmatpush1.bf16.msra.mxu0 %v5934
    %5968 = vmatprep.subr.bf16.mxu0 0
    %5969 = vmatpush1.bf16.msra.mxu0 %v5933
    %5970 = vmatprep.subr.bf16.mxu0 0
    %5971 = vmatpush1.bf16.msra.mxu0 %v5932
    %5972 = vmatprep.subr.bf16.mxu0 0
    %5973 = vmatpush1.bf16.msra.mxu0 %v5931
    %5974 = vmatprep.subr.bf16.mxu0 0
    %5975 = vmatpush1.bf16.msra.mxu0 %v5930
    %5976 = vmatprep.subr.bf16.mxu0 0
    %5977 = vmatpush2.bf16.msra.mxu0 0
    %5978 = vmatprep.subr.bf16.mxu0 0
    %5979 = vmatpush2.bf16.msra.mxu0 0
    %5980 = vmatprep.subr.bf16.mxu0 0
    %5981 = vmatpush2.bf16.msra.mxu0 0
    %5982 = vmatprep.subr.bf16.mxu0 0
    %5983 = vmatpush2.bf16.msra.mxu0 0
    %5984 = vmatprep.subr.bf16.mxu0 0
    %5985 = vmatpush2.bf16.msra.mxu0 0
    %5986 = vmatprep.subr.bf16.mxu0 0
    %5987 = vmatpush2.bf16.msra.mxu0 0
    %5988 = vmatprep.subr.bf16.mxu0 0
    %5989 = vmatpush2.bf16.msra.mxu0 0
    %5990 = vmatprep.subr.bf16.mxu0 0
    %5991 = vmatpush2.bf16.msra.mxu0 %v5938
    %5992 = vmatprep.mubr.bf16.mxu0 %v5949
    %5993 = vmatmul.mubr.bf16.gmra.mxu0 %v5882
    %v5994 = vpop.f32.mrf.mxu0
    %v5995 = vadd.f32 0.0, %v5994
    %v5996 = vpop.f32.mrf.mxu0
    %v5997 = vpop.f32.mrf.mxu0
    %v5998 = vadd.f32 0.0, %v5997
    %v5999 = vpop.f32.mrf.mxu0
    %6000 = vmatprep.mubr.bf16.mxu0 %v5952
    %6001 = vmatmul.mubr.bf16.gmra.mxu0 %v5884
    %v6002 = vpop.f32.mrf.mxu0
    %v6003 = vadd.f32 0.0, %v6002
    %v6004 = vpop.f32.mrf.mxu0
    %v6005 = vpop.f32.mrf.mxu0
    %v6006 = vadd.f32 0.0, %v6005
    %v6007 = vpop.f32.mrf.mxu0
    %6008 = vmatprep.mubr.bf16.mxu0 %v5955
    %6009 = vmatmul.mubr.bf16.gmra.mxu0 %v5886
    %v6010 = vpop.f32.mrf.mxu0
    %v6011 = vadd.f32 0.0, %v6010
    %v6012 = vpop.f32.mrf.mxu0
    %v6013 = vpop.f32.mrf.mxu0
    %v6014 = vadd.f32 0.0, %v6013
    %v6015 = vpop.f32.mrf.mxu0
    %6016 = vmatprep.mubr.bf16.mxu0 %v5958
    %6017 = vmatmul.mubr.bf16.gmra.mxu0 %v5888
    %v6018 = vpop.f32.mrf.mxu0
    %v6019 = vadd.f32 0.0, %v6018
    %v6020 = vpop.f32.mrf.mxu0
    %v6021 = vpop.f32.mrf.mxu0
    %v6022 = vadd.f32 0.0, %v6021
    %v6023 = vpop.f32.mrf.mxu0
    %6024 = vdwg.mxu0
    %v6025 = vadd.f32 %v5577, %v5995
    %v6026 = vadd.f32 %v5580, %v5998
    %v6027 = vadd.f32 %v5585, %v6003
    %v6028 = vadd.f32 %v5588, %v6006
    %v6029 = vadd.f32 %v5593, %v6011
    %v6030 = vadd.f32 %v5596, %v6014
    %v6031 = vadd.f32 %v5601, %v6019
    %v6032 = vadd.f32 %v5604, %v6022
    %s6033 = scalar_lea.vmem %s3, 216
    %v6034 = vld [vmem:[%s6033] sm:$0xf]
    %v6035 = vld [vmem:[%s6033 + $0x4] sm:$0xf]
    %v6036 = vld [vmem:[%s6033 + $0x8] sm:$0xf]
    %v6037 = vld [vmem:[%s6033 + $0xc] sm:$0xf]
    %v6038 = vld [vmem:[%s6033 + $0x10] sm:$0xf]
    %v6039 = vld [vmem:[%s6033 + $0x14] sm:$0xf]
    %v6040 = vld [vmem:[%s6033 + $0x18] sm:$0xf]
    %v6041 = vld [vmem:[%s6033 + $0x1c] sm:$0xf]
    %v6042 = vld [vmem:[%s6033 + $0x20] sm:$0xf]
    %v6043 = vld [vmem:[%s6033 + $0x24] sm:$0xf]
    %v6044 = vld [vmem:[%s6033 + $0x28] sm:$0xf]
    %v6045 = vld [vmem:[%s6033 + $0x2c] sm:$0xf]
    %v6046 = vld [vmem:[%s6033 + $0x30] sm:$0xf]
    %v6047 = vld [vmem:[%s6033 + $0x34] sm:$0xf]
    %v6048 = vld [vmem:[%s6033 + $0x38] sm:$0xf]
    %v6049 = vld [vmem:[%s6033 + $0x3c] sm:$0xf]
    %v6050 = vld [vmem:[%s6033 + $0x40] sm:$0xf]
    %v6051 = vld [vmem:[%s6033 + $0x44] sm:$0xf]
    %v6068 = vunpack.c.l.b16 %v4368
    %v6069 = vunpack.c.l.b16 %v4369
    %v6070 = vunpack.c.l.b16 %v4392
    %v6071 = vunpack.c.l.b16 %v4393
    %v6072 = vunpack.c.l.b16 %v4416
    %v6073 = vunpack.c.l.b16 %v4417
    %v6074 = vunpack.c.l.b16 %v4440
    %v6075 = vunpack.c.l.b16 %v4441
    %v6076 = vunpack.c.l.b16 %v4464
    %v6077 = vunpack.c.l.b16 %v4465
    %v6078 = vunpack.c.l.b16 %v4488
    %v6079 = vunpack.c.l.b16 %v4489
    %v6080 = vunpack.c.l.b16 %v4512
    %v6081 = vunpack.c.l.b16 %v4513
    %v6082 = vunpack.c.l.b16 %v4536
    %v6083 = vunpack.c.l.b16 %v4537
    %v6084 = vrot.slane %v4711, 7
    %v6085 = vsel %vm4834, %v6084, %v4709
    %v6086 = vrot.slane %v4713, 6
    %v6087 = vsel %vm4837, %v6086, %v6085
    %v6088 = vrot.slane %v4715, 5
    %v6089 = vsel %vm4840, %v6088, %v6087
    %v6090 = vrot.slane %v4717, 4
    %v6091 = vsel %vm4843, %v6090, %v6089
    %v6092 = vrot.slane %v4719, 3
    %v6093 = vsel %vm4846, %v6092, %v6091
    %v6094 = vrot.slane %v5642, 2
    %v6095 = vsel %vm4849, %v6094, %v6093
    %v6096 = vrot.slane %v6068, 1
    %v6097 = vsel %vm4852, %v6096, %v6095
    %v6098 = vrot.slane %v4712, 7
    %v6099 = vsel %vm4834, %v6098, %v4710
    %v6100 = vrot.slane %v4714, 6
    %v6101 = vsel %vm4837, %v6100, %v6099
    %v6102 = vrot.slane %v4716, 5
    %v6103 = vsel %vm4840, %v6102, %v6101
    %v6104 = vrot.slane %v4718, 4
    %v6105 = vsel %vm4843, %v6104, %v6103
    %v6106 = vrot.slane %v4720, 3
    %v6107 = vsel %vm4846, %v6106, %v6105
    %v6108 = vrot.slane %v5643, 2
    %v6109 = vsel %vm4849, %v6108, %v6107
    %v6110 = vrot.slane %v6069, 1
    %v6111 = vsel %vm4852, %v6110, %v6109
    %v6112 = vrot.slane %v4727, 7
    %v6113 = vsel %vm4834, %v6112, %v4725
    %v6114 = vrot.slane %v4729, 6
    %v6115 = vsel %vm4837, %v6114, %v6113
    %v6116 = vrot.slane %v4731, 5
    %v6117 = vsel %vm4840, %v6116, %v6115
    %v6118 = vrot.slane %v4733, 4
    %v6119 = vsel %vm4843, %v6118, %v6117
    %v6120 = vrot.slane %v4735, 3
    %v6121 = vsel %vm4846, %v6120, %v6119
    %v6122 = vrot.slane %v5644, 2
    %v6123 = vsel %vm4849, %v6122, %v6121
    %v6124 = vrot.slane %v6070, 1
    %v6125 = vsel %vm4852, %v6124, %v6123
    %v6126 = vrot.slane %v4728, 7
    %v6127 = vsel %vm4834, %v6126, %v4726
    %v6128 = vrot.slane %v4730, 6
    %v6129 = vsel %vm4837, %v6128, %v6127
    %v6130 = vrot.slane %v4732, 5
    %v6131 = vsel %vm4840, %v6130, %v6129
    %v6132 = vrot.slane %v4734, 4
    %v6133 = vsel %vm4843, %v6132, %v6131
    %v6134 = vrot.slane %v4736, 3
    %v6135 = vsel %vm4846, %v6134, %v6133
    %v6136 = vrot.slane %v5645, 2
    %v6137 = vsel %vm4849, %v6136, %v6135
    %v6138 = vrot.slane %v6071, 1
    %v6139 = vsel %vm4852, %v6138, %v6137
    %v6140 = vrot.slane %v4743, 7
    %v6141 = vsel %vm4834, %v6140, %v4741
    %v6142 = vrot.slane %v4745, 6
    %v6143 = vsel %vm4837, %v6142, %v6141
    %v6144 = vrot.slane %v4747, 5
    %v6145 = vsel %vm4840, %v6144, %v6143
    %v6146 = vrot.slane %v4749, 4
    %v6147 = vsel %vm4843, %v6146, %v6145
    %v6148 = vrot.slane %v4751, 3
    %v6149 = vsel %vm4846, %v6148, %v6147
    %v6150 = vrot.slane %v5646, 2
    %v6151 = vsel %vm4849, %v6150, %v6149
    %v6152 = vrot.slane %v6072, 1
    %v6153 = vsel %vm4852, %v6152, %v6151
    %v6154 = vrot.slane %v4744, 7
    %v6155 = vsel %vm4834, %v6154, %v4742
    %v6156 = vrot.slane %v4746, 6
    %v6157 = vsel %vm4837, %v6156, %v6155
    %v6158 = vrot.slane %v4748, 5
    %v6159 = vsel %vm4840, %v6158, %v6157
    %v6160 = vrot.slane %v4750, 4
    %v6161 = vsel %vm4843, %v6160, %v6159
    %v6162 = vrot.slane %v4752, 3
    %v6163 = vsel %vm4846, %v6162, %v6161
    %v6164 = vrot.slane %v5647, 2
    %v6165 = vsel %vm4849, %v6164, %v6163
    %v6166 = vrot.slane %v6073, 1
    %v6167 = vsel %vm4852, %v6166, %v6165
    %v6168 = vrot.slane %v4759, 7
    %v6169 = vsel %vm4834, %v6168, %v4757
    %v6170 = vrot.slane %v4761, 6
    %v6171 = vsel %vm4837, %v6170, %v6169
    %v6172 = vrot.slane %v4763, 5
    %v6173 = vsel %vm4840, %v6172, %v6171
    %v6174 = vrot.slane %v4765, 4
    %v6175 = vsel %vm4843, %v6174, %v6173
    %v6176 = vrot.slane %v4767, 3
    %v6177 = vsel %vm4846, %v6176, %v6175
    %v6178 = vrot.slane %v5648, 2
    %v6179 = vsel %vm4849, %v6178, %v6177
    %v6180 = vrot.slane %v6074, 1
    %v6181 = vsel %vm4852, %v6180, %v6179
    %v6182 = vrot.slane %v4760, 7
    %v6183 = vsel %vm4834, %v6182, %v4758
    %v6184 = vrot.slane %v4762, 6
    %v6185 = vsel %vm4837, %v6184, %v6183
    %v6186 = vrot.slane %v4764, 5
    %v6187 = vsel %vm4840, %v6186, %v6185
    %v6188 = vrot.slane %v4766, 4
    %v6189 = vsel %vm4843, %v6188, %v6187
    %v6190 = vrot.slane %v4768, 3
    %v6191 = vsel %vm4846, %v6190, %v6189
    %v6192 = vrot.slane %v5649, 2
    %v6193 = vsel %vm4849, %v6192, %v6191
    %v6194 = vrot.slane %v6075, 1
    %v6195 = vsel %vm4852, %v6194, %v6193
    %v6196 = vrot.slane %v4775, 7
    %v6197 = vsel %vm4834, %v6196, %v4773
    %v6198 = vrot.slane %v4777, 6
    %v6199 = vsel %vm4837, %v6198, %v6197
    %v6200 = vrot.slane %v4779, 5
    %v6201 = vsel %vm4840, %v6200, %v6199
    %v6202 = vrot.slane %v4781, 4
    %v6203 = vsel %vm4843, %v6202, %v6201
    %v6204 = vrot.slane %v4783, 3
    %v6205 = vsel %vm4846, %v6204, %v6203
    %v6206 = vrot.slane %v5650, 2
    %v6207 = vsel %vm4849, %v6206, %v6205
    %v6208 = vrot.slane %v6076, 1
    %v6209 = vsel %vm4852, %v6208, %v6207
    %v6210 = vrot.slane %v4776, 7
    %v6211 = vsel %vm4834, %v6210, %v4774
    %v6212 = vrot.slane %v4778, 6
    %v6213 = vsel %vm4837, %v6212, %v6211
    %v6214 = vrot.slane %v4780, 5
    %v6215 = vsel %vm4840, %v6214, %v6213
    %v6216 = vrot.slane %v4782, 4
    %v6217 = vsel %vm4843, %v6216, %v6215
    %v6218 = vrot.slane %v4784, 3
    %v6219 = vsel %vm4846, %v6218, %v6217
    %v6220 = vrot.slane %v5651, 2
    %v6221 = vsel %vm4849, %v6220, %v6219
    %v6222 = vrot.slane %v6077, 1
    %v6223 = vsel %vm4852, %v6222, %v6221
    %v6224 = vrot.slane %v4791, 7
    %v6225 = vsel %vm4834, %v6224, %v4789
    %v6226 = vrot.slane %v4793, 6
    %v6227 = vsel %vm4837, %v6226, %v6225
    %v6228 = vrot.slane %v4795, 5
    %v6229 = vsel %vm4840, %v6228, %v6227
    %v6230 = vrot.slane %v4797, 4
    %v6231 = vsel %vm4843, %v6230, %v6229
    %v6232 = vrot.slane %v4799, 3
    %v6233 = vsel %vm4846, %v6232, %v6231
    %v6234 = vrot.slane %v5652, 2
    %v6235 = vsel %vm4849, %v6234, %v6233
    %v6236 = vrot.slane %v6078, 1
    %v6237 = vsel %vm4852, %v6236, %v6235
    %v6238 = vrot.slane %v4792, 7
    %v6239 = vsel %vm4834, %v6238, %v4790
    %v6240 = vrot.slane %v4794, 6
    %v6241 = vsel %vm4837, %v6240, %v6239
    %v6242 = vrot.slane %v4796, 5
    %v6243 = vsel %vm4840, %v6242, %v6241
    %v6244 = vrot.slane %v4798, 4
    %v6245 = vsel %vm4843, %v6244, %v6243
    %v6246 = vrot.slane %v4800, 3
    %v6247 = vsel %vm4846, %v6246, %v6245
    %v6248 = vrot.slane %v5653, 2
    %v6249 = vsel %vm4849, %v6248, %v6247
    %v6250 = vrot.slane %v6079, 1
    %v6251 = vsel %vm4852, %v6250, %v6249
    %v6252 = vrot.slane %v4807, 7
    %v6253 = vsel %vm4834, %v6252, %v4805
    %v6254 = vrot.slane %v4809, 6
    %v6255 = vsel %vm4837, %v6254, %v6253
    %v6256 = vrot.slane %v4811, 5
    %v6257 = vsel %vm4840, %v6256, %v6255
    %v6258 = vrot.slane %v4813, 4
    %v6259 = vsel %vm4843, %v6258, %v6257
    %v6260 = vrot.slane %v4815, 3
    %v6261 = vsel %vm4846, %v6260, %v6259
    %v6262 = vrot.slane %v5654, 2
    %v6263 = vsel %vm4849, %v6262, %v6261
    %v6264 = vrot.slane %v6080, 1
    %v6265 = vsel %vm4852, %v6264, %v6263
    %v6266 = vrot.slane %v4808, 7
    %v6267 = vsel %vm4834, %v6266, %v4806
    %v6268 = vrot.slane %v4810, 6
    %v6269 = vsel %vm4837, %v6268, %v6267
    %v6270 = vrot.slane %v4812, 5
    %v6271 = vsel %vm4840, %v6270, %v6269
    %v6272 = vrot.slane %v4814, 4
    %v6273 = vsel %vm4843, %v6272, %v6271
    %v6274 = vrot.slane %v4816, 3
    %v6275 = vsel %vm4846, %v6274, %v6273
    %v6276 = vrot.slane %v5655, 2
    %v6277 = vsel %vm4849, %v6276, %v6275
    %v6278 = vrot.slane %v6081, 1
    %v6279 = vsel %vm4852, %v6278, %v6277
    %v6280 = vrot.slane %v4823, 7
    %v6281 = vsel %vm4834, %v6280, %v4821
    %v6282 = vrot.slane %v4825, 6
    %v6283 = vsel %vm4837, %v6282, %v6281
    %v6284 = vrot.slane %v4827, 5
    %v6285 = vsel %vm4840, %v6284, %v6283
    %v6286 = vrot.slane %v4829, 4
    %v6287 = vsel %vm4843, %v6286, %v6285
    %v6288 = vrot.slane %v4831, 3
    %v6289 = vsel %vm4846, %v6288, %v6287
    %v6290 = vrot.slane %v5656, 2
    %v6291 = vsel %vm4849, %v6290, %v6289
    %v6292 = vrot.slane %v6082, 1
    %v6293 = vsel %vm4852, %v6292, %v6291
    %v6294 = vrot.slane %v4824, 7
    %v6295 = vsel %vm4834, %v6294, %v4822
    %v6296 = vrot.slane %v4826, 6
    %v6297 = vsel %vm4837, %v6296, %v6295
    %v6298 = vrot.slane %v4828, 5
    %v6299 = vsel %vm4840, %v6298, %v6297
    %v6300 = vrot.slane %v4830, 4
    %v6301 = vsel %vm4843, %v6300, %v6299
    %v6302 = vrot.slane %v4832, 3
    %v6303 = vsel %vm4846, %v6302, %v6301
    %v6304 = vrot.slane %v5657, 2
    %v6305 = vsel %vm4849, %v6304, %v6303
    %v6306 = vrot.slane %v6083, 1
    %v6307 = vsel %vm4852, %v6306, %v6305
    %v6308 = vpack.c.b16 %v6125, %v6097
    %v6309 = vpack.c.b16 %v6139, %v6111
    %v6310 = vpack.c.b16 %v6181, %v6153
    %v6311 = vpack.c.b16 %v6195, %v6167
    %v6312 = vpack.c.b16 %v6237, %v6209
    %v6313 = vpack.c.b16 %v6251, %v6223
    %v6314 = vpack.c.b16 %v6293, %v6265
    %v6315 = vpack.c.b16 %v6307, %v6279
    %v6338 = vunpack.c.l.b16 %v6034
    %v6339 = vunpack.c.l.b16 %v6035
    %v6340 = vunpack.c.l.b16 %v6036
    %v6341 = vunpack.c.l.b16 %v6037
    %v6342 = vunpack.c.l.b16 %v6038
    %v6343 = vunpack.c.l.b16 %v6039
    %v6344 = vunpack.c.l.b16 %v6040
    %v6345 = vunpack.c.l.b16 %v6041
    %v6346 = vunpack.c.l.b16 %v6042
    %v6347 = vunpack.c.l.b16 %v6043
    %v6348 = vunpack.c.l.b16 %v6044
    %v6349 = vunpack.c.l.b16 %v6045
    %v6350 = vunpack.c.l.b16 %v6046
    %v6351 = vunpack.c.l.b16 %v6047
    %v6352 = vunpack.c.l.b16 %v6048
    %v6353 = vunpack.c.l.b16 %v6049
    %v6354 = vunpack.c.l.b16 %v6050
    %v6355 = vunpack.c.l.b16 %v6051
    %v6356 = vpack.c.b16 %v6339, %v6338
    %v6357 = vpack.c.b16 %v6341, %v6340
    %v6358 = vpack.c.b16 %v6343, %v6342
    %v6359 = vpack.c.b16 %v6345, %v6344
    %v6360 = vpack.c.b16 %v6347, %v6346
    %v6361 = vpack.c.b16 %v6349, %v6348
    %v6362 = vpack.c.b16 %v6351, %v6350
    %v6363 = vpack.c.b16 %v6353, %v6352
    %v6364 = vpack.c.b16 %v6355, %v6354
    %v6375 = vsel %vm5130, %v6309, 0
    %v6378 = vsel %vm5130, %v6311, 0
    %v6381 = vsel %vm5130, %v6313, 0
    %v6384 = vsel %vm5130, %v6315, 0
    %6386 = vmatprep.subr.bf16.mxu0 0
    %6387 = vmatpush1.bf16.msra.mxu0 %v6363
    %6388 = vmatprep.subr.bf16.mxu0 0
    %6389 = vmatpush1.bf16.msra.mxu0 %v6362
    %6390 = vmatprep.subr.bf16.mxu0 0
    %6391 = vmatpush1.bf16.msra.mxu0 %v6361
    %6392 = vmatprep.subr.bf16.mxu0 0
    %6393 = vmatpush1.bf16.msra.mxu0 %v6360
    %6394 = vmatprep.subr.bf16.mxu0 0
    %6395 = vmatpush1.bf16.msra.mxu0 %v6359
    %6396 = vmatprep.subr.bf16.mxu0 0
    %6397 = vmatpush1.bf16.msra.mxu0 %v6358
    %6398 = vmatprep.subr.bf16.mxu0 0
    %6399 = vmatpush1.bf16.msra.mxu0 %v6357
    %6400 = vmatprep.subr.bf16.mxu0 0
    %6401 = vmatpush1.bf16.msra.mxu0 %v6356
    %6402 = vmatprep.subr.bf16.mxu0 0
    %6403 = vmatpush2.bf16.msra.mxu0 0
    %6404 = vmatprep.subr.bf16.mxu0 0
    %6405 = vmatpush2.bf16.msra.mxu0 0
    %6406 = vmatprep.subr.bf16.mxu0 0
    %6407 = vmatpush2.bf16.msra.mxu0 0
    %6408 = vmatprep.subr.bf16.mxu0 0
    %6409 = vmatpush2.bf16.msra.mxu0 0
    %6410 = vmatprep.subr.bf16.mxu0 0
    %6411 = vmatpush2.bf16.msra.mxu0 0
    %6412 = vmatprep.subr.bf16.mxu0 0
    %6413 = vmatpush2.bf16.msra.mxu0 0
    %6414 = vmatprep.subr.bf16.mxu0 0
    %6415 = vmatpush2.bf16.msra.mxu0 0
    %6416 = vmatprep.subr.bf16.mxu0 0
    %6417 = vmatpush2.bf16.msra.mxu0 %v6364
    %6418 = vmatprep.mubr.bf16.mxu0 %v6375
    %6419 = vmatmul.mubr.bf16.gmra.mxu0 %v6308
    %v6420 = vpop.f32.mrf.mxu0
    %v6421 = vadd.f32 0.0, %v6420
    %v6422 = vpop.f32.mrf.mxu0
    %v6423 = vpop.f32.mrf.mxu0
    %v6424 = vadd.f32 0.0, %v6423
    %v6425 = vpop.f32.mrf.mxu0
    %6426 = vmatprep.mubr.bf16.mxu0 %v6378
    %6427 = vmatmul.mubr.bf16.gmra.mxu0 %v6310
    %v6428 = vpop.f32.mrf.mxu0
    %v6429 = vadd.f32 0.0, %v6428
    %v6430 = vpop.f32.mrf.mxu0
    %v6431 = vpop.f32.mrf.mxu0
    %v6432 = vadd.f32 0.0, %v6431
    %v6433 = vpop.f32.mrf.mxu0
    %6434 = vmatprep.mubr.bf16.mxu0 %v6381
    %6435 = vmatmul.mubr.bf16.gmra.mxu0 %v6312
    %v6436 = vpop.f32.mrf.mxu0
    %v6437 = vadd.f32 0.0, %v6436
    %v6438 = vpop.f32.mrf.mxu0
    %v6439 = vpop.f32.mrf.mxu0
    %v6440 = vadd.f32 0.0, %v6439
    %v6441 = vpop.f32.mrf.mxu0
    %6442 = vmatprep.mubr.bf16.mxu0 %v6384
    %6443 = vmatmul.mubr.bf16.gmra.mxu0 %v6314
    %v6444 = vpop.f32.mrf.mxu0
    %v6445 = vadd.f32 0.0, %v6444
    %v6446 = vpop.f32.mrf.mxu0
    %v6447 = vpop.f32.mrf.mxu0
    %v6448 = vadd.f32 0.0, %v6447
    %v6449 = vpop.f32.mrf.mxu0
    %6450 = vdwg.mxu0
    %v6451 = vadd.f32 %v6025, %v6421
    %v6452 = vadd.f32 %v6026, %v6424
    %v6453 = vadd.f32 %v6027, %v6429
    %v6454 = vadd.f32 %v6028, %v6432
    %v6455 = vadd.f32 %v6029, %v6437
    %v6456 = vadd.f32 %v6030, %v6440
    %v6457 = vadd.f32 %v6031, %v6445
    %v6458 = vadd.f32 %v6032, %v6448
    %s6459 = scalar_lea.vmem %s3, 288
    %v6460 = vld [vmem:[%s6459] sm:$0xf]
    %v6461 = vld [vmem:[%s6459 + $0x4] sm:$0xf]
    %v6462 = vld [vmem:[%s6459 + $0x8] sm:$0xf]
    %v6463 = vld [vmem:[%s6459 + $0xc] sm:$0xf]
    %v6464 = vld [vmem:[%s6459 + $0x10] sm:$0xf]
    %v6465 = vld [vmem:[%s6459 + $0x14] sm:$0xf]
    %v6466 = vld [vmem:[%s6459 + $0x18] sm:$0xf]
    %v6467 = vld [vmem:[%s6459 + $0x1c] sm:$0xf]
    %v6468 = vld [vmem:[%s6459 + $0x20] sm:$0xf]
    %v6469 = vld [vmem:[%s6459 + $0x24] sm:$0xf]
    %v6470 = vld [vmem:[%s6459 + $0x28] sm:$0xf]
    %v6471 = vld [vmem:[%s6459 + $0x2c] sm:$0xf]
    %v6472 = vld [vmem:[%s6459 + $0x30] sm:$0xf]
    %v6473 = vld [vmem:[%s6459 + $0x34] sm:$0xf]
    %v6474 = vld [vmem:[%s6459 + $0x38] sm:$0xf]
    %v6475 = vld [vmem:[%s6459 + $0x3c] sm:$0xf]
    %v6476 = vld [vmem:[%s6459 + $0x40] sm:$0xf]
    %v6477 = vld [vmem:[%s6459 + $0x44] sm:$0xf]
    %v6494 = vunpack.c.l.b16 %v4370
    %v6495 = vunpack.c.l.b16 %v4371
    %v6496 = vunpack.c.l.b16 %v4394
    %v6497 = vunpack.c.l.b16 %v4395
    %v6498 = vunpack.c.l.b16 %v4418
    %v6499 = vunpack.c.l.b16 %v4419
    %v6500 = vunpack.c.l.b16 %v4442
    %v6501 = vunpack.c.l.b16 %v4443
    %v6502 = vunpack.c.l.b16 %v4466
    %v6503 = vunpack.c.l.b16 %v4467
    %v6504 = vunpack.c.l.b16 %v4490
    %v6505 = vunpack.c.l.b16 %v4491
    %v6506 = vunpack.c.l.b16 %v4514
    %v6507 = vunpack.c.l.b16 %v4515
    %v6508 = vunpack.c.l.b16 %v4538
    %v6509 = vunpack.c.l.b16 %v4539
    %v6510 = vrot.slane %v4713, 7
    %v6511 = vsel %vm4834, %v6510, %v4711
    %v6512 = vrot.slane %v4715, 6
    %v6513 = vsel %vm4837, %v6512, %v6511
    %v6514 = vrot.slane %v4717, 5
    %v6515 = vsel %vm4840, %v6514, %v6513
    %v6516 = vrot.slane %v4719, 4
    %v6517 = vsel %vm4843, %v6516, %v6515
    %v6518 = vrot.slane %v5642, 3
    %v6519 = vsel %vm4846, %v6518, %v6517
    %v6520 = vrot.slane %v6068, 2
    %v6521 = vsel %vm4849, %v6520, %v6519
    %v6522 = vrot.slane %v6494, 1
    %v6523 = vsel %vm4852, %v6522, %v6521
    %v6524 = vrot.slane %v4714, 7
    %v6525 = vsel %vm4834, %v6524, %v4712
    %v6526 = vrot.slane %v4716, 6
    %v6527 = vsel %vm4837, %v6526, %v6525
    %v6528 = vrot.slane %v4718, 5
    %v6529 = vsel %vm4840, %v6528, %v6527
    %v6530 = vrot.slane %v4720, 4
    %v6531 = vsel %vm4843, %v6530, %v6529
    %v6532 = vrot.slane %v5643, 3
    %v6533 = vsel %vm4846, %v6532, %v6531
    %v6534 = vrot.slane %v6069, 2
    %v6535 = vsel %vm4849, %v6534, %v6533
    %v6536 = vrot.slane %v6495, 1
    %v6537 = vsel %vm4852, %v6536, %v6535
    %v6538 = vrot.slane %v4729, 7
    %v6539 = vsel %vm4834, %v6538, %v4727
    %v6540 = vrot.slane %v4731, 6
    %v6541 = vsel %vm4837, %v6540, %v6539
    %v6542 = vrot.slane %v4733, 5
    %v6543 = vsel %vm4840, %v6542, %v6541
    %v6544 = vrot.slane %v4735, 4
    %v6545 = vsel %vm4843, %v6544, %v6543
    %v6546 = vrot.slane %v5644, 3
    %v6547 = vsel %vm4846, %v6546, %v6545
    %v6548 = vrot.slane %v6070, 2
    %v6549 = vsel %vm4849, %v6548, %v6547
    %v6550 = vrot.slane %v6496, 1
    %v6551 = vsel %vm4852, %v6550, %v6549
    %v6552 = vrot.slane %v4730, 7
    %v6553 = vsel %vm4834, %v6552, %v4728
    %v6554 = vrot.slane %v4732, 6
    %v6555 = vsel %vm4837, %v6554, %v6553
    %v6556 = vrot.slane %v4734, 5
    %v6557 = vsel %vm4840, %v6556, %v6555
    %v6558 = vrot.slane %v4736, 4
    %v6559 = vsel %vm4843, %v6558, %v6557
    %v6560 = vrot.slane %v5645, 3
    %v6561 = vsel %vm4846, %v6560, %v6559
    %v6562 = vrot.slane %v6071, 2
    %v6563 = vsel %vm4849, %v6562, %v6561
    %v6564 = vrot.slane %v6497, 1
    %v6565 = vsel %vm4852, %v6564, %v6563
    %v6566 = vrot.slane %v4745, 7
    %v6567 = vsel %vm4834, %v6566, %v4743
    %v6568 = vrot.slane %v4747, 6
    %v6569 = vsel %vm4837, %v6568, %v6567
    %v6570 = vrot.slane %v4749, 5
    %v6571 = vsel %vm4840, %v6570, %v6569
    %v6572 = vrot.slane %v4751, 4
    %v6573 = vsel %vm4843, %v6572, %v6571
    %v6574 = vrot.slane %v5646, 3
    %v6575 = vsel %vm4846, %v6574, %v6573
    %v6576 = vrot.slane %v6072, 2
    %v6577 = vsel %vm4849, %v6576, %v6575
    %v6578 = vrot.slane %v6498, 1
    %v6579 = vsel %vm4852, %v6578, %v6577
    %v6580 = vrot.slane %v4746, 7
    %v6581 = vsel %vm4834, %v6580, %v4744
    %v6582 = vrot.slane %v4748, 6
    %v6583 = vsel %vm4837, %v6582, %v6581
    %v6584 = vrot.slane %v4750, 5
    %v6585 = vsel %vm4840, %v6584, %v6583
    %v6586 = vrot.slane %v4752, 4
    %v6587 = vsel %vm4843, %v6586, %v6585
    %v6588 = vrot.slane %v5647, 3
    %v6589 = vsel %vm4846, %v6588, %v6587
    %v6590 = vrot.slane %v6073, 2
    %v6591 = vsel %vm4849, %v6590, %v6589
    %v6592 = vrot.slane %v6499, 1
    %v6593 = vsel %vm4852, %v6592, %v6591
    %v6594 = vrot.slane %v4761, 7
    %v6595 = vsel %vm4834, %v6594, %v4759
    %v6596 = vrot.slane %v4763, 6
    %v6597 = vsel %vm4837, %v6596, %v6595
    %v6598 = vrot.slane %v4765, 5
    %v6599 = vsel %vm4840, %v6598, %v6597
    %v6600 = vrot.slane %v4767, 4
    %v6601 = vsel %vm4843, %v6600, %v6599
    %v6602 = vrot.slane %v5648, 3
    %v6603 = vsel %vm4846, %v6602, %v6601
    %v6604 = vrot.slane %v6074, 2
    %v6605 = vsel %vm4849, %v6604, %v6603
    %v6606 = vrot.slane %v6500, 1
    %v6607 = vsel %vm4852, %v6606, %v6605
    %v6608 = vrot.slane %v4762, 7
    %v6609 = vsel %vm4834, %v6608, %v4760
    %v6610 = vrot.slane %v4764, 6
    %v6611 = vsel %vm4837, %v6610, %v6609
    %v6612 = vrot.slane %v4766, 5
    %v6613 = vsel %vm4840, %v6612, %v6611
    %v6614 = vrot.slane %v4768, 4
    %v6615 = vsel %vm4843, %v6614, %v6613
    %v6616 = vrot.slane %v5649, 3
    %v6617 = vsel %vm4846, %v6616, %v6615
    %v6618 = vrot.slane %v6075, 2
    %v6619 = vsel %vm4849, %v6618, %v6617
    %v6620 = vrot.slane %v6501, 1
    %v6621 = vsel %vm4852, %v6620, %v6619
    %v6622 = vrot.slane %v4777, 7
    %v6623 = vsel %vm4834, %v6622, %v4775
    %v6624 = vrot.slane %v4779, 6
    %v6625 = vsel %vm4837, %v6624, %v6623
    %v6626 = vrot.slane %v4781, 5
    %v6627 = vsel %vm4840, %v6626, %v6625
    %v6628 = vrot.slane %v4783, 4
    %v6629 = vsel %vm4843, %v6628, %v6627
    %v6630 = vrot.slane %v5650, 3
    %v6631 = vsel %vm4846, %v6630, %v6629
    %v6632 = vrot.slane %v6076, 2
    %v6633 = vsel %vm4849, %v6632, %v6631
    %v6634 = vrot.slane %v6502, 1
    %v6635 = vsel %vm4852, %v6634, %v6633
    %v6636 = vrot.slane %v4778, 7
    %v6637 = vsel %vm4834, %v6636, %v4776
    %v6638 = vrot.slane %v4780, 6
    %v6639 = vsel %vm4837, %v6638, %v6637
    %v6640 = vrot.slane %v4782, 5
    %v6641 = vsel %vm4840, %v6640, %v6639
    %v6642 = vrot.slane %v4784, 4
    %v6643 = vsel %vm4843, %v6642, %v6641
    %v6644 = vrot.slane %v5651, 3
    %v6645 = vsel %vm4846, %v6644, %v6643
    %v6646 = vrot.slane %v6077, 2
    %v6647 = vsel %vm4849, %v6646, %v6645
    %v6648 = vrot.slane %v6503, 1
    %v6649 = vsel %vm4852, %v6648, %v6647
    %v6650 = vrot.slane %v4793, 7
    %v6651 = vsel %vm4834, %v6650, %v4791
    %v6652 = vrot.slane %v4795, 6
    %v6653 = vsel %vm4837, %v6652, %v6651
    %v6654 = vrot.slane %v4797, 5
    %v6655 = vsel %vm4840, %v6654, %v6653
    %v6656 = vrot.slane %v4799, 4
    %v6657 = vsel %vm4843, %v6656, %v6655
    %v6658 = vrot.slane %v5652, 3
    %v6659 = vsel %vm4846, %v6658, %v6657
    %v6660 = vrot.slane %v6078, 2
    %v6661 = vsel %vm4849, %v6660, %v6659
    %v6662 = vrot.slane %v6504, 1
    %v6663 = vsel %vm4852, %v6662, %v6661
    %v6664 = vrot.slane %v4794, 7
    %v6665 = vsel %vm4834, %v6664, %v4792
    %v6666 = vrot.slane %v4796, 6
    %v6667 = vsel %vm4837, %v6666, %v6665
    %v6668 = vrot.slane %v4798, 5
    %v6669 = vsel %vm4840, %v6668, %v6667
    %v6670 = vrot.slane %v4800, 4
    %v6671 = vsel %vm4843, %v6670, %v6669
    %v6672 = vrot.slane %v5653, 3
    %v6673 = vsel %vm4846, %v6672, %v6671
    %v6674 = vrot.slane %v6079, 2
    %v6675 = vsel %vm4849, %v6674, %v6673
    %v6676 = vrot.slane %v6505, 1
    %v6677 = vsel %vm4852, %v6676, %v6675
    %v6678 = vrot.slane %v4809, 7
    %v6679 = vsel %vm4834, %v6678, %v4807
    %v6680 = vrot.slane %v4811, 6
    %v6681 = vsel %vm4837, %v6680, %v6679
    %v6682 = vrot.slane %v4813, 5
    %v6683 = vsel %vm4840, %v6682, %v6681
    %v6684 = vrot.slane %v4815, 4
    %v6685 = vsel %vm4843, %v6684, %v6683
    %v6686 = vrot.slane %v5654, 3
    %v6687 = vsel %vm4846, %v6686, %v6685
    %v6688 = vrot.slane %v6080, 2
    %v6689 = vsel %vm4849, %v6688, %v6687
    %v6690 = vrot.slane %v6506, 1
    %v6691 = vsel %vm4852, %v6690, %v6689
    %v6692 = vrot.slane %v4810, 7
    %v6693 = vsel %vm4834, %v6692, %v4808
    %v6694 = vrot.slane %v4812, 6
    %v6695 = vsel %vm4837, %v6694, %v6693
    %v6696 = vrot.slane %v4814, 5
    %v6697 = vsel %vm4840, %v6696, %v6695
    %v6698 = vrot.slane %v4816, 4
    %v6699 = vsel %vm4843, %v6698, %v6697
    %v6700 = vrot.slane %v5655, 3
    %v6701 = vsel %vm4846, %v6700, %v6699
    %v6702 = vrot.slane %v6081, 2
    %v6703 = vsel %vm4849, %v6702, %v6701
    %v6704 = vrot.slane %v6507, 1
    %v6705 = vsel %vm4852, %v6704, %v6703
    %v6706 = vrot.slane %v4825, 7
    %v6707 = vsel %vm4834, %v6706, %v4823
    %v6708 = vrot.slane %v4827, 6
    %v6709 = vsel %vm4837, %v6708, %v6707
    %v6710 = vrot.slane %v4829, 5
    %v6711 = vsel %vm4840, %v6710, %v6709
    %v6712 = vrot.slane %v4831, 4
    %v6713 = vsel %vm4843, %v6712, %v6711
    %v6714 = vrot.slane %v5656, 3
    %v6715 = vsel %vm4846, %v6714, %v6713
    %v6716 = vrot.slane %v6082, 2
    %v6717 = vsel %vm4849, %v6716, %v6715
    %v6718 = vrot.slane %v6508, 1
    %v6719 = vsel %vm4852, %v6718, %v6717
    %v6720 = vrot.slane %v4826, 7
    %v6721 = vsel %vm4834, %v6720, %v4824
    %v6722 = vrot.slane %v4828, 6
    %v6723 = vsel %vm4837, %v6722, %v6721
    %v6724 = vrot.slane %v4830, 5
    %v6725 = vsel %vm4840, %v6724, %v6723
    %v6726 = vrot.slane %v4832, 4
    %v6727 = vsel %vm4843, %v6726, %v6725
    %v6728 = vrot.slane %v5657, 3
    %v6729 = vsel %vm4846, %v6728, %v6727
    %v6730 = vrot.slane %v6083, 2
    %v6731 = vsel %vm4849, %v6730, %v6729
    %v6732 = vrot.slane %v6509, 1
    %v6733 = vsel %vm4852, %v6732, %v6731
    %v6734 = vpack.c.b16 %v6551, %v6523
    %v6735 = vpack.c.b16 %v6565, %v6537
    %v6736 = vpack.c.b16 %v6607, %v6579
    %v6737 = vpack.c.b16 %v6621, %v6593
    %v6738 = vpack.c.b16 %v6663, %v6635
    %v6739 = vpack.c.b16 %v6677, %v6649
    %v6740 = vpack.c.b16 %v6719, %v6691
    %v6741 = vpack.c.b16 %v6733, %v6705
    %v6764 = vunpack.c.l.b16 %v6460
    %v6765 = vunpack.c.l.b16 %v6461
    %v6766 = vunpack.c.l.b16 %v6462
    %v6767 = vunpack.c.l.b16 %v6463
    %v6768 = vunpack.c.l.b16 %v6464
    %v6769 = vunpack.c.l.b16 %v6465
    %v6770 = vunpack.c.l.b16 %v6466
    %v6771 = vunpack.c.l.b16 %v6467
    %v6772 = vunpack.c.l.b16 %v6468
    %v6773 = vunpack.c.l.b16 %v6469
    %v6774 = vunpack.c.l.b16 %v6470
    %v6775 = vunpack.c.l.b16 %v6471
    %v6776 = vunpack.c.l.b16 %v6472
    %v6777 = vunpack.c.l.b16 %v6473
    %v6778 = vunpack.c.l.b16 %v6474
    %v6779 = vunpack.c.l.b16 %v6475
    %v6780 = vunpack.c.l.b16 %v6476
    %v6781 = vunpack.c.l.b16 %v6477
    %v6782 = vpack.c.b16 %v6765, %v6764
    %v6783 = vpack.c.b16 %v6767, %v6766
    %v6784 = vpack.c.b16 %v6769, %v6768
    %v6785 = vpack.c.b16 %v6771, %v6770
    %v6786 = vpack.c.b16 %v6773, %v6772
    %v6787 = vpack.c.b16 %v6775, %v6774
    %v6788 = vpack.c.b16 %v6777, %v6776
    %v6789 = vpack.c.b16 %v6779, %v6778
    %v6790 = vpack.c.b16 %v6781, %v6780
    %v6801 = vsel %vm5130, %v6735, 0
    %v6804 = vsel %vm5130, %v6737, 0
    %v6807 = vsel %vm5130, %v6739, 0
    %v6810 = vsel %vm5130, %v6741, 0
    %6812 = vmatprep.subr.bf16.mxu0 0
    %6813 = vmatpush1.bf16.msra.mxu0 %v6789
    %6814 = vmatprep.subr.bf16.mxu0 0
    %6815 = vmatpush1.bf16.msra.mxu0 %v6788
    %6816 = vmatprep.subr.bf16.mxu0 0
    %6817 = vmatpush1.bf16.msra.mxu0 %v6787
    %6818 = vmatprep.subr.bf16.mxu0 0
    %6819 = vmatpush1.bf16.msra.mxu0 %v6786
    %6820 = vmatprep.subr.bf16.mxu0 0
    %6821 = vmatpush1.bf16.msra.mxu0 %v6785
    %6822 = vmatprep.subr.bf16.mxu0 0
    %6823 = vmatpush1.bf16.msra.mxu0 %v6784
    %6824 = vmatprep.subr.bf16.mxu0 0
    %6825 = vmatpush1.bf16.msra.mxu0 %v6783
    %6826 = vmatprep.subr.bf16.mxu0 0
    %6827 = vmatpush1.bf16.msra.mxu0 %v6782
    %6828 = vmatprep.subr.bf16.mxu0 0
    %6829 = vmatpush2.bf16.msra.mxu0 0
    %6830 = vmatprep.subr.bf16.mxu0 0
    %6831 = vmatpush2.bf16.msra.mxu0 0
    %6832 = vmatprep.subr.bf16.mxu0 0
    %6833 = vmatpush2.bf16.msra.mxu0 0
    %6834 = vmatprep.subr.bf16.mxu0 0
    %6835 = vmatpush2.bf16.msra.mxu0 0
    %6836 = vmatprep.subr.bf16.mxu0 0
    %6837 = vmatpush2.bf16.msra.mxu0 0
    %6838 = vmatprep.subr.bf16.mxu0 0
    %6839 = vmatpush2.bf16.msra.mxu0 0
    %6840 = vmatprep.subr.bf16.mxu0 0
    %6841 = vmatpush2.bf16.msra.mxu0 0
    %6842 = vmatprep.subr.bf16.mxu0 0
    %6843 = vmatpush2.bf16.msra.mxu0 %v6790
    %6844 = vmatprep.mubr.bf16.mxu0 %v6801
    %6845 = vmatmul.mubr.bf16.gmra.mxu0 %v6734
    %v6846 = vpop.f32.mrf.mxu0
    %v6847 = vadd.f32 0.0, %v6846
    %v6848 = vpop.f32.mrf.mxu0
    %v6849 = vpop.f32.mrf.mxu0
    %v6850 = vadd.f32 0.0, %v6849
    %v6851 = vpop.f32.mrf.mxu0
    %6852 = vmatprep.mubr.bf16.mxu0 %v6804
    %6853 = vmatmul.mubr.bf16.gmra.mxu0 %v6736
    %v6854 = vpop.f32.mrf.mxu0
    %v6855 = vadd.f32 0.0, %v6854
    %v6856 = vpop.f32.mrf.mxu0
    %v6857 = vpop.f32.mrf.mxu0
    %v6858 = vadd.f32 0.0, %v6857
    %v6859 = vpop.f32.mrf.mxu0
    %6860 = vmatprep.mubr.bf16.mxu0 %v6807
    %6861 = vmatmul.mubr.bf16.gmra.mxu0 %v6738
    %v6862 = vpop.f32.mrf.mxu0
    %v6863 = vadd.f32 0.0, %v6862
    %v6864 = vpop.f32.mrf.mxu0
    %v6865 = vpop.f32.mrf.mxu0
    %v6866 = vadd.f32 0.0, %v6865
    %v6867 = vpop.f32.mrf.mxu0
    %6868 = vmatprep.mubr.bf16.mxu0 %v6810
    %6869 = vmatmul.mubr.bf16.gmra.mxu0 %v6740
    %v6870 = vpop.f32.mrf.mxu0
    %v6871 = vadd.f32 0.0, %v6870
    %v6872 = vpop.f32.mrf.mxu0
    %v6873 = vpop.f32.mrf.mxu0
    %v6874 = vadd.f32 0.0, %v6873
    %v6875 = vpop.f32.mrf.mxu0
    %6876 = vdwg.mxu0
    %v6877 = vadd.f32 %v6451, %v6847
    %v6878 = vadd.f32 %v6452, %v6850
    %v6879 = vadd.f32 %v6453, %v6855
    %v6880 = vadd.f32 %v6454, %v6858
    %v6881 = vadd.f32 %v6455, %v6863
    %v6882 = vadd.f32 %v6456, %v6866
    %v6883 = vadd.f32 %v6457, %v6871
    %v6884 = vadd.f32 %v6458, %v6874
    %v6885 = vld [vmem:[#allocation5] sm:$0x1]
    %v6887 = vlaneseq
    %v6888 = vshrl.u32 %v6887, 7
    %v6889 = vsub.s32 0, %v6888
    %v6890 = vrot.slane %v6885, %v6889
    %v6892 = vadd.f32 %v6877, %v6890
    %v6893 = vadd.f32 %v6878, %v6890
    %v6894 = vadd.f32 %v6879, %v6890
    %v6895 = vadd.f32 %v6880, %v6890
    %v6896 = vadd.f32 %v6881, %v6890
    %v6897 = vadd.f32 %v6882, %v6890
    %v6898 = vadd.f32 %v6883, %v6890
    %v6899 = vadd.f32 %v6884, %v6890
    %v6900 = vtanh.pop %v6892
    %v6901 = vtanh.pop %v6893
    %v6902 = vtanh.pop %v6894
    %v6903 = vtanh.pop %v6895
    %v6904 = vtanh.pop %v6896
    %v6905 = vtanh.pop %v6897
    %v6906 = vtanh.pop %v6898
    %v6907 = vtanh.pop %v6899
    %v6916 = vcombine.high %v6900, %v6900
    %v6918 = vunpack.c.l.s4 1983009808
    %v6919 = vunpack.c.0.s8 %v6918
    %v6920 = vlaneseq
    %v6921 = vshrl.u32 %v6920, 7
    %v6922 = vsub.s32 %v6919, %v6921
    %v6923 = vrot.slane %v6900, %v6922
    %v6925 = vunpack.c.l.s4 1983009808
    %v6926 = vunpack.c.0.s8 %v6925
    %v6927 = vlaneseq
    %v6928 = vshrl.u32 %v6927, 7
    %v6929 = vsub.s32 %v6926, %v6928
    %v6930 = vrot.slane %v6916, %v6929
    %v6931 = vcombine.high %v6923, %v6923
    %v6932 = vcombine.high %v6930, %v6930
    %v6933 = vcombine.high %v6901, %v6901
    %v6935 = vunpack.c.l.s4 1983009808
    %v6936 = vunpack.c.0.s8 %v6935
    %v6937 = vlaneseq
    %v6938 = vshrl.u32 %v6937, 7
    %v6939 = vsub.s32 %v6936, %v6938
    %v6940 = vrot.slane %v6901, %v6939
    %v6942 = vunpack.c.l.s4 1983009808
    %v6943 = vunpack.c.0.s8 %v6942
    %v6944 = vlaneseq
    %v6945 = vshrl.u32 %v6944, 7
    %v6946 = vsub.s32 %v6943, %v6945
    %v6947 = vrot.slane %v6933, %v6946
    %v6948 = vcombine.high %v6940, %v6940
    %v6949 = vcombine.high %v6947, %v6947
    %v6950 = vcombine.high %v6902, %v6902
    %v6952 = vunpack.c.l.s4 1983009808
    %v6953 = vunpack.c.0.s8 %v6952
    %v6954 = vlaneseq
    %v6955 = vshrl.u32 %v6954, 7
    %v6956 = vsub.s32 %v6953, %v6955
    %v6957 = vrot.slane %v6902, %v6956
    %v6959 = vunpack.c.l.s4 1983009808
    %v6960 = vunpack.c.0.s8 %v6959
    %v6961 = vlaneseq
    %v6962 = vshrl.u32 %v6961, 7
    %v6963 = vsub.s32 %v6960, %v6962
    %v6964 = vrot.slane %v6950, %v6963
    %v6965 = vcombine.high %v6957, %v6957
    %v6966 = vcombine.high %v6964, %v6964
    %v6967 = vcombine.high %v6903, %v6903
    %v6969 = vunpack.c.l.s4 1983009808
    %v6970 = vunpack.c.0.s8 %v6969
    %v6971 = vlaneseq
    %v6972 = vshrl.u32 %v6971, 7
    %v6973 = vsub.s32 %v6970, %v6972
    %v6974 = vrot.slane %v6903, %v6973
    %v6976 = vunpack.c.l.s4 1983009808
    %v6977 = vunpack.c.0.s8 %v6976
    %v6978 = vlaneseq
    %v6979 = vshrl.u32 %v6978, 7
    %v6980 = vsub.s32 %v6977, %v6979
    %v6981 = vrot.slane %v6967, %v6980
    %v6982 = vcombine.high %v6974, %v6974
    %v6983 = vcombine.high %v6981, %v6981
    %v6984 = vcombine.high %v6904, %v6904
    %v6986 = vunpack.c.l.s4 1983009808
    %v6987 = vunpack.c.0.s8 %v6986
    %v6988 = vlaneseq
    %v6989 = vshrl.u32 %v6988, 7
    %v6990 = vsub.s32 %v6987, %v6989
    %v6991 = vrot.slane %v6904, %v6990
    %v6993 = vunpack.c.l.s4 1983009808
    %v6994 = vunpack.c.0.s8 %v6993
    %v6995 = vlaneseq
    %v6996 = vshrl.u32 %v6995, 7
    %v6997 = vsub.s32 %v6994, %v6996
    %v6998 = vrot.slane %v6984, %v6997
    %v6999 = vcombine.high %v6991, %v6991
    %v7000 = vcombine.high %v6998, %v6998
    %v7001 = vcombine.high %v6905, %v6905
    %v7003 = vunpack.c.l.s4 1983009808
    %v7004 = vunpack.c.0.s8 %v7003
    %v7005 = vlaneseq
    %v7006 = vshrl.u32 %v7005, 7
    %v7007 = vsub.s32 %v7004, %v7006
    %v7008 = vrot.slane %v6905, %v7007
    %v7010 = vunpack.c.l.s4 1983009808
    %v7011 = vunpack.c.0.s8 %v7010
    %v7012 = vlaneseq
    %v7013 = vshrl.u32 %v7012, 7
    %v7014 = vsub.s32 %v7011, %v7013
    %v7015 = vrot.slane %v7001, %v7014
    %v7016 = vcombine.high %v7008, %v7008
    %v7017 = vcombine.high %v7015, %v7015
    %v7018 = vcombine.high %v6906, %v6906
    %v7020 = vunpack.c.l.s4 1983009808
    %v7021 = vunpack.c.0.s8 %v7020
    %v7022 = vlaneseq
    %v7023 = vshrl.u32 %v7022, 7
    %v7024 = vsub.s32 %v7021, %v7023
    %v7025 = vrot.slane %v6906, %v7024
    %v7027 = vunpack.c.l.s4 1983009808
    %v7028 = vunpack.c.0.s8 %v7027
    %v7029 = vlaneseq
    %v7030 = vshrl.u32 %v7029, 7
    %v7031 = vsub.s32 %v7028, %v7030
    %v7032 = vrot.slane %v7018, %v7031
    %v7033 = vcombine.high %v7025, %v7025
    %v7034 = vcombine.high %v7032, %v7032
    %v7035 = vcombine.high %v6907, %v6907
    %v7037 = vunpack.c.l.s4 1983009808
    %v7038 = vunpack.c.0.s8 %v7037
    %v7039 = vlaneseq
    %v7040 = vshrl.u32 %v7039, 7
    %v7041 = vsub.s32 %v7038, %v7040
    %v7042 = vrot.slane %v6907, %v7041
    %v7044 = vunpack.c.l.s4 1983009808
    %v7045 = vunpack.c.0.s8 %v7044
    %v7046 = vlaneseq
    %v7047 = vshrl.u32 %v7046, 7
    %v7048 = vsub.s32 %v7045, %v7047
    %v7049 = vrot.slane %v7035, %v7048
    %v7050 = vcombine.high %v7042, %v7042
    %v7051 = vcombine.high %v7049, %v7049
    %v7084 = vrot.slane %v6923, 7
    %v7085 = vrot.slane %v7084, 2
    %v7086 = vrot.slane %v6931, 7
    %v7087 = vrot.slane %v7086, 2
    %v7088 = vrot.slane %v6930, 7
    %v7089 = vrot.slane %v7088, 2
    %v7090 = vrot.slane %v6932, 7
    %v7091 = vrot.slane %v7090, 2
    %v7092 = vrot.slane %v6940, 7
    %v7093 = vrot.slane %v7092, 2
    %v7094 = vrot.slane %v6948, 7
    %v7095 = vrot.slane %v7094, 2
    %v7096 = vrot.slane %v6947, 7
    %v7097 = vrot.slane %v7096, 2
    %v7098 = vrot.slane %v6949, 7
    %v7099 = vrot.slane %v7098, 2
    %v7100 = vrot.slane %v6957, 7
    %v7101 = vrot.slane %v7100, 2
    %v7102 = vrot.slane %v6965, 7
    %v7103 = vrot.slane %v7102, 2
    %v7104 = vrot.slane %v6964, 7
    %v7105 = vrot.slane %v7104, 2
    %v7106 = vrot.slane %v6966, 7
    %v7107 = vrot.slane %v7106, 2
    %v7108 = vrot.slane %v6974, 7
    %v7109 = vrot.slane %v7108, 2
    %v7110 = vrot.slane %v6982, 7
    %v7111 = vrot.slane %v7110, 2
    %v7112 = vrot.slane %v6981, 7
    %v7113 = vrot.slane %v7112, 2
    %v7114 = vrot.slane %v6983, 7
    %v7115 = vrot.slane %v7114, 2
    %v7116 = vrot.slane %v6991, 7
    %v7117 = vrot.slane %v7116, 2
    %v7118 = vrot.slane %v6999, 7
    %v7119 = vrot.slane %v7118, 2
    %v7120 = vrot.slane %v6998, 7
    %v7121 = vrot.slane %v7120, 2
    %v7122 = vrot.slane %v7000, 7
    %v7123 = vrot.slane %v7122, 2
    %v7124 = vrot.slane %v7008, 7
    %v7125 = vrot.slane %v7124, 2
    %v7126 = vrot.slane %v7016, 7
    %v7127 = vrot.slane %v7126, 2
    %v7128 = vrot.slane %v7015, 7
    %v7129 = vrot.slane %v7128, 2
    %v7130 = vrot.slane %v7017, 7
    %v7131 = vrot.slane %v7130, 2
    %v7132 = vrot.slane %v7025, 7
    %v7133 = vrot.slane %v7132, 2
    %v7134 = vrot.slane %v7033, 7
    %v7135 = vrot.slane %v7134, 2
    %v7136 = vrot.slane %v7032, 7
    %v7137 = vrot.slane %v7136, 2
    %v7138 = vrot.slane %v7034, 7
    %v7139 = vrot.slane %v7138, 2
    %v7140 = vrot.slane %v7042, 7
    %v7141 = vrot.slane %v7140, 2
    %v7142 = vrot.slane %v7050, 7
    %v7143 = vrot.slane %v7142, 2
    %v7144 = vrot.slane %v7049, 7
    %v7145 = vrot.slane %v7144, 2
    %v7146 = vrot.slane %v7051, 7
    %v7147 = vrot.slane %v7146, 2
    %v7180 = vadd.f32 %v6923, %v7085
    %v7181 = vadd.f32 %v6931, %v7087
    %v7182 = vadd.f32 %v6930, %v7089
    %v7183 = vadd.f32 %v6932, %v7091
    %v7184 = vadd.f32 %v6940, %v7093
    %v7185 = vadd.f32 %v6948, %v7095
    %v7186 = vadd.f32 %v6947, %v7097
    %v7187 = vadd.f32 %v6949, %v7099
    %v7188 = vadd.f32 %v6957, %v7101
    %v7189 = vadd.f32 %v6965, %v7103
    %v7190 = vadd.f32 %v6964, %v7105
    %v7191 = vadd.f32 %v6966, %v7107
    %v7192 = vadd.f32 %v6974, %v7109
    %v7193 = vadd.f32 %v6982, %v7111
    %v7194 = vadd.f32 %v6981, %v7113
    %v7195 = vadd.f32 %v6983, %v7115
    %v7196 = vadd.f32 %v6991, %v7117
    %v7197 = vadd.f32 %v6999, %v7119
    %v7198 = vadd.f32 %v6998, %v7121
    %v7199 = vadd.f32 %v7000, %v7123
    %v7200 = vadd.f32 %v7008, %v7125
    %v7201 = vadd.f32 %v7016, %v7127
    %v7202 = vadd.f32 %v7015, %v7129
    %v7203 = vadd.f32 %v7017, %v7131
    %v7204 = vadd.f32 %v7025, %v7133
    %v7205 = vadd.f32 %v7033, %v7135
    %v7206 = vadd.f32 %v7032, %v7137
    %v7207 = vadd.f32 %v7034, %v7139
    %v7208 = vadd.f32 %v7042, %v7141
    %v7209 = vadd.f32 %v7050, %v7143
    %v7210 = vadd.f32 %v7049, %v7145
    %v7211 = vadd.f32 %v7051, %v7147
    %v7212 = vpack.c.bf16 %v7180, %v7180
    %v7213 = vpack.c.bf16 %v7181, %v7181
    %v7214 = vpack.c.bf16 %v7182, %v7182
    %v7215 = vpack.c.bf16 %v7183, %v7183
    %v7216 = vpack.c.bf16 %v7184, %v7184
    %v7217 = vpack.c.bf16 %v7185, %v7185
    %v7218 = vpack.c.bf16 %v7186, %v7186
    %v7219 = vpack.c.bf16 %v7187, %v7187
    %v7220 = vpack.c.bf16 %v7188, %v7188
    %v7221 = vpack.c.bf16 %v7189, %v7189
    %v7222 = vpack.c.bf16 %v7190, %v7190
    %v7223 = vpack.c.bf16 %v7191, %v7191
    %v7224 = vpack.c.bf16 %v7192, %v7192
    %v7225 = vpack.c.bf16 %v7193, %v7193
    %v7226 = vpack.c.bf16 %v7194, %v7194
    %v7227 = vpack.c.bf16 %v7195, %v7195
    %v7228 = vpack.c.bf16 %v7196, %v7196
    %v7229 = vpack.c.bf16 %v7197, %v7197
    %v7230 = vpack.c.bf16 %v7198, %v7198
    %v7231 = vpack.c.bf16 %v7199, %v7199
    %v7232 = vpack.c.bf16 %v7200, %v7200
    %v7233 = vpack.c.bf16 %v7201, %v7201
    %v7234 = vpack.c.bf16 %v7202, %v7202
    %v7235 = vpack.c.bf16 %v7203, %v7203
    %v7236 = vpack.c.bf16 %v7204, %v7204
    %v7237 = vpack.c.bf16 %v7205, %v7205
    %v7238 = vpack.c.bf16 %v7206, %v7206
    %v7239 = vpack.c.bf16 %v7207, %v7207
    %v7240 = vpack.c.bf16 %v7208, %v7208
    %v7241 = vpack.c.bf16 %v7209, %v7209
    %v7242 = vpack.c.bf16 %v7210, %v7210
    %v7243 = vpack.c.bf16 %v7211, %v7211
    %v7244 = vld [vmem:[#allocation7] sm:$0xf]
    %v7245 = vld [vmem:[#allocation7 + $0x4] sm:$0xf]
    %v7246 = vld [vmem:[#allocation7 + $0x8] sm:$0xf]
    %v7247 = vld [vmem:[#allocation7 + $0xc] sm:$0xf]
    %v7248 = vld [vmem:[#allocation7 + $0x10] sm:$0xf]
    %v7249 = vld [vmem:[#allocation7 + $0x14] sm:$0xf]
    %v7250 = vld [vmem:[#allocation7 + $0x18] sm:$0xf]
    %v7251 = vld [vmem:[#allocation7 + $0x1c] sm:$0xf]
    %v7252 = vld [vmem:[#allocation7 + $0x20] sm:$0xf]
    %v7253 = vld [vmem:[#allocation7 + $0x24] sm:$0xf]
    %v7254 = vld [vmem:[#allocation7 + $0x28] sm:$0xf]
    %v7255 = vld [vmem:[#allocation7 + $0x2c] sm:$0xf]
    %v7256 = vld [vmem:[#allocation7 + $0x30] sm:$0xf]
    %v7257 = vld [vmem:[#allocation7 + $0x34] sm:$0xf]
    %v7258 = vld [vmem:[#allocation7 + $0x38] sm:$0xf]
    %v7259 = vld [vmem:[#allocation7 + $0x3c] sm:$0xf]
    %s7260 = scalar_lea.vmem [#allocation7], 64
    %v7261 = vld [vmem:[%s7260] sm:$0xf]
    %v7262 = vld [vmem:[%s7260 + $0x4] sm:$0xf]
    %v7263 = vld [vmem:[%s7260 + $0x8] sm:$0xf]
    %v7264 = vld [vmem:[%s7260 + $0xc] sm:$0xf]
    %v7265 = vld [vmem:[%s7260 + $0x10] sm:$0xf]
    %v7266 = vld [vmem:[%s7260 + $0x14] sm:$0xf]
    %v7267 = vld [vmem:[%s7260 + $0x18] sm:$0xf]
    %v7268 = vld [vmem:[%s7260 + $0x1c] sm:$0xf]
    %v7269 = vld [vmem:[%s7260 + $0x20] sm:$0xf]
    %v7270 = vld [vmem:[%s7260 + $0x24] sm:$0xf]
    %v7271 = vld [vmem:[%s7260 + $0x28] sm:$0xf]
    %v7272 = vld [vmem:[%s7260 + $0x2c] sm:$0xf]
    %v7273 = vld [vmem:[%s7260 + $0x30] sm:$0xf]
    %v7274 = vld [vmem:[%s7260 + $0x34] sm:$0xf]
    %v7275 = vld [vmem:[%s7260 + $0x38] sm:$0xf]
    %v7276 = vld [vmem:[%s7260 + $0x3c] sm:$0xf]
    %v7285 = vunpack.c.l.b16 %v7213
    %v7286 = vunpack.c.l.b16 %v7217
    %v7287 = vunpack.c.l.b16 %v7221
    %v7288 = vunpack.c.l.b16 %v7225
    %v7289 = vunpack.c.l.b16 %v7229
    %v7290 = vunpack.c.l.b16 %v7233
    %v7291 = vunpack.c.l.b16 %v7237
    %v7292 = vunpack.c.l.b16 %v7241
    %v7293 = vrot.slane %v7286, 7
    %v7294 = vsel %vm4834, %v7293, %v7285
    %v7295 = vrot.slane %v7287, 6
    %v7296 = vsel %vm4837, %v7295, %v7294
    %v7297 = vrot.slane %v7288, 5
    %v7298 = vsel %vm4840, %v7297, %v7296
    %v7299 = vrot.slane %v7289, 4
    %v7300 = vsel %vm4843, %v7299, %v7298
    %v7301 = vrot.slane %v7290, 3
    %v7302 = vsel %vm4846, %v7301, %v7300
    %v7303 = vrot.slane %v7291, 2
    %v7304 = vsel %vm4849, %v7303, %v7302
    %v7305 = vrot.slane %v7292, 1
    %v7306 = vsel %vm4852, %v7305, %v7304
    %v7307 = vpack.c.b16 %v7306, %v7306
    %v7325 = vunpack.c.l.b16 %v7261
    %v7326 = vunpack.c.l.b16 %v7262
    %v7327 = vunpack.c.l.b16 %v7263
    %v7328 = vunpack.c.l.b16 %v7264
    %v7329 = vunpack.c.l.b16 %v7265
    %v7330 = vunpack.c.l.b16 %v7266
    %v7331 = vunpack.c.l.b16 %v7267
    %v7332 = vunpack.c.l.b16 %v7268
    %v7333 = vunpack.c.l.b16 %v7269
    %v7334 = vunpack.c.l.b16 %v7270
    %v7335 = vunpack.c.l.b16 %v7271
    %v7336 = vunpack.c.l.b16 %v7272
    %v7337 = vunpack.c.l.b16 %v7273
    %v7338 = vunpack.c.l.b16 %v7274
    %v7339 = vunpack.c.l.b16 %v7275
    %v7340 = vunpack.c.l.b16 %v7276
    %v7341 = vpack.c.b16 %v7326, %v7325
    %v7342 = vpack.c.b16 %v7328, %v7327
    %v7343 = vpack.c.b16 %v7330, %v7329
    %v7344 = vpack.c.b16 %v7332, %v7331
    %v7345 = vpack.c.b16 %v7334, %v7333
    %v7346 = vpack.c.b16 %v7336, %v7335
    %v7347 = vpack.c.b16 %v7338, %v7337
    %v7348 = vpack.c.b16 %v7340, %v7339
    %7357 = vmatprep.subr.bf16.mxu0 0
    %7358 = vmatpush1.bf16.msra.mxu0 %v7348
    %7359 = vmatprep.subr.bf16.mxu0 0
    %7360 = vmatpush1.bf16.msra.mxu0 %v7347
    %7361 = vmatprep.subr.bf16.mxu0 0
    %7362 = vmatpush1.bf16.msra.mxu0 %v7346
    %7363 = vmatprep.subr.bf16.mxu0 0
    %7364 = vmatpush1.bf16.msra.mxu0 %v7345
    %7365 = vmatprep.subr.bf16.mxu0 0
    %7366 = vmatpush1.bf16.msra.mxu0 %v7344
    %7367 = vmatprep.subr.bf16.mxu0 0
    %7368 = vmatpush1.bf16.msra.mxu0 %v7343
    %7369 = vmatprep.subr.bf16.mxu0 0
    %7370 = vmatpush1.bf16.msra.mxu0 %v7342
    %7371 = vmatprep.subr.bf16.mxu0 0
    %7372 = vmatpush1.bf16.msra.mxu0 %v7341
    %7373 = vmatprep.subr.bf16.mxu0 0
    %7374 = vmatpush2.bf16.msra.mxu0 0
    %7375 = vmatprep.subr.bf16.mxu0 0
    %7376 = vmatpush2.bf16.msra.mxu0 0
    %7377 = vmatprep.subr.bf16.mxu0 0
    %7378 = vmatpush2.bf16.msra.mxu0 0
    %7379 = vmatprep.subr.bf16.mxu0 0
    %7380 = vmatpush2.bf16.msra.mxu0 0
    %7381 = vmatprep.subr.bf16.mxu0 0
    %7382 = vmatpush2.bf16.msra.mxu0 0
    %7383 = vmatprep.subr.bf16.mxu0 0
    %7384 = vmatpush2.bf16.msra.mxu0 0
    %7385 = vmatprep.subr.bf16.mxu0 0
    %7386 = vmatpush2.bf16.msra.mxu0 0
    %7387 = vmatprep.subr.bf16.mxu0 0
    %7388 = vmatpush2.bf16.msra.mxu0 0
    %7389 = vmatprep.mubr.bf16.mxu0 0
    %7390 = vmatmul.mubr.bf16.gmra.mxu0 %v7307
    %v7391 = vpop.f32.mrf.mxu0
    %v7392 = vadd.f32 0.0, %v7391
    %v7393 = vpop.f32.mrf.mxu0
    %v7394 = vpop.f32.mrf.mxu0
    %v7395 = vpop.f32.mrf.mxu0
    %7396 = vdwg.mxu0
    %v7405 = vunpack.c.l.b16 %v7212
    %v7406 = vunpack.c.l.b16 %v7216
    %v7407 = vunpack.c.l.b16 %v7220
    %v7408 = vunpack.c.l.b16 %v7224
    %v7409 = vunpack.c.l.b16 %v7228
    %v7410 = vunpack.c.l.b16 %v7232
    %v7411 = vunpack.c.l.b16 %v7236
    %v7412 = vunpack.c.l.b16 %v7240
    %v7413 = vrot.slane %v7406, 7
    %v7414 = vsel %vm4834, %v7413, %v7405
    %v7415 = vrot.slane %v7407, 6
    %v7416 = vsel %vm4837, %v7415, %v7414
    %v7417 = vrot.slane %v7408, 5
    %v7418 = vsel %vm4840, %v7417, %v7416
    %v7419 = vrot.slane %v7409, 4
    %v7420 = vsel %vm4843, %v7419, %v7418
    %v7421 = vrot.slane %v7410, 3
    %v7422 = vsel %vm4846, %v7421, %v7420
    %v7423 = vrot.slane %v7411, 2
    %v7424 = vsel %vm4849, %v7423, %v7422
    %v7425 = vrot.slane %v7412, 1
    %v7426 = vsel %vm4852, %v7425, %v7424
    %v7427 = vpack.c.b16 %v7426, %v7426
    %v7445 = vunpack.c.l.b16 %v7244
    %v7446 = vunpack.c.l.b16 %v7245
    %v7447 = vunpack.c.l.b16 %v7246
    %v7448 = vunpack.c.l.b16 %v7247
    %v7449 = vunpack.c.l.b16 %v7248
    %v7450 = vunpack.c.l.b16 %v7249
    %v7451 = vunpack.c.l.b16 %v7250
    %v7452 = vunpack.c.l.b16 %v7251
    %v7453 = vunpack.c.l.b16 %v7252
    %v7454 = vunpack.c.l.b16 %v7253
    %v7455 = vunpack.c.l.b16 %v7254
    %v7456 = vunpack.c.l.b16 %v7255
    %v7457 = vunpack.c.l.b16 %v7256
    %v7458 = vunpack.c.l.b16 %v7257
    %v7459 = vunpack.c.l.b16 %v7258
    %v7460 = vunpack.c.l.b16 %v7259
    %v7461 = vpack.c.b16 %v7446, %v7445
    %v7462 = vpack.c.b16 %v7448, %v7447
    %v7463 = vpack.c.b16 %v7450, %v7449
    %v7464 = vpack.c.b16 %v7452, %v7451
    %v7465 = vpack.c.b16 %v7454, %v7453
    %v7466 = vpack.c.b16 %v7456, %v7455
    %v7467 = vpack.c.b16 %v7458, %v7457
    %v7468 = vpack.c.b16 %v7460, %v7459
    %7477 = vmatprep.subr.bf16.mxu0 0
    %7478 = vmatpush1.bf16.msra.mxu0 %v7468
    %7479 = vmatprep.subr.bf16.mxu0 0
    %7480 = vmatpush1.bf16.msra.mxu0 %v7467
    %7481 = vmatprep.subr.bf16.mxu0 0
    %7482 = vmatpush1.bf16.msra.mxu0 %v7466
    %7483 = vmatprep.subr.bf16.mxu0 0
    %7484 = vmatpush1.bf16.msra.mxu0 %v7465
    %7485 = vmatprep.subr.bf16.mxu0 0
    %7486 = vmatpush1.bf16.msra.mxu0 %v7464
    %7487 = vmatprep.subr.bf16.mxu0 0
    %7488 = vmatpush1.bf16.msra.mxu0 %v7463
    %7489 = vmatprep.subr.bf16.mxu0 0
    %7490 = vmatpush1.bf16.msra.mxu0 %v7462
    %7491 = vmatprep.subr.bf16.mxu0 0
    %7492 = vmatpush1.bf16.msra.mxu0 %v7461
    %7493 = vmatprep.subr.bf16.mxu0 0
    %7494 = vmatpush2.bf16.msra.mxu0 0
    %7495 = vmatprep.subr.bf16.mxu0 0
    %7496 = vmatpush2.bf16.msra.mxu0 0
    %7497 = vmatprep.subr.bf16.mxu0 0
    %7498 = vmatpush2.bf16.msra.mxu0 0
    %7499 = vmatprep.subr.bf16.mxu0 0
    %7500 = vmatpush2.bf16.msra.mxu0 0
    %7501 = vmatprep.subr.bf16.mxu0 0
    %7502 = vmatpush2.bf16.msra.mxu0 0
    %7503 = vmatprep.subr.bf16.mxu0 0
    %7504 = vmatpush2.bf16.msra.mxu0 0
    %7505 = vmatprep.subr.bf16.mxu0 0
    %7506 = vmatpush2.bf16.msra.mxu0 0
    %7507 = vmatprep.subr.bf16.mxu0 0
    %7508 = vmatpush2.bf16.msra.mxu0 0
    %7509 = vmatprep.mubr.bf16.mxu0 0
    %7510 = vmatmul.mubr.bf16.gmra.mxu0 %v7427
    %v7511 = vpop.f32.mrf.mxu0
    %v7512 = vadd.f32 %v7392, %v7511
    %v7513 = vpop.f32.mrf.mxu0
    %v7514 = vpop.f32.mrf.mxu0
    %v7515 = vpop.f32.mrf.mxu0
    %7516 = vdwg.mxu0
    %s7517 = scalar_lea.vmem [#allocation7], 128
    %v7518 = vld [vmem:[%s7517] sm:$0xf]
    %v7519 = vld [vmem:[%s7517 + $0x4] sm:$0xf]
    %v7520 = vld [vmem:[%s7517 + $0x8] sm:$0xf]
    %v7521 = vld [vmem:[%s7517 + $0xc] sm:$0xf]
    %v7522 = vld [vmem:[%s7517 + $0x10] sm:$0xf]
    %v7523 = vld [vmem:[%s7517 + $0x14] sm:$0xf]
    %v7524 = vld [vmem:[%s7517 + $0x18] sm:$0xf]
    %v7525 = vld [vmem:[%s7517 + $0x1c] sm:$0xf]
    %v7526 = vld [vmem:[%s7517 + $0x20] sm:$0xf]
    %v7527 = vld [vmem:[%s7517 + $0x24] sm:$0xf]
    %v7528 = vld [vmem:[%s7517 + $0x28] sm:$0xf]
    %v7529 = vld [vmem:[%s7517 + $0x2c] sm:$0xf]
    %v7530 = vld [vmem:[%s7517 + $0x30] sm:$0xf]
    %v7531 = vld [vmem:[%s7517 + $0x34] sm:$0xf]
    %v7532 = vld [vmem:[%s7517 + $0x38] sm:$0xf]
    %v7533 = vld [vmem:[%s7517 + $0x3c] sm:$0xf]
    %v7542 = vunpack.c.l.b16 %v7214
    %v7543 = vunpack.c.l.b16 %v7218
    %v7544 = vunpack.c.l.b16 %v7222
    %v7545 = vunpack.c.l.b16 %v7226
    %v7546 = vunpack.c.l.b16 %v7230
    %v7547 = vunpack.c.l.b16 %v7234
    %v7548 = vunpack.c.l.b16 %v7238
    %v7549 = vunpack.c.l.b16 %v7242
    %v7550 = vrot.slane %v7543, 7
    %v7551 = vsel %vm4834, %v7550, %v7542
    %v7552 = vrot.slane %v7544, 6
    %v7553 = vsel %vm4837, %v7552, %v7551
    %v7554 = vrot.slane %v7545, 5
    %v7555 = vsel %vm4840, %v7554, %v7553
    %v7556 = vrot.slane %v7546, 4
    %v7557 = vsel %vm4843, %v7556, %v7555
    %v7558 = vrot.slane %v7547, 3
    %v7559 = vsel %vm4846, %v7558, %v7557
    %v7560 = vrot.slane %v7548, 2
    %v7561 = vsel %vm4849, %v7560, %v7559
    %v7562 = vrot.slane %v7549, 1
    %v7563 = vsel %vm4852, %v7562, %v7561
    %v7564 = vpack.c.b16 %v7563, %v7563
    %v7582 = vunpack.c.l.b16 %v7518
    %v7583 = vunpack.c.l.b16 %v7519
    %v7584 = vunpack.c.l.b16 %v7520
    %v7585 = vunpack.c.l.b16 %v7521
    %v7586 = vunpack.c.l.b16 %v7522
    %v7587 = vunpack.c.l.b16 %v7523
    %v7588 = vunpack.c.l.b16 %v7524
    %v7589 = vunpack.c.l.b16 %v7525
    %v7590 = vunpack.c.l.b16 %v7526
    %v7591 = vunpack.c.l.b16 %v7527
    %v7592 = vunpack.c.l.b16 %v7528
    %v7593 = vunpack.c.l.b16 %v7529
    %v7594 = vunpack.c.l.b16 %v7530
    %v7595 = vunpack.c.l.b16 %v7531
    %v7596 = vunpack.c.l.b16 %v7532
    %v7597 = vunpack.c.l.b16 %v7533
    %v7598 = vpack.c.b16 %v7583, %v7582
    %v7599 = vpack.c.b16 %v7585, %v7584
    %v7600 = vpack.c.b16 %v7587, %v7586
    %v7601 = vpack.c.b16 %v7589, %v7588
    %v7602 = vpack.c.b16 %v7591, %v7590
    %v7603 = vpack.c.b16 %v7593, %v7592
    %v7604 = vpack.c.b16 %v7595, %v7594
    %v7605 = vpack.c.b16 %v7597, %v7596
    %7614 = vmatprep.subr.bf16.mxu0 0
    %7615 = vmatpush1.bf16.msra.mxu0 %v7605
    %7616 = vmatprep.subr.bf16.mxu0 0
    %7617 = vmatpush1.bf16.msra.mxu0 %v7604
    %7618 = vmatprep.subr.bf16.mxu0 0
    %7619 = vmatpush1.bf16.msra.mxu0 %v7603
    %7620 = vmatprep.subr.bf16.mxu0 0
    %7621 = vmatpush1.bf16.msra.mxu0 %v7602
    %7622 = vmatprep.subr.bf16.mxu0 0
    %7623 = vmatpush1.bf16.msra.mxu0 %v7601
    %7624 = vmatprep.subr.bf16.mxu0 0
    %7625 = vmatpush1.bf16.msra.mxu0 %v7600
    %7626 = vmatprep.subr.bf16.mxu0 0
    %7627 = vmatpush1.bf16.msra.mxu0 %v7599
    %7628 = vmatprep.subr.bf16.mxu0 0
    %7629 = vmatpush1.bf16.msra.mxu0 %v7598
    %7630 = vmatprep.subr.bf16.mxu0 0
    %7631 = vmatpush2.bf16.msra.mxu0 0
    %7632 = vmatprep.subr.bf16.mxu0 0
    %7633 = vmatpush2.bf16.msra.mxu0 0
    %7634 = vmatprep.subr.bf16.mxu0 0
    %7635 = vmatpush2.bf16.msra.mxu0 0
    %7636 = vmatprep.subr.bf16.mxu0 0
    %7637 = vmatpush2.bf16.msra.mxu0 0
    %7638 = vmatprep.subr.bf16.mxu0 0
    %7639 = vmatpush2.bf16.msra.mxu0 0
    %7640 = vmatprep.subr.bf16.mxu0 0
    %7641 = vmatpush2.bf16.msra.mxu0 0
    %7642 = vmatprep.subr.bf16.mxu0 0
    %7643 = vmatpush2.bf16.msra.mxu0 0
    %7644 = vmatprep.subr.bf16.mxu0 0
    %7645 = vmatpush2.bf16.msra.mxu0 0
    %7646 = vmatprep.mubr.bf16.mxu0 0
    %7647 = vmatmul.mubr.bf16.gmra.mxu0 %v7564
    %v7648 = vpop.f32.mrf.mxu0
    %v7649 = vadd.f32 0.0, %v7648
    %v7650 = vpop.f32.mrf.mxu0
    %v7651 = vpop.f32.mrf.mxu0
    %v7652 = vpop.f32.mrf.mxu0
    %7653 = vdwg.mxu0
    %v7654 = vadd.f32 %v7512, %v7649
    %s7655 = scalar_lea.vmem [#allocation7], 192
    %v7656 = vld [vmem:[%s7655] sm:$0xf]
    %v7657 = vld [vmem:[%s7655 + $0x4] sm:$0xf]
    %v7658 = vld [vmem:[%s7655 + $0x8] sm:$0xf]
    %v7659 = vld [vmem:[%s7655 + $0xc] sm:$0xf]
    %v7660 = vld [vmem:[%s7655 + $0x10] sm:$0xf]
    %v7661 = vld [vmem:[%s7655 + $0x14] sm:$0xf]
    %v7662 = vld [vmem:[%s7655 + $0x18] sm:$0xf]
    %v7663 = vld [vmem:[%s7655 + $0x1c] sm:$0xf]
    %v7664 = vld [vmem:[%s7655 + $0x20] sm:$0xf]
    %v7665 = vld [vmem:[%s7655 + $0x24] sm:$0xf]
    %v7666 = vld [vmem:[%s7655 + $0x28] sm:$0xf]
    %v7667 = vld [vmem:[%s7655 + $0x2c] sm:$0xf]
    %v7668 = vld [vmem:[%s7655 + $0x30] sm:$0xf]
    %v7669 = vld [vmem:[%s7655 + $0x34] sm:$0xf]
    %v7670 = vld [vmem:[%s7655 + $0x38] sm:$0xf]
    %v7671 = vld [vmem:[%s7655 + $0x3c] sm:$0xf]
    %v7680 = vunpack.c.l.b16 %v7215
    %v7681 = vunpack.c.l.b16 %v7219
    %v7682 = vunpack.c.l.b16 %v7223
    %v7683 = vunpack.c.l.b16 %v7227
    %v7684 = vunpack.c.l.b16 %v7231
    %v7685 = vunpack.c.l.b16 %v7235
    %v7686 = vunpack.c.l.b16 %v7239
    %v7687 = vunpack.c.l.b16 %v7243
    %v7688 = vrot.slane %v7681, 7
    %v7689 = vsel %vm4834, %v7688, %v7680
    %v7690 = vrot.slane %v7682, 6
    %v7691 = vsel %vm4837, %v7690, %v7689
    %v7692 = vrot.slane %v7683, 5
    %v7693 = vsel %vm4840, %v7692, %v7691
    %v7694 = vrot.slane %v7684, 4
    %v7695 = vsel %vm4843, %v7694, %v7693
    %v7696 = vrot.slane %v7685, 3
    %v7697 = vsel %vm4846, %v7696, %v7695
    %v7698 = vrot.slane %v7686, 2
    %v7699 = vsel %vm4849, %v7698, %v7697
    %v7700 = vrot.slane %v7687, 1
    %v7701 = vsel %vm4852, %v7700, %v7699
    %v7702 = vpack.c.b16 %v7701, %v7701
    %v7720 = vunpack.c.l.b16 %v7656
    %v7721 = vunpack.c.l.b16 %v7657
    %v7722 = vunpack.c.l.b16 %v7658
    %v7723 = vunpack.c.l.b16 %v7659
    %v7724 = vunpack.c.l.b16 %v7660
    %v7725 = vunpack.c.l.b16 %v7661
    %v7726 = vunpack.c.l.b16 %v7662
    %v7727 = vunpack.c.l.b16 %v7663
    %v7728 = vunpack.c.l.b16 %v7664
    %v7729 = vunpack.c.l.b16 %v7665
    %v7730 = vunpack.c.l.b16 %v7666
    %v7731 = vunpack.c.l.b16 %v7667
    %v7732 = vunpack.c.l.b16 %v7668
    %v7733 = vunpack.c.l.b16 %v7669
    %v7734 = vunpack.c.l.b16 %v7670
    %v7735 = vunpack.c.l.b16 %v7671
    %v7736 = vpack.c.b16 %v7721, %v7720
    %v7737 = vpack.c.b16 %v7723, %v7722
    %v7738 = vpack.c.b16 %v7725, %v7724
    %v7739 = vpack.c.b16 %v7727, %v7726
    %v7740 = vpack.c.b16 %v7729, %v7728
    %v7741 = vpack.c.b16 %v7731, %v7730
    %v7742 = vpack.c.b16 %v7733, %v7732
    %v7743 = vpack.c.b16 %v7735, %v7734
    %7752 = vmatprep.subr.bf16.mxu0 0
    %7753 = vmatpush1.bf16.msra.mxu0 %v7743
    %7754 = vmatprep.subr.bf16.mxu0 0
    %7755 = vmatpush1.bf16.msra.mxu0 %v7742
    %7756 = vmatprep.subr.bf16.mxu0 0
    %7757 = vmatpush1.bf16.msra.mxu0 %v7741
    %7758 = vmatprep.subr.bf16.mxu0 0
    %7759 = vmatpush1.bf16.msra.mxu0 %v7740
    %7760 = vmatprep.subr.bf16.mxu0 0
    %7761 = vmatpush1.bf16.msra.mxu0 %v7739
    %7762 = vmatprep.subr.bf16.mxu0 0
    %7763 = vmatpush1.bf16.msra.mxu0 %v7738
    %7764 = vmatprep.subr.bf16.mxu0 0
    %7765 = vmatpush1.bf16.msra.mxu0 %v7737
    %7766 = vmatprep.subr.bf16.mxu0 0
    %7767 = vmatpush1.bf16.msra.mxu0 %v7736
    %7768 = vmatprep.subr.bf16.mxu0 0
    %7769 = vmatpush2.bf16.msra.mxu0 0
    %7770 = vmatprep.subr.bf16.mxu0 0
    %7771 = vmatpush2.bf16.msra.mxu0 0
    %7772 = vmatprep.subr.bf16.mxu0 0
    %7773 = vmatpush2.bf16.msra.mxu0 0
    %7774 = vmatprep.subr.bf16.mxu0 0
    %7775 = vmatpush2.bf16.msra.mxu0 0
    %7776 = vmatprep.subr.bf16.mxu0 0
    %7777 = vmatpush2.bf16.msra.mxu0 0
    %7778 = vmatprep.subr.bf16.mxu0 0
    %7779 = vmatpush2.bf16.msra.mxu0 0
    %7780 = vmatprep.subr.bf16.mxu0 0
    %7781 = vmatpush2.bf16.msra.mxu0 0
    %7782 = vmatprep.subr.bf16.mxu0 0
    %7783 = vmatpush2.bf16.msra.mxu0 0
    %7784 = vmatprep.mubr.bf16.mxu0 0
    %7785 = vmatmul.mubr.bf16.gmra.mxu0 %v7702
    %v7786 = vpop.f32.mrf.mxu0
    %v7787 = vadd.f32 0.0, %v7786
    %v7788 = vpop.f32.mrf.mxu0
    %v7789 = vpop.f32.mrf.mxu0
    %v7790 = vpop.f32.mrf.mxu0
    %7791 = vdwg.mxu0
    %v7792 = vadd.f32 %v7654, %v7787
    %v7793 = vld [vmem:[#allocation8] sm:$0x1]
    %v7795 = vlaneseq
    %v7796 = vshrl.u32 %v7795, 7
    %v7797 = vsub.s32 0, %v7796
    %v7798 = vrot.slane %v7793, %v7797
    %v7800 = vadd.f32 %v7792, %v7798
    %v7801 = vtanh.pop %v7800
    %v7802 = vpack.c.bf16 %v7801, %v7801
    %v7803 = vld [vmem:[#allocation10] sm:$0xf]
    %v7804 = vld [vmem:[#allocation10 + $0x4] sm:$0xf]
    %v7805 = vld [vmem:[#allocation10 + $0x8] sm:$0xf]
    %v7806 = vld [vmem:[#allocation10 + $0xc] sm:$0xf]
    %v7807 = vld [vmem:[#allocation10 + $0x10] sm:$0xf]
    %v7808 = vld [vmem:[#allocation10 + $0x14] sm:$0xf]
    %v7809 = vld [vmem:[#allocation10 + $0x18] sm:$0xf]
    %v7810 = vld [vmem:[#allocation10 + $0x1c] sm:$0xf]
    %v7811 = vld [vmem:[#allocation10 + $0x20] sm:$0xf]
    %v7812 = vld [vmem:[#allocation10 + $0x24] sm:$0xf]
    %v7813 = vld [vmem:[#allocation10 + $0x28] sm:$0xf]
    %v7814 = vld [vmem:[#allocation10 + $0x2c] sm:$0xf]
    %v7815 = vld [vmem:[#allocation10 + $0x30] sm:$0xf]
    %v7816 = vld [vmem:[#allocation10 + $0x34] sm:$0xf]
    %v7817 = vld [vmem:[#allocation10 + $0x38] sm:$0xf]
    %v7818 = vld [vmem:[#allocation10 + $0x3c] sm:$0xf]
    %v7819 = vld [vmem:[#allocation11] sm:$0x1]
    %v7821 = vlaneseq
    %v7822 = vshrl.u32 %v7821, 7
    %v7823 = vsub.s32 0, %v7822
    %v7824 = vrot.slane %v7819, %v7823
    %v7842 = vunpack.c.l.b16 %v7803
    %v7843 = vunpack.c.l.b16 %v7804
    %v7844 = vunpack.c.l.b16 %v7805
    %v7845 = vunpack.c.l.b16 %v7806
    %v7846 = vunpack.c.l.b16 %v7807
    %v7847 = vunpack.c.l.b16 %v7808
    %v7848 = vunpack.c.l.b16 %v7809
    %v7849 = vunpack.c.l.b16 %v7810
    %v7850 = vunpack.c.l.b16 %v7811
    %v7851 = vunpack.c.l.b16 %v7812
    %v7852 = vunpack.c.l.b16 %v7813
    %v7853 = vunpack.c.l.b16 %v7814
    %v7854 = vunpack.c.l.b16 %v7815
    %v7855 = vunpack.c.l.b16 %v7816
    %v7856 = vunpack.c.l.b16 %v7817
    %v7857 = vunpack.c.l.b16 %v7818
    %v7858 = vpack.c.b16 %v7843, %v7842
    %v7859 = vpack.c.b16 %v7845, %v7844
    %v7860 = vpack.c.b16 %v7847, %v7846
    %v7861 = vpack.c.b16 %v7849, %v7848
    %v7862 = vpack.c.b16 %v7851, %v7850
    %v7863 = vpack.c.b16 %v7853, %v7852
    %v7864 = vpack.c.b16 %v7855, %v7854
    %v7865 = vpack.c.b16 %v7857, %v7856
    %7874 = vmatprep.subr.bf16.mxu0 0
    %7875 = vmatpush1.bf16.msra.mxu0 %v7865
    %7876 = vmatprep.subr.bf16.mxu0 0
    %7877 = vmatpush1.bf16.msra.mxu0 %v7864
    %7878 = vmatprep.subr.bf16.mxu0 0
    %7879 = vmatpush1.bf16.msra.mxu0 %v7863
    %7880 = vmatprep.subr.bf16.mxu0 0
    %7881 = vmatpush1.bf16.msra.mxu0 %v7862
    %7882 = vmatprep.subr.bf16.mxu0 0
    %7883 = vmatpush1.bf16.msra.mxu0 %v7861
    %7884 = vmatprep.subr.bf16.mxu0 0
    %7885 = vmatpush1.bf16.msra.mxu0 %v7860
    %7886 = vmatprep.subr.bf16.mxu0 0
    %7887 = vmatpush1.bf16.msra.mxu0 %v7859
    %7888 = vmatprep.subr.bf16.mxu0 0
    %7889 = vmatpush1.bf16.msra.mxu0 %v7858
    %7890 = vmatprep.subr.bf16.mxu0 0
    %7891 = vmatpush2.bf16.msra.mxu0 0
    %7892 = vmatprep.subr.bf16.mxu0 0
    %7893 = vmatpush2.bf16.msra.mxu0 0
    %7894 = vmatprep.subr.bf16.mxu0 0
    %7895 = vmatpush2.bf16.msra.mxu0 0
    %7896 = vmatprep.subr.bf16.mxu0 0
    %7897 = vmatpush2.bf16.msra.mxu0 0
    %7898 = vmatprep.subr.bf16.mxu0 0
    %7899 = vmatpush2.bf16.msra.mxu0 0
    %7900 = vmatprep.subr.bf16.mxu0 0
    %7901 = vmatpush2.bf16.msra.mxu0 0
    %7902 = vmatprep.subr.bf16.mxu0 0
    %7903 = vmatpush2.bf16.msra.mxu0 0
    %7904 = vmatprep.subr.bf16.mxu0 0
    %7905 = vmatpush2.bf16.msra.mxu0 0
    %7906 = vmatprep.mubr.bf16.mxu0 0
    %7907 = vmatmul.mubr.bf16.gmra.mxu0 %v7802
    %v7908 = vpop.f32.mrf.mxu0
    %v7909 = vadd.f32 %v7824, %v7908
    %v7910 = vpop.f32.mrf.mxu0
    %v7911 = vpop.f32.mrf.mxu0
    %v7912 = vpop.f32.mrf.mxu0
    %7913 = vdwg.mxu0
    %v7914 = vtanh.pop %v7909
    %v7915 = vpack.c.bf16 %v7914, %v7914
    %v7916 = vld [vmem:[#allocation13] sm:$0xf]
    %v7917 = vld [vmem:[#allocation13 + $0x4] sm:$0xf]
    %v7918 = vld [vmem:[#allocation13 + $0x8] sm:$0xf]
    %v7919 = vld [vmem:[#allocation13 + $0xc] sm:$0xf]
    %v7920 = vld [vmem:[#allocation13 + $0x10] sm:$0xf]
    %v7921 = vld [vmem:[#allocation13 + $0x14] sm:$0xf]
    %v7922 = vld [vmem:[#allocation13 + $0x18] sm:$0xf]
    %v7923 = vld [vmem:[#allocation13 + $0x1c] sm:$0xf]
    %v7924 = vld [vmem:[#allocation13 + $0x20] sm:$0xf]
    %v7925 = vld [vmem:[#allocation13 + $0x24] sm:$0xf]
    %v7926 = vld [vmem:[#allocation13 + $0x28] sm:$0xf]
    %v7927 = vld [vmem:[#allocation13 + $0x2c] sm:$0xf]
    %v7928 = vld [vmem:[#allocation13 + $0x30] sm:$0xf]
    %v7929 = vld [vmem:[#allocation13 + $0x34] sm:$0xf]
    %v7930 = vld [vmem:[#allocation13 + $0x38] sm:$0xf]
    %v7931 = vld [vmem:[#allocation13 + $0x3c] sm:$0xf]
    %v7932 = vld [vmem:[#allocation14] sm:$0x1]
    %v7934 = vlaneseq
    %v7935 = vshrl.u32 %v7934, 7
    %v7936 = vsub.s32 0, %v7935
    %v7937 = vrot.slane %v7932, %v7936
    %v7955 = vunpack.c.l.b16 %v7916
    %v7956 = vunpack.c.l.b16 %v7917
    %v7957 = vunpack.c.l.b16 %v7918
    %v7958 = vunpack.c.l.b16 %v7919
    %v7959 = vunpack.c.l.b16 %v7920
    %v7960 = vunpack.c.l.b16 %v7921
    %v7961 = vunpack.c.l.b16 %v7922
    %v7962 = vunpack.c.l.b16 %v7923
    %v7963 = vunpack.c.l.b16 %v7924
    %v7964 = vunpack.c.l.b16 %v7925
    %v7965 = vunpack.c.l.b16 %v7926
    %v7966 = vunpack.c.l.b16 %v7927
    %v7967 = vunpack.c.l.b16 %v7928
    %v7968 = vunpack.c.l.b16 %v7929
    %v7969 = vunpack.c.l.b16 %v7930
    %v7970 = vunpack.c.l.b16 %v7931
    %v7971 = vpack.c.b16 %v7956, %v7955
    %v7972 = vpack.c.b16 %v7958, %v7957
    %v7973 = vpack.c.b16 %v7960, %v7959
    %v7974 = vpack.c.b16 %v7962, %v7961
    %v7975 = vpack.c.b16 %v7964, %v7963
    %v7976 = vpack.c.b16 %v7966, %v7965
    %v7977 = vpack.c.b16 %v7968, %v7967
    %v7978 = vpack.c.b16 %v7970, %v7969
    %7987 = vmatprep.subr.bf16.mxu0 0
    %7988 = vmatpush1.bf16.msra.mxu0 %v7978
    %7989 = vmatprep.subr.bf16.mxu0 0
    %7990 = vmatpush1.bf16.msra.mxu0 %v7977
    %7991 = vmatprep.subr.bf16.mxu0 0
    %7992 = vmatpush1.bf16.msra.mxu0 %v7976
    %7993 = vmatprep.subr.bf16.mxu0 0
    %7994 = vmatpush1.bf16.msra.mxu0 %v7975
    %7995 = vmatprep.subr.bf16.mxu0 0
    %7996 = vmatpush1.bf16.msra.mxu0 %v7974
    %7997 = vmatprep.subr.bf16.mxu0 0
    %7998 = vmatpush1.bf16.msra.mxu0 %v7973
    %7999 = vmatprep.subr.bf16.mxu0 0
    %8000 = vmatpush1.bf16.msra.mxu0 %v7972
    %8001 = vmatprep.subr.bf16.mxu0 0
    %8002 = vmatpush1.bf16.msra.mxu0 %v7971
    %8003 = vmatprep.subr.bf16.mxu0 0
    %8004 = vmatpush2.bf16.msra.mxu0 0
    %8005 = vmatprep.subr.bf16.mxu0 0
    %8006 = vmatpush2.bf16.msra.mxu0 0
    %8007 = vmatprep.subr.bf16.mxu0 0
    %8008 = vmatpush2.bf16.msra.mxu0 0
    %8009 = vmatprep.subr.bf16.mxu0 0
    %8010 = vmatpush2.bf16.msra.mxu0 0
    %8011 = vmatprep.subr.bf16.mxu0 0
    %8012 = vmatpush2.bf16.msra.mxu0 0
    %8013 = vmatprep.subr.bf16.mxu0 0
    %8014 = vmatpush2.bf16.msra.mxu0 0
    %8015 = vmatprep.subr.bf16.mxu0 0
    %8016 = vmatpush2.bf16.msra.mxu0 0
    %8017 = vmatprep.subr.bf16.mxu0 0
    %8018 = vmatpush2.bf16.msra.mxu0 0
    %8019 = vmatprep.mubr.bf16.mxu0 0
    %8020 = vmatmul.mubr.bf16.gmra.mxu0 %v7915
    %v8021 = vpop.f32.mrf.mxu0
    %v8022 = vadd.f32 %v7937, %v8021
    %v8023 = vpop.f32.mrf.mxu0
    %v8024 = vpop.f32.mrf.mxu0
    %v8025 = vpop.f32.mrf.mxu0
    %8026 = vdwg.mxu0
    %8027 = vst [vmem:[#allocation16] sm:$0xff] %v8022
    // Predicated region
    $region78: #{model_mnist_forward.1} parent=1 // pred_check
      _
    $region79: #{model_mnist_forward.1} parent=1 // pred_check_branch
      %8029 = sbr.rel (0) target = $region81
    $region80: #{model_mnist_forward.1} parent=1 // pred_region
      %s8031 = ssub.s32 128, 128
      %8032 = vsyncadd [#allocation4], %s8031
      %s8034 = sshll.u32 [#allocation16], 4
      %s8035 = int_to_ptr.vmem [resolvable:$true] %s8034
      %8037 = dma.vmem_to_hbm [thread:$0]  %s8035, 128, %s11, [#allocation4]
    $region81: #{model_mnist_forward.1} parent=1 // pred_fallthru
      _
    // Predicated region
    $region82: #{model_mnist_forward.1} parent=1 // pred_check
      _
    $region83: #{model_mnist_forward.1} parent=1 // pred_check_branch
      %8039 = sbr.rel (0) target = $region85
    $region84: #{model_mnist_forward.1} parent=1 // pred_region
      %8040 = dma.done [#allocation4], 128
    $region85: #{model_mnist_forward.1} parent=1 // pred_fallthru
      _
    %8041 = vsyncpa [#allocation3], 1
    %8042 = vsyncpa [#allocation6], 1
    %8043 = vsyncpa [#allocation9], 1
    %8044 = vsyncpa [#allocation12], 1
    %8045 = vsyncpa [#allocation15], 1
    %8046 = vsyncpa [#allocation4], 1

</llo_original>
